<compile_context>
chip_gen: v5e
topology: v5e:2x2
jax: 0.10.0
libtpu: 0.0.40
codegen_flags: <defaults>
</compile_context>

<pallas_src>
import functools

import jax
import jax.numpy as jnp
from jax.experimental import pallas as pl
from jax.experimental.pallas import tpu as pltpu


# ----------------------------- kernels ------------------------------------


def support_kernel(x_ref, w_ref, s_ref):
    """s = x @ W   (row-tiled, single MXU matmul per tile; f32 output)."""
    s = jnp.dot(x_ref[...], w_ref[...], preferred_element_type=jnp.float32)
    s_ref[...] = s.astype(s_ref.dtype)


def gcn_mid_kernel(adj_ref, s_ref, b_ref, w_next_ref, out_ref, acc_ref):
    """out = relu(adj @ s + b) @ W_next.

    adj is streamed (tm, tk) tiles over a K-reduction grid axis; s is a
    full-extent VMEM-resident block and the matching K-chunk is sliced here.
    """
    k = pl.program_id(1)
    tk = adj_ref.shape[1]

    @pl.when(k == 0)
    def _():
        acc_ref[...] = jnp.zeros_like(acc_ref)

    k_start = pl.multiple_of(k * tk, tk)
    s_chunk = s_ref[pl.ds(k_start, tk), :]          # f32 resident -> chunk
    acc_ref[...] += jnp.dot(adj_ref[...], s_chunk.astype(adj_ref.dtype),
                            preferred_element_type=jnp.float32)

    @pl.when(k == pl.num_programs(1) - 1)
    def _():
        # Bias add + ReLU + next-layer support only in the epilogue.
        h = jnp.maximum(acc_ref[...] + b_ref[...], 0.0)
        out_ref[...] = jnp.dot(h.astype(w_next_ref.dtype), w_next_ref[...],
                               preferred_element_type=jnp.float32
                               ).astype(out_ref.dtype)


def gcn_out_kernel(adj_ref, s_ref, b_ref, w3_ref, b3_ref, out_ref, acc_ref):
    """out = relu(adj @ s + b) . w3 + b3 (fc3 as VPU multiply + lane reduce).

    Output block is lane-dense (tm, 128); the scalar result is broadcast over
    the lane axis and column 0 is sliced in the wrapper.
    """
    k = pl.program_id(1)
    tk = adj_ref.shape[1]

    @pl.when(k == 0)
    def _():
        acc_ref[...] = jnp.zeros_like(acc_ref)

    k_start = pl.multiple_of(k * tk, tk)
    s_chunk = s_ref[pl.ds(k_start, tk), :]
    acc_ref[...] += jnp.dot(adj_ref[...], s_chunk.astype(adj_ref.dtype),
                            preferred_element_type=jnp.float32)

    @pl.when(k == pl.num_programs(1) - 1)
    def _():
        h = jnp.maximum(acc_ref[...] + b_ref[...], 0.0)          # (tm, H2p) f32
        out = jnp.sum(h * w3_ref[...], axis=-1, keepdims=True) + b3_ref[...]
        out_ref[...] = jnp.broadcast_to(out, out_ref.shape).astype(out_ref.dtype)


# ----------------------------- wrapper -------------------------------------


def _round_up(v, m):
    return ((v + m - 1) // m) * m


def _pad2d(a, rows, cols, dtype):
    a = jnp.asarray(a, dtype=dtype)
    pr, pc = rows - a.shape[0], cols - a.shape[1]
    if pr or pc:
        a = jnp.pad(a, ((0, pr), (0, pc)))   # zero-pad (required for correctness)
    return a


def _default_vmem_limit():
    # Generation-aware scoped-VMEM limit: leave headroom on v7x (64 MiB
    # physical), allow more on v5e/v6e (128 MiB physical).  Actual usage at
    # tile=512 is only a few MiB, so the fallback is always safe.
    try:
        cap = pltpu.get_tpu_info().vmem_capacity_bytes
        return int(min(max(cap - (16 << 20), 32 << 20), 64 << 20))
    except Exception:
        return 32 << 20


_VMEM_LIMIT = _default_vmem_limit()


@functools.partial(jax.jit, static_argnames=("compute_dtype", "tile"))
def gpn_valuator_forward(x, adj, w1, b1, w2, b2, w3, b3, *,
                         compute_dtype=jnp.bfloat16, tile=512):
    """Inference forward of GPN_Valuator.

    x: [N, nfeat], adj: [N, N] (dense normalized adjacency),
    w1: [nfeat, 2*nhid], b1: [1, 2*nhid] (or [2*nhid]),
    w2: [2*nhid, nhid],  b2: [1, nhid],
    w3: [nhid, 1] (PyTorch Linear weight transposed), b3: [1, 1].
    Returns [N, 1] float32.
    """
    n, nfeat = x.shape
    h1_dim = w1.shape[1]
    h2_dim = w2.shape[1]

    # Tile sizing: tiles are sized for DMA efficiency / re-read amortization
    # (the kernels are HBM-bound).  Small graphs still get >= 2 row tiles so
    # the "parallel" row axis feeds both TensorCores on v7x.
    if n <= tile:
        n_pad = _round_up(n, 16)
        tk = n_pad                      # single K step
        tm = max(n_pad // 2, 8)         # >= 2 row tiles
    else:
        n_pad = _round_up(n, tile)
        tm = tk = tile

    # Lane-dense (multiple-of-128) feature / hidden dims; zero padding is
    # exact (padded W/bias columns stay 0 through bias / ReLU / next matmul,
    # padded adj rows/cols are 0 and padded output rows are sliced off).
    f_pad = _round_up(nfeat, 128)
    h1_pad = _round_up(h1_dim, 128)
    h2_pad = _round_up(h2_dim, 128)

    x_p = _pad2d(x, n_pad, f_pad, compute_dtype)
    adj_p = _pad2d(adj, n_pad, n_pad, compute_dtype)
    w1_p = _pad2d(w1, f_pad, h1_pad, compute_dtype)
    w2_p = _pad2d(w2, h1_pad, h2_pad, compute_dtype)
    b1_p = _pad2d(jnp.reshape(b1, (1, -1)), 1, h1_pad, jnp.float32)
    b2_p = _pad2d(jnp.reshape(b2, (1, -1)), 1, h2_pad, jnp.float32)
    w3_row = _pad2d(jnp.reshape(w3, (1, -1)), 1, h2_pad, jnp.float32)
    b3_p = jnp.reshape(b3, (1, 1)).astype(jnp.float32)

    grid_rows = n_pad // tm
    grid_k = n_pad // tk

    params_1d = pltpu.CompilerParams(
        dimension_semantics=("parallel",), vmem_limit_bytes=_VMEM_LIMIT)
    params_2d = pltpu.CompilerParams(
        dimension_semantics=("parallel", "arbitrary"),
        vmem_limit_bytes=_VMEM_LIMIT)

    # --- kernel A: s1 = x @ W1   (s1 kept f32) ----------------------------
    s1 = pl.pallas_call(
        support_kernel,
        out_shape=jax.ShapeDtypeStruct((n_pad, h1_pad), jnp.float32),
        grid_spec=pltpu.PrefetchScalarGridSpec(
            num_scalar_prefetch=0,
            grid=(grid_rows,),
            in_specs=[
                pl.BlockSpec((tm, f_pad), lambda i: (i, 0)),
                pl.BlockSpec((f_pad, h1_pad), lambda i: (0, 0)),
            ],
            out_specs=pl.BlockSpec((tm, h1_pad), lambda i: (i, 0)),
        ),
        compiler_params=params_1d,
    )(x_p, w1_p)

    # --- kernel B: s2 = relu(adj @ s1 + b1) @ W2   (s2 kept f32) -----------
    # s1 is VMEM-resident (constant index_map); only adj is streamed.
    s2 = pl.pallas_call(
        gcn_mid_kernel,
        out_shape=jax.ShapeDtypeStruct((n_pad, h2_pad), jnp.float32),
        grid_spec=pltpu.PrefetchScalarGridSpec(
            num_scalar_prefetch=0,
            grid=(grid_rows, grid_k),
            in_specs=[
                pl.BlockSpec((tm, tk), lambda i, k: (i, k)),          # adj tile
                pl.BlockSpec((n_pad, h1_pad), lambda i, k: (0, 0)),   # s1 resident
                pl.BlockSpec((1, h1_pad), lambda i, k: (0, 0)),       # b1
                pl.BlockSpec((h1_pad, h2_pad), lambda i, k: (0, 0)),  # W2
            ],
            out_specs=pl.BlockSpec((tm, h2_pad), lambda i, k: (i, 0)),
            scratch_shapes=[pltpu.VMEM((tm, h1_pad), jnp.float32)],
        ),
        compiler_params=params_2d,
    )(adj_p, s1, b1_p, w2_p)

    # --- kernel C: out = relu(adj @ s2 + b2) . w3 + b3 ---------------------
    # Lane-dense (n_pad, 128) output; column 0 holds the result.
    out_p = pl.pallas_call(
        gcn_out_kernel,
        out_shape=jax.ShapeDtypeStruct((n_pad, 128), jnp.float32),
        grid_spec=pltpu.PrefetchScalarGridSpec(
            num_scalar_prefetch=0,
            grid=(grid_rows, grid_k),
            in_specs=[
                pl.BlockSpec((tm, tk), lambda i, k: (i, k)),          # adj tile
                pl.BlockSpec((n_pad, h2_pad), lambda i, k: (0, 0)),   # s2 resident
                pl.BlockSpec((1, h2_pad), lambda i, k: (0, 0)),       # b2
                pl.BlockSpec((1, h2_pad), lambda i, k: (0, 0)),       # w3 row
                pl.BlockSpec((1, 1), lambda i, k: (0, 0)),            # b3
            ],
            out_specs=pl.BlockSpec((tm, 128), lambda i, k: (i, 0)),
            scratch_shapes=[pltpu.VMEM((tm, h2_pad), jnp.float32)],
        ),
        compiler_params=params_2d,
    )(adj_p, s2, b2_p, w3_row, b3_p)

    return out_p[:n, 0:1]


# ----------------------------- reference -----------------------------------


def reference_forward(x, adj, w1, b1, w2, b2, w3, b3):
    h1 = jnp.maximum(adj @ (x @ w1) + b1, 0.0)
    h2 = jnp.maximum(adj @ (h1 @ w2) + b2, 0.0)
    return h2 @ w3 + b3


# ----------------------------- demo / check ---------------------------------

if __name__ == "__main__":
    # 600 nodes -> n_pad = 1024 with tile=512: exercises a 2x2 (row, K) grid,
    # the K-reduction accumulator path, in-kernel pl.ds slicing of the
    # resident s1/s2, and row/col zero padding.
    N, nfeat, nhid = 600, 64, 32

    key = jax.random.PRNGKey(0)
    kx, kadj, k1, k2, k3, kb1, kb2, kb3 = jax.random.split(key, 8)

    x = jax.random.normal(kx, (N, nfeat), dtype=jnp.float32)

    # Symmetric, row-normalized dense adjacency (self-loops included).
    a = (jax.random.uniform(kadj, (N, N)) > 0.5).astype(jnp.float32)
    a = jnp.maximum(a, a.T) + jnp.eye(N, dtype=jnp.float32)
    adj = a / jnp.sum(a, axis=1, keepdims=True)

    def uinit(k, shape, fan_in):
        bound = 1.0 / jnp.sqrt(jnp.float32(fan_in))
        return jax.random.uniform(k, shape, jnp.float32, -bound, bound)

    w1 = uinit(k1, (nfeat, 2 * nhid), nfeat)
    b1 = uinit(kb1, (1, 2 * nhid), nfeat)
    w2 = uinit(k2, (2 * nhid, nhid), 2 * nhid)
    b2 = uinit(kb2, (1, nhid), 2 * nhid)
    w3 = uinit(k3, (nhid, 1), nhid)    # PyTorch Linear weight (1, nhid) transposed
    b3 = uinit(kb3, (1, 1), nhid)

    ref = reference_forward(x, adj, w1, b1, w2, b2, w3, b3)

    # f32 path (tight check).
    out_f32 = gpn_valuator_forward(x, adj, w1, b1, w2, b2, w3, b3,
                                   compute_dtype=jnp.float32)
    out_f32 = jax.block_until_ready(out_f32)
    assert out_f32.shape == (N, 1)
    assert jnp.allclose(out_f32, ref, atol=1e-4, rtol=1e-4), (
        float(jnp.max(jnp.abs(out_f32 - ref))))

    # Default bf16 path (adj/x/W bf16; s1/s2/accumulation f32); loose check.
    out = gpn_valuator_forward(x, adj, w1, b1, w2, b2, w3, b3)
    out = jax.block_until_ready(out)
    assert out.shape == (N, 1)
    assert float(jnp.max(jnp.abs(out - ref))) < 5e-2

    print("KERNEL_OK")
</pallas_src>

<mosaic_0001>
module attributes {stable_mosaic.version = 11 : i64} {
  func.func @support_kernel(%arg0: i32, %arg1: memref<512x128xf32, #tpu.memory_space<vmem>>, %arg2: memref<128x128xf32, #tpu.memory_space<vmem>>, %arg3: memref<512x128xf32, #tpu.memory_space<vmem>>) attributes {dimension_semantics = [#tpu.dimension_semantics<parallel>], iteration_bounds = array<i64: 2>, scalar_prefetch = 0 : i64, scratch_operands = 0 : i64, tpu.core_type = #tpu.core_type<tc>, window_params = [{transform_indices = @transform_0, window_bounds = array<i64: 512, 128>}, {pipeline_mode = #tpu.pipeline_mode<synchronous>, transform_indices = @transform_1, window_bounds = array<i64: 128, 128>}, {transform_indices = @transform_2, window_bounds = array<i64: 512, 128>}]} {
    %c0 = arith.constant 0 : index
    %c0_0 = arith.constant 0 : index
    %0 = vector.load %arg1[%c0, %c0_0] : memref<512x128xf32, #tpu.memory_space<vmem>>, vector<512x128xf32>
    %c0_1 = arith.constant 0 : index
    %c0_2 = arith.constant 0 : index
    %1 = vector.load %arg2[%c0_1, %c0_2] : memref<128x128xf32, #tpu.memory_space<vmem>>, vector<128x128xf32>
    %cst = arith.constant dense<0.000000e+00> : vector<512x128xf32>
    %2 = tpu.matmul %0, %1, %cst {dimension_numbers = #tpu.dot_dimension_numbers<[1], [0], [0], [1], [0, 0, 1, 1], [], []>} : vector<512x128xf32>, vector<128x128xf32>, vector<512x128xf32> -> vector<512x128xf32>
    %c0_3 = arith.constant 0 : index
    %c0_4 = arith.constant 0 : index
    %3 = vector.load %arg3[%c0_3, %c0_4] : memref<512x128xf32, #tpu.memory_space<vmem>>, vector<512x128xf32>
    tpu.vector_store %arg3[%c0_3, %c0_4], %2 {strides = array<i32>} : memref<512x128xf32, #tpu.memory_space<vmem>>, vector<512x128xf32>,
    return
  }
  func.func @transform_0(%arg0: i32) -> (i32, i32) {
    %c0_i32 = arith.constant 0 : i32
    %c0_i32_0 = arith.constant 0 : i32
    return %arg0, %c0_i32 : i32, i32
  }
  func.func @transform_1(%arg0: i32) -> (i32, i32) {
    %c0_i32 = arith.constant 0 : i32
    %c0_i32_0 = arith.constant 0 : i32
    %c0_i32_1 = arith.constant 0 : i32
    return %c0_i32, %c0_i32_0 : i32, i32
  }
  func.func @transform_2(%arg0: i32) -> (i32, i32) {
    %c0_i32 = arith.constant 0 : i32
    %c0_i32_0 = arith.constant 0 : i32
    return %arg0, %c0_i32 : i32, i32
  }
}

module attributes {stable_mosaic.version = 11 : i64} {
  func.func @gcn_mid_kernel(%arg0: i32, %arg1: i32, %arg2: memref<512x512xf32, #tpu.memory_space<vmem>>, %arg3: memref<1024x128xf32, #tpu.memory_space<vmem>>, %arg4: memref<1x128xf32, #tpu.memory_space<vmem>>, %arg5: memref<128x128xf32, #tpu.memory_space<vmem>>, %arg6: memref<512x128xf32, #tpu.memory_space<vmem>>, %arg7: memref<512x128xf32, #tpu.memory_space<vmem>>) attributes {dimension_semantics = [#tpu.dimension_semantics<parallel>, #tpu.dimension_semantics<arbitrary>], iteration_bounds = array<i64: 2, 2>, scalar_prefetch = 0 : i64, scratch_operands = 1 : i64, tpu.core_type = #tpu.core_type<tc>, window_params = [{transform_indices = @transform_0, window_bounds = array<i64: 512, 512>}, {pipeline_mode = #tpu.pipeline_mode<synchronous>, transform_indices = @transform_1, window_bounds = array<i64: 1024, 128>}, {pipeline_mode = #tpu.pipeline_mode<synchronous>, transform_indices = @transform_2, window_bounds = array<i64: 1, 128>}, {pipeline_mode = #tpu.pipeline_mode<synchronous>, transform_indices = @transform_3, window_bounds = array<i64: 128, 128>}, {transform_indices = @transform_4, window_bounds = array<i64: 512, 128>}]} {
    %c0_i32 = arith.constant 0 : i32
    %0 = arith.cmpi eq, %arg1, %c0_i32 : i32
    %1 = arith.extui %0 : i1 to i32
    %c0_i32_0 = arith.constant 0 : i32
    %2 = arith.cmpi ne, %1, %c0_i32_0 : i32
    scf.if %2 {
      %cst_8 = arith.constant 0.000000e+00 : f32
      %15 = vector.broadcast %cst_8 : f32 to vector<512x128xf32>
      %c0_9 = arith.constant 0 : index
      %c0_10 = arith.constant 0 : index
      %16 = vector.load %arg7[%c0_9, %c0_10] : memref<512x128xf32, #tpu.memory_space<vmem>>, vector<512x128xf32>
      tpu.vector_store %arg7[%c0_9, %c0_10], %15 {strides = array<i32>} : memref<512x128xf32, #tpu.memory_space<vmem>>, vector<512x128xf32>,
    } else {
    }
    %c512_i32 = arith.constant 512 : i32
    %3 = arith.muli %arg1, %c512_i32 : i32
    %4 = tpu.assume_multiple %3, 512 : i32
    %5 = arith.index_cast %4 : i32 to index
    %c0 = arith.constant 0 : index
    %6 = vector.load %arg3[%5, %c0] : memref<1024x128xf32, #tpu.memory_space<vmem>>, vector<512x128xf32>
    %c0_1 = arith.constant 0 : index
    %c0_2 = arith.constant 0 : index
    %7 = vector.load %arg7[%c0_1, %c0_2] : memref<512x128xf32, #tpu.memory_space<vmem>>, vector<512x128xf32>
    %c0_3 = arith.constant 0 : index
    %c0_4 = arith.constant 0 : index
    %8 = vector.load %arg2[%c0_3, %c0_4] : memref<512x512xf32, #tpu.memory_space<vmem>>, vector<512x512xf32>
    %cst = arith.constant dense<0.000000e+00> : vector<512x128xf32>
    %9 = tpu.matmul %8, %6, %cst {dimension_numbers = #tpu.dot_dimension_numbers<[1], [0], [0], [1], [0, 0, 1, 1], [], []>} : vector<512x512xf32>, vector<512x128xf32>, vector<512x128xf32> -> vector<512x128xf32>
    %10 = arith.addf %7, %9 : vector<512x128xf32>
    %c0_5 = arith.constant 0 : index
    %c0_6 = arith.constant 0 : index
    %11 = vector.load %arg7[%c0_5, %c0_6] : memref<512x128xf32, #tpu.memory_space<vmem>>, vector<512x128xf32>
    tpu.vector_store %arg7[%c0_5, %c0_6], %10 {strides = array<i32>} : memref<512x128xf32, #tpu.memory_space<vmem>>, vector<512x128xf32>,
    %c1_i32 = arith.constant 1 : i32
    %12 = arith.cmpi eq, %arg1, %c1_i32 : i32
    %13 = arith.extui %12 : i1 to i32
    %c0_i32_7 = arith.constant 0 : i32
    %14 = arith.cmpi ne, %13, %c0_i32_7 : i32
    scf.if %14 {
      %c0_8 = arith.constant 0 : index
      %c0_9 = arith.constant 0 : index
      %15 = vector.load %arg7[%c0_8, %c0_9] : memref<512x128xf32, #tpu.memory_space<vmem>>, vector<512x128xf32>
      %c0_10 = arith.constant 0 : index
      %c0_11 = arith.constant 0 : index
      %16 = vector.load %arg4[%c0_10, %c0_11] : memref<1x128xf32, #tpu.memory_space<vmem>>, vector<1x128xf32>
      %17 = vector.broadcast %16 : vector<1x128xf32> to vector<512x128xf32>
      %18 = arith.addf %15, %17 : vector<512x128xf32>
      %cst_12 = arith.constant 0.000000e+00 : f32
      %19 = vector.broadcast %cst_12 : f32 to vector<512x128xf32>
      %20 = arith.maximumf %18, %19 : vector<512x128xf32>
      %c0_13 = arith.constant 0 : index
      %c0_14 = arith.constant 0 : index
      %21 = vector.load %arg5[%c0_13, %c0_14] : memref<128x128xf32, #tpu.memory_space<vmem>>, vector<128x128xf32>
      %cst_15 = arith.constant dense<0.000000e+00> : vector<512x128xf32>
      %22 = tpu.matmul %20, %21, %cst_15 {dimension_numbers = #tpu.dot_dimension_numbers<[1], [0], [0], [1], [0, 0, 1, 1], [], []>} : vector<512x128xf32>, vector<128x128xf32>, vector<512x128xf32> -> vector<512x128xf32>
      %c0_16 = arith.constant 0 : index
      %c0_17 = arith.constant 0 : index
      %23 = vector.load %arg6[%c0_16, %c0_17] : memref<512x128xf32, #tpu.memory_space<vmem>>, vector<512x128xf32>
      tpu.vector_store %arg6[%c0_16, %c0_17], %22 {strides = array<i32>} : memref<512x128xf32, #tpu.memory_space<vmem>>, vector<512x128xf32>,
    } else {
    }
    return
  }
  func.func @transform_0(%arg0: i32, %arg1: i32) -> (i32, i32) {
    %c0_i32 = arith.constant 0 : i32
    return %arg0, %arg1 : i32, i32
  }
  func.func @transform_1(%arg0: i32, %arg1: i32) -> (i32, i32) {
    %c0_i32 = arith.constant 0 : i32
    %c0_i32_0 = arith.constant 0 : i32
    %c0_i32_1 = arith.constant 0 : i32
    return %c0_i32, %c0_i32_0 : i32, i32
  }
  func.func @transform_2(%arg0: i32, %arg1: i32) -> (i32, i32) {
    %c0_i32 = arith.constant 0 : i32
    %c0_i32_0 = arith.constant 0 : i32
    %c0_i32_1 = arith.constant 0 : i32
    return %c0_i32, %c0_i32_0 : i32, i32
  }
  func.func @transform_3(%arg0: i32, %arg1: i32) -> (i32, i32) {
    %c0_i32 = arith.constant 0 : i32
    %c0_i32_0 = arith.constant 0 : i32
    %c0_i32_1 = arith.constant 0 : i32
    return %c0_i32, %c0_i32_0 : i32, i32
  }
  func.func @transform_4(%arg0: i32, %arg1: i32) -> (i32, i32) {
    %c0_i32 = arith.constant 0 : i32
    %c0_i32_0 = arith.constant 0 : i32
    return %arg0, %c0_i32 : i32, i32
  }
}

module attributes {stable_mosaic.version = 11 : i64} {
  func.func @gcn_out_kernel(%arg0: i32, %arg1: i32, %arg2: memref<512x512xf32, #tpu.memory_space<vmem>>, %arg3: memref<1024x128xf32, #tpu.memory_space<vmem>>, %arg4: memref<1x128xf32, #tpu.memory_space<vmem>>, %arg5: memref<1x128xf32, #tpu.memory_space<vmem>>, %arg6: memref<1x1xf32, #tpu.memory_space<vmem>>, %arg7: memref<512x128xf32, #tpu.memory_space<vmem>>, %arg8: memref<512x128xf32, #tpu.memory_space<vmem>>) attributes {dimension_semantics = [#tpu.dimension_semantics<parallel>, #tpu.dimension_semantics<arbitrary>], iteration_bounds = array<i64: 2, 2>, scalar_prefetch = 0 : i64, scratch_operands = 1 : i64, tpu.core_type = #tpu.core_type<tc>, window_params = [{transform_indices = @transform_0, window_bounds = array<i64: 512, 512>}, {pipeline_mode = #tpu.pipeline_mode<synchronous>, transform_indices = @transform_1, window_bounds = array<i64: 1024, 128>}, {pipeline_mode = #tpu.pipeline_mode<synchronous>, transform_indices = @transform_2, window_bounds = array<i64: 1, 128>}, {pipeline_mode = #tpu.pipeline_mode<synchronous>, transform_indices = @transform_3, window_bounds = array<i64: 1, 128>}, {pipeline_mode = #tpu.pipeline_mode<synchronous>, transform_indices = @transform_4, window_bounds = array<i64: 1, 1>}, {transform_indices = @transform_5, window_bounds = array<i64: 512, 128>}]} {
    %c0_i32 = arith.constant 0 : i32
    %0 = arith.cmpi eq, %arg1, %c0_i32 : i32
    %1 = arith.extui %0 : i1 to i32
    %c0_i32_0 = arith.constant 0 : i32
    %2 = arith.cmpi ne, %1, %c0_i32_0 : i32
    scf.if %2 {
      %cst_8 = arith.constant 0.000000e+00 : f32
      %15 = vector.broadcast %cst_8 : f32 to vector<512x128xf32>
      %c0_9 = arith.constant 0 : index
      %c0_10 = arith.constant 0 : index
      %16 = vector.load %arg8[%c0_9, %c0_10] : memref<512x128xf32, #tpu.memory_space<vmem>>, vector<512x128xf32>
      tpu.vector_store %arg8[%c0_9, %c0_10], %15 {strides = array<i32>} : memref<512x128xf32, #tpu.memory_space<vmem>>, vector<512x128xf32>,
    } else {
    }
    %c512_i32 = arith.constant 512 : i32
    %3 = arith.muli %arg1, %c512_i32 : i32
    %4 = tpu.assume_multiple %3, 512 : i32
    %5 = arith.index_cast %4 : i32 to index
    %c0 = arith.constant 0 : index
    %6 = vector.load %arg3[%5, %c0] : memref<1024x128xf32, #tpu.memory_space<vmem>>, vector<512x128xf32>
    %c0_1 = arith.constant 0 : index
    %c0_2 = arith.constant 0 : index
    %7 = vector.load %arg8[%c0_1, %c0_2] : memref<512x128xf32, #tpu.memory_space<vmem>>, vector<512x128xf32>
    %c0_3 = arith.constant 0 : index
    %c0_4 = arith.constant 0 : index
    %8 = vector.load %arg2[%c0_3, %c0_4] : memref<512x512xf32, #tpu.memory_space<vmem>>, vector<512x512xf32>
    %cst = arith.constant dense<0.000000e+00> : vector<512x128xf32>
    %9 = tpu.matmul %8, %6, %cst {dimension_numbers = #tpu.dot_dimension_numbers<[1], [0], [0], [1], [0, 0, 1, 1], [], []>} : vector<512x512xf32>, vector<512x128xf32>, vector<512x128xf32> -> vector<512x128xf32>
    %10 = arith.addf %7, %9 : vector<512x128xf32>
    %c0_5 = arith.constant 0 : index
    %c0_6 = arith.constant 0 : index
    %11 = vector.load %arg8[%c0_5, %c0_6] : memref<512x128xf32, #tpu.memory_space<vmem>>, vector<512x128xf32>
    tpu.vector_store %arg8[%c0_5, %c0_6], %10 {strides = array<i32>} : memref<512x128xf32, #tpu.memory_space<vmem>>, vector<512x128xf32>,
    %c1_i32 = arith.constant 1 : i32
    %12 = arith.cmpi eq, %arg1, %c1_i32 : i32
    %13 = arith.extui %12 : i1 to i32
    %c0_i32_7 = arith.constant 0 : i32
    %14 = arith.cmpi ne, %13, %c0_i32_7 : i32
    scf.if %14 {
      %c0_8 = arith.constant 0 : index
      %c0_9 = arith.constant 0 : index
      %15 = vector.load %arg8[%c0_8, %c0_9] : memref<512x128xf32, #tpu.memory_space<vmem>>, vector<512x128xf32>
      %c0_10 = arith.constant 0 : index
      %c0_11 = arith.constant 0 : index
      %16 = vector.load %arg4[%c0_10, %c0_11] : memref<1x128xf32, #tpu.memory_space<vmem>>, vector<1x128xf32>
      %17 = vector.broadcast %16 : vector<1x128xf32> to vector<512x128xf32>
      %18 = arith.addf %15, %17 : vector<512x128xf32>
      %cst_12 = arith.constant 0.000000e+00 : f32
      %19 = vector.broadcast %cst_12 : f32 to vector<512x128xf32>
      %20 = arith.maximumf %18, %19 : vector<512x128xf32>
      %c0_13 = arith.constant 0 : index
      %c0_14 = arith.constant 0 : index
      %21 = vector.load %arg5[%c0_13, %c0_14] : memref<1x128xf32, #tpu.memory_space<vmem>>, vector<1x128xf32>
      %22 = vector.broadcast %21 : vector<1x128xf32> to vector<512x128xf32>
      %23 = arith.mulf %20, %22 : vector<512x128xf32>
      %cst_15 = arith.constant dense<0.000000e+00> : vector<512xf32>
      %24 = vector.multi_reduction <add>, %23, %cst_15 [1] : vector<512x128xf32> to vector<512xf32>
      %25 = vector.shape_cast %24 : vector<512xf32> to vector<512x1xf32>
      %c0_16 = arith.constant 0 : index
      %c0_17 = arith.constant 0 : index
      %26 = vector.load %arg6[%c0_16, %c0_17] : memref<1x1xf32, #tpu.memory_space<vmem>>, vector<1x1xf32>
      %27 = vector.broadcast %26 : vector<1x1xf32> to vector<512x1xf32>
      %28 = arith.addf %25, %27 : vector<512x1xf32>
      %29 = vector.shape_cast %28 : vector<512x1xf32> to vector<512x1xf32>
      %30 = vector.broadcast %29 : vector<512x1xf32> to vector<512x128xf32>
      %c0_18 = arith.constant 0 : index
      %c0_19 = arith.constant 0 : index
      %31 = vector.load %arg7[%c0_18, %c0_19] : memref<512x128xf32, #tpu.memory_space<vmem>>, vector<512x128xf32>
      tpu.vector_store %arg7[%c0_18, %c0_19], %30 {strides = array<i32>} : memref<512x128xf32, #tpu.memory_space<vmem>>, vector<512x128xf32>,
    } else {
    }
    return
  }
  func.func @transform_0(%arg0: i32, %arg1: i32) -> (i32, i32) {
    %c0_i32 = arith.constant 0 : i32
    return %arg0, %arg1 : i32, i32
  }
  func.func @transform_1(%arg0: i32, %arg1: i32) -> (i32, i32) {
    %c0_i32 = arith.constant 0 : i32
    %c0_i32_0 = arith.constant 0 : i32
    %c0_i32_1 = arith.constant 0 : i32
    return %c0_i32, %c0_i32_0 : i32, i32
  }
  func.func @transform_2(%arg0: i32, %arg1: i32) -> (i32, i32) {
    %c0_i32 = arith.constant 0 : i32
    %c0_i32_0 = arith.constant 0 : i32
    %c0_i32_1 = arith.constant 0 : i32
    return %c0_i32, %c0_i32_0 : i32, i32
  }
  func.func @transform_3(%arg0: i32, %arg1: i32) -> (i32, i32) {
    %c0_i32 = arith.constant 0 : i32
    %c0_i32_0 = arith.constant 0 : i32
    %c0_i32_1 = arith.constant 0 : i32
    return %c0_i32, %c0_i32_0 : i32, i32
  }
  func.func @transform_4(%arg0: i32, %arg1: i32) -> (i32, i32) {
    %c0_i32 = arith.constant 0 : i32
    %c0_i32_0 = arith.constant 0 : i32
    %c0_i32_1 = arith.constant 0 : i32
    return %c0_i32, %c0_i32_0 : i32, i32
  }
  func.func @transform_5(%arg0: i32, %arg1: i32) -> (i32, i32) {
    %c0_i32 = arith.constant 0 : i32
    %c0_i32_0 = arith.constant 0 : i32
    return %arg0, %c0_i32 : i32, i32
  }
}

</mosaic_0001>

<llo_original>
// kernel: gpn_valuator_forward.3
$region0: #{gpn_valuator_forward.3}
  #allocation0 [shape = 'u32[]', space=smem, size = 0x4, offset = 0x4, fixed_abs, tag = 'smem constant byte address 0x4 - core index']
  #allocation1 [shape = 'u32[72,128]{1,0:T(1,128)}', space=vmem, size = 0x9000, scoped, tag = 'internal scratch']
  %s0 = inlined_call_operand.vmem [shape: f32[1024,128], index: 0, kind: input, shape index: {}]
  %s1 = inlined_call_operand.vmem [shape: f32[128,128], index: 1, kind: input, shape index: {}]
  %s2 = inlined_call_operand.vmem [shape: f32[1024,128], index: 2, kind: output, shape index: {}]
  %s3 = sld [smem:[#allocation0]]
  $region41: #{gpn_valuator_forward.3} parent=0
    _
  %s5 = ssub.s32 1, %s3
  %s6 = scalar_select 0, %s5, %s3
  loop: start=0, step=1, limit=4
  $region2: #{gpn_valuator_forward.3} parent=0 // loop_pre_header
    _
  $region3: #{gpn_valuator_forward.3} parent=0 // loop_header
    %s8 = sphi 0, %s12
    %p9 = scmp.ge.s32.totalorder %s8, 4
    %s18 = sphi 0, %s20
    %s21 = sphi 0, %s18
    %s22 = sphi 0, %s21
    %s38 = sphi 0, %s22
    %s42 = sphi 0, %s42
    %s44 = sphi 0, %s42
    %s45 = sphi 0, %s44
    %s59 = sphi 0, %s45
    %s65 = sphi 0, %s67
    %s68 = sphi 0, %s65
    %s69 = sphi 0, %s68
    %s85 = sphi 0, %s69
  $region4: #{gpn_valuator_forward.3} parent=0 // loop_header_branch
    %11 = sbr.rel (%p9) target = $region8
  $region5: #{gpn_valuator_forward.3} parent=0 // loop_body
    %s13 = ssub.s32 %s8, 1
    %s14 = ssub.s32 %s8, 2
    %s15 = sadd.s32 %s8, 1
    %s16 = ssub.s32 %s8, %s15
    %p17 = scmp.eq.s32.totalorder %s16, 0
    %s19 = sadd.s32 %s18, 1
    %s20 = scalar_select %p17, %s18, %s19
    %p23 = pneg %p17
    %p24 = scmp.eq.s32.totalorder %s8, 1
    %p25 = por %p23, %p24
    %p26 = scmp.ne.s32.totalorder %s18, %s21
    %p27 = scmp.eq.s32.totalorder %s8, 0
    %p28 = por %p26, %p27
    %p29 = scmp.ne.s32.totalorder %s18, %s21
    %p30 = scmp.eq.s32.totalorder %s13, 1
    %p31 = por %p29, %p30
    %p32 = scmp.ne.s32.totalorder %s21, %s22
    %p33 = scmp.eq.s32.totalorder %s13, 0
    %p34 = por %p32, %p33
    %p35 = scmp.ne.s32.totalorder %s21, %s22
    %p36 = scmp.eq.s32.totalorder %s14, 1
    %p37 = por %p35, %p36
    %p39 = scmp.ne.s32.totalorder %s22, %s38
    %p40 = scmp.eq.s32.totalorder %s14, 0
    %p41 = por %p39, %p40
    %s43 = sadd.s32 %s42, 1
    %p46 = scmp.eq.s32.totalorder %s8, 1
    %p47 = scmp.ne.s32.totalorder %s42, %s44
    %p48 = scmp.eq.s32.totalorder %s8, 0
    %p49 = por %p47, %p48
    %p50 = scmp.ne.s32.totalorder %s42, %s44
    %p51 = scmp.eq.s32.totalorder %s13, 1
    %p52 = por %p50, %p51
    %p53 = scmp.ne.s32.totalorder %s44, %s45
    %p54 = scmp.eq.s32.totalorder %s13, 0
    %p55 = por %p53, %p54
    %p56 = scmp.ne.s32.totalorder %s44, %s45
    %p57 = scmp.eq.s32.totalorder %s14, 1
    %p58 = por %p56, %p57
    %p60 = scmp.ne.s32.totalorder %s45, %s59
    %p61 = scmp.eq.s32.totalorder %s14, 0
    %p62 = por %p60, %p61
    %s63 = ssub.s32 %s8, %s15
    %p64 = scmp.eq.s32.totalorder %s63, 0
    %s66 = sadd.s32 %s65, 1
    %s67 = scalar_select %p64, %s65, %s66
    %p70 = pneg %p64
    %p71 = scmp.eq.s32.totalorder %s8, 1
    %p72 = por %p70, %p71
    %p73 = scmp.ne.s32.totalorder %s65, %s68
    %p74 = scmp.eq.s32.totalorder %s8, 0
    %p75 = por %p73, %p74
    %p76 = scmp.ne.s32.totalorder %s65, %s68
    %p77 = scmp.eq.s32.totalorder %s13, 1
    %p78 = por %p76, %p77
    %p79 = scmp.ne.s32.totalorder %s68, %s69
    %p80 = scmp.eq.s32.totalorder %s13, 0
    %p81 = por %p79, %p80
    %p82 = scmp.ne.s32.totalorder %s68, %s69
    %p83 = scmp.eq.s32.totalorder %s14, 1
    %p84 = por %p82, %p83
    %p86 = scmp.ne.s32.totalorder %s69, %s85
    %p87 = scmp.eq.s32.totalorder %s14, 0
    %p88 = por %p86, %p87
    %p89 = scmp.le.s32.totalorder 1, %s8
    %p90 = scmp.lt.s32.totalorder %s8, 3
    %p91 = pnand %p89, %p90
    %p92 = pneg %p91
    // Predicated region
    $region9: #{gpn_valuator_forward.3} parent=5 // pred_check
      _
    $region10: #{gpn_valuator_forward.3} parent=5 // pred_check_branch
      %94 = sbr.rel (%p91) target = $region12
    $region11: #{gpn_valuator_forward.3} parent=5 // pred_region
      %s95 = ssub.s32 %s8, 1
      // Predicated region
      $region13: #{gpn_valuator_forward.3} parent=11 // pred_check
        %p96 = pneg %p55
      $region14: #{gpn_valuator_forward.3} parent=11 // pred_check_branch
        %98 = sbr.rel (%p96) target = $region16
      $region15: #{gpn_valuator_forward.3} parent=11 // pred_region
        _
      $region16: #{gpn_valuator_forward.3} parent=11 // pred_fallthru
        _
    $region12: #{gpn_valuator_forward.3} parent=5 // pred_fallthru
      _
    %p99 = scmp.lt.s32.totalorder %s8, 2
    // Predicated region
    $region17: #{gpn_valuator_forward.3} parent=5 // pred_check
      %p100 = pneg %p99
    $region18: #{gpn_valuator_forward.3} parent=5 // pred_check_branch
      %102 = sbr.rel (%p100) target = $region20
    $region19: #{gpn_valuator_forward.3} parent=5 // pred_region
      // Predicated region
      $region21: #{gpn_valuator_forward.3} parent=19 // pred_check
        %p103 = pneg %p28
      $region22: #{gpn_valuator_forward.3} parent=19 // pred_check_branch
        %105 = sbr.rel (%p103) target = $region24
      $region23: #{gpn_valuator_forward.3} parent=19 // pred_region
        %s106 = smul.u32 64, %s8
        %p107 = scmp.lt.s32.totalorder %s106, 127
        %s108 = scalar_select %p107, %s106, 127
        %s109 = smul.addr %s108, 8
        %s110 = scalar_lea.vmem %s0, %s109
        %s111 = smul.u32 64, %s8
      $region24: #{gpn_valuator_forward.3} parent=19 // pred_fallthru
        _
    $region20: #{gpn_valuator_forward.3} parent=5 // pred_fallthru
      _
    %p112 = scmp.le.s32.totalorder 1, %s8
    %p113 = scmp.lt.s32.totalorder %s8, 3
    %p114 = pnand %p112, %p113
    %p115 = pneg %p114
    // Predicated region
    $region25: #{gpn_valuator_forward.3} parent=5 // pred_check
      _
    $region26: #{gpn_valuator_forward.3} parent=5 // pred_check_branch
      %117 = sbr.rel (%p114) target = $region28
    $region27: #{gpn_valuator_forward.3} parent=5 // pred_region
      %s118 = ssub.s32 %s8, 1
      %s119 = smul.u32 64, %s13
      %p120 = scmp.lt.s32.totalorder %s119, 127
      %s121 = scalar_select %p120, %s119, 127
      %s122 = smul.addr %s121, 8
      %s123 = scalar_lea.vmem %s0, %s122
      %p124 = pneg %p34
      %p125 = pneg %p31
      %p126 = pneg %p55
      %p127 = pneg %p52
      %p128 = pneg %p81
      %p129 = pneg %p78
      %s130 = smul.u32 64, %s13
      %p131 = scmp.lt.s32.totalorder %s130, 127
      %s132 = scalar_select %p131, %s130, 127
      %s133 = smul.addr %s132, 8
      %s134 = scalar_lea.vmem %s2, %s133
      %s135 = smul.u32 64, %s13
      %p136 = scmp.lt.s32.totalorder %s135, 127
      %s137 = scalar_select %p136, %s135, 127
      %s138 = smul.addr %s137, 8
      %s139 = scalar_lea.vmem %s0, %s138
      %s140 = smul.u32 64, %s13
      %s141 = smul.u32 64, %s13
      %p142 = scmp.lt.s32.totalorder %s141, 127
      %s143 = scalar_select %p142, %s141, 127
      %s144 = smul.addr %s143, 8
      %s145 = scalar_lea.vmem %s2, %s144
      %s146 = smul.u32 64, %s13
      %v147 = vld [vmem:[%s139] sm:$0xff]
      %v148 = vld [vmem:[%s139 + $0x8] sm:$0xff]
      %v149 = vld [vmem:[%s139 + $0x10] sm:$0xff]
      %v150 = vld [vmem:[%s139 + $0x18] sm:$0xff]
      %v151 = vld [vmem:[%s139 + $0x20] sm:$0xff]
      %v152 = vld [vmem:[%s139 + $0x28] sm:$0xff]
      %v153 = vld [vmem:[%s139 + $0x30] sm:$0xff]
      %v154 = vld [vmem:[%s139 + $0x38] sm:$0xff]
      %v155 = vld [vmem:[%s139 + $0x40] sm:$0xff]
      %v156 = vld [vmem:[%s139 + $0x48] sm:$0xff]
      %v157 = vld [vmem:[%s139 + $0x50] sm:$0xff]
      %v158 = vld [vmem:[%s139 + $0x58] sm:$0xff]
      %v159 = vld [vmem:[%s139 + $0x60] sm:$0xff]
      %v160 = vld [vmem:[%s139 + $0x68] sm:$0xff]
      %v161 = vld [vmem:[%s139 + $0x70] sm:$0xff]
      %v162 = vld [vmem:[%s139 + $0x78] sm:$0xff]
      %v163 = vld [vmem:[%s139 + $0x80] sm:$0xff]
      %v164 = vld [vmem:[%s139 + $0x88] sm:$0xff]
      %v165 = vld [vmem:[%s139 + $0x90] sm:$0xff]
      %v166 = vld [vmem:[%s139 + $0x98] sm:$0xff]
      %v167 = vld [vmem:[%s139 + $0xa0] sm:$0xff]
      %v168 = vld [vmem:[%s139 + $0xa8] sm:$0xff]
      %v169 = vld [vmem:[%s139 + $0xb0] sm:$0xff]
      %v170 = vld [vmem:[%s139 + $0xb8] sm:$0xff]
      %v171 = vld [vmem:[%s139 + $0xc0] sm:$0xff]
      %v172 = vld [vmem:[%s139 + $0xc8] sm:$0xff]
      %v173 = vld [vmem:[%s139 + $0xd0] sm:$0xff]
      %v174 = vld [vmem:[%s139 + $0xd8] sm:$0xff]
      %v175 = vld [vmem:[%s139 + $0xe0] sm:$0xff]
      %v176 = vld [vmem:[%s139 + $0xe8] sm:$0xff]
      %v177 = vld [vmem:[%s139 + $0xf0] sm:$0xff]
      %v178 = vld [vmem:[%s139 + $0xf8] sm:$0xff]
      %v179 = vld [vmem:[%s139 + $0x100] sm:$0xff]
      %v180 = vld [vmem:[%s139 + $0x108] sm:$0xff]
      %v181 = vld [vmem:[%s139 + $0x110] sm:$0xff]
      %v182 = vld [vmem:[%s139 + $0x118] sm:$0xff]
      %v183 = vld [vmem:[%s139 + $0x120] sm:$0xff]
      %v184 = vld [vmem:[%s139 + $0x128] sm:$0xff]
      %v185 = vld [vmem:[%s139 + $0x130] sm:$0xff]
      %v186 = vld [vmem:[%s139 + $0x138] sm:$0xff]
      %v187 = vld [vmem:[%s139 + $0x140] sm:$0xff]
      %v188 = vld [vmem:[%s139 + $0x148] sm:$0xff]
      %v189 = vld [vmem:[%s139 + $0x150] sm:$0xff]
      %v190 = vld [vmem:[%s139 + $0x158] sm:$0xff]
      %v191 = vld [vmem:[%s139 + $0x160] sm:$0xff]
      %v192 = vld [vmem:[%s139 + $0x168] sm:$0xff]
      %v193 = vld [vmem:[%s139 + $0x170] sm:$0xff]
      %v194 = vld [vmem:[%s139 + $0x178] sm:$0xff]
      %v195 = vld [vmem:[%s139 + $0x180] sm:$0xff]
      %v196 = vld [vmem:[%s139 + $0x188] sm:$0xff]
      %v197 = vld [vmem:[%s139 + $0x190] sm:$0xff]
      %v198 = vld [vmem:[%s139 + $0x198] sm:$0xff]
      %v199 = vld [vmem:[%s139 + $0x1a0] sm:$0xff]
      %v200 = vld [vmem:[%s139 + $0x1a8] sm:$0xff]
      %v201 = vld [vmem:[%s139 + $0x1b0] sm:$0xff]
      %v202 = vld [vmem:[%s139 + $0x1b8] sm:$0xff]
      %v203 = vld [vmem:[%s139 + $0x1c0] sm:$0xff]
      %v204 = vld [vmem:[%s139 + $0x1c8] sm:$0xff]
      %v205 = vld [vmem:[%s139 + $0x1d0] sm:$0xff]
      %v206 = vld [vmem:[%s139 + $0x1d8] sm:$0xff]
      %v207 = vld [vmem:[%s139 + $0x1e0] sm:$0xff]
      %v208 = vld [vmem:[%s139 + $0x1e8] sm:$0xff]
      %v209 = vld [vmem:[%s139 + $0x1f0] sm:$0xff]
      %v210 = vld [vmem:[%s139 + $0x1f8] sm:$0xff]
      %v211 = vld [vmem:[%s1] sm:$0xff]
      %v212 = vld [vmem:[%s1 + $0x8] sm:$0xff]
      %v213 = vld [vmem:[%s1 + $0x10] sm:$0xff]
      %v214 = vld [vmem:[%s1 + $0x18] sm:$0xff]
      %v215 = vld [vmem:[%s1 + $0x20] sm:$0xff]
      %v216 = vld [vmem:[%s1 + $0x28] sm:$0xff]
      %v217 = vld [vmem:[%s1 + $0x30] sm:$0xff]
      %v218 = vld [vmem:[%s1 + $0x38] sm:$0xff]
      %v219 = vld [vmem:[%s1 + $0x40] sm:$0xff]
      %v220 = vld [vmem:[%s1 + $0x48] sm:$0xff]
      %v221 = vld [vmem:[%s1 + $0x50] sm:$0xff]
      %v222 = vld [vmem:[%s1 + $0x58] sm:$0xff]
      %v223 = vld [vmem:[%s1 + $0x60] sm:$0xff]
      %v224 = vld [vmem:[%s1 + $0x68] sm:$0xff]
      %v225 = vld [vmem:[%s1 + $0x70] sm:$0xff]
      %v226 = vld [vmem:[%s1 + $0x78] sm:$0xff]
      %227 = vmatpush.msra.mxu0 %v226
      %228 = vmatpush.msra.mxu0 %v225
      %229 = vmatpush.msra.mxu0 %v224
      %230 = vmatpush.msra.mxu0 %v223
      %231 = vmatpush.msra.mxu0 %v222
      %232 = vmatpush.msra.mxu0 %v221
      %233 = vmatpush.msra.mxu0 %v220
      %234 = vmatpush.msra.mxu0 %v219
      %235 = vmatpush.msra.mxu0 %v218
      %236 = vmatpush.msra.mxu0 %v217
      %237 = vmatpush.msra.mxu0 %v216
      %238 = vmatpush.msra.mxu0 %v215
      %239 = vmatpush.msra.mxu0 %v214
      %240 = vmatpush.msra.mxu0 %v213
      %241 = vmatpush.msra.mxu0 %v212
      %242 = vmatpush.msra.mxu0 %v211
      %243 = vmatmul.f32.gmra.mxu0 %v147
      %v244 = vpop.f32.mrf.mxu0
      %v245 = vadd.f32 0.0, %v244
      %246 = vmatmul.f32.gmra.mxu0 %v148
      %v247 = vpop.f32.mrf.mxu0
      %v248 = vadd.f32 0.0, %v247
      %249 = vmatmul.f32.gmra.mxu0 %v149
      %v250 = vpop.f32.mrf.mxu0
      %v251 = vadd.f32 0.0, %v250
      %252 = vmatmul.f32.gmra.mxu0 %v150
      %v253 = vpop.f32.mrf.mxu0
      %v254 = vadd.f32 0.0, %v253
      %255 = vmatmul.f32.gmra.mxu0 %v151
      %v256 = vpop.f32.mrf.mxu0
      %v257 = vadd.f32 0.0, %v256
      %258 = vmatmul.f32.gmra.mxu0 %v152
      %v259 = vpop.f32.mrf.mxu0
      %v260 = vadd.f32 0.0, %v259
      %261 = vmatmul.f32.gmra.mxu0 %v153
      %v262 = vpop.f32.mrf.mxu0
      %v263 = vadd.f32 0.0, %v262
      %264 = vmatmul.f32.gmra.mxu0 %v154
      %v265 = vpop.f32.mrf.mxu0
      %v266 = vadd.f32 0.0, %v265
      %267 = vmatmul.f32.gmra.mxu0 %v155
      %v268 = vpop.f32.mrf.mxu0
      %v269 = vadd.f32 0.0, %v268
      %270 = vmatmul.f32.gmra.mxu0 %v156
      %v271 = vpop.f32.mrf.mxu0
      %v272 = vadd.f32 0.0, %v271
      %273 = vmatmul.f32.gmra.mxu0 %v157
      %v274 = vpop.f32.mrf.mxu0
      %v275 = vadd.f32 0.0, %v274
      %276 = vmatmul.f32.gmra.mxu0 %v158
      %v277 = vpop.f32.mrf.mxu0
      %v278 = vadd.f32 0.0, %v277
      %279 = vmatmul.f32.gmra.mxu0 %v159
      %v280 = vpop.f32.mrf.mxu0
      %v281 = vadd.f32 0.0, %v280
      %282 = vmatmul.f32.gmra.mxu0 %v160
      %v283 = vpop.f32.mrf.mxu0
      %v284 = vadd.f32 0.0, %v283
      %285 = vmatmul.f32.gmra.mxu0 %v161
      %v286 = vpop.f32.mrf.mxu0
      %v287 = vadd.f32 0.0, %v286
      %288 = vmatmul.f32.gmra.mxu0 %v162
      %v289 = vpop.f32.mrf.mxu0
      %v290 = vadd.f32 0.0, %v289
      %291 = vmatmul.f32.gmra.mxu0 %v163
      %v292 = vpop.f32.mrf.mxu0
      %v293 = vadd.f32 0.0, %v292
      %294 = vmatmul.f32.gmra.mxu0 %v164
      %v295 = vpop.f32.mrf.mxu0
      %v296 = vadd.f32 0.0, %v295
      %297 = vmatmul.f32.gmra.mxu0 %v165
      %v298 = vpop.f32.mrf.mxu0
      %v299 = vadd.f32 0.0, %v298
      %300 = vmatmul.f32.gmra.mxu0 %v166
      %v301 = vpop.f32.mrf.mxu0
      %v302 = vadd.f32 0.0, %v301
      %303 = vmatmul.f32.gmra.mxu0 %v167
      %v304 = vpop.f32.mrf.mxu0
      %v305 = vadd.f32 0.0, %v304
      %306 = vmatmul.f32.gmra.mxu0 %v168
      %v307 = vpop.f32.mrf.mxu0
      %v308 = vadd.f32 0.0, %v307
      %309 = vmatmul.f32.gmra.mxu0 %v169
      %v310 = vpop.f32.mrf.mxu0
      %v311 = vadd.f32 0.0, %v310
      %312 = vmatmul.f32.gmra.mxu0 %v170
      %v313 = vpop.f32.mrf.mxu0
      %v314 = vadd.f32 0.0, %v313
      %315 = vmatmul.f32.gmra.mxu0 %v171
      %v316 = vpop.f32.mrf.mxu0
      %v317 = vadd.f32 0.0, %v316
      %318 = vmatmul.f32.gmra.mxu0 %v172
      %v319 = vpop.f32.mrf.mxu0
      %v320 = vadd.f32 0.0, %v319
      %321 = vmatmul.f32.gmra.mxu0 %v173
      %v322 = vpop.f32.mrf.mxu0
      %v323 = vadd.f32 0.0, %v322
      %324 = vmatmul.f32.gmra.mxu0 %v174
      %v325 = vpop.f32.mrf.mxu0
      %v326 = vadd.f32 0.0, %v325
      %327 = vmatmul.f32.gmra.mxu0 %v175
      %v328 = vpop.f32.mrf.mxu0
      %v329 = vadd.f32 0.0, %v328
      %330 = vmatmul.f32.gmra.mxu0 %v176
      %v331 = vpop.f32.mrf.mxu0
      %v332 = vadd.f32 0.0, %v331
      %333 = vmatmul.f32.gmra.mxu0 %v177
      %v334 = vpop.f32.mrf.mxu0
      %v335 = vadd.f32 0.0, %v334
      %336 = vmatmul.f32.gmra.mxu0 %v178
      %v337 = vpop.f32.mrf.mxu0
      %v338 = vadd.f32 0.0, %v337
      %339 = vmatmul.f32.gmra.mxu0 %v179
      %v340 = vpop.f32.mrf.mxu0
      %v341 = vadd.f32 0.0, %v340
      %342 = vmatmul.f32.gmra.mxu0 %v180
      %v343 = vpop.f32.mrf.mxu0
      %v344 = vadd.f32 0.0, %v343
      %345 = vmatmul.f32.gmra.mxu0 %v181
      %v346 = vpop.f32.mrf.mxu0
      %v347 = vadd.f32 0.0, %v346
      %348 = vmatmul.f32.gmra.mxu0 %v182
      %v349 = vpop.f32.mrf.mxu0
      %v350 = vadd.f32 0.0, %v349
      %351 = vmatmul.f32.gmra.mxu0 %v183
      %v352 = vpop.f32.mrf.mxu0
      %v353 = vadd.f32 0.0, %v352
      %354 = vmatmul.f32.gmra.mxu0 %v184
      %v355 = vpop.f32.mrf.mxu0
      %v356 = vadd.f32 0.0, %v355
      %357 = vmatmul.f32.gmra.mxu0 %v185
      %v358 = vpop.f32.mrf.mxu0
      %v359 = vadd.f32 0.0, %v358
      %360 = vmatmul.f32.gmra.mxu0 %v186
      %v361 = vpop.f32.mrf.mxu0
      %v362 = vadd.f32 0.0, %v361
      %363 = vmatmul.f32.gmra.mxu0 %v187
      %v364 = vpop.f32.mrf.mxu0
      %v365 = vadd.f32 0.0, %v364
      %366 = vmatmul.f32.gmra.mxu0 %v188
      %v367 = vpop.f32.mrf.mxu0
      %v368 = vadd.f32 0.0, %v367
      %369 = vmatmul.f32.gmra.mxu0 %v189
      %v370 = vpop.f32.mrf.mxu0
      %v371 = vadd.f32 0.0, %v370
      %372 = vmatmul.f32.gmra.mxu0 %v190
      %v373 = vpop.f32.mrf.mxu0
      %v374 = vadd.f32 0.0, %v373
      %375 = vmatmul.f32.gmra.mxu0 %v191
      %v376 = vpop.f32.mrf.mxu0
      %v377 = vadd.f32 0.0, %v376
      %378 = vmatmul.f32.gmra.mxu0 %v192
      %v379 = vpop.f32.mrf.mxu0
      %v380 = vadd.f32 0.0, %v379
      %381 = vmatmul.f32.gmra.mxu0 %v193
      %v382 = vpop.f32.mrf.mxu0
      %v383 = vadd.f32 0.0, %v382
      %384 = vmatmul.f32.gmra.mxu0 %v194
      %v385 = vpop.f32.mrf.mxu0
      %v386 = vadd.f32 0.0, %v385
      %387 = vmatmul.f32.gmra.mxu0 %v195
      %v388 = vpop.f32.mrf.mxu0
      %v389 = vadd.f32 0.0, %v388
      %390 = vmatmul.f32.gmra.mxu0 %v196
      %v391 = vpop.f32.mrf.mxu0
      %v392 = vadd.f32 0.0, %v391
      %393 = vmatmul.f32.gmra.mxu0 %v197
      %v394 = vpop.f32.mrf.mxu0
      %v395 = vadd.f32 0.0, %v394
      %396 = vmatmul.f32.gmra.mxu0 %v198
      %v397 = vpop.f32.mrf.mxu0
      %v398 = vadd.f32 0.0, %v397
      %399 = vmatmul.f32.gmra.mxu0 %v199
      %v400 = vpop.f32.mrf.mxu0
      %v401 = vadd.f32 0.0, %v400
      %402 = vmatmul.f32.gmra.mxu0 %v200
      %v403 = vpop.f32.mrf.mxu0
      %v404 = vadd.f32 0.0, %v403
      %405 = vmatmul.f32.gmra.mxu0 %v201
      %v406 = vpop.f32.mrf.mxu0
      %v407 = vadd.f32 0.0, %v406
      %408 = vmatmul.f32.gmra.mxu0 %v202
      %v409 = vpop.f32.mrf.mxu0
      %v410 = vadd.f32 0.0, %v409
      %411 = vmatmul.f32.gmra.mxu0 %v203
      %v412 = vpop.f32.mrf.mxu0
      %v413 = vadd.f32 0.0, %v412
      %414 = vmatmul.f32.gmra.mxu0 %v204
      %v415 = vpop.f32.mrf.mxu0
      %v416 = vadd.f32 0.0, %v415
      %417 = vmatmul.f32.gmra.mxu0 %v205
      %v418 = vpop.f32.mrf.mxu0
      %v419 = vadd.f32 0.0, %v418
      %420 = vmatmul.f32.gmra.mxu0 %v206
      %v421 = vpop.f32.mrf.mxu0
      %v422 = vadd.f32 0.0, %v421
      %423 = vmatmul.f32.gmra.mxu0 %v207
      %v424 = vpop.f32.mrf.mxu0
      %v425 = vadd.f32 0.0, %v424
      %426 = vmatmul.f32.gmra.mxu0 %v208
      %v427 = vpop.f32.mrf.mxu0
      %v428 = vadd.f32 0.0, %v427
      %429 = vmatmul.f32.gmra.mxu0 %v209
      %v430 = vpop.f32.mrf.mxu0
      %v431 = vadd.f32 0.0, %v430
      %432 = vmatmul.f32.gmra.mxu0 %v210
      %v433 = vpop.f32.mrf.mxu0
      %v434 = vadd.f32 0.0, %v433
      %435 = vdwg.mxu0
      %436 = vst [vmem:[%s145] sm:$0xff] %v245
      %437 = vst [vmem:[%s145 + $0x8] sm:$0xff] %v248
      %438 = vst [vmem:[%s145 + $0x10] sm:$0xff] %v251
      %439 = vst [vmem:[%s145 + $0x18] sm:$0xff] %v254
      %440 = vst [vmem:[%s145 + $0x20] sm:$0xff] %v257
      %441 = vst [vmem:[%s145 + $0x28] sm:$0xff] %v260
      %442 = vst [vmem:[%s145 + $0x30] sm:$0xff] %v263
      %443 = vst [vmem:[%s145 + $0x38] sm:$0xff] %v266
      %444 = vst [vmem:[%s145 + $0x40] sm:$0xff] %v269
      %445 = vst [vmem:[%s145 + $0x48] sm:$0xff] %v272
      %446 = vst [vmem:[%s145 + $0x50] sm:$0xff] %v275
      %447 = vst [vmem:[%s145 + $0x58] sm:$0xff] %v278
      %448 = vst [vmem:[%s145 + $0x60] sm:$0xff] %v281
      %449 = vst [vmem:[%s145 + $0x68] sm:$0xff] %v284
      %450 = vst [vmem:[%s145 + $0x70] sm:$0xff] %v287
      %451 = vst [vmem:[%s145 + $0x78] sm:$0xff] %v290
      %452 = vst [vmem:[%s145 + $0x80] sm:$0xff] %v293
      %453 = vst [vmem:[%s145 + $0x88] sm:$0xff] %v296
      %454 = vst [vmem:[%s145 + $0x90] sm:$0xff] %v299
      %455 = vst [vmem:[%s145 + $0x98] sm:$0xff] %v302
      %456 = vst [vmem:[%s145 + $0xa0] sm:$0xff] %v305
      %457 = vst [vmem:[%s145 + $0xa8] sm:$0xff] %v308
      %458 = vst [vmem:[%s145 + $0xb0] sm:$0xff] %v311
      %459 = vst [vmem:[%s145 + $0xb8] sm:$0xff] %v314
      %460 = vst [vmem:[%s145 + $0xc0] sm:$0xff] %v317
      %461 = vst [vmem:[%s145 + $0xc8] sm:$0xff] %v320
      %462 = vst [vmem:[%s145 + $0xd0] sm:$0xff] %v323
      %463 = vst [vmem:[%s145 + $0xd8] sm:$0xff] %v326
      %464 = vst [vmem:[%s145 + $0xe0] sm:$0xff] %v329
      %465 = vst [vmem:[%s145 + $0xe8] sm:$0xff] %v332
      %466 = vst [vmem:[%s145 + $0xf0] sm:$0xff] %v335
      %467 = vst [vmem:[%s145 + $0xf8] sm:$0xff] %v338
      %468 = vst [vmem:[%s145 + $0x100] sm:$0xff] %v341
      %469 = vst [vmem:[%s145 + $0x108] sm:$0xff] %v344
      %470 = vst [vmem:[%s145 + $0x110] sm:$0xff] %v347
      %471 = vst [vmem:[%s145 + $0x118] sm:$0xff] %v350
      %472 = vst [vmem:[%s145 + $0x120] sm:$0xff] %v353
      %473 = vst [vmem:[%s145 + $0x128] sm:$0xff] %v356
      %474 = vst [vmem:[%s145 + $0x130] sm:$0xff] %v359
      %475 = vst [vmem:[%s145 + $0x138] sm:$0xff] %v362
      %476 = vst [vmem:[%s145 + $0x140] sm:$0xff] %v365
      %477 = vst [vmem:[%s145 + $0x148] sm:$0xff] %v368
      %478 = vst [vmem:[%s145 + $0x150] sm:$0xff] %v371
      %479 = vst [vmem:[%s145 + $0x158] sm:$0xff] %v374
      %480 = vst [vmem:[%s145 + $0x160] sm:$0xff] %v377
      %481 = vst [vmem:[%s145 + $0x168] sm:$0xff] %v380
      %482 = vst [vmem:[%s145 + $0x170] sm:$0xff] %v383
      %483 = vst [vmem:[%s145 + $0x178] sm:$0xff] %v386
      %484 = vst [vmem:[%s145 + $0x180] sm:$0xff] %v389
      %485 = vst [vmem:[%s145 + $0x188] sm:$0xff] %v392
      %486 = vst [vmem:[%s145 + $0x190] sm:$0xff] %v395
      %487 = vst [vmem:[%s145 + $0x198] sm:$0xff] %v398
      %488 = vst [vmem:[%s145 + $0x1a0] sm:$0xff] %v401
      %489 = vst [vmem:[%s145 + $0x1a8] sm:$0xff] %v404
      %490 = vst [vmem:[%s145 + $0x1b0] sm:$0xff] %v407
      %491 = vst [vmem:[%s145 + $0x1b8] sm:$0xff] %v410
      %492 = vst [vmem:[%s145 + $0x1c0] sm:$0xff] %v413
      %493 = vst [vmem:[%s145 + $0x1c8] sm:$0xff] %v416
      %494 = vst [vmem:[%s145 + $0x1d0] sm:$0xff] %v419
      %495 = vst [vmem:[%s145 + $0x1d8] sm:$0xff] %v422
      %496 = vst [vmem:[%s145 + $0x1e0] sm:$0xff] %v425
      %497 = vst [vmem:[%s145 + $0x1e8] sm:$0xff] %v428
      %498 = vst [vmem:[%s145 + $0x1f0] sm:$0xff] %v431
      %499 = vst [vmem:[%s145 + $0x1f8] sm:$0xff] %v434
      %s500 = smul.u32 64, %s13
      %p501 = scmp.lt.s32.totalorder %s500, 127
      %s502 = scalar_select %p501, %s500, 127
      %s503 = smul.addr %s502, 8
      %s504 = scalar_lea.vmem %s2, %s503
      // Predicated region
      $region29: #{gpn_valuator_forward.3} parent=27 // pred_check
        %p505 = pneg %p78
      $region30: #{gpn_valuator_forward.3} parent=27 // pred_check_branch
        %507 = sbr.rel (%p505) target = $region32
      $region31: #{gpn_valuator_forward.3} parent=27 // pred_region
        %s508 = smul.u32 64, %s13
      $region32: #{gpn_valuator_forward.3} parent=27 // pred_fallthru
        _
    $region28: #{gpn_valuator_forward.3} parent=5 // pred_fallthru
      _
    %p509 = scmp.le.s32.totalorder 2, %s8
    // Predicated region
    $region33: #{gpn_valuator_forward.3} parent=5 // pred_check
      %p510 = pneg %p509
    $region34: #{gpn_valuator_forward.3} parent=5 // pred_check_branch
      %512 = sbr.rel (%p510) target = $region36
    $region35: #{gpn_valuator_forward.3} parent=5 // pred_region
      %s513 = ssub.s32 %s8, 2
      // Predicated region
      $region37: #{gpn_valuator_forward.3} parent=35 // pred_check
        %p514 = pneg %p84
      $region38: #{gpn_valuator_forward.3} parent=35 // pred_check_branch
        %516 = sbr.rel (%p514) target = $region40
      $region39: #{gpn_valuator_forward.3} parent=35 // pred_region
        %s517 = smul.u32 64, %s14
        %p518 = scmp.lt.s32.totalorder %s517, 127
        %s519 = scalar_select %p518, %s517, 127
        %s520 = smul.addr %s519, 8
        %s521 = scalar_lea.vmem %s2, %s520
      $region40: #{gpn_valuator_forward.3} parent=35 // pred_fallthru
        _
    $region36: #{gpn_valuator_forward.3} parent=5 // pred_fallthru
      _
  $region6: #{gpn_valuator_forward.3} parent=0 // loop_footer
    %s12 = sadd.s32 1, %s8
  $region7: #{gpn_valuator_forward.3} parent=0 // loop_footer_branch
    %7 = sbr.rel target = $region3
  $region8: #{gpn_valuator_forward.3} parent=0 // loop_exit
    _

// kernel: gpn_valuator_forward.4
$region0: #{gpn_valuator_forward.4}
  #allocation0 [shape = 'u32[]', space=smem, size = 0x4, offset = 0x4, fixed_abs, tag = 'smem constant byte address 0x4 - core index']
  #allocation1 [shape = 'u32[72,128]{1,0:T(1,128)}', space=vmem, size = 0x9000, scoped, tag = 'internal scratch']
  #allocation2 [shape = 'f32[512,128]{1,0:T(8,128)}', space=vmem, size = 0x40000, scoped, tag = 'scratch operand']
  %s0 = inlined_call_operand.vmem [shape: f32[1024,1024], index: 0, kind: input, shape index: {}]
  %s1 = inlined_call_operand.vmem [shape: f32[1024,128], index: 1, kind: input, shape index: {}]
  %s2 = inlined_call_operand.vmem [shape: f32[1,128], index: 2, kind: input, shape index: {}]
  %s3 = inlined_call_operand.vmem [shape: f32[128,128], index: 3, kind: input, shape index: {}]
  %s4 = inlined_call_operand.vmem [shape: f32[1024,128], index: 4, kind: output, shape index: {}]
  %s5 = sld [smem:[#allocation0]]
  $region80: #{gpn_valuator_forward.4} parent=0
    _
  %s7 = ssub.s32 1, %s5
  %s8 = scalar_select 0, %s7, %s5
  $region1: #{gpn_valuator_forward.4} parent=0
    #allocation3 [shape = 'u8[2097152]{0}', space=vmem, size = 0x200000, scoped, tag = 'input window, operand 0']
    loop: start=0, step=1, limit=6
    $region2: #{gpn_valuator_forward.4} parent=1 // loop_pre_header
      _
    $region3: #{gpn_valuator_forward.4} parent=1 // loop_header
      %s10 = sphi 0, %s14
      %p11 = scmp.ge.s32.totalorder %s10, 6
      %s17 = sphi 0, %s29
      %s18 = sphi 0, %s25
      %s19 = sphi 0, %s17
      %s20 = sphi 0, %s18
      %s21 = sphi 0, %s19
      %s22 = sphi 0, %s20
      %s34 = sphi 0, %s36
      %s37 = sphi 0, %s34
      %s38 = sphi 0, %s37
      %s54 = sphi 0, %s38
      %s58 = sphi 0, %s58
      %s60 = sphi 0, %s58
      %s61 = sphi 0, %s60
      %s75 = sphi 0, %s61
      %s79 = sphi 0, %s79
      %s81 = sphi 0, %s79
      %s82 = sphi 0, %s81
      %s96 = sphi 0, %s82
      %s100 = sphi 0, %s100
      %s102 = sphi 0, %s100
      %s103 = sphi 0, %s102
      %s117 = sphi 0, %s103
      %s123 = sphi 0, %s125
      %s126 = sphi 0, %s123
      %s127 = sphi 0, %s126
      %s143 = sphi 0, %s127
    $region4: #{gpn_valuator_forward.4} parent=1 // loop_header_branch
      %13 = sbr.rel (%p11) target = $region8
    $region5: #{gpn_valuator_forward.4} parent=1 // loop_body
      %s15 = ssub.s32 %s10, 1
      %s16 = ssub.s32 %s10, 2
      %s23 = sadd.s32 1, %s18
      %p24 = scmp.ge.s32.totalorder %s23, 2
      %s25 = scalar_select %p24, 0, %s23
      %s26 = sadd.s32 1, %s17
      %s27 = scalar_select %p24, %s26, %s17
      %p28 = scmp.ge.s32.totalorder %s27, 2
      %s29 = scalar_select %p28, 0, %s27
      %s30 = ssub.s32 %s17, %s29
      %s31 = ssub.s32 %s18, %s25
      %s32 = sor.u32 %s30, %s31
      %p33 = scmp.eq.s32.totalorder %s32, 0
      %s35 = sadd.s32 %s34, 1
      %s36 = scalar_select %p33, %s34, %s35
      %p39 = pneg %p33
      %p40 = scmp.eq.s32.totalorder %s10, 3
      %p41 = por %p39, %p40
      %p42 = scmp.ne.s32.totalorder %s34, %s37
      %p43 = scmp.eq.s32.totalorder %s10, 0
      %p44 = por %p42, %p43
      %p45 = scmp.ne.s32.totalorder %s34, %s37
      %p46 = scmp.eq.s32.totalorder %s15, 3
      %p47 = por %p45, %p46
      %p48 = scmp.ne.s32.totalorder %s37, %s38
      %p49 = scmp.eq.s32.totalorder %s15, 0
      %p50 = por %p48, %p49
      %p51 = scmp.ne.s32.totalorder %s37, %s38
      %p52 = scmp.eq.s32.totalorder %s16, 3
      %p53 = por %p51, %p52
      %p55 = scmp.ne.s32.totalorder %s38, %s54
      %p56 = scmp.eq.s32.totalorder %s16, 0
      %p57 = por %p55, %p56
      %s59 = sadd.s32 %s58, 1
      %p62 = scmp.eq.s32.totalorder %s10, 3
      %p63 = scmp.ne.s32.totalorder %s58, %s60
      %p64 = scmp.eq.s32.totalorder %s10, 0
      %p65 = por %p63, %p64
      %p66 = scmp.ne.s32.totalorder %s58, %s60
      %p67 = scmp.eq.s32.totalorder %s15, 3
      %p68 = por %p66, %p67
      %p69 = scmp.ne.s32.totalorder %s60, %s61
      %p70 = scmp.eq.s32.totalorder %s15, 0
      %p71 = por %p69, %p70
      %p72 = scmp.ne.s32.totalorder %s60, %s61
      %p73 = scmp.eq.s32.totalorder %s16, 3
      %p74 = por %p72, %p73
      %p76 = scmp.ne.s32.totalorder %s61, %s75
      %p77 = scmp.eq.s32.totalorder %s16, 0
      %p78 = por %p76, %p77
      %s80 = sadd.s32 %s79, 1
      %p83 = scmp.eq.s32.totalorder %s10, 3
      %p84 = scmp.ne.s32.totalorder %s79, %s81
      %p85 = scmp.eq.s32.totalorder %s10, 0
      %p86 = por %p84, %p85
      %p87 = scmp.ne.s32.totalorder %s79, %s81
      %p88 = scmp.eq.s32.totalorder %s15, 3
      %p89 = por %p87, %p88
      %p90 = scmp.ne.s32.totalorder %s81, %s82
      %p91 = scmp.eq.s32.totalorder %s15, 0
      %p92 = por %p90, %p91
      %p93 = scmp.ne.s32.totalorder %s81, %s82
      %p94 = scmp.eq.s32.totalorder %s16, 3
      %p95 = por %p93, %p94
      %p97 = scmp.ne.s32.totalorder %s82, %s96
      %p98 = scmp.eq.s32.totalorder %s16, 0
      %p99 = por %p97, %p98
      %s101 = sadd.s32 %s100, 1
      %p104 = scmp.eq.s32.totalorder %s10, 3
      %p105 = scmp.ne.s32.totalorder %s100, %s102
      %p106 = scmp.eq.s32.totalorder %s10, 0
      %p107 = por %p105, %p106
      %p108 = scmp.ne.s32.totalorder %s100, %s102
      %p109 = scmp.eq.s32.totalorder %s15, 3
      %p110 = por %p108, %p109
      %p111 = scmp.ne.s32.totalorder %s102, %s103
      %p112 = scmp.eq.s32.totalorder %s15, 0
      %p113 = por %p111, %p112
      %p114 = scmp.ne.s32.totalorder %s102, %s103
      %p115 = scmp.eq.s32.totalorder %s16, 3
      %p116 = por %p114, %p115
      %p118 = scmp.ne.s32.totalorder %s103, %s117
      %p119 = scmp.eq.s32.totalorder %s16, 0
      %p120 = por %p118, %p119
      %s121 = ssub.s32 %s17, %s29
      %p122 = scmp.eq.s32.totalorder %s121, 0
      %s124 = sadd.s32 %s123, 1
      %s125 = scalar_select %p122, %s123, %s124
      %p128 = pneg %p122
      %p129 = scmp.eq.s32.totalorder %s10, 3
      %p130 = por %p128, %p129
      %p131 = scmp.ne.s32.totalorder %s123, %s126
      %p132 = scmp.eq.s32.totalorder %s10, 0
      %p133 = por %p131, %p132
      %p134 = scmp.ne.s32.totalorder %s123, %s126
      %p135 = scmp.eq.s32.totalorder %s15, 3
      %p136 = por %p134, %p135
      %p137 = scmp.ne.s32.totalorder %s126, %s127
      %p138 = scmp.eq.s32.totalorder %s15, 0
      %p139 = por %p137, %p138
      %p140 = scmp.ne.s32.totalorder %s126, %s127
      %p141 = scmp.eq.s32.totalorder %s16, 3
      %p142 = por %p140, %p141
      %p144 = scmp.ne.s32.totalorder %s127, %s143
      %p145 = scmp.eq.s32.totalorder %s16, 0
      %p146 = por %p144, %p145
      %p147 = scmp.le.s32.totalorder 1, %s10
      %p148 = scmp.lt.s32.totalorder %s10, 5
      %p149 = pnand %p147, %p148
      %p150 = pneg %p149
      // Predicated region
      $region9: #{gpn_valuator_forward.4} parent=5 // pred_check
        _
      $region10: #{gpn_valuator_forward.4} parent=5 // pred_check_branch
        %152 = sbr.rel (%p149) target = $region12
      $region11: #{gpn_valuator_forward.4} parent=5 // pred_region
        %s153 = ssub.s32 %s10, 1
        // Predicated region
        $region13: #{gpn_valuator_forward.4} parent=11 // pred_check
          %p154 = pneg %p71
        $region14: #{gpn_valuator_forward.4} parent=11 // pred_check_branch
          %156 = sbr.rel (%p154) target = $region16
        $region15: #{gpn_valuator_forward.4} parent=11 // pred_region
          _
        $region16: #{gpn_valuator_forward.4} parent=11 // pred_fallthru
          _
        // Predicated region
        $region17: #{gpn_valuator_forward.4} parent=11 // pred_check
          %p157 = pneg %p92
        $region18: #{gpn_valuator_forward.4} parent=11 // pred_check_branch
          %159 = sbr.rel (%p157) target = $region20
        $region19: #{gpn_valuator_forward.4} parent=11 // pred_region
          _
        $region20: #{gpn_valuator_forward.4} parent=11 // pred_fallthru
          _
        // Predicated region
        $region21: #{gpn_valuator_forward.4} parent=11 // pred_check
          %p160 = pneg %p113
        $region22: #{gpn_valuator_forward.4} parent=11 // pred_check_branch
          %162 = sbr.rel (%p160) target = $region24
        $region23: #{gpn_valuator_forward.4} parent=11 // pred_region
          _
        $region24: #{gpn_valuator_forward.4} parent=11 // pred_fallthru
          _
      $region12: #{gpn_valuator_forward.4} parent=5 // pred_fallthru
        _
      %p163 = scmp.lt.s32.totalorder %s10, 4
      // Predicated region
      $region25: #{gpn_valuator_forward.4} parent=5 // pred_check
        %p164 = pneg %p163
      $region26: #{gpn_valuator_forward.4} parent=5 // pred_check_branch
        %166 = sbr.rel (%p164) target = $region28
      $region27: #{gpn_valuator_forward.4} parent=5 // pred_region
        // Predicated region
        $region29: #{gpn_valuator_forward.4} parent=27 // pred_check
          %p167 = pneg %p44
        $region30: #{gpn_valuator_forward.4} parent=27 // pred_check_branch
          %169 = sbr.rel (%p167) target = $region32
        $region31: #{gpn_valuator_forward.4} parent=27 // pred_region
          %s170 = sand.u32 %s34, 1
          %s171 = sand.u32 %s34, 1
          %s172 = smul.addr %s171, 2048
          %s173 = scalar_lea.vmem [#allocation3], %s172
          %s174 = smul.u32 64, %s17
          %s175 = smul.u32 4, %s18
          %s176 = smul.addr %s174, 8
          %s177 = sadd.s32 %s175, %s176
          %s178 = smul.addr %s177, 8
          %s179 = scalar_lea.vmem %s0, %s178
          // Predicated region
          $region33: #{gpn_valuator_forward.4} parent=31 // pred_check
            _
          $region34: #{gpn_valuator_forward.4} parent=31 // pred_check_branch
            %181 = sbr.rel (0) target = $region36
          $region35: #{gpn_valuator_forward.4} parent=31 // pred_region
            // Predicated region
            $region37: #{gpn_valuator_forward.4} parent=35 // pred_check
              _
            $region38: #{gpn_valuator_forward.4} parent=35 // pred_check_branch
              %183 = sbr.rel (0) target = $region40
            $region39: #{gpn_valuator_forward.4} parent=35 // pred_region
              loop: start=0, step=1, limit=1
              $region41: #{gpn_valuator_forward.4} parent=39 // loop_pre_header
                _
              $region42: #{gpn_valuator_forward.4} parent=39 // loop_header
                %s185 = sphi 0, %s189
                %p186 = scmp.ge.s32.totalorder %s185, 1
                %s190 = sphi %s179, %s179
                %s191 = sphi %s173, %s173
              $region43: #{gpn_valuator_forward.4} parent=39 // loop_header_branch
                %188 = sbr.rel (%p186) target = $region47
              $region44: #{gpn_valuator_forward.4} parent=39 // loop_body
                %v192 = vld [vmem:[%s190] sm:$0xff]
                %193 = vst [vmem:[%s191] sm:$0xff] %v192
                %v194 = vld [vmem:[%s190 + $0x8] sm:$0xff]
                %195 = vst [vmem:[%s191 + $0x8] sm:$0xff] %v194
                %v196 = vld [vmem:[%s190 + $0x10] sm:$0xff]
                %197 = vst [vmem:[%s191 + $0x10] sm:$0xff] %v196
                %v198 = vld [vmem:[%s190 + $0x18] sm:$0xff]
                %199 = vst [vmem:[%s191 + $0x18] sm:$0xff] %v198
                %v200 = vld [vmem:[%s190 + $0x40] sm:$0xff]
                %201 = vst [vmem:[%s191 + $0x20] sm:$0xff] %v200
                %v202 = vld [vmem:[%s190 + $0x48] sm:$0xff]
                %203 = vst [vmem:[%s191 + $0x28] sm:$0xff] %v202
                %v204 = vld [vmem:[%s190 + $0x50] sm:$0xff]
                %205 = vst [vmem:[%s191 + $0x30] sm:$0xff] %v204
                %v206 = vld [vmem:[%s190 + $0x58] sm:$0xff]
                %207 = vst [vmem:[%s191 + $0x38] sm:$0xff] %v206
                %v208 = vld [vmem:[%s190 + $0x80] sm:$0xff]
                %209 = vst [vmem:[%s191 + $0x40] sm:$0xff] %v208
                %v210 = vld [vmem:[%s190 + $0x88] sm:$0xff]
                %211 = vst [vmem:[%s191 + $0x48] sm:$0xff] %v210
                %v212 = vld [vmem:[%s190 + $0x90] sm:$0xff]
                %213 = vst [vmem:[%s191 + $0x50] sm:$0xff] %v212
                %v214 = vld [vmem:[%s190 + $0x98] sm:$0xff]
                %215 = vst [vmem:[%s191 + $0x58] sm:$0xff] %v214
                %v216 = vld [vmem:[%s190 + $0xc0] sm:$0xff]
                %217 = vst [vmem:[%s191 + $0x60] sm:$0xff] %v216
                %v218 = vld [vmem:[%s190 + $0xc8] sm:$0xff]
                %219 = vst [vmem:[%s191 + $0x68] sm:$0xff] %v218
                %v220 = vld [vmem:[%s190 + $0xd0] sm:$0xff]
                %221 = vst [vmem:[%s191 + $0x70] sm:$0xff] %v220
                %v222 = vld [vmem:[%s190 + $0xd8] sm:$0xff]
                %223 = vst [vmem:[%s191 + $0x78] sm:$0xff] %v222
                %v224 = vld [vmem:[%s190 + $0x100] sm:$0xff]
                %225 = vst [vmem:[%s191 + $0x80] sm:$0xff] %v224
                %v226 = vld [vmem:[%s190 + $0x108] sm:$0xff]
                %227 = vst [vmem:[%s191 + $0x88] sm:$0xff] %v226
                %v228 = vld [vmem:[%s190 + $0x110] sm:$0xff]
                %229 = vst [vmem:[%s191 + $0x90] sm:$0xff] %v228
                %v230 = vld [vmem:[%s190 + $0x118] sm:$0xff]
                %231 = vst [vmem:[%s191 + $0x98] sm:$0xff] %v230
                %v232 = vld [vmem:[%s190 + $0x140] sm:$0xff]
                %233 = vst [vmem:[%s191 + $0xa0] sm:$0xff] %v232
                %v234 = vld [vmem:[%s190 + $0x148] sm:$0xff]
                %235 = vst [vmem:[%s191 + $0xa8] sm:$0xff] %v234
                %v236 = vld [vmem:[%s190 + $0x150] sm:$0xff]
                %237 = vst [vmem:[%s191 + $0xb0] sm:$0xff] %v236
                %v238 = vld [vmem:[%s190 + $0x158] sm:$0xff]
                %239 = vst [vmem:[%s191 + $0xb8] sm:$0xff] %v238
                %v240 = vld [vmem:[%s190 + $0x180] sm:$0xff]
                %241 = vst [vmem:[%s191 + $0xc0] sm:$0xff] %v240
                %v242 = vld [vmem:[%s190 + $0x188] sm:$0xff]
                %243 = vst [vmem:[%s191 + $0xc8] sm:$0xff] %v242
                %v244 = vld [vmem:[%s190 + $0x190] sm:$0xff]
                %245 = vst [vmem:[%s191 + $0xd0] sm:$0xff] %v244
                %v246 = vld [vmem:[%s190 + $0x198] sm:$0xff]
                %247 = vst [vmem:[%s191 + $0xd8] sm:$0xff] %v246
                %v248 = vld [vmem:[%s190 + $0x1c0] sm:$0xff]
                %249 = vst [vmem:[%s191 + $0xe0] sm:$0xff] %v248
                %v250 = vld [vmem:[%s190 + $0x1c8] sm:$0xff]
                %251 = vst [vmem:[%s191 + $0xe8] sm:$0xff] %v250
                %v252 = vld [vmem:[%s190 + $0x1d0] sm:$0xff]
                %253 = vst [vmem:[%s191 + $0xf0] sm:$0xff] %v252
                %v254 = vld [vmem:[%s190 + $0x1d8] sm:$0xff]
                %255 = vst [vmem:[%s191 + $0xf8] sm:$0xff] %v254
                %v256 = vld [vmem:[%s190 + $0x200] sm:$0xff]
                %257 = vst [vmem:[%s191 + $0x100] sm:$0xff] %v256
                %v258 = vld [vmem:[%s190 + $0x208] sm:$0xff]
                %259 = vst [vmem:[%s191 + $0x108] sm:$0xff] %v258
                %v260 = vld [vmem:[%s190 + $0x210] sm:$0xff]
                %261 = vst [vmem:[%s191 + $0x110] sm:$0xff] %v260
                %v262 = vld [vmem:[%s190 + $0x218] sm:$0xff]
                %263 = vst [vmem:[%s191 + $0x118] sm:$0xff] %v262
                %v264 = vld [vmem:[%s190 + $0x240] sm:$0xff]
                %265 = vst [vmem:[%s191 + $0x120] sm:$0xff] %v264
                %v266 = vld [vmem:[%s190 + $0x248] sm:$0xff]
                %267 = vst [vmem:[%s191 + $0x128] sm:$0xff] %v266
                %v268 = vld [vmem:[%s190 + $0x250] sm:$0xff]
                %269 = vst [vmem:[%s191 + $0x130] sm:$0xff] %v268
                %v270 = vld [vmem:[%s190 + $0x258] sm:$0xff]
                %271 = vst [vmem:[%s191 + $0x138] sm:$0xff] %v270
                %v272 = vld [vmem:[%s190 + $0x280] sm:$0xff]
                %273 = vst [vmem:[%s191 + $0x140] sm:$0xff] %v272
                %v274 = vld [vmem:[%s190 + $0x288] sm:$0xff]
                %275 = vst [vmem:[%s191 + $0x148] sm:$0xff] %v274
                %v276 = vld [vmem:[%s190 + $0x290] sm:$0xff]
                %277 = vst [vmem:[%s191 + $0x150] sm:$0xff] %v276
                %v278 = vld [vmem:[%s190 + $0x298] sm:$0xff]
                %279 = vst [vmem:[%s191 + $0x158] sm:$0xff] %v278
                %v280 = vld [vmem:[%s190 + $0x2c0] sm:$0xff]
                %281 = vst [vmem:[%s191 + $0x160] sm:$0xff] %v280
                %v282 = vld [vmem:[%s190 + $0x2c8] sm:$0xff]
                %283 = vst [vmem:[%s191 + $0x168] sm:$0xff] %v282
                %v284 = vld [vmem:[%s190 + $0x2d0] sm:$0xff]
                %285 = vst [vmem:[%s191 + $0x170] sm:$0xff] %v284
                %v286 = vld [vmem:[%s190 + $0x2d8] sm:$0xff]
                %287 = vst [vmem:[%s191 + $0x178] sm:$0xff] %v286
                %v288 = vld [vmem:[%s190 + $0x300] sm:$0xff]
                %289 = vst [vmem:[%s191 + $0x180] sm:$0xff] %v288
                %v290 = vld [vmem:[%s190 + $0x308] sm:$0xff]
                %291 = vst [vmem:[%s191 + $0x188] sm:$0xff] %v290
                %v292 = vld [vmem:[%s190 + $0x310] sm:$0xff]
                %293 = vst [vmem:[%s191 + $0x190] sm:$0xff] %v292
                %v294 = vld [vmem:[%s190 + $0x318] sm:$0xff]
                %295 = vst [vmem:[%s191 + $0x198] sm:$0xff] %v294
                %v296 = vld [vmem:[%s190 + $0x340] sm:$0xff]
                %297 = vst [vmem:[%s191 + $0x1a0] sm:$0xff] %v296
                %v298 = vld [vmem:[%s190 + $0x348] sm:$0xff]
                %299 = vst [vmem:[%s191 + $0x1a8] sm:$0xff] %v298
                %v300 = vld [vmem:[%s190 + $0x350] sm:$0xff]
                %301 = vst [vmem:[%s191 + $0x1b0] sm:$0xff] %v300
                %v302 = vld [vmem:[%s190 + $0x358] sm:$0xff]
                %303 = vst [vmem:[%s191 + $0x1b8] sm:$0xff] %v302
                %v304 = vld [vmem:[%s190 + $0x380] sm:$0xff]
                %305 = vst [vmem:[%s191 + $0x1c0] sm:$0xff] %v304
                %v306 = vld [vmem:[%s190 + $0x388] sm:$0xff]
                %307 = vst [vmem:[%s191 + $0x1c8] sm:$0xff] %v306
                %v308 = vld [vmem:[%s190 + $0x390] sm:$0xff]
                %309 = vst [vmem:[%s191 + $0x1d0] sm:$0xff] %v308
                %v310 = vld [vmem:[%s190 + $0x398] sm:$0xff]
                %311 = vst [vmem:[%s191 + $0x1d8] sm:$0xff] %v310
                %v312 = vld [vmem:[%s190 + $0x3c0] sm:$0xff]
                %313 = vst [vmem:[%s191 + $0x1e0] sm:$0xff] %v312
                %v314 = vld [vmem:[%s190 + $0x3c8] sm:$0xff]
                %315 = vst [vmem:[%s191 + $0x1e8] sm:$0xff] %v314
                %v316 = vld [vmem:[%s190 + $0x3d0] sm:$0xff]
                %317 = vst [vmem:[%s191 + $0x1f0] sm:$0xff] %v316
                %v318 = vld [vmem:[%s190 + $0x3d8] sm:$0xff]
                %319 = vst [vmem:[%s191 + $0x1f8] sm:$0xff] %v318
                %v320 = vld [vmem:[%s190 + $0x400] sm:$0xff]
                %321 = vst [vmem:[%s191 + $0x200] sm:$0xff] %v320
                %v322 = vld [vmem:[%s190 + $0x408] sm:$0xff]
                %323 = vst [vmem:[%s191 + $0x208] sm:$0xff] %v322
                %v324 = vld [vmem:[%s190 + $0x410] sm:$0xff]
                %325 = vst [vmem:[%s191 + $0x210] sm:$0xff] %v324
                %v326 = vld [vmem:[%s190 + $0x418] sm:$0xff]
                %327 = vst [vmem:[%s191 + $0x218] sm:$0xff] %v326
                %v328 = vld [vmem:[%s190 + $0x440] sm:$0xff]
                %329 = vst [vmem:[%s191 + $0x220] sm:$0xff] %v328
                %v330 = vld [vmem:[%s190 + $0x448] sm:$0xff]
                %331 = vst [vmem:[%s191 + $0x228] sm:$0xff] %v330
                %v332 = vld [vmem:[%s190 + $0x450] sm:$0xff]
                %333 = vst [vmem:[%s191 + $0x230] sm:$0xff] %v332
                %v334 = vld [vmem:[%s190 + $0x458] sm:$0xff]
                %335 = vst [vmem:[%s191 + $0x238] sm:$0xff] %v334
                %v336 = vld [vmem:[%s190 + $0x480] sm:$0xff]
                %337 = vst [vmem:[%s191 + $0x240] sm:$0xff] %v336
                %v338 = vld [vmem:[%s190 + $0x488] sm:$0xff]
                %339 = vst [vmem:[%s191 + $0x248] sm:$0xff] %v338
                %v340 = vld [vmem:[%s190 + $0x490] sm:$0xff]
                %341 = vst [vmem:[%s191 + $0x250] sm:$0xff] %v340
                %v342 = vld [vmem:[%s190 + $0x498] sm:$0xff]
                %343 = vst [vmem:[%s191 + $0x258] sm:$0xff] %v342
                %v344 = vld [vmem:[%s190 + $0x4c0] sm:$0xff]
                %345 = vst [vmem:[%s191 + $0x260] sm:$0xff] %v344
                %v346 = vld [vmem:[%s190 + $0x4c8] sm:$0xff]
                %347 = vst [vmem:[%s191 + $0x268] sm:$0xff] %v346
                %v348 = vld [vmem:[%s190 + $0x4d0] sm:$0xff]
                %349 = vst [vmem:[%s191 + $0x270] sm:$0xff] %v348
                %v350 = vld [vmem:[%s190 + $0x4d8] sm:$0xff]
                %351 = vst [vmem:[%s191 + $0x278] sm:$0xff] %v350
                %v352 = vld [vmem:[%s190 + $0x500] sm:$0xff]
                %353 = vst [vmem:[%s191 + $0x280] sm:$0xff] %v352
                %v354 = vld [vmem:[%s190 + $0x508] sm:$0xff]
                %355 = vst [vmem:[%s191 + $0x288] sm:$0xff] %v354
                %v356 = vld [vmem:[%s190 + $0x510] sm:$0xff]
                %357 = vst [vmem:[%s191 + $0x290] sm:$0xff] %v356
                %v358 = vld [vmem:[%s190 + $0x518] sm:$0xff]
                %359 = vst [vmem:[%s191 + $0x298] sm:$0xff] %v358
                %v360 = vld [vmem:[%s190 + $0x540] sm:$0xff]
                %361 = vst [vmem:[%s191 + $0x2a0] sm:$0xff] %v360
                %v362 = vld [vmem:[%s190 + $0x548] sm:$0xff]
                %363 = vst [vmem:[%s191 + $0x2a8] sm:$0xff] %v362
                %v364 = vld [vmem:[%s190 + $0x550] sm:$0xff]
                %365 = vst [vmem:[%s191 + $0x2b0] sm:$0xff] %v364
                %v366 = vld [vmem:[%s190 + $0x558] sm:$0xff]
                %367 = vst [vmem:[%s191 + $0x2b8] sm:$0xff] %v366
                %v368 = vld [vmem:[%s190 + $0x580] sm:$0xff]
                %369 = vst [vmem:[%s191 + $0x2c0] sm:$0xff] %v368
                %v370 = vld [vmem:[%s190 + $0x588] sm:$0xff]
                %371 = vst [vmem:[%s191 + $0x2c8] sm:$0xff] %v370
                %v372 = vld [vmem:[%s190 + $0x590] sm:$0xff]
                %373 = vst [vmem:[%s191 + $0x2d0] sm:$0xff] %v372
                %v374 = vld [vmem:[%s190 + $0x598] sm:$0xff]
                %375 = vst [vmem:[%s191 + $0x2d8] sm:$0xff] %v374
                %v376 = vld [vmem:[%s190 + $0x5c0] sm:$0xff]
                %377 = vst [vmem:[%s191 + $0x2e0] sm:$0xff] %v376
                %v378 = vld [vmem:[%s190 + $0x5c8] sm:$0xff]
                %379 = vst [vmem:[%s191 + $0x2e8] sm:$0xff] %v378
                %v380 = vld [vmem:[%s190 + $0x5d0] sm:$0xff]
                %381 = vst [vmem:[%s191 + $0x2f0] sm:$0xff] %v380
                %v382 = vld [vmem:[%s190 + $0x5d8] sm:$0xff]
                %383 = vst [vmem:[%s191 + $0x2f8] sm:$0xff] %v382
                %v384 = vld [vmem:[%s190 + $0x600] sm:$0xff]
                %385 = vst [vmem:[%s191 + $0x300] sm:$0xff] %v384
                %v386 = vld [vmem:[%s190 + $0x608] sm:$0xff]
                %387 = vst [vmem:[%s191 + $0x308] sm:$0xff] %v386
                %v388 = vld [vmem:[%s190 + $0x610] sm:$0xff]
                %389 = vst [vmem:[%s191 + $0x310] sm:$0xff] %v388
                %v390 = vld [vmem:[%s190 + $0x618] sm:$0xff]
                %391 = vst [vmem:[%s191 + $0x318] sm:$0xff] %v390
                %v392 = vld [vmem:[%s190 + $0x640] sm:$0xff]
                %393 = vst [vmem:[%s191 + $0x320] sm:$0xff] %v392
                %v394 = vld [vmem:[%s190 + $0x648] sm:$0xff]
                %395 = vst [vmem:[%s191 + $0x328] sm:$0xff] %v394
                %v396 = vld [vmem:[%s190 + $0x650] sm:$0xff]
                %397 = vst [vmem:[%s191 + $0x330] sm:$0xff] %v396
                %v398 = vld [vmem:[%s190 + $0x658] sm:$0xff]
                %399 = vst [vmem:[%s191 + $0x338] sm:$0xff] %v398
                %v400 = vld [vmem:[%s190 + $0x680] sm:$0xff]
                %401 = vst [vmem:[%s191 + $0x340] sm:$0xff] %v400
                %v402 = vld [vmem:[%s190 + $0x688] sm:$0xff]
                %403 = vst [vmem:[%s191 + $0x348] sm:$0xff] %v402
                %v404 = vld [vmem:[%s190 + $0x690] sm:$0xff]
                %405 = vst [vmem:[%s191 + $0x350] sm:$0xff] %v404
                %v406 = vld [vmem:[%s190 + $0x698] sm:$0xff]
                %407 = vst [vmem:[%s191 + $0x358] sm:$0xff] %v406
                %v408 = vld [vmem:[%s190 + $0x6c0] sm:$0xff]
                %409 = vst [vmem:[%s191 + $0x360] sm:$0xff] %v408
                %v410 = vld [vmem:[%s190 + $0x6c8] sm:$0xff]
                %411 = vst [vmem:[%s191 + $0x368] sm:$0xff] %v410
                %v412 = vld [vmem:[%s190 + $0x6d0] sm:$0xff]
                %413 = vst [vmem:[%s191 + $0x370] sm:$0xff] %v412
                %v414 = vld [vmem:[%s190 + $0x6d8] sm:$0xff]
                %415 = vst [vmem:[%s191 + $0x378] sm:$0xff] %v414
                %v416 = vld [vmem:[%s190 + $0x700] sm:$0xff]
                %417 = vst [vmem:[%s191 + $0x380] sm:$0xff] %v416
                %v418 = vld [vmem:[%s190 + $0x708] sm:$0xff]
                %419 = vst [vmem:[%s191 + $0x388] sm:$0xff] %v418
                %v420 = vld [vmem:[%s190 + $0x710] sm:$0xff]
                %421 = vst [vmem:[%s191 + $0x390] sm:$0xff] %v420
                %v422 = vld [vmem:[%s190 + $0x718] sm:$0xff]
                %423 = vst [vmem:[%s191 + $0x398] sm:$0xff] %v422
                %v424 = vld [vmem:[%s190 + $0x740] sm:$0xff]
                %425 = vst [vmem:[%s191 + $0x3a0] sm:$0xff] %v424
                %v426 = vld [vmem:[%s190 + $0x748] sm:$0xff]
                %427 = vst [vmem:[%s191 + $0x3a8] sm:$0xff] %v426
                %v428 = vld [vmem:[%s190 + $0x750] sm:$0xff]
                %429 = vst [vmem:[%s191 + $0x3b0] sm:$0xff] %v428
                %v430 = vld [vmem:[%s190 + $0x758] sm:$0xff]
                %431 = vst [vmem:[%s191 + $0x3b8] sm:$0xff] %v430
                %v432 = vld [vmem:[%s190 + $0x780] sm:$0xff]
                %433 = vst [vmem:[%s191 + $0x3c0] sm:$0xff] %v432
                %v434 = vld [vmem:[%s190 + $0x788] sm:$0xff]
                %435 = vst [vmem:[%s191 + $0x3c8] sm:$0xff] %v434
                %v436 = vld [vmem:[%s190 + $0x790] sm:$0xff]
                %437 = vst [vmem:[%s191 + $0x3d0] sm:$0xff] %v436
                %v438 = vld [vmem:[%s190 + $0x798] sm:$0xff]
                %439 = vst [vmem:[%s191 + $0x3d8] sm:$0xff] %v438
                %v440 = vld [vmem:[%s190 + $0x7c0] sm:$0xff]
                %441 = vst [vmem:[%s191 + $0x3e0] sm:$0xff] %v440
                %v442 = vld [vmem:[%s190 + $0x7c8] sm:$0xff]
                %443 = vst [vmem:[%s191 + $0x3e8] sm:$0xff] %v442
                %v444 = vld [vmem:[%s190 + $0x7d0] sm:$0xff]
                %445 = vst [vmem:[%s191 + $0x3f0] sm:$0xff] %v444
                %v446 = vld [vmem:[%s190 + $0x7d8] sm:$0xff]
                %447 = vst [vmem:[%s191 + $0x3f8] sm:$0xff] %v446
                %v448 = vld [vmem:[%s190 + $0x800] sm:$0xff]
                %449 = vst [vmem:[%s191 + $0x400] sm:$0xff] %v448
                %v450 = vld [vmem:[%s190 + $0x808] sm:$0xff]
                %451 = vst [vmem:[%s191 + $0x408] sm:$0xff] %v450
                %v452 = vld [vmem:[%s190 + $0x810] sm:$0xff]
                %453 = vst [vmem:[%s191 + $0x410] sm:$0xff] %v452
                %v454 = vld [vmem:[%s190 + $0x818] sm:$0xff]
                %455 = vst [vmem:[%s191 + $0x418] sm:$0xff] %v454
                %v456 = vld [vmem:[%s190 + $0x840] sm:$0xff]
                %457 = vst [vmem:[%s191 + $0x420] sm:$0xff] %v456
                %v458 = vld [vmem:[%s190 + $0x848] sm:$0xff]
                %459 = vst [vmem:[%s191 + $0x428] sm:$0xff] %v458
                %v460 = vld [vmem:[%s190 + $0x850] sm:$0xff]
                %461 = vst [vmem:[%s191 + $0x430] sm:$0xff] %v460
                %v462 = vld [vmem:[%s190 + $0x858] sm:$0xff]
                %463 = vst [vmem:[%s191 + $0x438] sm:$0xff] %v462
                %v464 = vld [vmem:[%s190 + $0x880] sm:$0xff]
                %465 = vst [vmem:[%s191 + $0x440] sm:$0xff] %v464
                %v466 = vld [vmem:[%s190 + $0x888] sm:$0xff]
                %467 = vst [vmem:[%s191 + $0x448] sm:$0xff] %v466
                %v468 = vld [vmem:[%s190 + $0x890] sm:$0xff]
                %469 = vst [vmem:[%s191 + $0x450] sm:$0xff] %v468
                %v470 = vld [vmem:[%s190 + $0x898] sm:$0xff]
                %471 = vst [vmem:[%s191 + $0x458] sm:$0xff] %v470
                %v472 = vld [vmem:[%s190 + $0x8c0] sm:$0xff]
                %473 = vst [vmem:[%s191 + $0x460] sm:$0xff] %v472
                %v474 = vld [vmem:[%s190 + $0x8c8] sm:$0xff]
                %475 = vst [vmem:[%s191 + $0x468] sm:$0xff] %v474
                %v476 = vld [vmem:[%s190 + $0x8d0] sm:$0xff]
                %477 = vst [vmem:[%s191 + $0x470] sm:$0xff] %v476
                %v478 = vld [vmem:[%s190 + $0x8d8] sm:$0xff]
                %479 = vst [vmem:[%s191 + $0x478] sm:$0xff] %v478
                %v480 = vld [vmem:[%s190 + $0x900] sm:$0xff]
                %481 = vst [vmem:[%s191 + $0x480] sm:$0xff] %v480
                %v482 = vld [vmem:[%s190 + $0x908] sm:$0xff]
                %483 = vst [vmem:[%s191 + $0x488] sm:$0xff] %v482
                %v484 = vld [vmem:[%s190 + $0x910] sm:$0xff]
                %485 = vst [vmem:[%s191 + $0x490] sm:$0xff] %v484
                %v486 = vld [vmem:[%s190 + $0x918] sm:$0xff]
                %487 = vst [vmem:[%s191 + $0x498] sm:$0xff] %v486
                %v488 = vld [vmem:[%s190 + $0x940] sm:$0xff]
                %489 = vst [vmem:[%s191 + $0x4a0] sm:$0xff] %v488
                %v490 = vld [vmem:[%s190 + $0x948] sm:$0xff]
                %491 = vst [vmem:[%s191 + $0x4a8] sm:$0xff] %v490
                %v492 = vld [vmem:[%s190 + $0x950] sm:$0xff]
                %493 = vst [vmem:[%s191 + $0x4b0] sm:$0xff] %v492
                %v494 = vld [vmem:[%s190 + $0x958] sm:$0xff]
                %495 = vst [vmem:[%s191 + $0x4b8] sm:$0xff] %v494
                %v496 = vld [vmem:[%s190 + $0x980] sm:$0xff]
                %497 = vst [vmem:[%s191 + $0x4c0] sm:$0xff] %v496
                %v498 = vld [vmem:[%s190 + $0x988] sm:$0xff]
                %499 = vst [vmem:[%s191 + $0x4c8] sm:$0xff] %v498
                %v500 = vld [vmem:[%s190 + $0x990] sm:$0xff]
                %501 = vst [vmem:[%s191 + $0x4d0] sm:$0xff] %v500
                %v502 = vld [vmem:[%s190 + $0x998] sm:$0xff]
                %503 = vst [vmem:[%s191 + $0x4d8] sm:$0xff] %v502
                %v504 = vld [vmem:[%s190 + $0x9c0] sm:$0xff]
                %505 = vst [vmem:[%s191 + $0x4e0] sm:$0xff] %v504
                %v506 = vld [vmem:[%s190 + $0x9c8] sm:$0xff]
                %507 = vst [vmem:[%s191 + $0x4e8] sm:$0xff] %v506
                %v508 = vld [vmem:[%s190 + $0x9d0] sm:$0xff]
                %509 = vst [vmem:[%s191 + $0x4f0] sm:$0xff] %v508
                %v510 = vld [vmem:[%s190 + $0x9d8] sm:$0xff]
                %511 = vst [vmem:[%s191 + $0x4f8] sm:$0xff] %v510
                %v512 = vld [vmem:[%s190 + $0xa00] sm:$0xff]
                %513 = vst [vmem:[%s191 + $0x500] sm:$0xff] %v512
                %v514 = vld [vmem:[%s190 + $0xa08] sm:$0xff]
                %515 = vst [vmem:[%s191 + $0x508] sm:$0xff] %v514
                %v516 = vld [vmem:[%s190 + $0xa10] sm:$0xff]
                %517 = vst [vmem:[%s191 + $0x510] sm:$0xff] %v516
                %v518 = vld [vmem:[%s190 + $0xa18] sm:$0xff]
                %519 = vst [vmem:[%s191 + $0x518] sm:$0xff] %v518
                %v520 = vld [vmem:[%s190 + $0xa40] sm:$0xff]
                %521 = vst [vmem:[%s191 + $0x520] sm:$0xff] %v520
                %v522 = vld [vmem:[%s190 + $0xa48] sm:$0xff]
                %523 = vst [vmem:[%s191 + $0x528] sm:$0xff] %v522
                %v524 = vld [vmem:[%s190 + $0xa50] sm:$0xff]
                %525 = vst [vmem:[%s191 + $0x530] sm:$0xff] %v524
                %v526 = vld [vmem:[%s190 + $0xa58] sm:$0xff]
                %527 = vst [vmem:[%s191 + $0x538] sm:$0xff] %v526
                %v528 = vld [vmem:[%s190 + $0xa80] sm:$0xff]
                %529 = vst [vmem:[%s191 + $0x540] sm:$0xff] %v528
                %v530 = vld [vmem:[%s190 + $0xa88] sm:$0xff]
                %531 = vst [vmem:[%s191 + $0x548] sm:$0xff] %v530
                %v532 = vld [vmem:[%s190 + $0xa90] sm:$0xff]
                %533 = vst [vmem:[%s191 + $0x550] sm:$0xff] %v532
                %v534 = vld [vmem:[%s190 + $0xa98] sm:$0xff]
                %535 = vst [vmem:[%s191 + $0x558] sm:$0xff] %v534
                %v536 = vld [vmem:[%s190 + $0xac0] sm:$0xff]
                %537 = vst [vmem:[%s191 + $0x560] sm:$0xff] %v536
                %v538 = vld [vmem:[%s190 + $0xac8] sm:$0xff]
                %539 = vst [vmem:[%s191 + $0x568] sm:$0xff] %v538
                %v540 = vld [vmem:[%s190 + $0xad0] sm:$0xff]
                %541 = vst [vmem:[%s191 + $0x570] sm:$0xff] %v540
                %v542 = vld [vmem:[%s190 + $0xad8] sm:$0xff]
                %543 = vst [vmem:[%s191 + $0x578] sm:$0xff] %v542
                %v544 = vld [vmem:[%s190 + $0xb00] sm:$0xff]
                %545 = vst [vmem:[%s191 + $0x580] sm:$0xff] %v544
                %v546 = vld [vmem:[%s190 + $0xb08] sm:$0xff]
                %547 = vst [vmem:[%s191 + $0x588] sm:$0xff] %v546
                %v548 = vld [vmem:[%s190 + $0xb10] sm:$0xff]
                %549 = vst [vmem:[%s191 + $0x590] sm:$0xff] %v548
                %v550 = vld [vmem:[%s190 + $0xb18] sm:$0xff]
                %551 = vst [vmem:[%s191 + $0x598] sm:$0xff] %v550
                %v552 = vld [vmem:[%s190 + $0xb40] sm:$0xff]
                %553 = vst [vmem:[%s191 + $0x5a0] sm:$0xff] %v552
                %v554 = vld [vmem:[%s190 + $0xb48] sm:$0xff]
                %555 = vst [vmem:[%s191 + $0x5a8] sm:$0xff] %v554
                %v556 = vld [vmem:[%s190 + $0xb50] sm:$0xff]
                %557 = vst [vmem:[%s191 + $0x5b0] sm:$0xff] %v556
                %v558 = vld [vmem:[%s190 + $0xb58] sm:$0xff]
                %559 = vst [vmem:[%s191 + $0x5b8] sm:$0xff] %v558
                %v560 = vld [vmem:[%s190 + $0xb80] sm:$0xff]
                %561 = vst [vmem:[%s191 + $0x5c0] sm:$0xff] %v560
                %v562 = vld [vmem:[%s190 + $0xb88] sm:$0xff]
                %563 = vst [vmem:[%s191 + $0x5c8] sm:$0xff] %v562
                %v564 = vld [vmem:[%s190 + $0xb90] sm:$0xff]
                %565 = vst [vmem:[%s191 + $0x5d0] sm:$0xff] %v564
                %v566 = vld [vmem:[%s190 + $0xb98] sm:$0xff]
                %567 = vst [vmem:[%s191 + $0x5d8] sm:$0xff] %v566
                %v568 = vld [vmem:[%s190 + $0xbc0] sm:$0xff]
                %569 = vst [vmem:[%s191 + $0x5e0] sm:$0xff] %v568
                %v570 = vld [vmem:[%s190 + $0xbc8] sm:$0xff]
                %571 = vst [vmem:[%s191 + $0x5e8] sm:$0xff] %v570
                %v572 = vld [vmem:[%s190 + $0xbd0] sm:$0xff]
                %573 = vst [vmem:[%s191 + $0x5f0] sm:$0xff] %v572
                %v574 = vld [vmem:[%s190 + $0xbd8] sm:$0xff]
                %575 = vst [vmem:[%s191 + $0x5f8] sm:$0xff] %v574
                %v576 = vld [vmem:[%s190 + $0xc00] sm:$0xff]
                %577 = vst [vmem:[%s191 + $0x600] sm:$0xff] %v576
                %v578 = vld [vmem:[%s190 + $0xc08] sm:$0xff]
                %579 = vst [vmem:[%s191 + $0x608] sm:$0xff] %v578
                %v580 = vld [vmem:[%s190 + $0xc10] sm:$0xff]
                %581 = vst [vmem:[%s191 + $0x610] sm:$0xff] %v580
                %v582 = vld [vmem:[%s190 + $0xc18] sm:$0xff]
                %583 = vst [vmem:[%s191 + $0x618] sm:$0xff] %v582
                %v584 = vld [vmem:[%s190 + $0xc40] sm:$0xff]
                %585 = vst [vmem:[%s191 + $0x620] sm:$0xff] %v584
                %v586 = vld [vmem:[%s190 + $0xc48] sm:$0xff]
                %587 = vst [vmem:[%s191 + $0x628] sm:$0xff] %v586
                %v588 = vld [vmem:[%s190 + $0xc50] sm:$0xff]
                %589 = vst [vmem:[%s191 + $0x630] sm:$0xff] %v588
                %v590 = vld [vmem:[%s190 + $0xc58] sm:$0xff]
                %591 = vst [vmem:[%s191 + $0x638] sm:$0xff] %v590
                %v592 = vld [vmem:[%s190 + $0xc80] sm:$0xff]
                %593 = vst [vmem:[%s191 + $0x640] sm:$0xff] %v592
                %v594 = vld [vmem:[%s190 + $0xc88] sm:$0xff]
                %595 = vst [vmem:[%s191 + $0x648] sm:$0xff] %v594
                %v596 = vld [vmem:[%s190 + $0xc90] sm:$0xff]
                %597 = vst [vmem:[%s191 + $0x650] sm:$0xff] %v596
                %v598 = vld [vmem:[%s190 + $0xc98] sm:$0xff]
                %599 = vst [vmem:[%s191 + $0x658] sm:$0xff] %v598
                %v600 = vld [vmem:[%s190 + $0xcc0] sm:$0xff]
                %601 = vst [vmem:[%s191 + $0x660] sm:$0xff] %v600
                %v602 = vld [vmem:[%s190 + $0xcc8] sm:$0xff]
                %603 = vst [vmem:[%s191 + $0x668] sm:$0xff] %v602
                %v604 = vld [vmem:[%s190 + $0xcd0] sm:$0xff]
                %605 = vst [vmem:[%s191 + $0x670] sm:$0xff] %v604
                %v606 = vld [vmem:[%s190 + $0xcd8] sm:$0xff]
                %607 = vst [vmem:[%s191 + $0x678] sm:$0xff] %v606
                %v608 = vld [vmem:[%s190 + $0xd00] sm:$0xff]
                %609 = vst [vmem:[%s191 + $0x680] sm:$0xff] %v608
                %v610 = vld [vmem:[%s190 + $0xd08] sm:$0xff]
                %611 = vst [vmem:[%s191 + $0x688] sm:$0xff] %v610
                %v612 = vld [vmem:[%s190 + $0xd10] sm:$0xff]
                %613 = vst [vmem:[%s191 + $0x690] sm:$0xff] %v612
                %v614 = vld [vmem:[%s190 + $0xd18] sm:$0xff]
                %615 = vst [vmem:[%s191 + $0x698] sm:$0xff] %v614
                %v616 = vld [vmem:[%s190 + $0xd40] sm:$0xff]
                %617 = vst [vmem:[%s191 + $0x6a0] sm:$0xff] %v616
                %v618 = vld [vmem:[%s190 + $0xd48] sm:$0xff]
                %619 = vst [vmem:[%s191 + $0x6a8] sm:$0xff] %v618
                %v620 = vld [vmem:[%s190 + $0xd50] sm:$0xff]
                %621 = vst [vmem:[%s191 + $0x6b0] sm:$0xff] %v620
                %v622 = vld [vmem:[%s190 + $0xd58] sm:$0xff]
                %623 = vst [vmem:[%s191 + $0x6b8] sm:$0xff] %v622
                %v624 = vld [vmem:[%s190 + $0xd80] sm:$0xff]
                %625 = vst [vmem:[%s191 + $0x6c0] sm:$0xff] %v624
                %v626 = vld [vmem:[%s190 + $0xd88] sm:$0xff]
                %627 = vst [vmem:[%s191 + $0x6c8] sm:$0xff] %v626
                %v628 = vld [vmem:[%s190 + $0xd90] sm:$0xff]
                %629 = vst [vmem:[%s191 + $0x6d0] sm:$0xff] %v628
                %v630 = vld [vmem:[%s190 + $0xd98] sm:$0xff]
                %631 = vst [vmem:[%s191 + $0x6d8] sm:$0xff] %v630
                %v632 = vld [vmem:[%s190 + $0xdc0] sm:$0xff]
                %633 = vst [vmem:[%s191 + $0x6e0] sm:$0xff] %v632
                %v634 = vld [vmem:[%s190 + $0xdc8] sm:$0xff]
                %635 = vst [vmem:[%s191 + $0x6e8] sm:$0xff] %v634
                %v636 = vld [vmem:[%s190 + $0xdd0] sm:$0xff]
                %637 = vst [vmem:[%s191 + $0x6f0] sm:$0xff] %v636
                %v638 = vld [vmem:[%s190 + $0xdd8] sm:$0xff]
                %639 = vst [vmem:[%s191 + $0x6f8] sm:$0xff] %v638
                %v640 = vld [vmem:[%s190 + $0xe00] sm:$0xff]
                %641 = vst [vmem:[%s191 + $0x700] sm:$0xff] %v640
                %v642 = vld [vmem:[%s190 + $0xe08] sm:$0xff]
                %643 = vst [vmem:[%s191 + $0x708] sm:$0xff] %v642
                %v644 = vld [vmem:[%s190 + $0xe10] sm:$0xff]
                %645 = vst [vmem:[%s191 + $0x710] sm:$0xff] %v644
                %v646 = vld [vmem:[%s190 + $0xe18] sm:$0xff]
                %647 = vst [vmem:[%s191 + $0x718] sm:$0xff] %v646
                %v648 = vld [vmem:[%s190 + $0xe40] sm:$0xff]
                %649 = vst [vmem:[%s191 + $0x720] sm:$0xff] %v648
                %v650 = vld [vmem:[%s190 + $0xe48] sm:$0xff]
                %651 = vst [vmem:[%s191 + $0x728] sm:$0xff] %v650
                %v652 = vld [vmem:[%s190 + $0xe50] sm:$0xff]
                %653 = vst [vmem:[%s191 + $0x730] sm:$0xff] %v652
                %v654 = vld [vmem:[%s190 + $0xe58] sm:$0xff]
                %655 = vst [vmem:[%s191 + $0x738] sm:$0xff] %v654
                %v656 = vld [vmem:[%s190 + $0xe80] sm:$0xff]
                %657 = vst [vmem:[%s191 + $0x740] sm:$0xff] %v656
                %v658 = vld [vmem:[%s190 + $0xe88] sm:$0xff]
                %659 = vst [vmem:[%s191 + $0x748] sm:$0xff] %v658
                %v660 = vld [vmem:[%s190 + $0xe90] sm:$0xff]
                %661 = vst [vmem:[%s191 + $0x750] sm:$0xff] %v660
                %v662 = vld [vmem:[%s190 + $0xe98] sm:$0xff]
                %663 = vst [vmem:[%s191 + $0x758] sm:$0xff] %v662
                %v664 = vld [vmem:[%s190 + $0xec0] sm:$0xff]
                %665 = vst [vmem:[%s191 + $0x760] sm:$0xff] %v664
                %v666 = vld [vmem:[%s190 + $0xec8] sm:$0xff]
                %667 = vst [vmem:[%s191 + $0x768] sm:$0xff] %v666
                %v668 = vld [vmem:[%s190 + $0xed0] sm:$0xff]
                %669 = vst [vmem:[%s191 + $0x770] sm:$0xff] %v668
                %v670 = vld [vmem:[%s190 + $0xed8] sm:$0xff]
                %671 = vst [vmem:[%s191 + $0x778] sm:$0xff] %v670
                %v672 = vld [vmem:[%s190 + $0xf00] sm:$0xff]
                %673 = vst [vmem:[%s191 + $0x780] sm:$0xff] %v672
                %v674 = vld [vmem:[%s190 + $0xf08] sm:$0xff]
                %675 = vst [vmem:[%s191 + $0x788] sm:$0xff] %v674
                %v676 = vld [vmem:[%s190 + $0xf10] sm:$0xff]
                %677 = vst [vmem:[%s191 + $0x790] sm:$0xff] %v676
                %v678 = vld [vmem:[%s190 + $0xf18] sm:$0xff]
                %679 = vst [vmem:[%s191 + $0x798] sm:$0xff] %v678
                %v680 = vld [vmem:[%s190 + $0xf40] sm:$0xff]
                %681 = vst [vmem:[%s191 + $0x7a0] sm:$0xff] %v680
                %v682 = vld [vmem:[%s190 + $0xf48] sm:$0xff]
                %683 = vst [vmem:[%s191 + $0x7a8] sm:$0xff] %v682
                %v684 = vld [vmem:[%s190 + $0xf50] sm:$0xff]
                %685 = vst [vmem:[%s191 + $0x7b0] sm:$0xff] %v684
                %v686 = vld [vmem:[%s190 + $0xf58] sm:$0xff]
                %687 = vst [vmem:[%s191 + $0x7b8] sm:$0xff] %v686
                %v688 = vld [vmem:[%s190 + $0xf80] sm:$0xff]
                %689 = vst [vmem:[%s191 + $0x7c0] sm:$0xff] %v688
                %v690 = vld [vmem:[%s190 + $0xf88] sm:$0xff]
                %691 = vst [vmem:[%s191 + $0x7c8] sm:$0xff] %v690
                %v692 = vld [vmem:[%s190 + $0xf90] sm:$0xff]
                %693 = vst [vmem:[%s191 + $0x7d0] sm:$0xff] %v692
                %v694 = vld [vmem:[%s190 + $0xf98] sm:$0xff]
                %695 = vst [vmem:[%s191 + $0x7d8] sm:$0xff] %v694
                %v696 = vld [vmem:[%s190 + $0xfc0] sm:$0xff]
                %697 = vst [vmem:[%s191 + $0x7e0] sm:$0xff] %v696
                %v698 = vld [vmem:[%s190 + $0xfc8] sm:$0xff]
                %699 = vst [vmem:[%s191 + $0x7e8] sm:$0xff] %v698
                %v700 = vld [vmem:[%s190 + $0xfd0] sm:$0xff]
                %701 = vst [vmem:[%s191 + $0x7f0] sm:$0xff] %v700
                %v702 = vld [vmem:[%s190 + $0xfd8] sm:$0xff]
                %703 = vst [vmem:[%s191 + $0x7f8] sm:$0xff] %v702
              $region45: #{gpn_valuator_forward.4} parent=39 // loop_footer
                %s189 = sadd.s32 1, %s185
              $region46: #{gpn_valuator_forward.4} parent=39 // loop_footer_branch
                %184 = sbr.rel target = $region42
              $region47: #{gpn_valuator_forward.4} parent=39 // loop_exit
                _
            $region40: #{gpn_valuator_forward.4} parent=35 // pred_fallthru
              _
            // Predicated region
            $region48: #{gpn_valuator_forward.4} parent=35 // pred_check
              _
            $region49: #{gpn_valuator_forward.4} parent=35 // pred_check_branch
              %705 = sbr.rel target = $region51
            $region50: #{gpn_valuator_forward.4} parent=35 // pred_region
              _
            $region51: #{gpn_valuator_forward.4} parent=35 // pred_fallthru
              _
          $region36: #{gpn_valuator_forward.4} parent=31 // pred_fallthru
            _
          %706 = vnop
        $region32: #{gpn_valuator_forward.4} parent=27 // pred_fallthru
          _
      $region28: #{gpn_valuator_forward.4} parent=5 // pred_fallthru
        _
      %p707 = scmp.le.s32.totalorder 1, %s10
      %p708 = scmp.lt.s32.totalorder %s10, 5
      %p709 = pnand %p707, %p708
      %p710 = pneg %p709
      // Predicated region
      $region52: #{gpn_valuator_forward.4} parent=5 // pred_check
        _
      $region53: #{gpn_valuator_forward.4} parent=5 // pred_check_branch
        %712 = sbr.rel (%p709) target = $region55
      $region54: #{gpn_valuator_forward.4} parent=5 // pred_region
        %s713 = ssub.s32 %s10, 1
        %s714 = sand.u32 %s37, 1
        %s715 = sand.u32 %s37, 1
        %s716 = smul.addr %s715, 2048
        %s717 = scalar_lea.vmem [#allocation3], %s716
        // Predicated region
        $region56: #{gpn_valuator_forward.4} parent=54 // pred_check
          %p718 = pneg %p50
        $region57: #{gpn_valuator_forward.4} parent=54 // pred_check_branch
          %720 = sbr.rel (%p718) target = $region59
        $region58: #{gpn_valuator_forward.4} parent=54 // pred_region
          _
        $region59: #{gpn_valuator_forward.4} parent=54 // pred_fallthru
          _
        %s721 = sand.u32 %s37, 1
        %s722 = sand.u32 %s37, 1
        %s723 = smul.addr %s722, 2048
        %s724 = scalar_lea.vmem [#allocation3], %s723
        %p725 = pneg %p50
        %p726 = pneg %p47
        %p727 = pneg %p71
        %p728 = pneg %p68
        %p729 = pneg %p92
        %p730 = pneg %p89
        %p731 = pneg %p113
        %p732 = pneg %p110
        %p733 = pneg %p139
        %p734 = pneg %p136
        %s735 = smul.u32 64, %s19
        %p736 = scmp.lt.s32.totalorder %s735, 127
        %s737 = scalar_select %p736, %s735, 127
        %s738 = smul.addr %s737, 8
        %s739 = scalar_lea.vmem %s4, %s738
        %s740 = smul.u32 64, %s19
        %s741 = smul.u32 4, %s20
        %s742 = smul.u32 64, %s19
        %p743 = scmp.lt.s32.totalorder %s742, 127
        %s744 = scalar_select %p743, %s742, 127
        %s745 = smul.addr %s744, 8
        %s746 = scalar_lea.vmem %s4, %s745
        %s747 = smul.u32 64, %s19
        %p748 = scmp.eq.s32.totalorder %s20, 0
        // Predicated region
        $region60: #{gpn_valuator_forward.4} parent=54 // pred_check
          %p749 = pneg %p748
        $region61: #{gpn_valuator_forward.4} parent=54 // pred_check_branch
          %751 = sbr.rel (%p749) target = $region63
        $region62: #{gpn_valuator_forward.4} parent=54 // pred_region
          %752 = vst [vmem:[#allocation2] sm:$0xff] 0.0
          %753 = vst [vmem:[#allocation2 + $0x8] sm:$0xff] 0.0
          %754 = vst [vmem:[#allocation2 + $0x10] sm:$0xff] 0.0
          %755 = vst [vmem:[#allocation2 + $0x18] sm:$0xff] 0.0
          %756 = vst [vmem:[#allocation2 + $0x20] sm:$0xff] 0.0
          %757 = vst [vmem:[#allocation2 + $0x28] sm:$0xff] 0.0
          %758 = vst [vmem:[#allocation2 + $0x30] sm:$0xff] 0.0
          %759 = vst [vmem:[#allocation2 + $0x38] sm:$0xff] 0.0
          %760 = vst [vmem:[#allocation2 + $0x40] sm:$0xff] 0.0
          %761 = vst [vmem:[#allocation2 + $0x48] sm:$0xff] 0.0
          %762 = vst [vmem:[#allocation2 + $0x50] sm:$0xff] 0.0
          %763 = vst [vmem:[#allocation2 + $0x58] sm:$0xff] 0.0
          %764 = vst [vmem:[#allocation2 + $0x60] sm:$0xff] 0.0
          %765 = vst [vmem:[#allocation2 + $0x68] sm:$0xff] 0.0
          %766 = vst [vmem:[#allocation2 + $0x70] sm:$0xff] 0.0
          %767 = vst [vmem:[#allocation2 + $0x78] sm:$0xff] 0.0
          %768 = vst [vmem:[#allocation2 + $0x80] sm:$0xff] 0.0
          %769 = vst [vmem:[#allocation2 + $0x88] sm:$0xff] 0.0
          %770 = vst [vmem:[#allocation2 + $0x90] sm:$0xff] 0.0
          %771 = vst [vmem:[#allocation2 + $0x98] sm:$0xff] 0.0
          %772 = vst [vmem:[#allocation2 + $0xa0] sm:$0xff] 0.0
          %773 = vst [vmem:[#allocation2 + $0xa8] sm:$0xff] 0.0
          %774 = vst [vmem:[#allocation2 + $0xb0] sm:$0xff] 0.0
          %775 = vst [vmem:[#allocation2 + $0xb8] sm:$0xff] 0.0
          %776 = vst [vmem:[#allocation2 + $0xc0] sm:$0xff] 0.0
          %777 = vst [vmem:[#allocation2 + $0xc8] sm:$0xff] 0.0
          %778 = vst [vmem:[#allocation2 + $0xd0] sm:$0xff] 0.0
          %779 = vst [vmem:[#allocation2 + $0xd8] sm:$0xff] 0.0
          %780 = vst [vmem:[#allocation2 + $0xe0] sm:$0xff] 0.0
          %781 = vst [vmem:[#allocation2 + $0xe8] sm:$0xff] 0.0
          %782 = vst [vmem:[#allocation2 + $0xf0] sm:$0xff] 0.0
          %783 = vst [vmem:[#allocation2 + $0xf8] sm:$0xff] 0.0
          %784 = vst [vmem:[#allocation2 + $0x100] sm:$0xff] 0.0
          %785 = vst [vmem:[#allocation2 + $0x108] sm:$0xff] 0.0
          %786 = vst [vmem:[#allocation2 + $0x110] sm:$0xff] 0.0
          %787 = vst [vmem:[#allocation2 + $0x118] sm:$0xff] 0.0
          %788 = vst [vmem:[#allocation2 + $0x120] sm:$0xff] 0.0
          %789 = vst [vmem:[#allocation2 + $0x128] sm:$0xff] 0.0
          %790 = vst [vmem:[#allocation2 + $0x130] sm:$0xff] 0.0
          %791 = vst [vmem:[#allocation2 + $0x138] sm:$0xff] 0.0
          %792 = vst [vmem:[#allocation2 + $0x140] sm:$0xff] 0.0
          %793 = vst [vmem:[#allocation2 + $0x148] sm:$0xff] 0.0
          %794 = vst [vmem:[#allocation2 + $0x150] sm:$0xff] 0.0
          %795 = vst [vmem:[#allocation2 + $0x158] sm:$0xff] 0.0
          %796 = vst [vmem:[#allocation2 + $0x160] sm:$0xff] 0.0
          %797 = vst [vmem:[#allocation2 + $0x168] sm:$0xff] 0.0
          %798 = vst [vmem:[#allocation2 + $0x170] sm:$0xff] 0.0
          %799 = vst [vmem:[#allocation2 + $0x178] sm:$0xff] 0.0
          %800 = vst [vmem:[#allocation2 + $0x180] sm:$0xff] 0.0
          %801 = vst [vmem:[#allocation2 + $0x188] sm:$0xff] 0.0
          %802 = vst [vmem:[#allocation2 + $0x190] sm:$0xff] 0.0
          %803 = vst [vmem:[#allocation2 + $0x198] sm:$0xff] 0.0
          %804 = vst [vmem:[#allocation2 + $0x1a0] sm:$0xff] 0.0
          %805 = vst [vmem:[#allocation2 + $0x1a8] sm:$0xff] 0.0
          %806 = vst [vmem:[#allocation2 + $0x1b0] sm:$0xff] 0.0
          %807 = vst [vmem:[#allocation2 + $0x1b8] sm:$0xff] 0.0
          %808 = vst [vmem:[#allocation2 + $0x1c0] sm:$0xff] 0.0
          %809 = vst [vmem:[#allocation2 + $0x1c8] sm:$0xff] 0.0
          %810 = vst [vmem:[#allocation2 + $0x1d0] sm:$0xff] 0.0
          %811 = vst [vmem:[#allocation2 + $0x1d8] sm:$0xff] 0.0
          %812 = vst [vmem:[#allocation2 + $0x1e0] sm:$0xff] 0.0
          %813 = vst [vmem:[#allocation2 + $0x1e8] sm:$0xff] 0.0
          %814 = vst [vmem:[#allocation2 + $0x1f0] sm:$0xff] 0.0
          %815 = vst [vmem:[#allocation2 + $0x1f8] sm:$0xff] 0.0
        $region63: #{gpn_valuator_forward.4} parent=54 // pred_fallthru
          _
        %s816 = smul.u32 %s20, 512
        %s817 = scalar_lea.vmem %s1, %s816
        %v818 = vld [vmem:[%s817] sm:$0xff]
        %v819 = vld [vmem:[%s817 + $0x8] sm:$0xff]
        %v820 = vld [vmem:[%s817 + $0x10] sm:$0xff]
        %v821 = vld [vmem:[%s817 + $0x18] sm:$0xff]
        %v822 = vld [vmem:[%s817 + $0x20] sm:$0xff]
        %v823 = vld [vmem:[%s817 + $0x28] sm:$0xff]
        %v824 = vld [vmem:[%s817 + $0x30] sm:$0xff]
        %v825 = vld [vmem:[%s817 + $0x38] sm:$0xff]
        %v826 = vld [vmem:[%s817 + $0x40] sm:$0xff]
        %v827 = vld [vmem:[%s817 + $0x48] sm:$0xff]
        %v828 = vld [vmem:[%s817 + $0x50] sm:$0xff]
        %v829 = vld [vmem:[%s817 + $0x58] sm:$0xff]
        %v830 = vld [vmem:[%s817 + $0x60] sm:$0xff]
        %v831 = vld [vmem:[%s817 + $0x68] sm:$0xff]
        %v832 = vld [vmem:[%s817 + $0x70] sm:$0xff]
        %v833 = vld [vmem:[%s817 + $0x78] sm:$0xff]
        %v834 = vld [vmem:[%s817 + $0x80] sm:$0xff]
        %v835 = vld [vmem:[%s817 + $0x88] sm:$0xff]
        %v836 = vld [vmem:[%s817 + $0x90] sm:$0xff]
        %v837 = vld [vmem:[%s817 + $0x98] sm:$0xff]
        %v838 = vld [vmem:[%s817 + $0xa0] sm:$0xff]
        %v839 = vld [vmem:[%s817 + $0xa8] sm:$0xff]
        %v840 = vld [vmem:[%s817 + $0xb0] sm:$0xff]
        %v841 = vld [vmem:[%s817 + $0xb8] sm:$0xff]
        %v842 = vld [vmem:[%s817 + $0xc0] sm:$0xff]
        %v843 = vld [vmem:[%s817 + $0xc8] sm:$0xff]
        %v844 = vld [vmem:[%s817 + $0xd0] sm:$0xff]
        %v845 = vld [vmem:[%s817 + $0xd8] sm:$0xff]
        %v846 = vld [vmem:[%s817 + $0xe0] sm:$0xff]
        %v847 = vld [vmem:[%s817 + $0xe8] sm:$0xff]
        %v848 = vld [vmem:[%s817 + $0xf0] sm:$0xff]
        %v849 = vld [vmem:[%s817 + $0xf8] sm:$0xff]
        %v850 = vld [vmem:[%s817 + $0x100] sm:$0xff]
        %v851 = vld [vmem:[%s817 + $0x108] sm:$0xff]
        %v852 = vld [vmem:[%s817 + $0x110] sm:$0xff]
        %v853 = vld [vmem:[%s817 + $0x118] sm:$0xff]
        %v854 = vld [vmem:[%s817 + $0x120] sm:$0xff]
        %v855 = vld [vmem:[%s817 + $0x128] sm:$0xff]
        %v856 = vld [vmem:[%s817 + $0x130] sm:$0xff]
        %v857 = vld [vmem:[%s817 + $0x138] sm:$0xff]
        %v858 = vld [vmem:[%s817 + $0x140] sm:$0xff]
        %v859 = vld [vmem:[%s817 + $0x148] sm:$0xff]
        %v860 = vld [vmem:[%s817 + $0x150] sm:$0xff]
        %v861 = vld [vmem:[%s817 + $0x158] sm:$0xff]
        %v862 = vld [vmem:[%s817 + $0x160] sm:$0xff]
        %v863 = vld [vmem:[%s817 + $0x168] sm:$0xff]
        %v864 = vld [vmem:[%s817 + $0x170] sm:$0xff]
        %v865 = vld [vmem:[%s817 + $0x178] sm:$0xff]
        %v866 = vld [vmem:[%s817 + $0x180] sm:$0xff]
        %v867 = vld [vmem:[%s817 + $0x188] sm:$0xff]
        %v868 = vld [vmem:[%s817 + $0x190] sm:$0xff]
        %v869 = vld [vmem:[%s817 + $0x198] sm:$0xff]
        %v870 = vld [vmem:[%s817 + $0x1a0] sm:$0xff]
        %v871 = vld [vmem:[%s817 + $0x1a8] sm:$0xff]
        %v872 = vld [vmem:[%s817 + $0x1b0] sm:$0xff]
        %v873 = vld [vmem:[%s817 + $0x1b8] sm:$0xff]
        %v874 = vld [vmem:[%s817 + $0x1c0] sm:$0xff]
        %v875 = vld [vmem:[%s817 + $0x1c8] sm:$0xff]
        %v876 = vld [vmem:[%s817 + $0x1d0] sm:$0xff]
        %v877 = vld [vmem:[%s817 + $0x1d8] sm:$0xff]
        %v878 = vld [vmem:[%s817 + $0x1e0] sm:$0xff]
        %v879 = vld [vmem:[%s817 + $0x1e8] sm:$0xff]
        %v880 = vld [vmem:[%s817 + $0x1f0] sm:$0xff]
        %v881 = vld [vmem:[%s817 + $0x1f8] sm:$0xff]
        %v882 = vld [vmem:[#allocation2] sm:$0xff]
        %v883 = vld [vmem:[#allocation2 + $0x8] sm:$0xff]
        %v884 = vld [vmem:[#allocation2 + $0x10] sm:$0xff]
        %v885 = vld [vmem:[#allocation2 + $0x18] sm:$0xff]
        %v886 = vld [vmem:[#allocation2 + $0x20] sm:$0xff]
        %v887 = vld [vmem:[#allocation2 + $0x28] sm:$0xff]
        %v888 = vld [vmem:[#allocation2 + $0x30] sm:$0xff]
        %v889 = vld [vmem:[#allocation2 + $0x38] sm:$0xff]
        %v890 = vld [vmem:[#allocation2 + $0x40] sm:$0xff]
        %v891 = vld [vmem:[#allocation2 + $0x48] sm:$0xff]
        %v892 = vld [vmem:[#allocation2 + $0x50] sm:$0xff]
        %v893 = vld [vmem:[#allocation2 + $0x58] sm:$0xff]
        %v894 = vld [vmem:[#allocation2 + $0x60] sm:$0xff]
        %v895 = vld [vmem:[#allocation2 + $0x68] sm:$0xff]
        %v896 = vld [vmem:[#allocation2 + $0x70] sm:$0xff]
        %v897 = vld [vmem:[#allocation2 + $0x78] sm:$0xff]
        %v898 = vld [vmem:[#allocation2 + $0x80] sm:$0xff]
        %v899 = vld [vmem:[#allocation2 + $0x88] sm:$0xff]
        %v900 = vld [vmem:[#allocation2 + $0x90] sm:$0xff]
        %v901 = vld [vmem:[#allocation2 + $0x98] sm:$0xff]
        %v902 = vld [vmem:[#allocation2 + $0xa0] sm:$0xff]
        %v903 = vld [vmem:[#allocation2 + $0xa8] sm:$0xff]
        %v904 = vld [vmem:[#allocation2 + $0xb0] sm:$0xff]
        %v905 = vld [vmem:[#allocation2 + $0xb8] sm:$0xff]
        %v906 = vld [vmem:[#allocation2 + $0xc0] sm:$0xff]
        %v907 = vld [vmem:[#allocation2 + $0xc8] sm:$0xff]
        %v908 = vld [vmem:[#allocation2 + $0xd0] sm:$0xff]
        %v909 = vld [vmem:[#allocation2 + $0xd8] sm:$0xff]
        %v910 = vld [vmem:[#allocation2 + $0xe0] sm:$0xff]
        %v911 = vld [vmem:[#allocation2 + $0xe8] sm:$0xff]
        %v912 = vld [vmem:[#allocation2 + $0xf0] sm:$0xff]
        %v913 = vld [vmem:[#allocation2 + $0xf8] sm:$0xff]
        %v914 = vld [vmem:[#allocation2 + $0x100] sm:$0xff]
        %v915 = vld [vmem:[#allocation2 + $0x108] sm:$0xff]
        %v916 = vld [vmem:[#allocation2 + $0x110] sm:$0xff]
        %v917 = vld [vmem:[#allocation2 + $0x118] sm:$0xff]
        %v918 = vld [vmem:[#allocation2 + $0x120] sm:$0xff]
        %v919 = vld [vmem:[#allocation2 + $0x128] sm:$0xff]
        %v920 = vld [vmem:[#allocation2 + $0x130] sm:$0xff]
        %v921 = vld [vmem:[#allocation2 + $0x138] sm:$0xff]
        %v922 = vld [vmem:[#allocation2 + $0x140] sm:$0xff]
        %v923 = vld [vmem:[#allocation2 + $0x148] sm:$0xff]
        %v924 = vld [vmem:[#allocation2 + $0x150] sm:$0xff]
        %v925 = vld [vmem:[#allocation2 + $0x158] sm:$0xff]
        %v926 = vld [vmem:[#allocation2 + $0x160] sm:$0xff]
        %v927 = vld [vmem:[#allocation2 + $0x168] sm:$0xff]
        %v928 = vld [vmem:[#allocation2 + $0x170] sm:$0xff]
        %v929 = vld [vmem:[#allocation2 + $0x178] sm:$0xff]
        %v930 = vld [vmem:[#allocation2 + $0x180] sm:$0xff]
        %v931 = vld [vmem:[#allocation2 + $0x188] sm:$0xff]
        %v932 = vld [vmem:[#allocation2 + $0x190] sm:$0xff]
        %v933 = vld [vmem:[#allocation2 + $0x198] sm:$0xff]
        %v934 = vld [vmem:[#allocation2 + $0x1a0] sm:$0xff]
        %v935 = vld [vmem:[#allocation2 + $0x1a8] sm:$0xff]
        %v936 = vld [vmem:[#allocation2 + $0x1b0] sm:$0xff]
        %v937 = vld [vmem:[#allocation2 + $0x1b8] sm:$0xff]
        %v938 = vld [vmem:[#allocation2 + $0x1c0] sm:$0xff]
        %v939 = vld [vmem:[#allocation2 + $0x1c8] sm:$0xff]
        %v940 = vld [vmem:[#allocation2 + $0x1d0] sm:$0xff]
        %v941 = vld [vmem:[#allocation2 + $0x1d8] sm:$0xff]
        %v942 = vld [vmem:[#allocation2 + $0x1e0] sm:$0xff]
        %v943 = vld [vmem:[#allocation2 + $0x1e8] sm:$0xff]
        %v944 = vld [vmem:[#allocation2 + $0x1f0] sm:$0xff]
        %v945 = vld [vmem:[#allocation2 + $0x1f8] sm:$0xff]
        %v946 = vld [vmem:[%s717] sm:$0xff]
        %v947 = vld [vmem:[%s717 + $0x8] sm:$0xff]
        %v948 = vld [vmem:[%s717 + $0x10] sm:$0xff]
        %v949 = vld [vmem:[%s717 + $0x18] sm:$0xff]
        %v950 = vld [vmem:[%s717 + $0x20] sm:$0xff]
        %v951 = vld [vmem:[%s717 + $0x28] sm:$0xff]
        %v952 = vld [vmem:[%s717 + $0x30] sm:$0xff]
        %v953 = vld [vmem:[%s717 + $0x38] sm:$0xff]
        %v954 = vld [vmem:[%s717 + $0x40] sm:$0xff]
        %v955 = vld [vmem:[%s717 + $0x48] sm:$0xff]
        %v956 = vld [vmem:[%s717 + $0x50] sm:$0xff]
        %v957 = vld [vmem:[%s717 + $0x58] sm:$0xff]
        %v958 = vld [vmem:[%s717 + $0x60] sm:$0xff]
        %v959 = vld [vmem:[%s717 + $0x68] sm:$0xff]
        %v960 = vld [vmem:[%s717 + $0x70] sm:$0xff]
        %v961 = vld [vmem:[%s717 + $0x78] sm:$0xff]
        %v962 = vld [vmem:[%s717 + $0x80] sm:$0xff]
        %v963 = vld [vmem:[%s717 + $0x88] sm:$0xff]
        %v964 = vld [vmem:[%s717 + $0x90] sm:$0xff]
        %v965 = vld [vmem:[%s717 + $0x98] sm:$0xff]
        %v966 = vld [vmem:[%s717 + $0xa0] sm:$0xff]
        %v967 = vld [vmem:[%s717 + $0xa8] sm:$0xff]
        %v968 = vld [vmem:[%s717 + $0xb0] sm:$0xff]
        %v969 = vld [vmem:[%s717 + $0xb8] sm:$0xff]
        %v970 = vld [vmem:[%s717 + $0xc0] sm:$0xff]
        %v971 = vld [vmem:[%s717 + $0xc8] sm:$0xff]
        %v972 = vld [vmem:[%s717 + $0xd0] sm:$0xff]
        %v973 = vld [vmem:[%s717 + $0xd8] sm:$0xff]
        %v974 = vld [vmem:[%s717 + $0xe0] sm:$0xff]
        %v975 = vld [vmem:[%s717 + $0xe8] sm:$0xff]
        %v976 = vld [vmem:[%s717 + $0xf0] sm:$0xff]
        %v977 = vld [vmem:[%s717 + $0xf8] sm:$0xff]
        %v978 = vld [vmem:[%s717 + $0x100] sm:$0xff]
        %v979 = vld [vmem:[%s717 + $0x108] sm:$0xff]
        %v980 = vld [vmem:[%s717 + $0x110] sm:$0xff]
        %v981 = vld [vmem:[%s717 + $0x118] sm:$0xff]
        %v982 = vld [vmem:[%s717 + $0x120] sm:$0xff]
        %v983 = vld [vmem:[%s717 + $0x128] sm:$0xff]
        %v984 = vld [vmem:[%s717 + $0x130] sm:$0xff]
        %v985 = vld [vmem:[%s717 + $0x138] sm:$0xff]
        %v986 = vld [vmem:[%s717 + $0x140] sm:$0xff]
        %v987 = vld [vmem:[%s717 + $0x148] sm:$0xff]
        %v988 = vld [vmem:[%s717 + $0x150] sm:$0xff]
        %v989 = vld [vmem:[%s717 + $0x158] sm:$0xff]
        %v990 = vld [vmem:[%s717 + $0x160] sm:$0xff]
        %v991 = vld [vmem:[%s717 + $0x168] sm:$0xff]
        %v992 = vld [vmem:[%s717 + $0x170] sm:$0xff]
        %v993 = vld [vmem:[%s717 + $0x178] sm:$0xff]
        %v994 = vld [vmem:[%s717 + $0x180] sm:$0xff]
        %v995 = vld [vmem:[%s717 + $0x188] sm:$0xff]
        %v996 = vld [vmem:[%s717 + $0x190] sm:$0xff]
        %v997 = vld [vmem:[%s717 + $0x198] sm:$0xff]
        %v998 = vld [vmem:[%s717 + $0x1a0] sm:$0xff]
        %v999 = vld [vmem:[%s717 + $0x1a8] sm:$0xff]
        %v1000 = vld [vmem:[%s717 + $0x1b0] sm:$0xff]
        %v1001 = vld [vmem:[%s717 + $0x1b8] sm:$0xff]
        %v1002 = vld [vmem:[%s717 + $0x1c0] sm:$0xff]
        %v1003 = vld [vmem:[%s717 + $0x1c8] sm:$0xff]
        %v1004 = vld [vmem:[%s717 + $0x1d0] sm:$0xff]
        %v1005 = vld [vmem:[%s717 + $0x1d8] sm:$0xff]
        %v1006 = vld [vmem:[%s717 + $0x1e0] sm:$0xff]
        %v1007 = vld [vmem:[%s717 + $0x1e8] sm:$0xff]
        %v1008 = vld [vmem:[%s717 + $0x1f0] sm:$0xff]
        %v1009 = vld [vmem:[%s717 + $0x1f8] sm:$0xff]
        %v1010 = vld [vmem:[%s717 + $0x200] sm:$0xff]
        %v1011 = vld [vmem:[%s717 + $0x208] sm:$0xff]
        %v1012 = vld [vmem:[%s717 + $0x210] sm:$0xff]
        %v1013 = vld [vmem:[%s717 + $0x218] sm:$0xff]
        %v1014 = vld [vmem:[%s717 + $0x220] sm:$0xff]
        %v1015 = vld [vmem:[%s717 + $0x228] sm:$0xff]
        %v1016 = vld [vmem:[%s717 + $0x230] sm:$0xff]
        %v1017 = vld [vmem:[%s717 + $0x238] sm:$0xff]
        %v1018 = vld [vmem:[%s717 + $0x240] sm:$0xff]
        %v1019 = vld [vmem:[%s717 + $0x248] sm:$0xff]
        %v1020 = vld [vmem:[%s717 + $0x250] sm:$0xff]
        %v1021 = vld [vmem:[%s717 + $0x258] sm:$0xff]
        %v1022 = vld [vmem:[%s717 + $0x260] sm:$0xff]
        %v1023 = vld [vmem:[%s717 + $0x268] sm:$0xff]
        %v1024 = vld [vmem:[%s717 + $0x270] sm:$0xff]
        %v1025 = vld [vmem:[%s717 + $0x278] sm:$0xff]
        %v1026 = vld [vmem:[%s717 + $0x280] sm:$0xff]
        %v1027 = vld [vmem:[%s717 + $0x288] sm:$0xff]
        %v1028 = vld [vmem:[%s717 + $0x290] sm:$0xff]
        %v1029 = vld [vmem:[%s717 + $0x298] sm:$0xff]
        %v1030 = vld [vmem:[%s717 + $0x2a0] sm:$0xff]
        %v1031 = vld [vmem:[%s717 + $0x2a8] sm:$0xff]
        %v1032 = vld [vmem:[%s717 + $0x2b0] sm:$0xff]
        %v1033 = vld [vmem:[%s717 + $0x2b8] sm:$0xff]
        %v1034 = vld [vmem:[%s717 + $0x2c0] sm:$0xff]
        %v1035 = vld [vmem:[%s717 + $0x2c8] sm:$0xff]
        %v1036 = vld [vmem:[%s717 + $0x2d0] sm:$0xff]
        %v1037 = vld [vmem:[%s717 + $0x2d8] sm:$0xff]
        %v1038 = vld [vmem:[%s717 + $0x2e0] sm:$0xff]
        %v1039 = vld [vmem:[%s717 + $0x2e8] sm:$0xff]
        %v1040 = vld [vmem:[%s717 + $0x2f0] sm:$0xff]
        %v1041 = vld [vmem:[%s717 + $0x2f8] sm:$0xff]
        %v1042 = vld [vmem:[%s717 + $0x300] sm:$0xff]
        %v1043 = vld [vmem:[%s717 + $0x308] sm:$0xff]
        %v1044 = vld [vmem:[%s717 + $0x310] sm:$0xff]
        %v1045 = vld [vmem:[%s717 + $0x318] sm:$0xff]
        %v1046 = vld [vmem:[%s717 + $0x320] sm:$0xff]
        %v1047 = vld [vmem:[%s717 + $0x328] sm:$0xff]
        %v1048 = vld [vmem:[%s717 + $0x330] sm:$0xff]
        %v1049 = vld [vmem:[%s717 + $0x338] sm:$0xff]
        %v1050 = vld [vmem:[%s717 + $0x340] sm:$0xff]
        %v1051 = vld [vmem:[%s717 + $0x348] sm:$0xff]
        %v1052 = vld [vmem:[%s717 + $0x350] sm:$0xff]
        %v1053 = vld [vmem:[%s717 + $0x358] sm:$0xff]
        %v1054 = vld [vmem:[%s717 + $0x360] sm:$0xff]
        %v1055 = vld [vmem:[%s717 + $0x368] sm:$0xff]
        %v1056 = vld [vmem:[%s717 + $0x370] sm:$0xff]
        %v1057 = vld [vmem:[%s717 + $0x378] sm:$0xff]
        %v1058 = vld [vmem:[%s717 + $0x380] sm:$0xff]
        %v1059 = vld [vmem:[%s717 + $0x388] sm:$0xff]
        %v1060 = vld [vmem:[%s717 + $0x390] sm:$0xff]
        %v1061 = vld [vmem:[%s717 + $0x398] sm:$0xff]
        %v1062 = vld [vmem:[%s717 + $0x3a0] sm:$0xff]
        %v1063 = vld [vmem:[%s717 + $0x3a8] sm:$0xff]
        %v1064 = vld [vmem:[%s717 + $0x3b0] sm:$0xff]
        %v1065 = vld [vmem:[%s717 + $0x3b8] sm:$0xff]
        %v1066 = vld [vmem:[%s717 + $0x3c0] sm:$0xff]
        %v1067 = vld [vmem:[%s717 + $0x3c8] sm:$0xff]
        %v1068 = vld [vmem:[%s717 + $0x3d0] sm:$0xff]
        %v1069 = vld [vmem:[%s717 + $0x3d8] sm:$0xff]
        %v1070 = vld [vmem:[%s717 + $0x3e0] sm:$0xff]
        %v1071 = vld [vmem:[%s717 + $0x3e8] sm:$0xff]
        %v1072 = vld [vmem:[%s717 + $0x3f0] sm:$0xff]
        %v1073 = vld [vmem:[%s717 + $0x3f8] sm:$0xff]
        %v1074 = vld [vmem:[%s717 + $0x400] sm:$0xff]
        %v1075 = vld [vmem:[%s717 + $0x408] sm:$0xff]
        %v1076 = vld [vmem:[%s717 + $0x410] sm:$0xff]
        %v1077 = vld [vmem:[%s717 + $0x418] sm:$0xff]
        %v1078 = vld [vmem:[%s717 + $0x420] sm:$0xff]
        %v1079 = vld [vmem:[%s717 + $0x428] sm:$0xff]
        %v1080 = vld [vmem:[%s717 + $0x430] sm:$0xff]
        %v1081 = vld [vmem:[%s717 + $0x438] sm:$0xff]
        %v1082 = vld [vmem:[%s717 + $0x440] sm:$0xff]
        %v1083 = vld [vmem:[%s717 + $0x448] sm:$0xff]
        %v1084 = vld [vmem:[%s717 + $0x450] sm:$0xff]
        %v1085 = vld [vmem:[%s717 + $0x458] sm:$0xff]
        %v1086 = vld [vmem:[%s717 + $0x460] sm:$0xff]
        %v1087 = vld [vmem:[%s717 + $0x468] sm:$0xff]
        %v1088 = vld [vmem:[%s717 + $0x470] sm:$0xff]
        %v1089 = vld [vmem:[%s717 + $0x478] sm:$0xff]
        %v1090 = vld [vmem:[%s717 + $0x480] sm:$0xff]
        %v1091 = vld [vmem:[%s717 + $0x488] sm:$0xff]
        %v1092 = vld [vmem:[%s717 + $0x490] sm:$0xff]
        %v1093 = vld [vmem:[%s717 + $0x498] sm:$0xff]
        %v1094 = vld [vmem:[%s717 + $0x4a0] sm:$0xff]
        %v1095 = vld [vmem:[%s717 + $0x4a8] sm:$0xff]
        %v1096 = vld [vmem:[%s717 + $0x4b0] sm:$0xff]
        %v1097 = vld [vmem:[%s717 + $0x4b8] sm:$0xff]
        %v1098 = vld [vmem:[%s717 + $0x4c0] sm:$0xff]
        %v1099 = vld [vmem:[%s717 + $0x4c8] sm:$0xff]
        %v1100 = vld [vmem:[%s717 + $0x4d0] sm:$0xff]
        %v1101 = vld [vmem:[%s717 + $0x4d8] sm:$0xff]
        %v1102 = vld [vmem:[%s717 + $0x4e0] sm:$0xff]
        %v1103 = vld [vmem:[%s717 + $0x4e8] sm:$0xff]
        %v1104 = vld [vmem:[%s717 + $0x4f0] sm:$0xff]
        %v1105 = vld [vmem:[%s717 + $0x4f8] sm:$0xff]
        %v1106 = vld [vmem:[%s717 + $0x500] sm:$0xff]
        %v1107 = vld [vmem:[%s717 + $0x508] sm:$0xff]
        %v1108 = vld [vmem:[%s717 + $0x510] sm:$0xff]
        %v1109 = vld [vmem:[%s717 + $0x518] sm:$0xff]
        %v1110 = vld [vmem:[%s717 + $0x520] sm:$0xff]
        %v1111 = vld [vmem:[%s717 + $0x528] sm:$0xff]
        %v1112 = vld [vmem:[%s717 + $0x530] sm:$0xff]
        %v1113 = vld [vmem:[%s717 + $0x538] sm:$0xff]
        %v1114 = vld [vmem:[%s717 + $0x540] sm:$0xff]
        %v1115 = vld [vmem:[%s717 + $0x548] sm:$0xff]
        %v1116 = vld [vmem:[%s717 + $0x550] sm:$0xff]
        %v1117 = vld [vmem:[%s717 + $0x558] sm:$0xff]
        %v1118 = vld [vmem:[%s717 + $0x560] sm:$0xff]
        %v1119 = vld [vmem:[%s717 + $0x568] sm:$0xff]
        %v1120 = vld [vmem:[%s717 + $0x570] sm:$0xff]
        %v1121 = vld [vmem:[%s717 + $0x578] sm:$0xff]
        %v1122 = vld [vmem:[%s717 + $0x580] sm:$0xff]
        %v1123 = vld [vmem:[%s717 + $0x588] sm:$0xff]
        %v1124 = vld [vmem:[%s717 + $0x590] sm:$0xff]
        %v1125 = vld [vmem:[%s717 + $0x598] sm:$0xff]
        %v1126 = vld [vmem:[%s717 + $0x5a0] sm:$0xff]
        %v1127 = vld [vmem:[%s717 + $0x5a8] sm:$0xff]
        %v1128 = vld [vmem:[%s717 + $0x5b0] sm:$0xff]
        %v1129 = vld [vmem:[%s717 + $0x5b8] sm:$0xff]
        %v1130 = vld [vmem:[%s717 + $0x5c0] sm:$0xff]
        %v1131 = vld [vmem:[%s717 + $0x5c8] sm:$0xff]
        %v1132 = vld [vmem:[%s717 + $0x5d0] sm:$0xff]
        %v1133 = vld [vmem:[%s717 + $0x5d8] sm:$0xff]
        %v1134 = vld [vmem:[%s717 + $0x5e0] sm:$0xff]
        %v1135 = vld [vmem:[%s717 + $0x5e8] sm:$0xff]
        %v1136 = vld [vmem:[%s717 + $0x5f0] sm:$0xff]
        %v1137 = vld [vmem:[%s717 + $0x5f8] sm:$0xff]
        %v1138 = vld [vmem:[%s717 + $0x600] sm:$0xff]
        %v1139 = vld [vmem:[%s717 + $0x608] sm:$0xff]
        %v1140 = vld [vmem:[%s717 + $0x610] sm:$0xff]
        %v1141 = vld [vmem:[%s717 + $0x618] sm:$0xff]
        %v1142 = vld [vmem:[%s717 + $0x620] sm:$0xff]
        %v1143 = vld [vmem:[%s717 + $0x628] sm:$0xff]
        %v1144 = vld [vmem:[%s717 + $0x630] sm:$0xff]
        %v1145 = vld [vmem:[%s717 + $0x638] sm:$0xff]
        %v1146 = vld [vmem:[%s717 + $0x640] sm:$0xff]
        %v1147 = vld [vmem:[%s717 + $0x648] sm:$0xff]
        %v1148 = vld [vmem:[%s717 + $0x650] sm:$0xff]
        %v1149 = vld [vmem:[%s717 + $0x658] sm:$0xff]
        %v1150 = vld [vmem:[%s717 + $0x660] sm:$0xff]
        %v1151 = vld [vmem:[%s717 + $0x668] sm:$0xff]
        %v1152 = vld [vmem:[%s717 + $0x670] sm:$0xff]
        %v1153 = vld [vmem:[%s717 + $0x678] sm:$0xff]
        %v1154 = vld [vmem:[%s717 + $0x680] sm:$0xff]
        %v1155 = vld [vmem:[%s717 + $0x688] sm:$0xff]
        %v1156 = vld [vmem:[%s717 + $0x690] sm:$0xff]
        %v1157 = vld [vmem:[%s717 + $0x698] sm:$0xff]
        %v1158 = vld [vmem:[%s717 + $0x6a0] sm:$0xff]
        %v1159 = vld [vmem:[%s717 + $0x6a8] sm:$0xff]
        %v1160 = vld [vmem:[%s717 + $0x6b0] sm:$0xff]
        %v1161 = vld [vmem:[%s717 + $0x6b8] sm:$0xff]
        %v1162 = vld [vmem:[%s717 + $0x6c0] sm:$0xff]
        %v1163 = vld [vmem:[%s717 + $0x6c8] sm:$0xff]
        %v1164 = vld [vmem:[%s717 + $0x6d0] sm:$0xff]
        %v1165 = vld [vmem:[%s717 + $0x6d8] sm:$0xff]
        %v1166 = vld [vmem:[%s717 + $0x6e0] sm:$0xff]
        %v1167 = vld [vmem:[%s717 + $0x6e8] sm:$0xff]
        %v1168 = vld [vmem:[%s717 + $0x6f0] sm:$0xff]
        %v1169 = vld [vmem:[%s717 + $0x6f8] sm:$0xff]
        %v1170 = vld [vmem:[%s717 + $0x700] sm:$0xff]
        %v1171 = vld [vmem:[%s717 + $0x708] sm:$0xff]
        %v1172 = vld [vmem:[%s717 + $0x710] sm:$0xff]
        %v1173 = vld [vmem:[%s717 + $0x718] sm:$0xff]
        %v1174 = vld [vmem:[%s717 + $0x720] sm:$0xff]
        %v1175 = vld [vmem:[%s717 + $0x728] sm:$0xff]
        %v1176 = vld [vmem:[%s717 + $0x730] sm:$0xff]
        %v1177 = vld [vmem:[%s717 + $0x738] sm:$0xff]
        %v1178 = vld [vmem:[%s717 + $0x740] sm:$0xff]
        %v1179 = vld [vmem:[%s717 + $0x748] sm:$0xff]
        %v1180 = vld [vmem:[%s717 + $0x750] sm:$0xff]
        %v1181 = vld [vmem:[%s717 + $0x758] sm:$0xff]
        %v1182 = vld [vmem:[%s717 + $0x760] sm:$0xff]
        %v1183 = vld [vmem:[%s717 + $0x768] sm:$0xff]
        %v1184 = vld [vmem:[%s717 + $0x770] sm:$0xff]
        %v1185 = vld [vmem:[%s717 + $0x778] sm:$0xff]
        %v1186 = vld [vmem:[%s717 + $0x780] sm:$0xff]
        %v1187 = vld [vmem:[%s717 + $0x788] sm:$0xff]
        %v1188 = vld [vmem:[%s717 + $0x790] sm:$0xff]
        %v1189 = vld [vmem:[%s717 + $0x798] sm:$0xff]
        %v1190 = vld [vmem:[%s717 + $0x7a0] sm:$0xff]
        %v1191 = vld [vmem:[%s717 + $0x7a8] sm:$0xff]
        %v1192 = vld [vmem:[%s717 + $0x7b0] sm:$0xff]
        %v1193 = vld [vmem:[%s717 + $0x7b8] sm:$0xff]
        %v1194 = vld [vmem:[%s717 + $0x7c0] sm:$0xff]
        %v1195 = vld [vmem:[%s717 + $0x7c8] sm:$0xff]
        %v1196 = vld [vmem:[%s717 + $0x7d0] sm:$0xff]
        %v1197 = vld [vmem:[%s717 + $0x7d8] sm:$0xff]
        %v1198 = vld [vmem:[%s717 + $0x7e0] sm:$0xff]
        %v1199 = vld [vmem:[%s717 + $0x7e8] sm:$0xff]
        %v1200 = vld [vmem:[%s717 + $0x7f0] sm:$0xff]
        %v1201 = vld [vmem:[%s717 + $0x7f8] sm:$0xff]
        %1202 = vmatpush.msra.mxu0 %v833
        %1203 = vmatpush.msra.mxu0 %v832
        %1204 = vmatpush.msra.mxu0 %v831
        %1205 = vmatpush.msra.mxu0 %v830
        %1206 = vmatpush.msra.mxu0 %v829
        %1207 = vmatpush.msra.mxu0 %v828
        %1208 = vmatpush.msra.mxu0 %v827
        %1209 = vmatpush.msra.mxu0 %v826
        %1210 = vmatpush.msra.mxu0 %v825
        %1211 = vmatpush.msra.mxu0 %v824
        %1212 = vmatpush.msra.mxu0 %v823
        %1213 = vmatpush.msra.mxu0 %v822
        %1214 = vmatpush.msra.mxu0 %v821
        %1215 = vmatpush.msra.mxu0 %v820
        %1216 = vmatpush.msra.mxu0 %v819
        %1217 = vmatpush.msra.mxu0 %v818
        %1218 = vmatmul.f32.gmra.mxu0 %v946
        %v1219 = vpop.f32.mrf.mxu0
        %v1220 = vadd.f32 0.0, %v1219
        %1221 = vmatmul.f32.gmra.mxu0 %v950
        %v1222 = vpop.f32.mrf.mxu0
        %v1223 = vadd.f32 0.0, %v1222
        %1224 = vmatmul.f32.gmra.mxu0 %v954
        %v1225 = vpop.f32.mrf.mxu0
        %v1226 = vadd.f32 0.0, %v1225
        %1227 = vmatmul.f32.gmra.mxu0 %v958
        %v1228 = vpop.f32.mrf.mxu0
        %v1229 = vadd.f32 0.0, %v1228
        %1230 = vmatmul.f32.gmra.mxu0 %v962
        %v1231 = vpop.f32.mrf.mxu0
        %v1232 = vadd.f32 0.0, %v1231
        %1233 = vmatmul.f32.gmra.mxu0 %v966
        %v1234 = vpop.f32.mrf.mxu0
        %v1235 = vadd.f32 0.0, %v1234
        %1236 = vmatmul.f32.gmra.mxu0 %v970
        %v1237 = vpop.f32.mrf.mxu0
        %v1238 = vadd.f32 0.0, %v1237
        %1239 = vmatmul.f32.gmra.mxu0 %v974
        %v1240 = vpop.f32.mrf.mxu0
        %v1241 = vadd.f32 0.0, %v1240
        %1242 = vmatmul.f32.gmra.mxu0 %v978
        %v1243 = vpop.f32.mrf.mxu0
        %v1244 = vadd.f32 0.0, %v1243
        %1245 = vmatmul.f32.gmra.mxu0 %v982
        %v1246 = vpop.f32.mrf.mxu0
        %v1247 = vadd.f32 0.0, %v1246
        %1248 = vmatmul.f32.gmra.mxu0 %v986
        %v1249 = vpop.f32.mrf.mxu0
        %v1250 = vadd.f32 0.0, %v1249
        %1251 = vmatmul.f32.gmra.mxu0 %v990
        %v1252 = vpop.f32.mrf.mxu0
        %v1253 = vadd.f32 0.0, %v1252
        %1254 = vmatmul.f32.gmra.mxu0 %v994
        %v1255 = vpop.f32.mrf.mxu0
        %v1256 = vadd.f32 0.0, %v1255
        %1257 = vmatmul.f32.gmra.mxu0 %v998
        %v1258 = vpop.f32.mrf.mxu0
        %v1259 = vadd.f32 0.0, %v1258
        %1260 = vmatmul.f32.gmra.mxu0 %v1002
        %v1261 = vpop.f32.mrf.mxu0
        %v1262 = vadd.f32 0.0, %v1261
        %1263 = vmatmul.f32.gmra.mxu0 %v1006
        %v1264 = vpop.f32.mrf.mxu0
        %v1265 = vadd.f32 0.0, %v1264
        %1266 = vmatmul.f32.gmra.mxu0 %v1010
        %v1267 = vpop.f32.mrf.mxu0
        %v1268 = vadd.f32 0.0, %v1267
        %1269 = vmatmul.f32.gmra.mxu0 %v1014
        %v1270 = vpop.f32.mrf.mxu0
        %v1271 = vadd.f32 0.0, %v1270
        %1272 = vmatmul.f32.gmra.mxu0 %v1018
        %v1273 = vpop.f32.mrf.mxu0
        %v1274 = vadd.f32 0.0, %v1273
        %1275 = vmatmul.f32.gmra.mxu0 %v1022
        %v1276 = vpop.f32.mrf.mxu0
        %v1277 = vadd.f32 0.0, %v1276
        %1278 = vmatmul.f32.gmra.mxu0 %v1026
        %v1279 = vpop.f32.mrf.mxu0
        %v1280 = vadd.f32 0.0, %v1279
        %1281 = vmatmul.f32.gmra.mxu0 %v1030
        %v1282 = vpop.f32.mrf.mxu0
        %v1283 = vadd.f32 0.0, %v1282
        %1284 = vmatmul.f32.gmra.mxu0 %v1034
        %v1285 = vpop.f32.mrf.mxu0
        %v1286 = vadd.f32 0.0, %v1285
        %1287 = vmatmul.f32.gmra.mxu0 %v1038
        %v1288 = vpop.f32.mrf.mxu0
        %v1289 = vadd.f32 0.0, %v1288
        %1290 = vmatmul.f32.gmra.mxu0 %v1042
        %v1291 = vpop.f32.mrf.mxu0
        %v1292 = vadd.f32 0.0, %v1291
        %1293 = vmatmul.f32.gmra.mxu0 %v1046
        %v1294 = vpop.f32.mrf.mxu0
        %v1295 = vadd.f32 0.0, %v1294
        %1296 = vmatmul.f32.gmra.mxu0 %v1050
        %v1297 = vpop.f32.mrf.mxu0
        %v1298 = vadd.f32 0.0, %v1297
        %1299 = vmatmul.f32.gmra.mxu0 %v1054
        %v1300 = vpop.f32.mrf.mxu0
        %v1301 = vadd.f32 0.0, %v1300
        %1302 = vmatmul.f32.gmra.mxu0 %v1058
        %v1303 = vpop.f32.mrf.mxu0
        %v1304 = vadd.f32 0.0, %v1303
        %1305 = vmatmul.f32.gmra.mxu0 %v1062
        %v1306 = vpop.f32.mrf.mxu0
        %v1307 = vadd.f32 0.0, %v1306
        %1308 = vmatmul.f32.gmra.mxu0 %v1066
        %v1309 = vpop.f32.mrf.mxu0
        %v1310 = vadd.f32 0.0, %v1309
        %1311 = vmatmul.f32.gmra.mxu0 %v1070
        %v1312 = vpop.f32.mrf.mxu0
        %v1313 = vadd.f32 0.0, %v1312
        %1314 = vmatmul.f32.gmra.mxu0 %v1074
        %v1315 = vpop.f32.mrf.mxu0
        %v1316 = vadd.f32 0.0, %v1315
        %1317 = vmatmul.f32.gmra.mxu0 %v1078
        %v1318 = vpop.f32.mrf.mxu0
        %v1319 = vadd.f32 0.0, %v1318
        %1320 = vmatmul.f32.gmra.mxu0 %v1082
        %v1321 = vpop.f32.mrf.mxu0
        %v1322 = vadd.f32 0.0, %v1321
        %1323 = vmatmul.f32.gmra.mxu0 %v1086
        %v1324 = vpop.f32.mrf.mxu0
        %v1325 = vadd.f32 0.0, %v1324
        %1326 = vmatmul.f32.gmra.mxu0 %v1090
        %v1327 = vpop.f32.mrf.mxu0
        %v1328 = vadd.f32 0.0, %v1327
        %1329 = vmatmul.f32.gmra.mxu0 %v1094
        %v1330 = vpop.f32.mrf.mxu0
        %v1331 = vadd.f32 0.0, %v1330
        %1332 = vmatmul.f32.gmra.mxu0 %v1098
        %v1333 = vpop.f32.mrf.mxu0
        %v1334 = vadd.f32 0.0, %v1333
        %1335 = vmatmul.f32.gmra.mxu0 %v1102
        %v1336 = vpop.f32.mrf.mxu0
        %v1337 = vadd.f32 0.0, %v1336
        %1338 = vmatmul.f32.gmra.mxu0 %v1106
        %v1339 = vpop.f32.mrf.mxu0
        %v1340 = vadd.f32 0.0, %v1339
        %1341 = vmatmul.f32.gmra.mxu0 %v1110
        %v1342 = vpop.f32.mrf.mxu0
        %v1343 = vadd.f32 0.0, %v1342
        %1344 = vmatmul.f32.gmra.mxu0 %v1114
        %v1345 = vpop.f32.mrf.mxu0
        %v1346 = vadd.f32 0.0, %v1345
        %1347 = vmatmul.f32.gmra.mxu0 %v1118
        %v1348 = vpop.f32.mrf.mxu0
        %v1349 = vadd.f32 0.0, %v1348
        %1350 = vmatmul.f32.gmra.mxu0 %v1122
        %v1351 = vpop.f32.mrf.mxu0
        %v1352 = vadd.f32 0.0, %v1351
        %1353 = vmatmul.f32.gmra.mxu0 %v1126
        %v1354 = vpop.f32.mrf.mxu0
        %v1355 = vadd.f32 0.0, %v1354
        %1356 = vmatmul.f32.gmra.mxu0 %v1130
        %v1357 = vpop.f32.mrf.mxu0
        %v1358 = vadd.f32 0.0, %v1357
        %1359 = vmatmul.f32.gmra.mxu0 %v1134
        %v1360 = vpop.f32.mrf.mxu0
        %v1361 = vadd.f32 0.0, %v1360
        %1362 = vmatmul.f32.gmra.mxu0 %v1138
        %v1363 = vpop.f32.mrf.mxu0
        %v1364 = vadd.f32 0.0, %v1363
        %1365 = vmatmul.f32.gmra.mxu0 %v1142
        %v1366 = vpop.f32.mrf.mxu0
        %v1367 = vadd.f32 0.0, %v1366
        %1368 = vmatmul.f32.gmra.mxu0 %v1146
        %v1369 = vpop.f32.mrf.mxu0
        %v1370 = vadd.f32 0.0, %v1369
        %1371 = vmatmul.f32.gmra.mxu0 %v1150
        %v1372 = vpop.f32.mrf.mxu0
        %v1373 = vadd.f32 0.0, %v1372
        %1374 = vmatmul.f32.gmra.mxu0 %v1154
        %v1375 = vpop.f32.mrf.mxu0
        %v1376 = vadd.f32 0.0, %v1375
        %1377 = vmatmul.f32.gmra.mxu0 %v1158
        %v1378 = vpop.f32.mrf.mxu0
        %v1379 = vadd.f32 0.0, %v1378
        %1380 = vmatmul.f32.gmra.mxu0 %v1162
        %v1381 = vpop.f32.mrf.mxu0
        %v1382 = vadd.f32 0.0, %v1381
        %1383 = vmatmul.f32.gmra.mxu0 %v1166
        %v1384 = vpop.f32.mrf.mxu0
        %v1385 = vadd.f32 0.0, %v1384
        %1386 = vmatmul.f32.gmra.mxu0 %v1170
        %v1387 = vpop.f32.mrf.mxu0
        %v1388 = vadd.f32 0.0, %v1387
        %1389 = vmatmul.f32.gmra.mxu0 %v1174
        %v1390 = vpop.f32.mrf.mxu0
        %v1391 = vadd.f32 0.0, %v1390
        %1392 = vmatmul.f32.gmra.mxu0 %v1178
        %v1393 = vpop.f32.mrf.mxu0
        %v1394 = vadd.f32 0.0, %v1393
        %1395 = vmatmul.f32.gmra.mxu0 %v1182
        %v1396 = vpop.f32.mrf.mxu0
        %v1397 = vadd.f32 0.0, %v1396
        %1398 = vmatmul.f32.gmra.mxu0 %v1186
        %v1399 = vpop.f32.mrf.mxu0
        %v1400 = vadd.f32 0.0, %v1399
        %1401 = vmatmul.f32.gmra.mxu0 %v1190
        %v1402 = vpop.f32.mrf.mxu0
        %v1403 = vadd.f32 0.0, %v1402
        %1404 = vmatmul.f32.gmra.mxu0 %v1194
        %v1405 = vpop.f32.mrf.mxu0
        %v1406 = vadd.f32 0.0, %v1405
        %1407 = vmatmul.f32.gmra.mxu0 %v1198
        %v1408 = vpop.f32.mrf.mxu0
        %v1409 = vadd.f32 0.0, %v1408
        %1410 = vdwg.mxu0
        %1411 = vmatpush.msra.mxu0 %v849
        %1412 = vmatpush.msra.mxu0 %v848
        %1413 = vmatpush.msra.mxu0 %v847
        %1414 = vmatpush.msra.mxu0 %v846
        %1415 = vmatpush.msra.mxu0 %v845
        %1416 = vmatpush.msra.mxu0 %v844
        %1417 = vmatpush.msra.mxu0 %v843
        %1418 = vmatpush.msra.mxu0 %v842
        %1419 = vmatpush.msra.mxu0 %v841
        %1420 = vmatpush.msra.mxu0 %v840
        %1421 = vmatpush.msra.mxu0 %v839
        %1422 = vmatpush.msra.mxu0 %v838
        %1423 = vmatpush.msra.mxu0 %v837
        %1424 = vmatpush.msra.mxu0 %v836
        %1425 = vmatpush.msra.mxu0 %v835
        %1426 = vmatpush.msra.mxu0 %v834
        %1427 = vmatmul.f32.gmra.mxu0 %v947
        %v1428 = vpop.f32.mrf.mxu0
        %v1429 = vadd.f32 %v1220, %v1428
        %1430 = vmatmul.f32.gmra.mxu0 %v951
        %v1431 = vpop.f32.mrf.mxu0
        %v1432 = vadd.f32 %v1223, %v1431
        %1433 = vmatmul.f32.gmra.mxu0 %v955
        %v1434 = vpop.f32.mrf.mxu0
        %v1435 = vadd.f32 %v1226, %v1434
        %1436 = vmatmul.f32.gmra.mxu0 %v959
        %v1437 = vpop.f32.mrf.mxu0
        %v1438 = vadd.f32 %v1229, %v1437
        %1439 = vmatmul.f32.gmra.mxu0 %v963
        %v1440 = vpop.f32.mrf.mxu0
        %v1441 = vadd.f32 %v1232, %v1440
        %1442 = vmatmul.f32.gmra.mxu0 %v967
        %v1443 = vpop.f32.mrf.mxu0
        %v1444 = vadd.f32 %v1235, %v1443
        %1445 = vmatmul.f32.gmra.mxu0 %v971
        %v1446 = vpop.f32.mrf.mxu0
        %v1447 = vadd.f32 %v1238, %v1446
        %1448 = vmatmul.f32.gmra.mxu0 %v975
        %v1449 = vpop.f32.mrf.mxu0
        %v1450 = vadd.f32 %v1241, %v1449
        %1451 = vmatmul.f32.gmra.mxu0 %v979
        %v1452 = vpop.f32.mrf.mxu0
        %v1453 = vadd.f32 %v1244, %v1452
        %1454 = vmatmul.f32.gmra.mxu0 %v983
        %v1455 = vpop.f32.mrf.mxu0
        %v1456 = vadd.f32 %v1247, %v1455
        %1457 = vmatmul.f32.gmra.mxu0 %v987
        %v1458 = vpop.f32.mrf.mxu0
        %v1459 = vadd.f32 %v1250, %v1458
        %1460 = vmatmul.f32.gmra.mxu0 %v991
        %v1461 = vpop.f32.mrf.mxu0
        %v1462 = vadd.f32 %v1253, %v1461
        %1463 = vmatmul.f32.gmra.mxu0 %v995
        %v1464 = vpop.f32.mrf.mxu0
        %v1465 = vadd.f32 %v1256, %v1464
        %1466 = vmatmul.f32.gmra.mxu0 %v999
        %v1467 = vpop.f32.mrf.mxu0
        %v1468 = vadd.f32 %v1259, %v1467
        %1469 = vmatmul.f32.gmra.mxu0 %v1003
        %v1470 = vpop.f32.mrf.mxu0
        %v1471 = vadd.f32 %v1262, %v1470
        %1472 = vmatmul.f32.gmra.mxu0 %v1007
        %v1473 = vpop.f32.mrf.mxu0
        %v1474 = vadd.f32 %v1265, %v1473
        %1475 = vmatmul.f32.gmra.mxu0 %v1011
        %v1476 = vpop.f32.mrf.mxu0
        %v1477 = vadd.f32 %v1268, %v1476
        %1478 = vmatmul.f32.gmra.mxu0 %v1015
        %v1479 = vpop.f32.mrf.mxu0
        %v1480 = vadd.f32 %v1271, %v1479
        %1481 = vmatmul.f32.gmra.mxu0 %v1019
        %v1482 = vpop.f32.mrf.mxu0
        %v1483 = vadd.f32 %v1274, %v1482
        %1484 = vmatmul.f32.gmra.mxu0 %v1023
        %v1485 = vpop.f32.mrf.mxu0
        %v1486 = vadd.f32 %v1277, %v1485
        %1487 = vmatmul.f32.gmra.mxu0 %v1027
        %v1488 = vpop.f32.mrf.mxu0
        %v1489 = vadd.f32 %v1280, %v1488
        %1490 = vmatmul.f32.gmra.mxu0 %v1031
        %v1491 = vpop.f32.mrf.mxu0
        %v1492 = vadd.f32 %v1283, %v1491
        %1493 = vmatmul.f32.gmra.mxu0 %v1035
        %v1494 = vpop.f32.mrf.mxu0
        %v1495 = vadd.f32 %v1286, %v1494
        %1496 = vmatmul.f32.gmra.mxu0 %v1039
        %v1497 = vpop.f32.mrf.mxu0
        %v1498 = vadd.f32 %v1289, %v1497
        %1499 = vmatmul.f32.gmra.mxu0 %v1043
        %v1500 = vpop.f32.mrf.mxu0
        %v1501 = vadd.f32 %v1292, %v1500
        %1502 = vmatmul.f32.gmra.mxu0 %v1047
        %v1503 = vpop.f32.mrf.mxu0
        %v1504 = vadd.f32 %v1295, %v1503
        %1505 = vmatmul.f32.gmra.mxu0 %v1051
        %v1506 = vpop.f32.mrf.mxu0
        %v1507 = vadd.f32 %v1298, %v1506
        %1508 = vmatmul.f32.gmra.mxu0 %v1055
        %v1509 = vpop.f32.mrf.mxu0
        %v1510 = vadd.f32 %v1301, %v1509
        %1511 = vmatmul.f32.gmra.mxu0 %v1059
        %v1512 = vpop.f32.mrf.mxu0
        %v1513 = vadd.f32 %v1304, %v1512
        %1514 = vmatmul.f32.gmra.mxu0 %v1063
        %v1515 = vpop.f32.mrf.mxu0
        %v1516 = vadd.f32 %v1307, %v1515
        %1517 = vmatmul.f32.gmra.mxu0 %v1067
        %v1518 = vpop.f32.mrf.mxu0
        %v1519 = vadd.f32 %v1310, %v1518
        %1520 = vmatmul.f32.gmra.mxu0 %v1071
        %v1521 = vpop.f32.mrf.mxu0
        %v1522 = vadd.f32 %v1313, %v1521
        %1523 = vmatmul.f32.gmra.mxu0 %v1075
        %v1524 = vpop.f32.mrf.mxu0
        %v1525 = vadd.f32 %v1316, %v1524
        %1526 = vmatmul.f32.gmra.mxu0 %v1079
        %v1527 = vpop.f32.mrf.mxu0
        %v1528 = vadd.f32 %v1319, %v1527
        %1529 = vmatmul.f32.gmra.mxu0 %v1083
        %v1530 = vpop.f32.mrf.mxu0
        %v1531 = vadd.f32 %v1322, %v1530
        %1532 = vmatmul.f32.gmra.mxu0 %v1087
        %v1533 = vpop.f32.mrf.mxu0
        %v1534 = vadd.f32 %v1325, %v1533
        %1535 = vmatmul.f32.gmra.mxu0 %v1091
        %v1536 = vpop.f32.mrf.mxu0
        %v1537 = vadd.f32 %v1328, %v1536
        %1538 = vmatmul.f32.gmra.mxu0 %v1095
        %v1539 = vpop.f32.mrf.mxu0
        %v1540 = vadd.f32 %v1331, %v1539
        %1541 = vmatmul.f32.gmra.mxu0 %v1099
        %v1542 = vpop.f32.mrf.mxu0
        %v1543 = vadd.f32 %v1334, %v1542
        %1544 = vmatmul.f32.gmra.mxu0 %v1103
        %v1545 = vpop.f32.mrf.mxu0
        %v1546 = vadd.f32 %v1337, %v1545
        %1547 = vmatmul.f32.gmra.mxu0 %v1107
        %v1548 = vpop.f32.mrf.mxu0
        %v1549 = vadd.f32 %v1340, %v1548
        %1550 = vmatmul.f32.gmra.mxu0 %v1111
        %v1551 = vpop.f32.mrf.mxu0
        %v1552 = vadd.f32 %v1343, %v1551
        %1553 = vmatmul.f32.gmra.mxu0 %v1115
        %v1554 = vpop.f32.mrf.mxu0
        %v1555 = vadd.f32 %v1346, %v1554
        %1556 = vmatmul.f32.gmra.mxu0 %v1119
        %v1557 = vpop.f32.mrf.mxu0
        %v1558 = vadd.f32 %v1349, %v1557
        %1559 = vmatmul.f32.gmra.mxu0 %v1123
        %v1560 = vpop.f32.mrf.mxu0
        %v1561 = vadd.f32 %v1352, %v1560
        %1562 = vmatmul.f32.gmra.mxu0 %v1127
        %v1563 = vpop.f32.mrf.mxu0
        %v1564 = vadd.f32 %v1355, %v1563
        %1565 = vmatmul.f32.gmra.mxu0 %v1131
        %v1566 = vpop.f32.mrf.mxu0
        %v1567 = vadd.f32 %v1358, %v1566
        %1568 = vmatmul.f32.gmra.mxu0 %v1135
        %v1569 = vpop.f32.mrf.mxu0
        %v1570 = vadd.f32 %v1361, %v1569
        %1571 = vmatmul.f32.gmra.mxu0 %v1139
        %v1572 = vpop.f32.mrf.mxu0
        %v1573 = vadd.f32 %v1364, %v1572
        %1574 = vmatmul.f32.gmra.mxu0 %v1143
        %v1575 = vpop.f32.mrf.mxu0
        %v1576 = vadd.f32 %v1367, %v1575
        %1577 = vmatmul.f32.gmra.mxu0 %v1147
        %v1578 = vpop.f32.mrf.mxu0
        %v1579 = vadd.f32 %v1370, %v1578
        %1580 = vmatmul.f32.gmra.mxu0 %v1151
        %v1581 = vpop.f32.mrf.mxu0
        %v1582 = vadd.f32 %v1373, %v1581
        %1583 = vmatmul.f32.gmra.mxu0 %v1155
        %v1584 = vpop.f32.mrf.mxu0
        %v1585 = vadd.f32 %v1376, %v1584
        %1586 = vmatmul.f32.gmra.mxu0 %v1159
        %v1587 = vpop.f32.mrf.mxu0
        %v1588 = vadd.f32 %v1379, %v1587
        %1589 = vmatmul.f32.gmra.mxu0 %v1163
        %v1590 = vpop.f32.mrf.mxu0
        %v1591 = vadd.f32 %v1382, %v1590
        %1592 = vmatmul.f32.gmra.mxu0 %v1167
        %v1593 = vpop.f32.mrf.mxu0
        %v1594 = vadd.f32 %v1385, %v1593
        %1595 = vmatmul.f32.gmra.mxu0 %v1171
        %v1596 = vpop.f32.mrf.mxu0
        %v1597 = vadd.f32 %v1388, %v1596
        %1598 = vmatmul.f32.gmra.mxu0 %v1175
        %v1599 = vpop.f32.mrf.mxu0
        %v1600 = vadd.f32 %v1391, %v1599
        %1601 = vmatmul.f32.gmra.mxu0 %v1179
        %v1602 = vpop.f32.mrf.mxu0
        %v1603 = vadd.f32 %v1394, %v1602
        %1604 = vmatmul.f32.gmra.mxu0 %v1183
        %v1605 = vpop.f32.mrf.mxu0
        %v1606 = vadd.f32 %v1397, %v1605
        %1607 = vmatmul.f32.gmra.mxu0 %v1187
        %v1608 = vpop.f32.mrf.mxu0
        %v1609 = vadd.f32 %v1400, %v1608
        %1610 = vmatmul.f32.gmra.mxu0 %v1191
        %v1611 = vpop.f32.mrf.mxu0
        %v1612 = vadd.f32 %v1403, %v1611
        %1613 = vmatmul.f32.gmra.mxu0 %v1195
        %v1614 = vpop.f32.mrf.mxu0
        %v1615 = vadd.f32 %v1406, %v1614
        %1616 = vmatmul.f32.gmra.mxu0 %v1199
        %v1617 = vpop.f32.mrf.mxu0
        %v1618 = vadd.f32 %v1409, %v1617
        %1619 = vdwg.mxu0
        %1620 = vmatpush.msra.mxu0 %v865
        %1621 = vmatpush.msra.mxu0 %v864
        %1622 = vmatpush.msra.mxu0 %v863
        %1623 = vmatpush.msra.mxu0 %v862
        %1624 = vmatpush.msra.mxu0 %v861
        %1625 = vmatpush.msra.mxu0 %v860
        %1626 = vmatpush.msra.mxu0 %v859
        %1627 = vmatpush.msra.mxu0 %v858
        %1628 = vmatpush.msra.mxu0 %v857
        %1629 = vmatpush.msra.mxu0 %v856
        %1630 = vmatpush.msra.mxu0 %v855
        %1631 = vmatpush.msra.mxu0 %v854
        %1632 = vmatpush.msra.mxu0 %v853
        %1633 = vmatpush.msra.mxu0 %v852
        %1634 = vmatpush.msra.mxu0 %v851
        %1635 = vmatpush.msra.mxu0 %v850
        %1636 = vmatmul.f32.gmra.mxu0 %v948
        %v1637 = vpop.f32.mrf.mxu0
        %v1638 = vadd.f32 %v1429, %v1637
        %1639 = vmatmul.f32.gmra.mxu0 %v952
        %v1640 = vpop.f32.mrf.mxu0
        %v1641 = vadd.f32 %v1432, %v1640
        %1642 = vmatmul.f32.gmra.mxu0 %v956
        %v1643 = vpop.f32.mrf.mxu0
        %v1644 = vadd.f32 %v1435, %v1643
        %1645 = vmatmul.f32.gmra.mxu0 %v960
        %v1646 = vpop.f32.mrf.mxu0
        %v1647 = vadd.f32 %v1438, %v1646
        %1648 = vmatmul.f32.gmra.mxu0 %v964
        %v1649 = vpop.f32.mrf.mxu0
        %v1650 = vadd.f32 %v1441, %v1649
        %1651 = vmatmul.f32.gmra.mxu0 %v968
        %v1652 = vpop.f32.mrf.mxu0
        %v1653 = vadd.f32 %v1444, %v1652
        %1654 = vmatmul.f32.gmra.mxu0 %v972
        %v1655 = vpop.f32.mrf.mxu0
        %v1656 = vadd.f32 %v1447, %v1655
        %1657 = vmatmul.f32.gmra.mxu0 %v976
        %v1658 = vpop.f32.mrf.mxu0
        %v1659 = vadd.f32 %v1450, %v1658
        %1660 = vmatmul.f32.gmra.mxu0 %v980
        %v1661 = vpop.f32.mrf.mxu0
        %v1662 = vadd.f32 %v1453, %v1661
        %1663 = vmatmul.f32.gmra.mxu0 %v984
        %v1664 = vpop.f32.mrf.mxu0
        %v1665 = vadd.f32 %v1456, %v1664
        %1666 = vmatmul.f32.gmra.mxu0 %v988
        %v1667 = vpop.f32.mrf.mxu0
        %v1668 = vadd.f32 %v1459, %v1667
        %1669 = vmatmul.f32.gmra.mxu0 %v992
        %v1670 = vpop.f32.mrf.mxu0
        %v1671 = vadd.f32 %v1462, %v1670
        %1672 = vmatmul.f32.gmra.mxu0 %v996
        %v1673 = vpop.f32.mrf.mxu0
        %v1674 = vadd.f32 %v1465, %v1673
        %1675 = vmatmul.f32.gmra.mxu0 %v1000
        %v1676 = vpop.f32.mrf.mxu0
        %v1677 = vadd.f32 %v1468, %v1676
        %1678 = vmatmul.f32.gmra.mxu0 %v1004
        %v1679 = vpop.f32.mrf.mxu0
        %v1680 = vadd.f32 %v1471, %v1679
        %1681 = vmatmul.f32.gmra.mxu0 %v1008
        %v1682 = vpop.f32.mrf.mxu0
        %v1683 = vadd.f32 %v1474, %v1682
        %1684 = vmatmul.f32.gmra.mxu0 %v1012
        %v1685 = vpop.f32.mrf.mxu0
        %v1686 = vadd.f32 %v1477, %v1685
        %1687 = vmatmul.f32.gmra.mxu0 %v1016
        %v1688 = vpop.f32.mrf.mxu0
        %v1689 = vadd.f32 %v1480, %v1688
        %1690 = vmatmul.f32.gmra.mxu0 %v1020
        %v1691 = vpop.f32.mrf.mxu0
        %v1692 = vadd.f32 %v1483, %v1691
        %1693 = vmatmul.f32.gmra.mxu0 %v1024
        %v1694 = vpop.f32.mrf.mxu0
        %v1695 = vadd.f32 %v1486, %v1694
        %1696 = vmatmul.f32.gmra.mxu0 %v1028
        %v1697 = vpop.f32.mrf.mxu0
        %v1698 = vadd.f32 %v1489, %v1697
        %1699 = vmatmul.f32.gmra.mxu0 %v1032
        %v1700 = vpop.f32.mrf.mxu0
        %v1701 = vadd.f32 %v1492, %v1700
        %1702 = vmatmul.f32.gmra.mxu0 %v1036
        %v1703 = vpop.f32.mrf.mxu0
        %v1704 = vadd.f32 %v1495, %v1703
        %1705 = vmatmul.f32.gmra.mxu0 %v1040
        %v1706 = vpop.f32.mrf.mxu0
        %v1707 = vadd.f32 %v1498, %v1706
        %1708 = vmatmul.f32.gmra.mxu0 %v1044
        %v1709 = vpop.f32.mrf.mxu0
        %v1710 = vadd.f32 %v1501, %v1709
        %1711 = vmatmul.f32.gmra.mxu0 %v1048
        %v1712 = vpop.f32.mrf.mxu0
        %v1713 = vadd.f32 %v1504, %v1712
        %1714 = vmatmul.f32.gmra.mxu0 %v1052
        %v1715 = vpop.f32.mrf.mxu0
        %v1716 = vadd.f32 %v1507, %v1715
        %1717 = vmatmul.f32.gmra.mxu0 %v1056
        %v1718 = vpop.f32.mrf.mxu0
        %v1719 = vadd.f32 %v1510, %v1718
        %1720 = vmatmul.f32.gmra.mxu0 %v1060
        %v1721 = vpop.f32.mrf.mxu0
        %v1722 = vadd.f32 %v1513, %v1721
        %1723 = vmatmul.f32.gmra.mxu0 %v1064
        %v1724 = vpop.f32.mrf.mxu0
        %v1725 = vadd.f32 %v1516, %v1724
        %1726 = vmatmul.f32.gmra.mxu0 %v1068
        %v1727 = vpop.f32.mrf.mxu0
        %v1728 = vadd.f32 %v1519, %v1727
        %1729 = vmatmul.f32.gmra.mxu0 %v1072
        %v1730 = vpop.f32.mrf.mxu0
        %v1731 = vadd.f32 %v1522, %v1730
        %1732 = vmatmul.f32.gmra.mxu0 %v1076
        %v1733 = vpop.f32.mrf.mxu0
        %v1734 = vadd.f32 %v1525, %v1733
        %1735 = vmatmul.f32.gmra.mxu0 %v1080
        %v1736 = vpop.f32.mrf.mxu0
        %v1737 = vadd.f32 %v1528, %v1736
        %1738 = vmatmul.f32.gmra.mxu0 %v1084
        %v1739 = vpop.f32.mrf.mxu0
        %v1740 = vadd.f32 %v1531, %v1739
        %1741 = vmatmul.f32.gmra.mxu0 %v1088
        %v1742 = vpop.f32.mrf.mxu0
        %v1743 = vadd.f32 %v1534, %v1742
        %1744 = vmatmul.f32.gmra.mxu0 %v1092
        %v1745 = vpop.f32.mrf.mxu0
        %v1746 = vadd.f32 %v1537, %v1745
        %1747 = vmatmul.f32.gmra.mxu0 %v1096
        %v1748 = vpop.f32.mrf.mxu0
        %v1749 = vadd.f32 %v1540, %v1748
        %1750 = vmatmul.f32.gmra.mxu0 %v1100
        %v1751 = vpop.f32.mrf.mxu0
        %v1752 = vadd.f32 %v1543, %v1751
        %1753 = vmatmul.f32.gmra.mxu0 %v1104
        %v1754 = vpop.f32.mrf.mxu0
        %v1755 = vadd.f32 %v1546, %v1754
        %1756 = vmatmul.f32.gmra.mxu0 %v1108
        %v1757 = vpop.f32.mrf.mxu0
        %v1758 = vadd.f32 %v1549, %v1757
        %1759 = vmatmul.f32.gmra.mxu0 %v1112
        %v1760 = vpop.f32.mrf.mxu0
        %v1761 = vadd.f32 %v1552, %v1760
        %1762 = vmatmul.f32.gmra.mxu0 %v1116
        %v1763 = vpop.f32.mrf.mxu0
        %v1764 = vadd.f32 %v1555, %v1763
        %1765 = vmatmul.f32.gmra.mxu0 %v1120
        %v1766 = vpop.f32.mrf.mxu0
        %v1767 = vadd.f32 %v1558, %v1766
        %1768 = vmatmul.f32.gmra.mxu0 %v1124
        %v1769 = vpop.f32.mrf.mxu0
        %v1770 = vadd.f32 %v1561, %v1769
        %1771 = vmatmul.f32.gmra.mxu0 %v1128
        %v1772 = vpop.f32.mrf.mxu0
        %v1773 = vadd.f32 %v1564, %v1772
        %1774 = vmatmul.f32.gmra.mxu0 %v1132
        %v1775 = vpop.f32.mrf.mxu0
        %v1776 = vadd.f32 %v1567, %v1775
        %1777 = vmatmul.f32.gmra.mxu0 %v1136
        %v1778 = vpop.f32.mrf.mxu0
        %v1779 = vadd.f32 %v1570, %v1778
        %1780 = vmatmul.f32.gmra.mxu0 %v1140
        %v1781 = vpop.f32.mrf.mxu0
        %v1782 = vadd.f32 %v1573, %v1781
        %1783 = vmatmul.f32.gmra.mxu0 %v1144
        %v1784 = vpop.f32.mrf.mxu0
        %v1785 = vadd.f32 %v1576, %v1784
        %1786 = vmatmul.f32.gmra.mxu0 %v1148
        %v1787 = vpop.f32.mrf.mxu0
        %v1788 = vadd.f32 %v1579, %v1787
        %1789 = vmatmul.f32.gmra.mxu0 %v1152
        %v1790 = vpop.f32.mrf.mxu0
        %v1791 = vadd.f32 %v1582, %v1790
        %1792 = vmatmul.f32.gmra.mxu0 %v1156
        %v1793 = vpop.f32.mrf.mxu0
        %v1794 = vadd.f32 %v1585, %v1793
        %1795 = vmatmul.f32.gmra.mxu0 %v1160
        %v1796 = vpop.f32.mrf.mxu0
        %v1797 = vadd.f32 %v1588, %v1796
        %1798 = vmatmul.f32.gmra.mxu0 %v1164
        %v1799 = vpop.f32.mrf.mxu0
        %v1800 = vadd.f32 %v1591, %v1799
        %1801 = vmatmul.f32.gmra.mxu0 %v1168
        %v1802 = vpop.f32.mrf.mxu0
        %v1803 = vadd.f32 %v1594, %v1802
        %1804 = vmatmul.f32.gmra.mxu0 %v1172
        %v1805 = vpop.f32.mrf.mxu0
        %v1806 = vadd.f32 %v1597, %v1805
        %1807 = vmatmul.f32.gmra.mxu0 %v1176
        %v1808 = vpop.f32.mrf.mxu0
        %v1809 = vadd.f32 %v1600, %v1808
        %1810 = vmatmul.f32.gmra.mxu0 %v1180
        %v1811 = vpop.f32.mrf.mxu0
        %v1812 = vadd.f32 %v1603, %v1811
        %1813 = vmatmul.f32.gmra.mxu0 %v1184
        %v1814 = vpop.f32.mrf.mxu0
        %v1815 = vadd.f32 %v1606, %v1814
        %1816 = vmatmul.f32.gmra.mxu0 %v1188
        %v1817 = vpop.f32.mrf.mxu0
        %v1818 = vadd.f32 %v1609, %v1817
        %1819 = vmatmul.f32.gmra.mxu0 %v1192
        %v1820 = vpop.f32.mrf.mxu0
        %v1821 = vadd.f32 %v1612, %v1820
        %1822 = vmatmul.f32.gmra.mxu0 %v1196
        %v1823 = vpop.f32.mrf.mxu0
        %v1824 = vadd.f32 %v1615, %v1823
        %1825 = vmatmul.f32.gmra.mxu0 %v1200
        %v1826 = vpop.f32.mrf.mxu0
        %v1827 = vadd.f32 %v1618, %v1826
        %1828 = vdwg.mxu0
        %1829 = vmatpush.msra.mxu0 %v881
        %1830 = vmatpush.msra.mxu0 %v880
        %1831 = vmatpush.msra.mxu0 %v879
        %1832 = vmatpush.msra.mxu0 %v878
        %1833 = vmatpush.msra.mxu0 %v877
        %1834 = vmatpush.msra.mxu0 %v876
        %1835 = vmatpush.msra.mxu0 %v875
        %1836 = vmatpush.msra.mxu0 %v874
        %1837 = vmatpush.msra.mxu0 %v873
        %1838 = vmatpush.msra.mxu0 %v872
        %1839 = vmatpush.msra.mxu0 %v871
        %1840 = vmatpush.msra.mxu0 %v870
        %1841 = vmatpush.msra.mxu0 %v869
        %1842 = vmatpush.msra.mxu0 %v868
        %1843 = vmatpush.msra.mxu0 %v867
        %1844 = vmatpush.msra.mxu0 %v866
        %1845 = vmatmul.f32.gmra.mxu0 %v949
        %v1846 = vpop.f32.mrf.mxu0
        %v1847 = vadd.f32 %v1638, %v1846
        %1848 = vmatmul.f32.gmra.mxu0 %v953
        %v1849 = vpop.f32.mrf.mxu0
        %v1850 = vadd.f32 %v1641, %v1849
        %1851 = vmatmul.f32.gmra.mxu0 %v957
        %v1852 = vpop.f32.mrf.mxu0
        %v1853 = vadd.f32 %v1644, %v1852
        %1854 = vmatmul.f32.gmra.mxu0 %v961
        %v1855 = vpop.f32.mrf.mxu0
        %v1856 = vadd.f32 %v1647, %v1855
        %1857 = vmatmul.f32.gmra.mxu0 %v965
        %v1858 = vpop.f32.mrf.mxu0
        %v1859 = vadd.f32 %v1650, %v1858
        %1860 = vmatmul.f32.gmra.mxu0 %v969
        %v1861 = vpop.f32.mrf.mxu0
        %v1862 = vadd.f32 %v1653, %v1861
        %1863 = vmatmul.f32.gmra.mxu0 %v973
        %v1864 = vpop.f32.mrf.mxu0
        %v1865 = vadd.f32 %v1656, %v1864
        %1866 = vmatmul.f32.gmra.mxu0 %v977
        %v1867 = vpop.f32.mrf.mxu0
        %v1868 = vadd.f32 %v1659, %v1867
        %1869 = vmatmul.f32.gmra.mxu0 %v981
        %v1870 = vpop.f32.mrf.mxu0
        %v1871 = vadd.f32 %v1662, %v1870
        %1872 = vmatmul.f32.gmra.mxu0 %v985
        %v1873 = vpop.f32.mrf.mxu0
        %v1874 = vadd.f32 %v1665, %v1873
        %1875 = vmatmul.f32.gmra.mxu0 %v989
        %v1876 = vpop.f32.mrf.mxu0
        %v1877 = vadd.f32 %v1668, %v1876
        %1878 = vmatmul.f32.gmra.mxu0 %v993
        %v1879 = vpop.f32.mrf.mxu0
        %v1880 = vadd.f32 %v1671, %v1879
        %1881 = vmatmul.f32.gmra.mxu0 %v997
        %v1882 = vpop.f32.mrf.mxu0
        %v1883 = vadd.f32 %v1674, %v1882
        %1884 = vmatmul.f32.gmra.mxu0 %v1001
        %v1885 = vpop.f32.mrf.mxu0
        %v1886 = vadd.f32 %v1677, %v1885
        %1887 = vmatmul.f32.gmra.mxu0 %v1005
        %v1888 = vpop.f32.mrf.mxu0
        %v1889 = vadd.f32 %v1680, %v1888
        %1890 = vmatmul.f32.gmra.mxu0 %v1009
        %v1891 = vpop.f32.mrf.mxu0
        %v1892 = vadd.f32 %v1683, %v1891
        %1893 = vmatmul.f32.gmra.mxu0 %v1013
        %v1894 = vpop.f32.mrf.mxu0
        %v1895 = vadd.f32 %v1686, %v1894
        %1896 = vmatmul.f32.gmra.mxu0 %v1017
        %v1897 = vpop.f32.mrf.mxu0
        %v1898 = vadd.f32 %v1689, %v1897
        %1899 = vmatmul.f32.gmra.mxu0 %v1021
        %v1900 = vpop.f32.mrf.mxu0
        %v1901 = vadd.f32 %v1692, %v1900
        %1902 = vmatmul.f32.gmra.mxu0 %v1025
        %v1903 = vpop.f32.mrf.mxu0
        %v1904 = vadd.f32 %v1695, %v1903
        %1905 = vmatmul.f32.gmra.mxu0 %v1029
        %v1906 = vpop.f32.mrf.mxu0
        %v1907 = vadd.f32 %v1698, %v1906
        %1908 = vmatmul.f32.gmra.mxu0 %v1033
        %v1909 = vpop.f32.mrf.mxu0
        %v1910 = vadd.f32 %v1701, %v1909
        %1911 = vmatmul.f32.gmra.mxu0 %v1037
        %v1912 = vpop.f32.mrf.mxu0
        %v1913 = vadd.f32 %v1704, %v1912
        %1914 = vmatmul.f32.gmra.mxu0 %v1041
        %v1915 = vpop.f32.mrf.mxu0
        %v1916 = vadd.f32 %v1707, %v1915
        %1917 = vmatmul.f32.gmra.mxu0 %v1045
        %v1918 = vpop.f32.mrf.mxu0
        %v1919 = vadd.f32 %v1710, %v1918
        %1920 = vmatmul.f32.gmra.mxu0 %v1049
        %v1921 = vpop.f32.mrf.mxu0
        %v1922 = vadd.f32 %v1713, %v1921
        %1923 = vmatmul.f32.gmra.mxu0 %v1053
        %v1924 = vpop.f32.mrf.mxu0
        %v1925 = vadd.f32 %v1716, %v1924
        %1926 = vmatmul.f32.gmra.mxu0 %v1057
        %v1927 = vpop.f32.mrf.mxu0
        %v1928 = vadd.f32 %v1719, %v1927
        %1929 = vmatmul.f32.gmra.mxu0 %v1061
        %v1930 = vpop.f32.mrf.mxu0
        %v1931 = vadd.f32 %v1722, %v1930
        %1932 = vmatmul.f32.gmra.mxu0 %v1065
        %v1933 = vpop.f32.mrf.mxu0
        %v1934 = vadd.f32 %v1725, %v1933
        %1935 = vmatmul.f32.gmra.mxu0 %v1069
        %v1936 = vpop.f32.mrf.mxu0
        %v1937 = vadd.f32 %v1728, %v1936
        %1938 = vmatmul.f32.gmra.mxu0 %v1073
        %v1939 = vpop.f32.mrf.mxu0
        %v1940 = vadd.f32 %v1731, %v1939
        %1941 = vmatmul.f32.gmra.mxu0 %v1077
        %v1942 = vpop.f32.mrf.mxu0
        %v1943 = vadd.f32 %v1734, %v1942
        %1944 = vmatmul.f32.gmra.mxu0 %v1081
        %v1945 = vpop.f32.mrf.mxu0
        %v1946 = vadd.f32 %v1737, %v1945
        %1947 = vmatmul.f32.gmra.mxu0 %v1085
        %v1948 = vpop.f32.mrf.mxu0
        %v1949 = vadd.f32 %v1740, %v1948
        %1950 = vmatmul.f32.gmra.mxu0 %v1089
        %v1951 = vpop.f32.mrf.mxu0
        %v1952 = vadd.f32 %v1743, %v1951
        %1953 = vmatmul.f32.gmra.mxu0 %v1093
        %v1954 = vpop.f32.mrf.mxu0
        %v1955 = vadd.f32 %v1746, %v1954
        %1956 = vmatmul.f32.gmra.mxu0 %v1097
        %v1957 = vpop.f32.mrf.mxu0
        %v1958 = vadd.f32 %v1749, %v1957
        %1959 = vmatmul.f32.gmra.mxu0 %v1101
        %v1960 = vpop.f32.mrf.mxu0
        %v1961 = vadd.f32 %v1752, %v1960
        %1962 = vmatmul.f32.gmra.mxu0 %v1105
        %v1963 = vpop.f32.mrf.mxu0
        %v1964 = vadd.f32 %v1755, %v1963
        %1965 = vmatmul.f32.gmra.mxu0 %v1109
        %v1966 = vpop.f32.mrf.mxu0
        %v1967 = vadd.f32 %v1758, %v1966
        %1968 = vmatmul.f32.gmra.mxu0 %v1113
        %v1969 = vpop.f32.mrf.mxu0
        %v1970 = vadd.f32 %v1761, %v1969
        %1971 = vmatmul.f32.gmra.mxu0 %v1117
        %v1972 = vpop.f32.mrf.mxu0
        %v1973 = vadd.f32 %v1764, %v1972
        %1974 = vmatmul.f32.gmra.mxu0 %v1121
        %v1975 = vpop.f32.mrf.mxu0
        %v1976 = vadd.f32 %v1767, %v1975
        %1977 = vmatmul.f32.gmra.mxu0 %v1125
        %v1978 = vpop.f32.mrf.mxu0
        %v1979 = vadd.f32 %v1770, %v1978
        %1980 = vmatmul.f32.gmra.mxu0 %v1129
        %v1981 = vpop.f32.mrf.mxu0
        %v1982 = vadd.f32 %v1773, %v1981
        %1983 = vmatmul.f32.gmra.mxu0 %v1133
        %v1984 = vpop.f32.mrf.mxu0
        %v1985 = vadd.f32 %v1776, %v1984
        %1986 = vmatmul.f32.gmra.mxu0 %v1137
        %v1987 = vpop.f32.mrf.mxu0
        %v1988 = vadd.f32 %v1779, %v1987
        %1989 = vmatmul.f32.gmra.mxu0 %v1141
        %v1990 = vpop.f32.mrf.mxu0
        %v1991 = vadd.f32 %v1782, %v1990
        %1992 = vmatmul.f32.gmra.mxu0 %v1145
        %v1993 = vpop.f32.mrf.mxu0
        %v1994 = vadd.f32 %v1785, %v1993
        %1995 = vmatmul.f32.gmra.mxu0 %v1149
        %v1996 = vpop.f32.mrf.mxu0
        %v1997 = vadd.f32 %v1788, %v1996
        %1998 = vmatmul.f32.gmra.mxu0 %v1153
        %v1999 = vpop.f32.mrf.mxu0
        %v2000 = vadd.f32 %v1791, %v1999
        %2001 = vmatmul.f32.gmra.mxu0 %v1157
        %v2002 = vpop.f32.mrf.mxu0
        %v2003 = vadd.f32 %v1794, %v2002
        %2004 = vmatmul.f32.gmra.mxu0 %v1161
        %v2005 = vpop.f32.mrf.mxu0
        %v2006 = vadd.f32 %v1797, %v2005
        %2007 = vmatmul.f32.gmra.mxu0 %v1165
        %v2008 = vpop.f32.mrf.mxu0
        %v2009 = vadd.f32 %v1800, %v2008
        %2010 = vmatmul.f32.gmra.mxu0 %v1169
        %v2011 = vpop.f32.mrf.mxu0
        %v2012 = vadd.f32 %v1803, %v2011
        %2013 = vmatmul.f32.gmra.mxu0 %v1173
        %v2014 = vpop.f32.mrf.mxu0
        %v2015 = vadd.f32 %v1806, %v2014
        %2016 = vmatmul.f32.gmra.mxu0 %v1177
        %v2017 = vpop.f32.mrf.mxu0
        %v2018 = vadd.f32 %v1809, %v2017
        %2019 = vmatmul.f32.gmra.mxu0 %v1181
        %v2020 = vpop.f32.mrf.mxu0
        %v2021 = vadd.f32 %v1812, %v2020
        %2022 = vmatmul.f32.gmra.mxu0 %v1185
        %v2023 = vpop.f32.mrf.mxu0
        %v2024 = vadd.f32 %v1815, %v2023
        %2025 = vmatmul.f32.gmra.mxu0 %v1189
        %v2026 = vpop.f32.mrf.mxu0
        %v2027 = vadd.f32 %v1818, %v2026
        %2028 = vmatmul.f32.gmra.mxu0 %v1193
        %v2029 = vpop.f32.mrf.mxu0
        %v2030 = vadd.f32 %v1821, %v2029
        %2031 = vmatmul.f32.gmra.mxu0 %v1197
        %v2032 = vpop.f32.mrf.mxu0
        %v2033 = vadd.f32 %v1824, %v2032
        %2034 = vmatmul.f32.gmra.mxu0 %v1201
        %v2035 = vpop.f32.mrf.mxu0
        %v2036 = vadd.f32 %v1827, %v2035
        %2037 = vdwg.mxu0
        %v2038 = vadd.f32 %v882, %v1847
        %v2039 = vadd.f32 %v883, %v1850
        %v2040 = vadd.f32 %v884, %v1853
        %v2041 = vadd.f32 %v885, %v1856
        %v2042 = vadd.f32 %v886, %v1859
        %v2043 = vadd.f32 %v887, %v1862
        %v2044 = vadd.f32 %v888, %v1865
        %v2045 = vadd.f32 %v889, %v1868
        %v2046 = vadd.f32 %v890, %v1871
        %v2047 = vadd.f32 %v891, %v1874
        %v2048 = vadd.f32 %v892, %v1877
        %v2049 = vadd.f32 %v893, %v1880
        %v2050 = vadd.f32 %v894, %v1883
        %v2051 = vadd.f32 %v895, %v1886
        %v2052 = vadd.f32 %v896, %v1889
        %v2053 = vadd.f32 %v897, %v1892
        %v2054 = vadd.f32 %v898, %v1895
        %v2055 = vadd.f32 %v899, %v1898
        %v2056 = vadd.f32 %v900, %v1901
        %v2057 = vadd.f32 %v901, %v1904
        %v2058 = vadd.f32 %v902, %v1907
        %v2059 = vadd.f32 %v903, %v1910
        %v2060 = vadd.f32 %v904, %v1913
        %v2061 = vadd.f32 %v905, %v1916
        %v2062 = vadd.f32 %v906, %v1919
        %v2063 = vadd.f32 %v907, %v1922
        %v2064 = vadd.f32 %v908, %v1925
        %v2065 = vadd.f32 %v909, %v1928
        %v2066 = vadd.f32 %v910, %v1931
        %v2067 = vadd.f32 %v911, %v1934
        %v2068 = vadd.f32 %v912, %v1937
        %v2069 = vadd.f32 %v913, %v1940
        %v2070 = vadd.f32 %v914, %v1943
        %v2071 = vadd.f32 %v915, %v1946
        %v2072 = vadd.f32 %v916, %v1949
        %v2073 = vadd.f32 %v917, %v1952
        %v2074 = vadd.f32 %v918, %v1955
        %v2075 = vadd.f32 %v919, %v1958
        %v2076 = vadd.f32 %v920, %v1961
        %v2077 = vadd.f32 %v921, %v1964
        %v2078 = vadd.f32 %v922, %v1967
        %v2079 = vadd.f32 %v923, %v1970
        %v2080 = vadd.f32 %v924, %v1973
        %v2081 = vadd.f32 %v925, %v1976
        %v2082 = vadd.f32 %v926, %v1979
        %v2083 = vadd.f32 %v927, %v1982
        %v2084 = vadd.f32 %v928, %v1985
        %v2085 = vadd.f32 %v929, %v1988
        %v2086 = vadd.f32 %v930, %v1991
        %v2087 = vadd.f32 %v931, %v1994
        %v2088 = vadd.f32 %v932, %v1997
        %v2089 = vadd.f32 %v933, %v2000
        %v2090 = vadd.f32 %v934, %v2003
        %v2091 = vadd.f32 %v935, %v2006
        %v2092 = vadd.f32 %v936, %v2009
        %v2093 = vadd.f32 %v937, %v2012
        %v2094 = vadd.f32 %v938, %v2015
        %v2095 = vadd.f32 %v939, %v2018
        %v2096 = vadd.f32 %v940, %v2021
        %v2097 = vadd.f32 %v941, %v2024
        %v2098 = vadd.f32 %v942, %v2027
        %v2099 = vadd.f32 %v943, %v2030
        %v2100 = vadd.f32 %v944, %v2033
        %v2101 = vadd.f32 %v945, %v2036
        %2102 = vst [vmem:[#allocation2] sm:$0xff] %v2038
        %2103 = vst [vmem:[#allocation2 + $0x8] sm:$0xff] %v2039
        %2104 = vst [vmem:[#allocation2 + $0x10] sm:$0xff] %v2040
        %2105 = vst [vmem:[#allocation2 + $0x18] sm:$0xff] %v2041
        %2106 = vst [vmem:[#allocation2 + $0x20] sm:$0xff] %v2042
        %2107 = vst [vmem:[#allocation2 + $0x28] sm:$0xff] %v2043
        %2108 = vst [vmem:[#allocation2 + $0x30] sm:$0xff] %v2044
        %2109 = vst [vmem:[#allocation2 + $0x38] sm:$0xff] %v2045
        %2110 = vst [vmem:[#allocation2 + $0x40] sm:$0xff] %v2046
        %2111 = vst [vmem:[#allocation2 + $0x48] sm:$0xff] %v2047
        %2112 = vst [vmem:[#allocation2 + $0x50] sm:$0xff] %v2048
        %2113 = vst [vmem:[#allocation2 + $0x58] sm:$0xff] %v2049
        %2114 = vst [vmem:[#allocation2 + $0x60] sm:$0xff] %v2050
        %2115 = vst [vmem:[#allocation2 + $0x68] sm:$0xff] %v2051
        %2116 = vst [vmem:[#allocation2 + $0x70] sm:$0xff] %v2052
        %2117 = vst [vmem:[#allocation2 + $0x78] sm:$0xff] %v2053
        %2118 = vst [vmem:[#allocation2 + $0x80] sm:$0xff] %v2054
        %2119 = vst [vmem:[#allocation2 + $0x88] sm:$0xff] %v2055
        %2120 = vst [vmem:[#allocation2 + $0x90] sm:$0xff] %v2056
        %2121 = vst [vmem:[#allocation2 + $0x98] sm:$0xff] %v2057
        %2122 = vst [vmem:[#allocation2 + $0xa0] sm:$0xff] %v2058
        %2123 = vst [vmem:[#allocation2 + $0xa8] sm:$0xff] %v2059
        %2124 = vst [vmem:[#allocation2 + $0xb0] sm:$0xff] %v2060
        %2125 = vst [vmem:[#allocation2 + $0xb8] sm:$0xff] %v2061
        %2126 = vst [vmem:[#allocation2 + $0xc0] sm:$0xff] %v2062
        %2127 = vst [vmem:[#allocation2 + $0xc8] sm:$0xff] %v2063
        %2128 = vst [vmem:[#allocation2 + $0xd0] sm:$0xff] %v2064
        %2129 = vst [vmem:[#allocation2 + $0xd8] sm:$0xff] %v2065
        %2130 = vst [vmem:[#allocation2 + $0xe0] sm:$0xff] %v2066
        %2131 = vst [vmem:[#allocation2 + $0xe8] sm:$0xff] %v2067
        %2132 = vst [vmem:[#allocation2 + $0xf0] sm:$0xff] %v2068
        %2133 = vst [vmem:[#allocation2 + $0xf8] sm:$0xff] %v2069
        %2134 = vst [vmem:[#allocation2 + $0x100] sm:$0xff] %v2070
        %2135 = vst [vmem:[#allocation2 + $0x108] sm:$0xff] %v2071
        %2136 = vst [vmem:[#allocation2 + $0x110] sm:$0xff] %v2072
        %2137 = vst [vmem:[#allocation2 + $0x118] sm:$0xff] %v2073
        %2138 = vst [vmem:[#allocation2 + $0x120] sm:$0xff] %v2074
        %2139 = vst [vmem:[#allocation2 + $0x128] sm:$0xff] %v2075
        %2140 = vst [vmem:[#allocation2 + $0x130] sm:$0xff] %v2076
        %2141 = vst [vmem:[#allocation2 + $0x138] sm:$0xff] %v2077
        %2142 = vst [vmem:[#allocation2 + $0x140] sm:$0xff] %v2078
        %2143 = vst [vmem:[#allocation2 + $0x148] sm:$0xff] %v2079
        %2144 = vst [vmem:[#allocation2 + $0x150] sm:$0xff] %v2080
        %2145 = vst [vmem:[#allocation2 + $0x158] sm:$0xff] %v2081
        %2146 = vst [vmem:[#allocation2 + $0x160] sm:$0xff] %v2082
        %2147 = vst [vmem:[#allocation2 + $0x168] sm:$0xff] %v2083
        %2148 = vst [vmem:[#allocation2 + $0x170] sm:$0xff] %v2084
        %2149 = vst [vmem:[#allocation2 + $0x178] sm:$0xff] %v2085
        %2150 = vst [vmem:[#allocation2 + $0x180] sm:$0xff] %v2086
        %2151 = vst [vmem:[#allocation2 + $0x188] sm:$0xff] %v2087
        %2152 = vst [vmem:[#allocation2 + $0x190] sm:$0xff] %v2088
        %2153 = vst [vmem:[#allocation2 + $0x198] sm:$0xff] %v2089
        %2154 = vst [vmem:[#allocation2 + $0x1a0] sm:$0xff] %v2090
        %2155 = vst [vmem:[#allocation2 + $0x1a8] sm:$0xff] %v2091
        %2156 = vst [vmem:[#allocation2 + $0x1b0] sm:$0xff] %v2092
        %2157 = vst [vmem:[#allocation2 + $0x1b8] sm:$0xff] %v2093
        %2158 = vst [vmem:[#allocation2 + $0x1c0] sm:$0xff] %v2094
        %2159 = vst [vmem:[#allocation2 + $0x1c8] sm:$0xff] %v2095
        %2160 = vst [vmem:[#allocation2 + $0x1d0] sm:$0xff] %v2096
        %2161 = vst [vmem:[#allocation2 + $0x1d8] sm:$0xff] %v2097
        %2162 = vst [vmem:[#allocation2 + $0x1e0] sm:$0xff] %v2098
        %2163 = vst [vmem:[#allocation2 + $0x1e8] sm:$0xff] %v2099
        %2164 = vst [vmem:[#allocation2 + $0x1f0] sm:$0xff] %v2100
        %2165 = vst [vmem:[#allocation2 + $0x1f8] sm:$0xff] %v2101
        %p2166 = scmp.eq.s32.totalorder %s20, 1
        // Predicated region
        $region64: #{gpn_valuator_forward.4} parent=54 // pred_check
          %p2167 = pneg %p2166
        $region65: #{gpn_valuator_forward.4} parent=54 // pred_check_branch
          %2169 = sbr.rel (%p2167) target = $region67
        $region66: #{gpn_valuator_forward.4} parent=54 // pred_region
          %v2170 = vld [vmem:[#allocation2] sm:$0xff]
          %v2171 = vld [vmem:[#allocation2 + $0x8] sm:$0xff]
          %v2172 = vld [vmem:[#allocation2 + $0x10] sm:$0xff]
          %v2173 = vld [vmem:[#allocation2 + $0x18] sm:$0xff]
          %v2174 = vld [vmem:[#allocation2 + $0x20] sm:$0xff]
          %v2175 = vld [vmem:[#allocation2 + $0x28] sm:$0xff]
          %v2176 = vld [vmem:[#allocation2 + $0x30] sm:$0xff]
          %v2177 = vld [vmem:[#allocation2 + $0x38] sm:$0xff]
          %v2178 = vld [vmem:[#allocation2 + $0x40] sm:$0xff]
          %v2179 = vld [vmem:[#allocation2 + $0x48] sm:$0xff]
          %v2180 = vld [vmem:[#allocation2 + $0x50] sm:$0xff]
          %v2181 = vld [vmem:[#allocation2 + $0x58] sm:$0xff]
          %v2182 = vld [vmem:[#allocation2 + $0x60] sm:$0xff]
          %v2183 = vld [vmem:[#allocation2 + $0x68] sm:$0xff]
          %v2184 = vld [vmem:[#allocation2 + $0x70] sm:$0xff]
          %v2185 = vld [vmem:[#allocation2 + $0x78] sm:$0xff]
          %v2186 = vld [vmem:[#allocation2 + $0x80] sm:$0xff]
          %v2187 = vld [vmem:[#allocation2 + $0x88] sm:$0xff]
          %v2188 = vld [vmem:[#allocation2 + $0x90] sm:$0xff]
          %v2189 = vld [vmem:[#allocation2 + $0x98] sm:$0xff]
          %v2190 = vld [vmem:[#allocation2 + $0xa0] sm:$0xff]
          %v2191 = vld [vmem:[#allocation2 + $0xa8] sm:$0xff]
          %v2192 = vld [vmem:[#allocation2 + $0xb0] sm:$0xff]
          %v2193 = vld [vmem:[#allocation2 + $0xb8] sm:$0xff]
          %v2194 = vld [vmem:[#allocation2 + $0xc0] sm:$0xff]
          %v2195 = vld [vmem:[#allocation2 + $0xc8] sm:$0xff]
          %v2196 = vld [vmem:[#allocation2 + $0xd0] sm:$0xff]
          %v2197 = vld [vmem:[#allocation2 + $0xd8] sm:$0xff]
          %v2198 = vld [vmem:[#allocation2 + $0xe0] sm:$0xff]
          %v2199 = vld [vmem:[#allocation2 + $0xe8] sm:$0xff]
          %v2200 = vld [vmem:[#allocation2 + $0xf0] sm:$0xff]
          %v2201 = vld [vmem:[#allocation2 + $0xf8] sm:$0xff]
          %v2202 = vld [vmem:[#allocation2 + $0x100] sm:$0xff]
          %v2203 = vld [vmem:[#allocation2 + $0x108] sm:$0xff]
          %v2204 = vld [vmem:[#allocation2 + $0x110] sm:$0xff]
          %v2205 = vld [vmem:[#allocation2 + $0x118] sm:$0xff]
          %v2206 = vld [vmem:[#allocation2 + $0x120] sm:$0xff]
          %v2207 = vld [vmem:[#allocation2 + $0x128] sm:$0xff]
          %v2208 = vld [vmem:[#allocation2 + $0x130] sm:$0xff]
          %v2209 = vld [vmem:[#allocation2 + $0x138] sm:$0xff]
          %v2210 = vld [vmem:[#allocation2 + $0x140] sm:$0xff]
          %v2211 = vld [vmem:[#allocation2 + $0x148] sm:$0xff]
          %v2212 = vld [vmem:[#allocation2 + $0x150] sm:$0xff]
          %v2213 = vld [vmem:[#allocation2 + $0x158] sm:$0xff]
          %v2214 = vld [vmem:[#allocation2 + $0x160] sm:$0xff]
          %v2215 = vld [vmem:[#allocation2 + $0x168] sm:$0xff]
          %v2216 = vld [vmem:[#allocation2 + $0x170] sm:$0xff]
          %v2217 = vld [vmem:[#allocation2 + $0x178] sm:$0xff]
          %v2218 = vld [vmem:[#allocation2 + $0x180] sm:$0xff]
          %v2219 = vld [vmem:[#allocation2 + $0x188] sm:$0xff]
          %v2220 = vld [vmem:[#allocation2 + $0x190] sm:$0xff]
          %v2221 = vld [vmem:[#allocation2 + $0x198] sm:$0xff]
          %v2222 = vld [vmem:[#allocation2 + $0x1a0] sm:$0xff]
          %v2223 = vld [vmem:[#allocation2 + $0x1a8] sm:$0xff]
          %v2224 = vld [vmem:[#allocation2 + $0x1b0] sm:$0xff]
          %v2225 = vld [vmem:[#allocation2 + $0x1b8] sm:$0xff]
          %v2226 = vld [vmem:[#allocation2 + $0x1c0] sm:$0xff]
          %v2227 = vld [vmem:[#allocation2 + $0x1c8] sm:$0xff]
          %v2228 = vld [vmem:[#allocation2 + $0x1d0] sm:$0xff]
          %v2229 = vld [vmem:[#allocation2 + $0x1d8] sm:$0xff]
          %v2230 = vld [vmem:[#allocation2 + $0x1e0] sm:$0xff]
          %v2231 = vld [vmem:[#allocation2 + $0x1e8] sm:$0xff]
          %v2232 = vld [vmem:[#allocation2 + $0x1f0] sm:$0xff]
          %v2233 = vld [vmem:[#allocation2 + $0x1f8] sm:$0xff]
          %v2234 = vld [vmem:[%s2] sm:$0x1]
          %v2236 = vperm.slane %v2234, 0
          %v2238 = vadd.f32 %v2170, %v2236
          %v2239 = vadd.f32 %v2171, %v2236
          %v2240 = vadd.f32 %v2172, %v2236
          %v2241 = vadd.f32 %v2173, %v2236
          %v2242 = vadd.f32 %v2174, %v2236
          %v2243 = vadd.f32 %v2175, %v2236
          %v2244 = vadd.f32 %v2176, %v2236
          %v2245 = vadd.f32 %v2177, %v2236
          %v2246 = vadd.f32 %v2178, %v2236
          %v2247 = vadd.f32 %v2179, %v2236
          %v2248 = vadd.f32 %v2180, %v2236
          %v2249 = vadd.f32 %v2181, %v2236
          %v2250 = vadd.f32 %v2182, %v2236
          %v2251 = vadd.f32 %v2183, %v2236
          %v2252 = vadd.f32 %v2184, %v2236
          %v2253 = vadd.f32 %v2185, %v2236
          %v2254 = vadd.f32 %v2186, %v2236
          %v2255 = vadd.f32 %v2187, %v2236
          %v2256 = vadd.f32 %v2188, %v2236
          %v2257 = vadd.f32 %v2189, %v2236
          %v2258 = vadd.f32 %v2190, %v2236
          %v2259 = vadd.f32 %v2191, %v2236
          %v2260 = vadd.f32 %v2192, %v2236
          %v2261 = vadd.f32 %v2193, %v2236
          %v2262 = vadd.f32 %v2194, %v2236
          %v2263 = vadd.f32 %v2195, %v2236
          %v2264 = vadd.f32 %v2196, %v2236
          %v2265 = vadd.f32 %v2197, %v2236
          %v2266 = vadd.f32 %v2198, %v2236
          %v2267 = vadd.f32 %v2199, %v2236
          %v2268 = vadd.f32 %v2200, %v2236
          %v2269 = vadd.f32 %v2201, %v2236
          %v2270 = vadd.f32 %v2202, %v2236
          %v2271 = vadd.f32 %v2203, %v2236
          %v2272 = vadd.f32 %v2204, %v2236
          %v2273 = vadd.f32 %v2205, %v2236
          %v2274 = vadd.f32 %v2206, %v2236
          %v2275 = vadd.f32 %v2207, %v2236
          %v2276 = vadd.f32 %v2208, %v2236
          %v2277 = vadd.f32 %v2209, %v2236
          %v2278 = vadd.f32 %v2210, %v2236
          %v2279 = vadd.f32 %v2211, %v2236
          %v2280 = vadd.f32 %v2212, %v2236
          %v2281 = vadd.f32 %v2213, %v2236
          %v2282 = vadd.f32 %v2214, %v2236
          %v2283 = vadd.f32 %v2215, %v2236
          %v2284 = vadd.f32 %v2216, %v2236
          %v2285 = vadd.f32 %v2217, %v2236
          %v2286 = vadd.f32 %v2218, %v2236
          %v2287 = vadd.f32 %v2219, %v2236
          %v2288 = vadd.f32 %v2220, %v2236
          %v2289 = vadd.f32 %v2221, %v2236
          %v2290 = vadd.f32 %v2222, %v2236
          %v2291 = vadd.f32 %v2223, %v2236
          %v2292 = vadd.f32 %v2224, %v2236
          %v2293 = vadd.f32 %v2225, %v2236
          %v2294 = vadd.f32 %v2226, %v2236
          %v2295 = vadd.f32 %v2227, %v2236
          %v2296 = vadd.f32 %v2228, %v2236
          %v2297 = vadd.f32 %v2229, %v2236
          %v2298 = vadd.f32 %v2230, %v2236
          %v2299 = vadd.f32 %v2231, %v2236
          %v2300 = vadd.f32 %v2232, %v2236
          %v2301 = vadd.f32 %v2233, %v2236
          %v2302 = vmax.f32 %v2238, 0.0
          %v2303 = vmax.f32 %v2239, 0.0
          %v2304 = vmax.f32 %v2240, 0.0
          %v2305 = vmax.f32 %v2241, 0.0
          %v2306 = vmax.f32 %v2242, 0.0
          %v2307 = vmax.f32 %v2243, 0.0
          %v2308 = vmax.f32 %v2244, 0.0
          %v2309 = vmax.f32 %v2245, 0.0
          %v2310 = vmax.f32 %v2246, 0.0
          %v2311 = vmax.f32 %v2247, 0.0
          %v2312 = vmax.f32 %v2248, 0.0
          %v2313 = vmax.f32 %v2249, 0.0
          %v2314 = vmax.f32 %v2250, 0.0
          %v2315 = vmax.f32 %v2251, 0.0
          %v2316 = vmax.f32 %v2252, 0.0
          %v2317 = vmax.f32 %v2253, 0.0
          %v2318 = vmax.f32 %v2254, 0.0
          %v2319 = vmax.f32 %v2255, 0.0
          %v2320 = vmax.f32 %v2256, 0.0
          %v2321 = vmax.f32 %v2257, 0.0
          %v2322 = vmax.f32 %v2258, 0.0
          %v2323 = vmax.f32 %v2259, 0.0
          %v2324 = vmax.f32 %v2260, 0.0
          %v2325 = vmax.f32 %v2261, 0.0
          %v2326 = vmax.f32 %v2262, 0.0
          %v2327 = vmax.f32 %v2263, 0.0
          %v2328 = vmax.f32 %v2264, 0.0
          %v2329 = vmax.f32 %v2265, 0.0
          %v2330 = vmax.f32 %v2266, 0.0
          %v2331 = vmax.f32 %v2267, 0.0
          %v2332 = vmax.f32 %v2268, 0.0
          %v2333 = vmax.f32 %v2269, 0.0
          %v2334 = vmax.f32 %v2270, 0.0
          %v2335 = vmax.f32 %v2271, 0.0
          %v2336 = vmax.f32 %v2272, 0.0
          %v2337 = vmax.f32 %v2273, 0.0
          %v2338 = vmax.f32 %v2274, 0.0
          %v2339 = vmax.f32 %v2275, 0.0
          %v2340 = vmax.f32 %v2276, 0.0
          %v2341 = vmax.f32 %v2277, 0.0
          %v2342 = vmax.f32 %v2278, 0.0
          %v2343 = vmax.f32 %v2279, 0.0
          %v2344 = vmax.f32 %v2280, 0.0
          %v2345 = vmax.f32 %v2281, 0.0
          %v2346 = vmax.f32 %v2282, 0.0
          %v2347 = vmax.f32 %v2283, 0.0
          %v2348 = vmax.f32 %v2284, 0.0
          %v2349 = vmax.f32 %v2285, 0.0
          %v2350 = vmax.f32 %v2286, 0.0
          %v2351 = vmax.f32 %v2287, 0.0
          %v2352 = vmax.f32 %v2288, 0.0
          %v2353 = vmax.f32 %v2289, 0.0
          %v2354 = vmax.f32 %v2290, 0.0
          %v2355 = vmax.f32 %v2291, 0.0
          %v2356 = vmax.f32 %v2292, 0.0
          %v2357 = vmax.f32 %v2293, 0.0
          %v2358 = vmax.f32 %v2294, 0.0
          %v2359 = vmax.f32 %v2295, 0.0
          %v2360 = vmax.f32 %v2296, 0.0
          %v2361 = vmax.f32 %v2297, 0.0
          %v2362 = vmax.f32 %v2298, 0.0
          %v2363 = vmax.f32 %v2299, 0.0
          %v2364 = vmax.f32 %v2300, 0.0
          %v2365 = vmax.f32 %v2301, 0.0
          %v2366 = vld [vmem:[%s3] sm:$0xff]
          %v2367 = vld [vmem:[%s3 + $0x8] sm:$0xff]
          %v2368 = vld [vmem:[%s3 + $0x10] sm:$0xff]
          %v2369 = vld [vmem:[%s3 + $0x18] sm:$0xff]
          %v2370 = vld [vmem:[%s3 + $0x20] sm:$0xff]
          %v2371 = vld [vmem:[%s3 + $0x28] sm:$0xff]
          %v2372 = vld [vmem:[%s3 + $0x30] sm:$0xff]
          %v2373 = vld [vmem:[%s3 + $0x38] sm:$0xff]
          %v2374 = vld [vmem:[%s3 + $0x40] sm:$0xff]
          %v2375 = vld [vmem:[%s3 + $0x48] sm:$0xff]
          %v2376 = vld [vmem:[%s3 + $0x50] sm:$0xff]
          %v2377 = vld [vmem:[%s3 + $0x58] sm:$0xff]
          %v2378 = vld [vmem:[%s3 + $0x60] sm:$0xff]
          %v2379 = vld [vmem:[%s3 + $0x68] sm:$0xff]
          %v2380 = vld [vmem:[%s3 + $0x70] sm:$0xff]
          %v2381 = vld [vmem:[%s3 + $0x78] sm:$0xff]
          %2382 = vmatpush.msra.mxu0 %v2381
          %2383 = vmatpush.msra.mxu0 %v2380
          %2384 = vmatpush.msra.mxu0 %v2379
          %2385 = vmatpush.msra.mxu0 %v2378
          %2386 = vmatpush.msra.mxu0 %v2377
          %2387 = vmatpush.msra.mxu0 %v2376
          %2388 = vmatpush.msra.mxu0 %v2375
          %2389 = vmatpush.msra.mxu0 %v2374
          %2390 = vmatpush.msra.mxu0 %v2373
          %2391 = vmatpush.msra.mxu0 %v2372
          %2392 = vmatpush.msra.mxu0 %v2371
          %2393 = vmatpush.msra.mxu0 %v2370
          %2394 = vmatpush.msra.mxu0 %v2369
          %2395 = vmatpush.msra.mxu0 %v2368
          %2396 = vmatpush.msra.mxu0 %v2367
          %2397 = vmatpush.msra.mxu0 %v2366
          %2398 = vmatmul.f32.gmra.mxu0 %v2302
          %v2399 = vpop.f32.mrf.mxu0
          %v2400 = vadd.f32 0.0, %v2399
          %2401 = vmatmul.f32.gmra.mxu0 %v2303
          %v2402 = vpop.f32.mrf.mxu0
          %v2403 = vadd.f32 0.0, %v2402
          %2404 = vmatmul.f32.gmra.mxu0 %v2304
          %v2405 = vpop.f32.mrf.mxu0
          %v2406 = vadd.f32 0.0, %v2405
          %2407 = vmatmul.f32.gmra.mxu0 %v2305
          %v2408 = vpop.f32.mrf.mxu0
          %v2409 = vadd.f32 0.0, %v2408
          %2410 = vmatmul.f32.gmra.mxu0 %v2306
          %v2411 = vpop.f32.mrf.mxu0
          %v2412 = vadd.f32 0.0, %v2411
          %2413 = vmatmul.f32.gmra.mxu0 %v2307
          %v2414 = vpop.f32.mrf.mxu0
          %v2415 = vadd.f32 0.0, %v2414
          %2416 = vmatmul.f32.gmra.mxu0 %v2308
          %v2417 = vpop.f32.mrf.mxu0
          %v2418 = vadd.f32 0.0, %v2417
          %2419 = vmatmul.f32.gmra.mxu0 %v2309
          %v2420 = vpop.f32.mrf.mxu0
          %v2421 = vadd.f32 0.0, %v2420
          %2422 = vmatmul.f32.gmra.mxu0 %v2310
          %v2423 = vpop.f32.mrf.mxu0
          %v2424 = vadd.f32 0.0, %v2423
          %2425 = vmatmul.f32.gmra.mxu0 %v2311
          %v2426 = vpop.f32.mrf.mxu0
          %v2427 = vadd.f32 0.0, %v2426
          %2428 = vmatmul.f32.gmra.mxu0 %v2312
          %v2429 = vpop.f32.mrf.mxu0
          %v2430 = vadd.f32 0.0, %v2429
          %2431 = vmatmul.f32.gmra.mxu0 %v2313
          %v2432 = vpop.f32.mrf.mxu0
          %v2433 = vadd.f32 0.0, %v2432
          %2434 = vmatmul.f32.gmra.mxu0 %v2314
          %v2435 = vpop.f32.mrf.mxu0
          %v2436 = vadd.f32 0.0, %v2435
          %2437 = vmatmul.f32.gmra.mxu0 %v2315
          %v2438 = vpop.f32.mrf.mxu0
          %v2439 = vadd.f32 0.0, %v2438
          %2440 = vmatmul.f32.gmra.mxu0 %v2316
          %v2441 = vpop.f32.mrf.mxu0
          %v2442 = vadd.f32 0.0, %v2441
          %2443 = vmatmul.f32.gmra.mxu0 %v2317
          %v2444 = vpop.f32.mrf.mxu0
          %v2445 = vadd.f32 0.0, %v2444
          %2446 = vmatmul.f32.gmra.mxu0 %v2318
          %v2447 = vpop.f32.mrf.mxu0
          %v2448 = vadd.f32 0.0, %v2447
          %2449 = vmatmul.f32.gmra.mxu0 %v2319
          %v2450 = vpop.f32.mrf.mxu0
          %v2451 = vadd.f32 0.0, %v2450
          %2452 = vmatmul.f32.gmra.mxu0 %v2320
          %v2453 = vpop.f32.mrf.mxu0
          %v2454 = vadd.f32 0.0, %v2453
          %2455 = vmatmul.f32.gmra.mxu0 %v2321
          %v2456 = vpop.f32.mrf.mxu0
          %v2457 = vadd.f32 0.0, %v2456
          %2458 = vmatmul.f32.gmra.mxu0 %v2322
          %v2459 = vpop.f32.mrf.mxu0
          %v2460 = vadd.f32 0.0, %v2459
          %2461 = vmatmul.f32.gmra.mxu0 %v2323
          %v2462 = vpop.f32.mrf.mxu0
          %v2463 = vadd.f32 0.0, %v2462
          %2464 = vmatmul.f32.gmra.mxu0 %v2324
          %v2465 = vpop.f32.mrf.mxu0
          %v2466 = vadd.f32 0.0, %v2465
          %2467 = vmatmul.f32.gmra.mxu0 %v2325
          %v2468 = vpop.f32.mrf.mxu0
          %v2469 = vadd.f32 0.0, %v2468
          %2470 = vmatmul.f32.gmra.mxu0 %v2326
          %v2471 = vpop.f32.mrf.mxu0
          %v2472 = vadd.f32 0.0, %v2471
          %2473 = vmatmul.f32.gmra.mxu0 %v2327
          %v2474 = vpop.f32.mrf.mxu0
          %v2475 = vadd.f32 0.0, %v2474
          %2476 = vmatmul.f32.gmra.mxu0 %v2328
          %v2477 = vpop.f32.mrf.mxu0
          %v2478 = vadd.f32 0.0, %v2477
          %2479 = vmatmul.f32.gmra.mxu0 %v2329
          %v2480 = vpop.f32.mrf.mxu0
          %v2481 = vadd.f32 0.0, %v2480
          %2482 = vmatmul.f32.gmra.mxu0 %v2330
          %v2483 = vpop.f32.mrf.mxu0
          %v2484 = vadd.f32 0.0, %v2483
          %2485 = vmatmul.f32.gmra.mxu0 %v2331
          %v2486 = vpop.f32.mrf.mxu0
          %v2487 = vadd.f32 0.0, %v2486
          %2488 = vmatmul.f32.gmra.mxu0 %v2332
          %v2489 = vpop.f32.mrf.mxu0
          %v2490 = vadd.f32 0.0, %v2489
          %2491 = vmatmul.f32.gmra.mxu0 %v2333
          %v2492 = vpop.f32.mrf.mxu0
          %v2493 = vadd.f32 0.0, %v2492
          %2494 = vmatmul.f32.gmra.mxu0 %v2334
          %v2495 = vpop.f32.mrf.mxu0
          %v2496 = vadd.f32 0.0, %v2495
          %2497 = vmatmul.f32.gmra.mxu0 %v2335
          %v2498 = vpop.f32.mrf.mxu0
          %v2499 = vadd.f32 0.0, %v2498
          %2500 = vmatmul.f32.gmra.mxu0 %v2336
          %v2501 = vpop.f32.mrf.mxu0
          %v2502 = vadd.f32 0.0, %v2501
          %2503 = vmatmul.f32.gmra.mxu0 %v2337
          %v2504 = vpop.f32.mrf.mxu0
          %v2505 = vadd.f32 0.0, %v2504
          %2506 = vmatmul.f32.gmra.mxu0 %v2338
          %v2507 = vpop.f32.mrf.mxu0
          %v2508 = vadd.f32 0.0, %v2507
          %2509 = vmatmul.f32.gmra.mxu0 %v2339
          %v2510 = vpop.f32.mrf.mxu0
          %v2511 = vadd.f32 0.0, %v2510
          %2512 = vmatmul.f32.gmra.mxu0 %v2340
          %v2513 = vpop.f32.mrf.mxu0
          %v2514 = vadd.f32 0.0, %v2513
          %2515 = vmatmul.f32.gmra.mxu0 %v2341
          %v2516 = vpop.f32.mrf.mxu0
          %v2517 = vadd.f32 0.0, %v2516
          %2518 = vmatmul.f32.gmra.mxu0 %v2342
          %v2519 = vpop.f32.mrf.mxu0
          %v2520 = vadd.f32 0.0, %v2519
          %2521 = vmatmul.f32.gmra.mxu0 %v2343
          %v2522 = vpop.f32.mrf.mxu0
          %v2523 = vadd.f32 0.0, %v2522
          %2524 = vmatmul.f32.gmra.mxu0 %v2344
          %v2525 = vpop.f32.mrf.mxu0
          %v2526 = vadd.f32 0.0, %v2525
          %2527 = vmatmul.f32.gmra.mxu0 %v2345
          %v2528 = vpop.f32.mrf.mxu0
          %v2529 = vadd.f32 0.0, %v2528
          %2530 = vmatmul.f32.gmra.mxu0 %v2346
          %v2531 = vpop.f32.mrf.mxu0
          %v2532 = vadd.f32 0.0, %v2531
          %2533 = vmatmul.f32.gmra.mxu0 %v2347
          %v2534 = vpop.f32.mrf.mxu0
          %v2535 = vadd.f32 0.0, %v2534
          %2536 = vmatmul.f32.gmra.mxu0 %v2348
          %v2537 = vpop.f32.mrf.mxu0
          %v2538 = vadd.f32 0.0, %v2537
          %2539 = vmatmul.f32.gmra.mxu0 %v2349
          %v2540 = vpop.f32.mrf.mxu0
          %v2541 = vadd.f32 0.0, %v2540
          %2542 = vmatmul.f32.gmra.mxu0 %v2350
          %v2543 = vpop.f32.mrf.mxu0
          %v2544 = vadd.f32 0.0, %v2543
          %2545 = vmatmul.f32.gmra.mxu0 %v2351
          %v2546 = vpop.f32.mrf.mxu0
          %v2547 = vadd.f32 0.0, %v2546
          %2548 = vmatmul.f32.gmra.mxu0 %v2352
          %v2549 = vpop.f32.mrf.mxu0
          %v2550 = vadd.f32 0.0, %v2549
          %2551 = vmatmul.f32.gmra.mxu0 %v2353
          %v2552 = vpop.f32.mrf.mxu0
          %v2553 = vadd.f32 0.0, %v2552
          %2554 = vmatmul.f32.gmra.mxu0 %v2354
          %v2555 = vpop.f32.mrf.mxu0
          %v2556 = vadd.f32 0.0, %v2555
          %2557 = vmatmul.f32.gmra.mxu0 %v2355
          %v2558 = vpop.f32.mrf.mxu0
          %v2559 = vadd.f32 0.0, %v2558
          %2560 = vmatmul.f32.gmra.mxu0 %v2356
          %v2561 = vpop.f32.mrf.mxu0
          %v2562 = vadd.f32 0.0, %v2561
          %2563 = vmatmul.f32.gmra.mxu0 %v2357
          %v2564 = vpop.f32.mrf.mxu0
          %v2565 = vadd.f32 0.0, %v2564
          %2566 = vmatmul.f32.gmra.mxu0 %v2358
          %v2567 = vpop.f32.mrf.mxu0
          %v2568 = vadd.f32 0.0, %v2567
          %2569 = vmatmul.f32.gmra.mxu0 %v2359
          %v2570 = vpop.f32.mrf.mxu0
          %v2571 = vadd.f32 0.0, %v2570
          %2572 = vmatmul.f32.gmra.mxu0 %v2360
          %v2573 = vpop.f32.mrf.mxu0
          %v2574 = vadd.f32 0.0, %v2573
          %2575 = vmatmul.f32.gmra.mxu0 %v2361
          %v2576 = vpop.f32.mrf.mxu0
          %v2577 = vadd.f32 0.0, %v2576
          %2578 = vmatmul.f32.gmra.mxu0 %v2362
          %v2579 = vpop.f32.mrf.mxu0
          %v2580 = vadd.f32 0.0, %v2579
          %2581 = vmatmul.f32.gmra.mxu0 %v2363
          %v2582 = vpop.f32.mrf.mxu0
          %v2583 = vadd.f32 0.0, %v2582
          %2584 = vmatmul.f32.gmra.mxu0 %v2364
          %v2585 = vpop.f32.mrf.mxu0
          %v2586 = vadd.f32 0.0, %v2585
          %2587 = vmatmul.f32.gmra.mxu0 %v2365
          %v2588 = vpop.f32.mrf.mxu0
          %v2589 = vadd.f32 0.0, %v2588
          %2590 = vdwg.mxu0
          %2591 = vst [vmem:[%s746] sm:$0xff] %v2400
          %2592 = vst [vmem:[%s746 + $0x8] sm:$0xff] %v2403
          %2593 = vst [vmem:[%s746 + $0x10] sm:$0xff] %v2406
          %2594 = vst [vmem:[%s746 + $0x18] sm:$0xff] %v2409
          %2595 = vst [vmem:[%s746 + $0x20] sm:$0xff] %v2412
          %2596 = vst [vmem:[%s746 + $0x28] sm:$0xff] %v2415
          %2597 = vst [vmem:[%s746 + $0x30] sm:$0xff] %v2418
          %2598 = vst [vmem:[%s746 + $0x38] sm:$0xff] %v2421
          %2599 = vst [vmem:[%s746 + $0x40] sm:$0xff] %v2424
          %2600 = vst [vmem:[%s746 + $0x48] sm:$0xff] %v2427
          %2601 = vst [vmem:[%s746 + $0x50] sm:$0xff] %v2430
          %2602 = vst [vmem:[%s746 + $0x58] sm:$0xff] %v2433
          %2603 = vst [vmem:[%s746 + $0x60] sm:$0xff] %v2436
          %2604 = vst [vmem:[%s746 + $0x68] sm:$0xff] %v2439
          %2605 = vst [vmem:[%s746 + $0x70] sm:$0xff] %v2442
          %2606 = vst [vmem:[%s746 + $0x78] sm:$0xff] %v2445
          %2607 = vst [vmem:[%s746 + $0x80] sm:$0xff] %v2448
          %2608 = vst [vmem:[%s746 + $0x88] sm:$0xff] %v2451
          %2609 = vst [vmem:[%s746 + $0x90] sm:$0xff] %v2454
          %2610 = vst [vmem:[%s746 + $0x98] sm:$0xff] %v2457
          %2611 = vst [vmem:[%s746 + $0xa0] sm:$0xff] %v2460
          %2612 = vst [vmem:[%s746 + $0xa8] sm:$0xff] %v2463
          %2613 = vst [vmem:[%s746 + $0xb0] sm:$0xff] %v2466
          %2614 = vst [vmem:[%s746 + $0xb8] sm:$0xff] %v2469
          %2615 = vst [vmem:[%s746 + $0xc0] sm:$0xff] %v2472
          %2616 = vst [vmem:[%s746 + $0xc8] sm:$0xff] %v2475
          %2617 = vst [vmem:[%s746 + $0xd0] sm:$0xff] %v2478
          %2618 = vst [vmem:[%s746 + $0xd8] sm:$0xff] %v2481
          %2619 = vst [vmem:[%s746 + $0xe0] sm:$0xff] %v2484
          %2620 = vst [vmem:[%s746 + $0xe8] sm:$0xff] %v2487
          %2621 = vst [vmem:[%s746 + $0xf0] sm:$0xff] %v2490
          %2622 = vst [vmem:[%s746 + $0xf8] sm:$0xff] %v2493
          %2623 = vst [vmem:[%s746 + $0x100] sm:$0xff] %v2496
          %2624 = vst [vmem:[%s746 + $0x108] sm:$0xff] %v2499
          %2625 = vst [vmem:[%s746 + $0x110] sm:$0xff] %v2502
          %2626 = vst [vmem:[%s746 + $0x118] sm:$0xff] %v2505
          %2627 = vst [vmem:[%s746 + $0x120] sm:$0xff] %v2508
          %2628 = vst [vmem:[%s746 + $0x128] sm:$0xff] %v2511
          %2629 = vst [vmem:[%s746 + $0x130] sm:$0xff] %v2514
          %2630 = vst [vmem:[%s746 + $0x138] sm:$0xff] %v2517
          %2631 = vst [vmem:[%s746 + $0x140] sm:$0xff] %v2520
          %2632 = vst [vmem:[%s746 + $0x148] sm:$0xff] %v2523
          %2633 = vst [vmem:[%s746 + $0x150] sm:$0xff] %v2526
          %2634 = vst [vmem:[%s746 + $0x158] sm:$0xff] %v2529
          %2635 = vst [vmem:[%s746 + $0x160] sm:$0xff] %v2532
          %2636 = vst [vmem:[%s746 + $0x168] sm:$0xff] %v2535
          %2637 = vst [vmem:[%s746 + $0x170] sm:$0xff] %v2538
          %2638 = vst [vmem:[%s746 + $0x178] sm:$0xff] %v2541
          %2639 = vst [vmem:[%s746 + $0x180] sm:$0xff] %v2544
          %2640 = vst [vmem:[%s746 + $0x188] sm:$0xff] %v2547
          %2641 = vst [vmem:[%s746 + $0x190] sm:$0xff] %v2550
          %2642 = vst [vmem:[%s746 + $0x198] sm:$0xff] %v2553
          %2643 = vst [vmem:[%s746 + $0x1a0] sm:$0xff] %v2556
          %2644 = vst [vmem:[%s746 + $0x1a8] sm:$0xff] %v2559
          %2645 = vst [vmem:[%s746 + $0x1b0] sm:$0xff] %v2562
          %2646 = vst [vmem:[%s746 + $0x1b8] sm:$0xff] %v2565
          %2647 = vst [vmem:[%s746 + $0x1c0] sm:$0xff] %v2568
          %2648 = vst [vmem:[%s746 + $0x1c8] sm:$0xff] %v2571
          %2649 = vst [vmem:[%s746 + $0x1d0] sm:$0xff] %v2574
          %2650 = vst [vmem:[%s746 + $0x1d8] sm:$0xff] %v2577
          %2651 = vst [vmem:[%s746 + $0x1e0] sm:$0xff] %v2580
          %2652 = vst [vmem:[%s746 + $0x1e8] sm:$0xff] %v2583
          %2653 = vst [vmem:[%s746 + $0x1f0] sm:$0xff] %v2586
          %2654 = vst [vmem:[%s746 + $0x1f8] sm:$0xff] %v2589
        $region67: #{gpn_valuator_forward.4} parent=54 // pred_fallthru
          _
        %s2655 = smul.u32 64, %s19
        %p2656 = scmp.lt.s32.totalorder %s2655, 127
        %s2657 = scalar_select %p2656, %s2655, 127
        %s2658 = smul.addr %s2657, 8
        %s2659 = scalar_lea.vmem %s4, %s2658
        // Predicated region
        $region68: #{gpn_valuator_forward.4} parent=54 // pred_check
          %p2660 = pneg %p136
        $region69: #{gpn_valuator_forward.4} parent=54 // pred_check_branch
          %2662 = sbr.rel (%p2660) target = $region71
        $region70: #{gpn_valuator_forward.4} parent=54 // pred_region
          %s2663 = smul.u32 64, %s19
        $region71: #{gpn_valuator_forward.4} parent=54 // pred_fallthru
          _
      $region55: #{gpn_valuator_forward.4} parent=5 // pred_fallthru
        _
      %p2664 = scmp.le.s32.totalorder 2, %s10
      // Predicated region
      $region72: #{gpn_valuator_forward.4} parent=5 // pred_check
        %p2665 = pneg %p2664
      $region73: #{gpn_valuator_forward.4} parent=5 // pred_check_branch
        %2667 = sbr.rel (%p2665) target = $region75
      $region74: #{gpn_valuator_forward.4} parent=5 // pred_region
        %s2668 = ssub.s32 %s10, 2
        // Predicated region
        $region76: #{gpn_valuator_forward.4} parent=74 // pred_check
          %p2669 = pneg %p142
        $region77: #{gpn_valuator_forward.4} parent=74 // pred_check_branch
          %2671 = sbr.rel (%p2669) target = $region79
        $region78: #{gpn_valuator_forward.4} parent=74 // pred_region
          %s2672 = smul.u32 64, %s21
          %p2673 = scmp.lt.s32.totalorder %s2672, 127
          %s2674 = scalar_select %p2673, %s2672, 127
          %s2675 = smul.addr %s2674, 8
          %s2676 = scalar_lea.vmem %s4, %s2675
        $region79: #{gpn_valuator_forward.4} parent=74 // pred_fallthru
          _
      $region75: #{gpn_valuator_forward.4} parent=5 // pred_fallthru
        _
    $region6: #{gpn_valuator_forward.4} parent=1 // loop_footer
      %s14 = sadd.s32 1, %s10
    $region7: #{gpn_valuator_forward.4} parent=1 // loop_footer_branch
      %9 = sbr.rel target = $region3
    $region8: #{gpn_valuator_forward.4} parent=1 // loop_exit
      _

// kernel: gpn_valuator_forward.5
$region0: #{gpn_valuator_forward.5}
  #allocation0 [shape = 'u32[]', space=smem, size = 0x4, offset = 0x4, fixed_abs, tag = 'smem constant byte address 0x4 - core index']
  #allocation1 [shape = 'u32[72,128]{1,0:T(1,128)}', space=vmem, size = 0x9000, scoped, tag = 'internal scratch']
  #allocation2 [shape = 'f32[512,128]{1,0:T(8,128)}', space=vmem, size = 0x40000, scoped, tag = 'scratch operand']
  #allocation3 [shape = 'f32[1,1]{1,0:T(1,128)S(1)}', space=vmem, size = 0x200, scoped, tag = 'scoped memory for gpn_valuator_forward.5']
  %s0 = inlined_call_operand.vmem [shape: f32[1024,1024], index: 0, kind: input, shape index: {}]
  %s1 = inlined_call_operand.vmem [shape: f32[1024,128], index: 1, kind: input, shape index: {}]
  %s2 = inlined_call_operand.vmem [shape: f32[1,128], index: 2, kind: input, shape index: {}]
  %s3 = inlined_call_operand.vmem [shape: f32[1,128], index: 3, kind: input, shape index: {}]
  %s4 = inlined_call_operand.<no memory space> [shape: f32[1,1], index: 4, kind: input, shape index: {}]
  %s5 = inlined_call_operand.vmem [shape: f32[1024,128], index: 5, kind: output, shape index: {}]
  %s6 = sld [smem:[#allocation0]]
  $region84: #{gpn_valuator_forward.5} parent=0
    _
  %s8 = ssub.s32 1, %s6
  %s9 = scalar_select 0, %s8, %s6
  %v10 = vstv %s4
  %11 = vst [vmem:[#allocation3] sm:$0x1] %v10
  $region1: #{gpn_valuator_forward.5} parent=0
    #allocation4 [shape = 'u8[2097152]{0}', space=vmem, size = 0x200000, scoped, tag = 'input window, operand 0']
    loop: start=0, step=1, limit=6
    $region2: #{gpn_valuator_forward.5} parent=1 // loop_pre_header
      _
    $region3: #{gpn_valuator_forward.5} parent=1 // loop_header
      %s13 = sphi 0, %s17
      %p14 = scmp.ge.s32.totalorder %s13, 6
      %s20 = sphi 0, %s32
      %s21 = sphi 0, %s28
      %s22 = sphi 0, %s20
      %s23 = sphi 0, %s21
      %s24 = sphi 0, %s22
      %s25 = sphi 0, %s23
      %s37 = sphi 0, %s39
      %s40 = sphi 0, %s37
      %s41 = sphi 0, %s40
      %s57 = sphi 0, %s41
      %s61 = sphi 0, %s61
      %s63 = sphi 0, %s61
      %s64 = sphi 0, %s63
      %s78 = sphi 0, %s64
      %s82 = sphi 0, %s82
      %s84 = sphi 0, %s82
      %s85 = sphi 0, %s84
      %s99 = sphi 0, %s85
      %s103 = sphi 0, %s103
      %s105 = sphi 0, %s103
      %s106 = sphi 0, %s105
      %s120 = sphi 0, %s106
      %s124 = sphi 0, %s124
      %s126 = sphi 0, %s124
      %s127 = sphi 0, %s126
      %s141 = sphi 0, %s127
      %s147 = sphi 0, %s149
      %s150 = sphi 0, %s147
      %s151 = sphi 0, %s150
      %s167 = sphi 0, %s151
    $region4: #{gpn_valuator_forward.5} parent=1 // loop_header_branch
      %16 = sbr.rel (%p14) target = $region8
    $region5: #{gpn_valuator_forward.5} parent=1 // loop_body
      %s18 = ssub.s32 %s13, 1
      %s19 = ssub.s32 %s13, 2
      %s26 = sadd.s32 1, %s21
      %p27 = scmp.ge.s32.totalorder %s26, 2
      %s28 = scalar_select %p27, 0, %s26
      %s29 = sadd.s32 1, %s20
      %s30 = scalar_select %p27, %s29, %s20
      %p31 = scmp.ge.s32.totalorder %s30, 2
      %s32 = scalar_select %p31, 0, %s30
      %s33 = ssub.s32 %s20, %s32
      %s34 = ssub.s32 %s21, %s28
      %s35 = sor.u32 %s33, %s34
      %p36 = scmp.eq.s32.totalorder %s35, 0
      %s38 = sadd.s32 %s37, 1
      %s39 = scalar_select %p36, %s37, %s38
      %p42 = pneg %p36
      %p43 = scmp.eq.s32.totalorder %s13, 3
      %p44 = por %p42, %p43
      %p45 = scmp.ne.s32.totalorder %s37, %s40
      %p46 = scmp.eq.s32.totalorder %s13, 0
      %p47 = por %p45, %p46
      %p48 = scmp.ne.s32.totalorder %s37, %s40
      %p49 = scmp.eq.s32.totalorder %s18, 3
      %p50 = por %p48, %p49
      %p51 = scmp.ne.s32.totalorder %s40, %s41
      %p52 = scmp.eq.s32.totalorder %s18, 0
      %p53 = por %p51, %p52
      %p54 = scmp.ne.s32.totalorder %s40, %s41
      %p55 = scmp.eq.s32.totalorder %s19, 3
      %p56 = por %p54, %p55
      %p58 = scmp.ne.s32.totalorder %s41, %s57
      %p59 = scmp.eq.s32.totalorder %s19, 0
      %p60 = por %p58, %p59
      %s62 = sadd.s32 %s61, 1
      %p65 = scmp.eq.s32.totalorder %s13, 3
      %p66 = scmp.ne.s32.totalorder %s61, %s63
      %p67 = scmp.eq.s32.totalorder %s13, 0
      %p68 = por %p66, %p67
      %p69 = scmp.ne.s32.totalorder %s61, %s63
      %p70 = scmp.eq.s32.totalorder %s18, 3
      %p71 = por %p69, %p70
      %p72 = scmp.ne.s32.totalorder %s63, %s64
      %p73 = scmp.eq.s32.totalorder %s18, 0
      %p74 = por %p72, %p73
      %p75 = scmp.ne.s32.totalorder %s63, %s64
      %p76 = scmp.eq.s32.totalorder %s19, 3
      %p77 = por %p75, %p76
      %p79 = scmp.ne.s32.totalorder %s64, %s78
      %p80 = scmp.eq.s32.totalorder %s19, 0
      %p81 = por %p79, %p80
      %s83 = sadd.s32 %s82, 1
      %p86 = scmp.eq.s32.totalorder %s13, 3
      %p87 = scmp.ne.s32.totalorder %s82, %s84
      %p88 = scmp.eq.s32.totalorder %s13, 0
      %p89 = por %p87, %p88
      %p90 = scmp.ne.s32.totalorder %s82, %s84
      %p91 = scmp.eq.s32.totalorder %s18, 3
      %p92 = por %p90, %p91
      %p93 = scmp.ne.s32.totalorder %s84, %s85
      %p94 = scmp.eq.s32.totalorder %s18, 0
      %p95 = por %p93, %p94
      %p96 = scmp.ne.s32.totalorder %s84, %s85
      %p97 = scmp.eq.s32.totalorder %s19, 3
      %p98 = por %p96, %p97
      %p100 = scmp.ne.s32.totalorder %s85, %s99
      %p101 = scmp.eq.s32.totalorder %s19, 0
      %p102 = por %p100, %p101
      %s104 = sadd.s32 %s103, 1
      %p107 = scmp.eq.s32.totalorder %s13, 3
      %p108 = scmp.ne.s32.totalorder %s103, %s105
      %p109 = scmp.eq.s32.totalorder %s13, 0
      %p110 = por %p108, %p109
      %p111 = scmp.ne.s32.totalorder %s103, %s105
      %p112 = scmp.eq.s32.totalorder %s18, 3
      %p113 = por %p111, %p112
      %p114 = scmp.ne.s32.totalorder %s105, %s106
      %p115 = scmp.eq.s32.totalorder %s18, 0
      %p116 = por %p114, %p115
      %p117 = scmp.ne.s32.totalorder %s105, %s106
      %p118 = scmp.eq.s32.totalorder %s19, 3
      %p119 = por %p117, %p118
      %p121 = scmp.ne.s32.totalorder %s106, %s120
      %p122 = scmp.eq.s32.totalorder %s19, 0
      %p123 = por %p121, %p122
      %s125 = sadd.s32 %s124, 1
      %p128 = scmp.eq.s32.totalorder %s13, 3
      %p129 = scmp.ne.s32.totalorder %s124, %s126
      %p130 = scmp.eq.s32.totalorder %s13, 0
      %p131 = por %p129, %p130
      %p132 = scmp.ne.s32.totalorder %s124, %s126
      %p133 = scmp.eq.s32.totalorder %s18, 3
      %p134 = por %p132, %p133
      %p135 = scmp.ne.s32.totalorder %s126, %s127
      %p136 = scmp.eq.s32.totalorder %s18, 0
      %p137 = por %p135, %p136
      %p138 = scmp.ne.s32.totalorder %s126, %s127
      %p139 = scmp.eq.s32.totalorder %s19, 3
      %p140 = por %p138, %p139
      %p142 = scmp.ne.s32.totalorder %s127, %s141
      %p143 = scmp.eq.s32.totalorder %s19, 0
      %p144 = por %p142, %p143
      %s145 = ssub.s32 %s20, %s32
      %p146 = scmp.eq.s32.totalorder %s145, 0
      %s148 = sadd.s32 %s147, 1
      %s149 = scalar_select %p146, %s147, %s148
      %p152 = pneg %p146
      %p153 = scmp.eq.s32.totalorder %s13, 3
      %p154 = por %p152, %p153
      %p155 = scmp.ne.s32.totalorder %s147, %s150
      %p156 = scmp.eq.s32.totalorder %s13, 0
      %p157 = por %p155, %p156
      %p158 = scmp.ne.s32.totalorder %s147, %s150
      %p159 = scmp.eq.s32.totalorder %s18, 3
      %p160 = por %p158, %p159
      %p161 = scmp.ne.s32.totalorder %s150, %s151
      %p162 = scmp.eq.s32.totalorder %s18, 0
      %p163 = por %p161, %p162
      %p164 = scmp.ne.s32.totalorder %s150, %s151
      %p165 = scmp.eq.s32.totalorder %s19, 3
      %p166 = por %p164, %p165
      %p168 = scmp.ne.s32.totalorder %s151, %s167
      %p169 = scmp.eq.s32.totalorder %s19, 0
      %p170 = por %p168, %p169
      %p171 = scmp.le.s32.totalorder 1, %s13
      %p172 = scmp.lt.s32.totalorder %s13, 5
      %p173 = pnand %p171, %p172
      %p174 = pneg %p173
      // Predicated region
      $region9: #{gpn_valuator_forward.5} parent=5 // pred_check
        _
      $region10: #{gpn_valuator_forward.5} parent=5 // pred_check_branch
        %176 = sbr.rel (%p173) target = $region12
      $region11: #{gpn_valuator_forward.5} parent=5 // pred_region
        %s177 = ssub.s32 %s13, 1
        // Predicated region
        $region13: #{gpn_valuator_forward.5} parent=11 // pred_check
          %p178 = pneg %p74
        $region14: #{gpn_valuator_forward.5} parent=11 // pred_check_branch
          %180 = sbr.rel (%p178) target = $region16
        $region15: #{gpn_valuator_forward.5} parent=11 // pred_region
          _
        $region16: #{gpn_valuator_forward.5} parent=11 // pred_fallthru
          _
        // Predicated region
        $region17: #{gpn_valuator_forward.5} parent=11 // pred_check
          %p181 = pneg %p95
        $region18: #{gpn_valuator_forward.5} parent=11 // pred_check_branch
          %183 = sbr.rel (%p181) target = $region20
        $region19: #{gpn_valuator_forward.5} parent=11 // pred_region
          _
        $region20: #{gpn_valuator_forward.5} parent=11 // pred_fallthru
          _
        // Predicated region
        $region21: #{gpn_valuator_forward.5} parent=11 // pred_check
          %p184 = pneg %p116
        $region22: #{gpn_valuator_forward.5} parent=11 // pred_check_branch
          %186 = sbr.rel (%p184) target = $region24
        $region23: #{gpn_valuator_forward.5} parent=11 // pred_region
          _
        $region24: #{gpn_valuator_forward.5} parent=11 // pred_fallthru
          _
        // Predicated region
        $region25: #{gpn_valuator_forward.5} parent=11 // pred_check
          %p187 = pneg %p137
        $region26: #{gpn_valuator_forward.5} parent=11 // pred_check_branch
          %189 = sbr.rel (%p187) target = $region28
        $region27: #{gpn_valuator_forward.5} parent=11 // pred_region
          _
        $region28: #{gpn_valuator_forward.5} parent=11 // pred_fallthru
          _
      $region12: #{gpn_valuator_forward.5} parent=5 // pred_fallthru
        _
      %p190 = scmp.lt.s32.totalorder %s13, 4
      // Predicated region
      $region29: #{gpn_valuator_forward.5} parent=5 // pred_check
        %p191 = pneg %p190
      $region30: #{gpn_valuator_forward.5} parent=5 // pred_check_branch
        %193 = sbr.rel (%p191) target = $region32
      $region31: #{gpn_valuator_forward.5} parent=5 // pred_region
        // Predicated region
        $region33: #{gpn_valuator_forward.5} parent=31 // pred_check
          %p194 = pneg %p47
        $region34: #{gpn_valuator_forward.5} parent=31 // pred_check_branch
          %196 = sbr.rel (%p194) target = $region36
        $region35: #{gpn_valuator_forward.5} parent=31 // pred_region
          %s197 = sand.u32 %s37, 1
          %s198 = sand.u32 %s37, 1
          %s199 = smul.addr %s198, 2048
          %s200 = scalar_lea.vmem [#allocation4], %s199
          %s201 = smul.u32 64, %s20
          %s202 = smul.u32 4, %s21
          %s203 = smul.addr %s201, 8
          %s204 = sadd.s32 %s202, %s203
          %s205 = smul.addr %s204, 8
          %s206 = scalar_lea.vmem %s0, %s205
          // Predicated region
          $region37: #{gpn_valuator_forward.5} parent=35 // pred_check
            _
          $region38: #{gpn_valuator_forward.5} parent=35 // pred_check_branch
            %208 = sbr.rel (0) target = $region40
          $region39: #{gpn_valuator_forward.5} parent=35 // pred_region
            // Predicated region
            $region41: #{gpn_valuator_forward.5} parent=39 // pred_check
              _
            $region42: #{gpn_valuator_forward.5} parent=39 // pred_check_branch
              %210 = sbr.rel (0) target = $region44
            $region43: #{gpn_valuator_forward.5} parent=39 // pred_region
              loop: start=0, step=1, limit=1
              $region45: #{gpn_valuator_forward.5} parent=43 // loop_pre_header
                _
              $region46: #{gpn_valuator_forward.5} parent=43 // loop_header
                %s212 = sphi 0, %s216
                %p213 = scmp.ge.s32.totalorder %s212, 1
                %s217 = sphi %s206, %s206
                %s218 = sphi %s200, %s200
              $region47: #{gpn_valuator_forward.5} parent=43 // loop_header_branch
                %215 = sbr.rel (%p213) target = $region51
              $region48: #{gpn_valuator_forward.5} parent=43 // loop_body
                %v219 = vld [vmem:[%s217] sm:$0xff]
                %220 = vst [vmem:[%s218] sm:$0xff] %v219
                %v221 = vld [vmem:[%s217 + $0x8] sm:$0xff]
                %222 = vst [vmem:[%s218 + $0x8] sm:$0xff] %v221
                %v223 = vld [vmem:[%s217 + $0x10] sm:$0xff]
                %224 = vst [vmem:[%s218 + $0x10] sm:$0xff] %v223
                %v225 = vld [vmem:[%s217 + $0x18] sm:$0xff]
                %226 = vst [vmem:[%s218 + $0x18] sm:$0xff] %v225
                %v227 = vld [vmem:[%s217 + $0x40] sm:$0xff]
                %228 = vst [vmem:[%s218 + $0x20] sm:$0xff] %v227
                %v229 = vld [vmem:[%s217 + $0x48] sm:$0xff]
                %230 = vst [vmem:[%s218 + $0x28] sm:$0xff] %v229
                %v231 = vld [vmem:[%s217 + $0x50] sm:$0xff]
                %232 = vst [vmem:[%s218 + $0x30] sm:$0xff] %v231
                %v233 = vld [vmem:[%s217 + $0x58] sm:$0xff]
                %234 = vst [vmem:[%s218 + $0x38] sm:$0xff] %v233
                %v235 = vld [vmem:[%s217 + $0x80] sm:$0xff]
                %236 = vst [vmem:[%s218 + $0x40] sm:$0xff] %v235
                %v237 = vld [vmem:[%s217 + $0x88] sm:$0xff]
                %238 = vst [vmem:[%s218 + $0x48] sm:$0xff] %v237
                %v239 = vld [vmem:[%s217 + $0x90] sm:$0xff]
                %240 = vst [vmem:[%s218 + $0x50] sm:$0xff] %v239
                %v241 = vld [vmem:[%s217 + $0x98] sm:$0xff]
                %242 = vst [vmem:[%s218 + $0x58] sm:$0xff] %v241
                %v243 = vld [vmem:[%s217 + $0xc0] sm:$0xff]
                %244 = vst [vmem:[%s218 + $0x60] sm:$0xff] %v243
                %v245 = vld [vmem:[%s217 + $0xc8] sm:$0xff]
                %246 = vst [vmem:[%s218 + $0x68] sm:$0xff] %v245
                %v247 = vld [vmem:[%s217 + $0xd0] sm:$0xff]
                %248 = vst [vmem:[%s218 + $0x70] sm:$0xff] %v247
                %v249 = vld [vmem:[%s217 + $0xd8] sm:$0xff]
                %250 = vst [vmem:[%s218 + $0x78] sm:$0xff] %v249
                %v251 = vld [vmem:[%s217 + $0x100] sm:$0xff]
                %252 = vst [vmem:[%s218 + $0x80] sm:$0xff] %v251
                %v253 = vld [vmem:[%s217 + $0x108] sm:$0xff]
                %254 = vst [vmem:[%s218 + $0x88] sm:$0xff] %v253
                %v255 = vld [vmem:[%s217 + $0x110] sm:$0xff]
                %256 = vst [vmem:[%s218 + $0x90] sm:$0xff] %v255
                %v257 = vld [vmem:[%s217 + $0x118] sm:$0xff]
                %258 = vst [vmem:[%s218 + $0x98] sm:$0xff] %v257
                %v259 = vld [vmem:[%s217 + $0x140] sm:$0xff]
                %260 = vst [vmem:[%s218 + $0xa0] sm:$0xff] %v259
                %v261 = vld [vmem:[%s217 + $0x148] sm:$0xff]
                %262 = vst [vmem:[%s218 + $0xa8] sm:$0xff] %v261
                %v263 = vld [vmem:[%s217 + $0x150] sm:$0xff]
                %264 = vst [vmem:[%s218 + $0xb0] sm:$0xff] %v263
                %v265 = vld [vmem:[%s217 + $0x158] sm:$0xff]
                %266 = vst [vmem:[%s218 + $0xb8] sm:$0xff] %v265
                %v267 = vld [vmem:[%s217 + $0x180] sm:$0xff]
                %268 = vst [vmem:[%s218 + $0xc0] sm:$0xff] %v267
                %v269 = vld [vmem:[%s217 + $0x188] sm:$0xff]
                %270 = vst [vmem:[%s218 + $0xc8] sm:$0xff] %v269
                %v271 = vld [vmem:[%s217 + $0x190] sm:$0xff]
                %272 = vst [vmem:[%s218 + $0xd0] sm:$0xff] %v271
                %v273 = vld [vmem:[%s217 + $0x198] sm:$0xff]
                %274 = vst [vmem:[%s218 + $0xd8] sm:$0xff] %v273
                %v275 = vld [vmem:[%s217 + $0x1c0] sm:$0xff]
                %276 = vst [vmem:[%s218 + $0xe0] sm:$0xff] %v275
                %v277 = vld [vmem:[%s217 + $0x1c8] sm:$0xff]
                %278 = vst [vmem:[%s218 + $0xe8] sm:$0xff] %v277
                %v279 = vld [vmem:[%s217 + $0x1d0] sm:$0xff]
                %280 = vst [vmem:[%s218 + $0xf0] sm:$0xff] %v279
                %v281 = vld [vmem:[%s217 + $0x1d8] sm:$0xff]
                %282 = vst [vmem:[%s218 + $0xf8] sm:$0xff] %v281
                %v283 = vld [vmem:[%s217 + $0x200] sm:$0xff]
                %284 = vst [vmem:[%s218 + $0x100] sm:$0xff] %v283
                %v285 = vld [vmem:[%s217 + $0x208] sm:$0xff]
                %286 = vst [vmem:[%s218 + $0x108] sm:$0xff] %v285
                %v287 = vld [vmem:[%s217 + $0x210] sm:$0xff]
                %288 = vst [vmem:[%s218 + $0x110] sm:$0xff] %v287
                %v289 = vld [vmem:[%s217 + $0x218] sm:$0xff]
                %290 = vst [vmem:[%s218 + $0x118] sm:$0xff] %v289
                %v291 = vld [vmem:[%s217 + $0x240] sm:$0xff]
                %292 = vst [vmem:[%s218 + $0x120] sm:$0xff] %v291
                %v293 = vld [vmem:[%s217 + $0x248] sm:$0xff]
                %294 = vst [vmem:[%s218 + $0x128] sm:$0xff] %v293
                %v295 = vld [vmem:[%s217 + $0x250] sm:$0xff]
                %296 = vst [vmem:[%s218 + $0x130] sm:$0xff] %v295
                %v297 = vld [vmem:[%s217 + $0x258] sm:$0xff]
                %298 = vst [vmem:[%s218 + $0x138] sm:$0xff] %v297
                %v299 = vld [vmem:[%s217 + $0x280] sm:$0xff]
                %300 = vst [vmem:[%s218 + $0x140] sm:$0xff] %v299
                %v301 = vld [vmem:[%s217 + $0x288] sm:$0xff]
                %302 = vst [vmem:[%s218 + $0x148] sm:$0xff] %v301
                %v303 = vld [vmem:[%s217 + $0x290] sm:$0xff]
                %304 = vst [vmem:[%s218 + $0x150] sm:$0xff] %v303
                %v305 = vld [vmem:[%s217 + $0x298] sm:$0xff]
                %306 = vst [vmem:[%s218 + $0x158] sm:$0xff] %v305
                %v307 = vld [vmem:[%s217 + $0x2c0] sm:$0xff]
                %308 = vst [vmem:[%s218 + $0x160] sm:$0xff] %v307
                %v309 = vld [vmem:[%s217 + $0x2c8] sm:$0xff]
                %310 = vst [vmem:[%s218 + $0x168] sm:$0xff] %v309
                %v311 = vld [vmem:[%s217 + $0x2d0] sm:$0xff]
                %312 = vst [vmem:[%s218 + $0x170] sm:$0xff] %v311
                %v313 = vld [vmem:[%s217 + $0x2d8] sm:$0xff]
                %314 = vst [vmem:[%s218 + $0x178] sm:$0xff] %v313
                %v315 = vld [vmem:[%s217 + $0x300] sm:$0xff]
                %316 = vst [vmem:[%s218 + $0x180] sm:$0xff] %v315
                %v317 = vld [vmem:[%s217 + $0x308] sm:$0xff]
                %318 = vst [vmem:[%s218 + $0x188] sm:$0xff] %v317
                %v319 = vld [vmem:[%s217 + $0x310] sm:$0xff]
                %320 = vst [vmem:[%s218 + $0x190] sm:$0xff] %v319
                %v321 = vld [vmem:[%s217 + $0x318] sm:$0xff]
                %322 = vst [vmem:[%s218 + $0x198] sm:$0xff] %v321
                %v323 = vld [vmem:[%s217 + $0x340] sm:$0xff]
                %324 = vst [vmem:[%s218 + $0x1a0] sm:$0xff] %v323
                %v325 = vld [vmem:[%s217 + $0x348] sm:$0xff]
                %326 = vst [vmem:[%s218 + $0x1a8] sm:$0xff] %v325
                %v327 = vld [vmem:[%s217 + $0x350] sm:$0xff]
                %328 = vst [vmem:[%s218 + $0x1b0] sm:$0xff] %v327
                %v329 = vld [vmem:[%s217 + $0x358] sm:$0xff]
                %330 = vst [vmem:[%s218 + $0x1b8] sm:$0xff] %v329
                %v331 = vld [vmem:[%s217 + $0x380] sm:$0xff]
                %332 = vst [vmem:[%s218 + $0x1c0] sm:$0xff] %v331
                %v333 = vld [vmem:[%s217 + $0x388] sm:$0xff]
                %334 = vst [vmem:[%s218 + $0x1c8] sm:$0xff] %v333
                %v335 = vld [vmem:[%s217 + $0x390] sm:$0xff]
                %336 = vst [vmem:[%s218 + $0x1d0] sm:$0xff] %v335
                %v337 = vld [vmem:[%s217 + $0x398] sm:$0xff]
                %338 = vst [vmem:[%s218 + $0x1d8] sm:$0xff] %v337
                %v339 = vld [vmem:[%s217 + $0x3c0] sm:$0xff]
                %340 = vst [vmem:[%s218 + $0x1e0] sm:$0xff] %v339
                %v341 = vld [vmem:[%s217 + $0x3c8] sm:$0xff]
                %342 = vst [vmem:[%s218 + $0x1e8] sm:$0xff] %v341
                %v343 = vld [vmem:[%s217 + $0x3d0] sm:$0xff]
                %344 = vst [vmem:[%s218 + $0x1f0] sm:$0xff] %v343
                %v345 = vld [vmem:[%s217 + $0x3d8] sm:$0xff]
                %346 = vst [vmem:[%s218 + $0x1f8] sm:$0xff] %v345
                %v347 = vld [vmem:[%s217 + $0x400] sm:$0xff]
                %348 = vst [vmem:[%s218 + $0x200] sm:$0xff] %v347
                %v349 = vld [vmem:[%s217 + $0x408] sm:$0xff]
                %350 = vst [vmem:[%s218 + $0x208] sm:$0xff] %v349
                %v351 = vld [vmem:[%s217 + $0x410] sm:$0xff]
                %352 = vst [vmem:[%s218 + $0x210] sm:$0xff] %v351
                %v353 = vld [vmem:[%s217 + $0x418] sm:$0xff]
                %354 = vst [vmem:[%s218 + $0x218] sm:$0xff] %v353
                %v355 = vld [vmem:[%s217 + $0x440] sm:$0xff]
                %356 = vst [vmem:[%s218 + $0x220] sm:$0xff] %v355
                %v357 = vld [vmem:[%s217 + $0x448] sm:$0xff]
                %358 = vst [vmem:[%s218 + $0x228] sm:$0xff] %v357
                %v359 = vld [vmem:[%s217 + $0x450] sm:$0xff]
                %360 = vst [vmem:[%s218 + $0x230] sm:$0xff] %v359
                %v361 = vld [vmem:[%s217 + $0x458] sm:$0xff]
                %362 = vst [vmem:[%s218 + $0x238] sm:$0xff] %v361
                %v363 = vld [vmem:[%s217 + $0x480] sm:$0xff]
                %364 = vst [vmem:[%s218 + $0x240] sm:$0xff] %v363
                %v365 = vld [vmem:[%s217 + $0x488] sm:$0xff]
                %366 = vst [vmem:[%s218 + $0x248] sm:$0xff] %v365
                %v367 = vld [vmem:[%s217 + $0x490] sm:$0xff]
                %368 = vst [vmem:[%s218 + $0x250] sm:$0xff] %v367
                %v369 = vld [vmem:[%s217 + $0x498] sm:$0xff]
                %370 = vst [vmem:[%s218 + $0x258] sm:$0xff] %v369
                %v371 = vld [vmem:[%s217 + $0x4c0] sm:$0xff]
                %372 = vst [vmem:[%s218 + $0x260] sm:$0xff] %v371
                %v373 = vld [vmem:[%s217 + $0x4c8] sm:$0xff]
                %374 = vst [vmem:[%s218 + $0x268] sm:$0xff] %v373
                %v375 = vld [vmem:[%s217 + $0x4d0] sm:$0xff]
                %376 = vst [vmem:[%s218 + $0x270] sm:$0xff] %v375
                %v377 = vld [vmem:[%s217 + $0x4d8] sm:$0xff]
                %378 = vst [vmem:[%s218 + $0x278] sm:$0xff] %v377
                %v379 = vld [vmem:[%s217 + $0x500] sm:$0xff]
                %380 = vst [vmem:[%s218 + $0x280] sm:$0xff] %v379
                %v381 = vld [vmem:[%s217 + $0x508] sm:$0xff]
                %382 = vst [vmem:[%s218 + $0x288] sm:$0xff] %v381
                %v383 = vld [vmem:[%s217 + $0x510] sm:$0xff]
                %384 = vst [vmem:[%s218 + $0x290] sm:$0xff] %v383
                %v385 = vld [vmem:[%s217 + $0x518] sm:$0xff]
                %386 = vst [vmem:[%s218 + $0x298] sm:$0xff] %v385
                %v387 = vld [vmem:[%s217 + $0x540] sm:$0xff]
                %388 = vst [vmem:[%s218 + $0x2a0] sm:$0xff] %v387
                %v389 = vld [vmem:[%s217 + $0x548] sm:$0xff]
                %390 = vst [vmem:[%s218 + $0x2a8] sm:$0xff] %v389
                %v391 = vld [vmem:[%s217 + $0x550] sm:$0xff]
                %392 = vst [vmem:[%s218 + $0x2b0] sm:$0xff] %v391
                %v393 = vld [vmem:[%s217 + $0x558] sm:$0xff]
                %394 = vst [vmem:[%s218 + $0x2b8] sm:$0xff] %v393
                %v395 = vld [vmem:[%s217 + $0x580] sm:$0xff]
                %396 = vst [vmem:[%s218 + $0x2c0] sm:$0xff] %v395
                %v397 = vld [vmem:[%s217 + $0x588] sm:$0xff]
                %398 = vst [vmem:[%s218 + $0x2c8] sm:$0xff] %v397
                %v399 = vld [vmem:[%s217 + $0x590] sm:$0xff]
                %400 = vst [vmem:[%s218 + $0x2d0] sm:$0xff] %v399
                %v401 = vld [vmem:[%s217 + $0x598] sm:$0xff]
                %402 = vst [vmem:[%s218 + $0x2d8] sm:$0xff] %v401
                %v403 = vld [vmem:[%s217 + $0x5c0] sm:$0xff]
                %404 = vst [vmem:[%s218 + $0x2e0] sm:$0xff] %v403
                %v405 = vld [vmem:[%s217 + $0x5c8] sm:$0xff]
                %406 = vst [vmem:[%s218 + $0x2e8] sm:$0xff] %v405
                %v407 = vld [vmem:[%s217 + $0x5d0] sm:$0xff]
                %408 = vst [vmem:[%s218 + $0x2f0] sm:$0xff] %v407
                %v409 = vld [vmem:[%s217 + $0x5d8] sm:$0xff]
                %410 = vst [vmem:[%s218 + $0x2f8] sm:$0xff] %v409
                %v411 = vld [vmem:[%s217 + $0x600] sm:$0xff]
                %412 = vst [vmem:[%s218 + $0x300] sm:$0xff] %v411
                %v413 = vld [vmem:[%s217 + $0x608] sm:$0xff]
                %414 = vst [vmem:[%s218 + $0x308] sm:$0xff] %v413
                %v415 = vld [vmem:[%s217 + $0x610] sm:$0xff]
                %416 = vst [vmem:[%s218 + $0x310] sm:$0xff] %v415
                %v417 = vld [vmem:[%s217 + $0x618] sm:$0xff]
                %418 = vst [vmem:[%s218 + $0x318] sm:$0xff] %v417
                %v419 = vld [vmem:[%s217 + $0x640] sm:$0xff]
                %420 = vst [vmem:[%s218 + $0x320] sm:$0xff] %v419
                %v421 = vld [vmem:[%s217 + $0x648] sm:$0xff]
                %422 = vst [vmem:[%s218 + $0x328] sm:$0xff] %v421
                %v423 = vld [vmem:[%s217 + $0x650] sm:$0xff]
                %424 = vst [vmem:[%s218 + $0x330] sm:$0xff] %v423
                %v425 = vld [vmem:[%s217 + $0x658] sm:$0xff]
                %426 = vst [vmem:[%s218 + $0x338] sm:$0xff] %v425
                %v427 = vld [vmem:[%s217 + $0x680] sm:$0xff]
                %428 = vst [vmem:[%s218 + $0x340] sm:$0xff] %v427
                %v429 = vld [vmem:[%s217 + $0x688] sm:$0xff]
                %430 = vst [vmem:[%s218 + $0x348] sm:$0xff] %v429
                %v431 = vld [vmem:[%s217 + $0x690] sm:$0xff]
                %432 = vst [vmem:[%s218 + $0x350] sm:$0xff] %v431
                %v433 = vld [vmem:[%s217 + $0x698] sm:$0xff]
                %434 = vst [vmem:[%s218 + $0x358] sm:$0xff] %v433
                %v435 = vld [vmem:[%s217 + $0x6c0] sm:$0xff]
                %436 = vst [vmem:[%s218 + $0x360] sm:$0xff] %v435
                %v437 = vld [vmem:[%s217 + $0x6c8] sm:$0xff]
                %438 = vst [vmem:[%s218 + $0x368] sm:$0xff] %v437
                %v439 = vld [vmem:[%s217 + $0x6d0] sm:$0xff]
                %440 = vst [vmem:[%s218 + $0x370] sm:$0xff] %v439
                %v441 = vld [vmem:[%s217 + $0x6d8] sm:$0xff]
                %442 = vst [vmem:[%s218 + $0x378] sm:$0xff] %v441
                %v443 = vld [vmem:[%s217 + $0x700] sm:$0xff]
                %444 = vst [vmem:[%s218 + $0x380] sm:$0xff] %v443
                %v445 = vld [vmem:[%s217 + $0x708] sm:$0xff]
                %446 = vst [vmem:[%s218 + $0x388] sm:$0xff] %v445
                %v447 = vld [vmem:[%s217 + $0x710] sm:$0xff]
                %448 = vst [vmem:[%s218 + $0x390] sm:$0xff] %v447
                %v449 = vld [vmem:[%s217 + $0x718] sm:$0xff]
                %450 = vst [vmem:[%s218 + $0x398] sm:$0xff] %v449
                %v451 = vld [vmem:[%s217 + $0x740] sm:$0xff]
                %452 = vst [vmem:[%s218 + $0x3a0] sm:$0xff] %v451
                %v453 = vld [vmem:[%s217 + $0x748] sm:$0xff]
                %454 = vst [vmem:[%s218 + $0x3a8] sm:$0xff] %v453
                %v455 = vld [vmem:[%s217 + $0x750] sm:$0xff]
                %456 = vst [vmem:[%s218 + $0x3b0] sm:$0xff] %v455
                %v457 = vld [vmem:[%s217 + $0x758] sm:$0xff]
                %458 = vst [vmem:[%s218 + $0x3b8] sm:$0xff] %v457
                %v459 = vld [vmem:[%s217 + $0x780] sm:$0xff]
                %460 = vst [vmem:[%s218 + $0x3c0] sm:$0xff] %v459
                %v461 = vld [vmem:[%s217 + $0x788] sm:$0xff]
                %462 = vst [vmem:[%s218 + $0x3c8] sm:$0xff] %v461
                %v463 = vld [vmem:[%s217 + $0x790] sm:$0xff]
                %464 = vst [vmem:[%s218 + $0x3d0] sm:$0xff] %v463
                %v465 = vld [vmem:[%s217 + $0x798] sm:$0xff]
                %466 = vst [vmem:[%s218 + $0x3d8] sm:$0xff] %v465
                %v467 = vld [vmem:[%s217 + $0x7c0] sm:$0xff]
                %468 = vst [vmem:[%s218 + $0x3e0] sm:$0xff] %v467
                %v469 = vld [vmem:[%s217 + $0x7c8] sm:$0xff]
                %470 = vst [vmem:[%s218 + $0x3e8] sm:$0xff] %v469
                %v471 = vld [vmem:[%s217 + $0x7d0] sm:$0xff]
                %472 = vst [vmem:[%s218 + $0x3f0] sm:$0xff] %v471
                %v473 = vld [vmem:[%s217 + $0x7d8] sm:$0xff]
                %474 = vst [vmem:[%s218 + $0x3f8] sm:$0xff] %v473
                %v475 = vld [vmem:[%s217 + $0x800] sm:$0xff]
                %476 = vst [vmem:[%s218 + $0x400] sm:$0xff] %v475
                %v477 = vld [vmem:[%s217 + $0x808] sm:$0xff]
                %478 = vst [vmem:[%s218 + $0x408] sm:$0xff] %v477
                %v479 = vld [vmem:[%s217 + $0x810] sm:$0xff]
                %480 = vst [vmem:[%s218 + $0x410] sm:$0xff] %v479
                %v481 = vld [vmem:[%s217 + $0x818] sm:$0xff]
                %482 = vst [vmem:[%s218 + $0x418] sm:$0xff] %v481
                %v483 = vld [vmem:[%s217 + $0x840] sm:$0xff]
                %484 = vst [vmem:[%s218 + $0x420] sm:$0xff] %v483
                %v485 = vld [vmem:[%s217 + $0x848] sm:$0xff]
                %486 = vst [vmem:[%s218 + $0x428] sm:$0xff] %v485
                %v487 = vld [vmem:[%s217 + $0x850] sm:$0xff]
                %488 = vst [vmem:[%s218 + $0x430] sm:$0xff] %v487
                %v489 = vld [vmem:[%s217 + $0x858] sm:$0xff]
                %490 = vst [vmem:[%s218 + $0x438] sm:$0xff] %v489
                %v491 = vld [vmem:[%s217 + $0x880] sm:$0xff]
                %492 = vst [vmem:[%s218 + $0x440] sm:$0xff] %v491
                %v493 = vld [vmem:[%s217 + $0x888] sm:$0xff]
                %494 = vst [vmem:[%s218 + $0x448] sm:$0xff] %v493
                %v495 = vld [vmem:[%s217 + $0x890] sm:$0xff]
                %496 = vst [vmem:[%s218 + $0x450] sm:$0xff] %v495
                %v497 = vld [vmem:[%s217 + $0x898] sm:$0xff]
                %498 = vst [vmem:[%s218 + $0x458] sm:$0xff] %v497
                %v499 = vld [vmem:[%s217 + $0x8c0] sm:$0xff]
                %500 = vst [vmem:[%s218 + $0x460] sm:$0xff] %v499
                %v501 = vld [vmem:[%s217 + $0x8c8] sm:$0xff]
                %502 = vst [vmem:[%s218 + $0x468] sm:$0xff] %v501
                %v503 = vld [vmem:[%s217 + $0x8d0] sm:$0xff]
                %504 = vst [vmem:[%s218 + $0x470] sm:$0xff] %v503
                %v505 = vld [vmem:[%s217 + $0x8d8] sm:$0xff]
                %506 = vst [vmem:[%s218 + $0x478] sm:$0xff] %v505
                %v507 = vld [vmem:[%s217 + $0x900] sm:$0xff]
                %508 = vst [vmem:[%s218 + $0x480] sm:$0xff] %v507
                %v509 = vld [vmem:[%s217 + $0x908] sm:$0xff]
                %510 = vst [vmem:[%s218 + $0x488] sm:$0xff] %v509
                %v511 = vld [vmem:[%s217 + $0x910] sm:$0xff]
                %512 = vst [vmem:[%s218 + $0x490] sm:$0xff] %v511
                %v513 = vld [vmem:[%s217 + $0x918] sm:$0xff]
                %514 = vst [vmem:[%s218 + $0x498] sm:$0xff] %v513
                %v515 = vld [vmem:[%s217 + $0x940] sm:$0xff]
                %516 = vst [vmem:[%s218 + $0x4a0] sm:$0xff] %v515
                %v517 = vld [vmem:[%s217 + $0x948] sm:$0xff]
                %518 = vst [vmem:[%s218 + $0x4a8] sm:$0xff] %v517
                %v519 = vld [vmem:[%s217 + $0x950] sm:$0xff]
                %520 = vst [vmem:[%s218 + $0x4b0] sm:$0xff] %v519
                %v521 = vld [vmem:[%s217 + $0x958] sm:$0xff]
                %522 = vst [vmem:[%s218 + $0x4b8] sm:$0xff] %v521
                %v523 = vld [vmem:[%s217 + $0x980] sm:$0xff]
                %524 = vst [vmem:[%s218 + $0x4c0] sm:$0xff] %v523
                %v525 = vld [vmem:[%s217 + $0x988] sm:$0xff]
                %526 = vst [vmem:[%s218 + $0x4c8] sm:$0xff] %v525
                %v527 = vld [vmem:[%s217 + $0x990] sm:$0xff]
                %528 = vst [vmem:[%s218 + $0x4d0] sm:$0xff] %v527
                %v529 = vld [vmem:[%s217 + $0x998] sm:$0xff]
                %530 = vst [vmem:[%s218 + $0x4d8] sm:$0xff] %v529
                %v531 = vld [vmem:[%s217 + $0x9c0] sm:$0xff]
                %532 = vst [vmem:[%s218 + $0x4e0] sm:$0xff] %v531
                %v533 = vld [vmem:[%s217 + $0x9c8] sm:$0xff]
                %534 = vst [vmem:[%s218 + $0x4e8] sm:$0xff] %v533
                %v535 = vld [vmem:[%s217 + $0x9d0] sm:$0xff]
                %536 = vst [vmem:[%s218 + $0x4f0] sm:$0xff] %v535
                %v537 = vld [vmem:[%s217 + $0x9d8] sm:$0xff]
                %538 = vst [vmem:[%s218 + $0x4f8] sm:$0xff] %v537
                %v539 = vld [vmem:[%s217 + $0xa00] sm:$0xff]
                %540 = vst [vmem:[%s218 + $0x500] sm:$0xff] %v539
                %v541 = vld [vmem:[%s217 + $0xa08] sm:$0xff]
                %542 = vst [vmem:[%s218 + $0x508] sm:$0xff] %v541
                %v543 = vld [vmem:[%s217 + $0xa10] sm:$0xff]
                %544 = vst [vmem:[%s218 + $0x510] sm:$0xff] %v543
                %v545 = vld [vmem:[%s217 + $0xa18] sm:$0xff]
                %546 = vst [vmem:[%s218 + $0x518] sm:$0xff] %v545
                %v547 = vld [vmem:[%s217 + $0xa40] sm:$0xff]
                %548 = vst [vmem:[%s218 + $0x520] sm:$0xff] %v547
                %v549 = vld [vmem:[%s217 + $0xa48] sm:$0xff]
                %550 = vst [vmem:[%s218 + $0x528] sm:$0xff] %v549
                %v551 = vld [vmem:[%s217 + $0xa50] sm:$0xff]
                %552 = vst [vmem:[%s218 + $0x530] sm:$0xff] %v551
                %v553 = vld [vmem:[%s217 + $0xa58] sm:$0xff]
                %554 = vst [vmem:[%s218 + $0x538] sm:$0xff] %v553
                %v555 = vld [vmem:[%s217 + $0xa80] sm:$0xff]
                %556 = vst [vmem:[%s218 + $0x540] sm:$0xff] %v555
                %v557 = vld [vmem:[%s217 + $0xa88] sm:$0xff]
                %558 = vst [vmem:[%s218 + $0x548] sm:$0xff] %v557
                %v559 = vld [vmem:[%s217 + $0xa90] sm:$0xff]
                %560 = vst [vmem:[%s218 + $0x550] sm:$0xff] %v559
                %v561 = vld [vmem:[%s217 + $0xa98] sm:$0xff]
                %562 = vst [vmem:[%s218 + $0x558] sm:$0xff] %v561
                %v563 = vld [vmem:[%s217 + $0xac0] sm:$0xff]
                %564 = vst [vmem:[%s218 + $0x560] sm:$0xff] %v563
                %v565 = vld [vmem:[%s217 + $0xac8] sm:$0xff]
                %566 = vst [vmem:[%s218 + $0x568] sm:$0xff] %v565
                %v567 = vld [vmem:[%s217 + $0xad0] sm:$0xff]
                %568 = vst [vmem:[%s218 + $0x570] sm:$0xff] %v567
                %v569 = vld [vmem:[%s217 + $0xad8] sm:$0xff]
                %570 = vst [vmem:[%s218 + $0x578] sm:$0xff] %v569
                %v571 = vld [vmem:[%s217 + $0xb00] sm:$0xff]
                %572 = vst [vmem:[%s218 + $0x580] sm:$0xff] %v571
                %v573 = vld [vmem:[%s217 + $0xb08] sm:$0xff]
                %574 = vst [vmem:[%s218 + $0x588] sm:$0xff] %v573
                %v575 = vld [vmem:[%s217 + $0xb10] sm:$0xff]
                %576 = vst [vmem:[%s218 + $0x590] sm:$0xff] %v575
                %v577 = vld [vmem:[%s217 + $0xb18] sm:$0xff]
                %578 = vst [vmem:[%s218 + $0x598] sm:$0xff] %v577
                %v579 = vld [vmem:[%s217 + $0xb40] sm:$0xff]
                %580 = vst [vmem:[%s218 + $0x5a0] sm:$0xff] %v579
                %v581 = vld [vmem:[%s217 + $0xb48] sm:$0xff]
                %582 = vst [vmem:[%s218 + $0x5a8] sm:$0xff] %v581
                %v583 = vld [vmem:[%s217 + $0xb50] sm:$0xff]
                %584 = vst [vmem:[%s218 + $0x5b0] sm:$0xff] %v583
                %v585 = vld [vmem:[%s217 + $0xb58] sm:$0xff]
                %586 = vst [vmem:[%s218 + $0x5b8] sm:$0xff] %v585
                %v587 = vld [vmem:[%s217 + $0xb80] sm:$0xff]
                %588 = vst [vmem:[%s218 + $0x5c0] sm:$0xff] %v587
                %v589 = vld [vmem:[%s217 + $0xb88] sm:$0xff]
                %590 = vst [vmem:[%s218 + $0x5c8] sm:$0xff] %v589
                %v591 = vld [vmem:[%s217 + $0xb90] sm:$0xff]
                %592 = vst [vmem:[%s218 + $0x5d0] sm:$0xff] %v591
                %v593 = vld [vmem:[%s217 + $0xb98] sm:$0xff]
                %594 = vst [vmem:[%s218 + $0x5d8] sm:$0xff] %v593
                %v595 = vld [vmem:[%s217 + $0xbc0] sm:$0xff]
                %596 = vst [vmem:[%s218 + $0x5e0] sm:$0xff] %v595
                %v597 = vld [vmem:[%s217 + $0xbc8] sm:$0xff]
                %598 = vst [vmem:[%s218 + $0x5e8] sm:$0xff] %v597
                %v599 = vld [vmem:[%s217 + $0xbd0] sm:$0xff]
                %600 = vst [vmem:[%s218 + $0x5f0] sm:$0xff] %v599
                %v601 = vld [vmem:[%s217 + $0xbd8] sm:$0xff]
                %602 = vst [vmem:[%s218 + $0x5f8] sm:$0xff] %v601
                %v603 = vld [vmem:[%s217 + $0xc00] sm:$0xff]
                %604 = vst [vmem:[%s218 + $0x600] sm:$0xff] %v603
                %v605 = vld [vmem:[%s217 + $0xc08] sm:$0xff]
                %606 = vst [vmem:[%s218 + $0x608] sm:$0xff] %v605
                %v607 = vld [vmem:[%s217 + $0xc10] sm:$0xff]
                %608 = vst [vmem:[%s218 + $0x610] sm:$0xff] %v607
                %v609 = vld [vmem:[%s217 + $0xc18] sm:$0xff]
                %610 = vst [vmem:[%s218 + $0x618] sm:$0xff] %v609
                %v611 = vld [vmem:[%s217 + $0xc40] sm:$0xff]
                %612 = vst [vmem:[%s218 + $0x620] sm:$0xff] %v611
                %v613 = vld [vmem:[%s217 + $0xc48] sm:$0xff]
                %614 = vst [vmem:[%s218 + $0x628] sm:$0xff] %v613
                %v615 = vld [vmem:[%s217 + $0xc50] sm:$0xff]
                %616 = vst [vmem:[%s218 + $0x630] sm:$0xff] %v615
                %v617 = vld [vmem:[%s217 + $0xc58] sm:$0xff]
                %618 = vst [vmem:[%s218 + $0x638] sm:$0xff] %v617
                %v619 = vld [vmem:[%s217 + $0xc80] sm:$0xff]
                %620 = vst [vmem:[%s218 + $0x640] sm:$0xff] %v619
                %v621 = vld [vmem:[%s217 + $0xc88] sm:$0xff]
                %622 = vst [vmem:[%s218 + $0x648] sm:$0xff] %v621
                %v623 = vld [vmem:[%s217 + $0xc90] sm:$0xff]
                %624 = vst [vmem:[%s218 + $0x650] sm:$0xff] %v623
                %v625 = vld [vmem:[%s217 + $0xc98] sm:$0xff]
                %626 = vst [vmem:[%s218 + $0x658] sm:$0xff] %v625
                %v627 = vld [vmem:[%s217 + $0xcc0] sm:$0xff]
                %628 = vst [vmem:[%s218 + $0x660] sm:$0xff] %v627
                %v629 = vld [vmem:[%s217 + $0xcc8] sm:$0xff]
                %630 = vst [vmem:[%s218 + $0x668] sm:$0xff] %v629
                %v631 = vld [vmem:[%s217 + $0xcd0] sm:$0xff]
                %632 = vst [vmem:[%s218 + $0x670] sm:$0xff] %v631
                %v633 = vld [vmem:[%s217 + $0xcd8] sm:$0xff]
                %634 = vst [vmem:[%s218 + $0x678] sm:$0xff] %v633
                %v635 = vld [vmem:[%s217 + $0xd00] sm:$0xff]
                %636 = vst [vmem:[%s218 + $0x680] sm:$0xff] %v635
                %v637 = vld [vmem:[%s217 + $0xd08] sm:$0xff]
                %638 = vst [vmem:[%s218 + $0x688] sm:$0xff] %v637
                %v639 = vld [vmem:[%s217 + $0xd10] sm:$0xff]
                %640 = vst [vmem:[%s218 + $0x690] sm:$0xff] %v639
                %v641 = vld [vmem:[%s217 + $0xd18] sm:$0xff]
                %642 = vst [vmem:[%s218 + $0x698] sm:$0xff] %v641
                %v643 = vld [vmem:[%s217 + $0xd40] sm:$0xff]
                %644 = vst [vmem:[%s218 + $0x6a0] sm:$0xff] %v643
                %v645 = vld [vmem:[%s217 + $0xd48] sm:$0xff]
                %646 = vst [vmem:[%s218 + $0x6a8] sm:$0xff] %v645
                %v647 = vld [vmem:[%s217 + $0xd50] sm:$0xff]
                %648 = vst [vmem:[%s218 + $0x6b0] sm:$0xff] %v647
                %v649 = vld [vmem:[%s217 + $0xd58] sm:$0xff]
                %650 = vst [vmem:[%s218 + $0x6b8] sm:$0xff] %v649
                %v651 = vld [vmem:[%s217 + $0xd80] sm:$0xff]
                %652 = vst [vmem:[%s218 + $0x6c0] sm:$0xff] %v651
                %v653 = vld [vmem:[%s217 + $0xd88] sm:$0xff]
                %654 = vst [vmem:[%s218 + $0x6c8] sm:$0xff] %v653
                %v655 = vld [vmem:[%s217 + $0xd90] sm:$0xff]
                %656 = vst [vmem:[%s218 + $0x6d0] sm:$0xff] %v655
                %v657 = vld [vmem:[%s217 + $0xd98] sm:$0xff]
                %658 = vst [vmem:[%s218 + $0x6d8] sm:$0xff] %v657
                %v659 = vld [vmem:[%s217 + $0xdc0] sm:$0xff]
                %660 = vst [vmem:[%s218 + $0x6e0] sm:$0xff] %v659
                %v661 = vld [vmem:[%s217 + $0xdc8] sm:$0xff]
                %662 = vst [vmem:[%s218 + $0x6e8] sm:$0xff] %v661
                %v663 = vld [vmem:[%s217 + $0xdd0] sm:$0xff]
                %664 = vst [vmem:[%s218 + $0x6f0] sm:$0xff] %v663
                %v665 = vld [vmem:[%s217 + $0xdd8] sm:$0xff]
                %666 = vst [vmem:[%s218 + $0x6f8] sm:$0xff] %v665
                %v667 = vld [vmem:[%s217 + $0xe00] sm:$0xff]
                %668 = vst [vmem:[%s218 + $0x700] sm:$0xff] %v667
                %v669 = vld [vmem:[%s217 + $0xe08] sm:$0xff]
                %670 = vst [vmem:[%s218 + $0x708] sm:$0xff] %v669
                %v671 = vld [vmem:[%s217 + $0xe10] sm:$0xff]
                %672 = vst [vmem:[%s218 + $0x710] sm:$0xff] %v671
                %v673 = vld [vmem:[%s217 + $0xe18] sm:$0xff]
                %674 = vst [vmem:[%s218 + $0x718] sm:$0xff] %v673
                %v675 = vld [vmem:[%s217 + $0xe40] sm:$0xff]
                %676 = vst [vmem:[%s218 + $0x720] sm:$0xff] %v675
                %v677 = vld [vmem:[%s217 + $0xe48] sm:$0xff]
                %678 = vst [vmem:[%s218 + $0x728] sm:$0xff] %v677
                %v679 = vld [vmem:[%s217 + $0xe50] sm:$0xff]
                %680 = vst [vmem:[%s218 + $0x730] sm:$0xff] %v679
                %v681 = vld [vmem:[%s217 + $0xe58] sm:$0xff]
                %682 = vst [vmem:[%s218 + $0x738] sm:$0xff] %v681
                %v683 = vld [vmem:[%s217 + $0xe80] sm:$0xff]
                %684 = vst [vmem:[%s218 + $0x740] sm:$0xff] %v683
                %v685 = vld [vmem:[%s217 + $0xe88] sm:$0xff]
                %686 = vst [vmem:[%s218 + $0x748] sm:$0xff] %v685
                %v687 = vld [vmem:[%s217 + $0xe90] sm:$0xff]
                %688 = vst [vmem:[%s218 + $0x750] sm:$0xff] %v687
                %v689 = vld [vmem:[%s217 + $0xe98] sm:$0xff]
                %690 = vst [vmem:[%s218 + $0x758] sm:$0xff] %v689
                %v691 = vld [vmem:[%s217 + $0xec0] sm:$0xff]
                %692 = vst [vmem:[%s218 + $0x760] sm:$0xff] %v691
                %v693 = vld [vmem:[%s217 + $0xec8] sm:$0xff]
                %694 = vst [vmem:[%s218 + $0x768] sm:$0xff] %v693
                %v695 = vld [vmem:[%s217 + $0xed0] sm:$0xff]
                %696 = vst [vmem:[%s218 + $0x770] sm:$0xff] %v695
                %v697 = vld [vmem:[%s217 + $0xed8] sm:$0xff]
                %698 = vst [vmem:[%s218 + $0x778] sm:$0xff] %v697
                %v699 = vld [vmem:[%s217 + $0xf00] sm:$0xff]
                %700 = vst [vmem:[%s218 + $0x780] sm:$0xff] %v699
                %v701 = vld [vmem:[%s217 + $0xf08] sm:$0xff]
                %702 = vst [vmem:[%s218 + $0x788] sm:$0xff] %v701
                %v703 = vld [vmem:[%s217 + $0xf10] sm:$0xff]
                %704 = vst [vmem:[%s218 + $0x790] sm:$0xff] %v703
                %v705 = vld [vmem:[%s217 + $0xf18] sm:$0xff]
                %706 = vst [vmem:[%s218 + $0x798] sm:$0xff] %v705
                %v707 = vld [vmem:[%s217 + $0xf40] sm:$0xff]
                %708 = vst [vmem:[%s218 + $0x7a0] sm:$0xff] %v707
                %v709 = vld [vmem:[%s217 + $0xf48] sm:$0xff]
                %710 = vst [vmem:[%s218 + $0x7a8] sm:$0xff] %v709
                %v711 = vld [vmem:[%s217 + $0xf50] sm:$0xff]
                %712 = vst [vmem:[%s218 + $0x7b0] sm:$0xff] %v711
                %v713 = vld [vmem:[%s217 + $0xf58] sm:$0xff]
                %714 = vst [vmem:[%s218 + $0x7b8] sm:$0xff] %v713
                %v715 = vld [vmem:[%s217 + $0xf80] sm:$0xff]
                %716 = vst [vmem:[%s218 + $0x7c0] sm:$0xff] %v715
                %v717 = vld [vmem:[%s217 + $0xf88] sm:$0xff]
                %718 = vst [vmem:[%s218 + $0x7c8] sm:$0xff] %v717
                %v719 = vld [vmem:[%s217 + $0xf90] sm:$0xff]
                %720 = vst [vmem:[%s218 + $0x7d0] sm:$0xff] %v719
                %v721 = vld [vmem:[%s217 + $0xf98] sm:$0xff]
                %722 = vst [vmem:[%s218 + $0x7d8] sm:$0xff] %v721
                %v723 = vld [vmem:[%s217 + $0xfc0] sm:$0xff]
                %724 = vst [vmem:[%s218 + $0x7e0] sm:$0xff] %v723
                %v725 = vld [vmem:[%s217 + $0xfc8] sm:$0xff]
                %726 = vst [vmem:[%s218 + $0x7e8] sm:$0xff] %v725
                %v727 = vld [vmem:[%s217 + $0xfd0] sm:$0xff]
                %728 = vst [vmem:[%s218 + $0x7f0] sm:$0xff] %v727
                %v729 = vld [vmem:[%s217 + $0xfd8] sm:$0xff]
                %730 = vst [vmem:[%s218 + $0x7f8] sm:$0xff] %v729
              $region49: #{gpn_valuator_forward.5} parent=43 // loop_footer
                %s216 = sadd.s32 1, %s212
              $region50: #{gpn_valuator_forward.5} parent=43 // loop_footer_branch
                %211 = sbr.rel target = $region46
              $region51: #{gpn_valuator_forward.5} parent=43 // loop_exit
                _
            $region44: #{gpn_valuator_forward.5} parent=39 // pred_fallthru
              _
            // Predicated region
            $region52: #{gpn_valuator_forward.5} parent=39 // pred_check
              _
            $region53: #{gpn_valuator_forward.5} parent=39 // pred_check_branch
              %732 = sbr.rel target = $region55
            $region54: #{gpn_valuator_forward.5} parent=39 // pred_region
              _
            $region55: #{gpn_valuator_forward.5} parent=39 // pred_fallthru
              _
          $region40: #{gpn_valuator_forward.5} parent=35 // pred_fallthru
            _
          %733 = vnop
        $region36: #{gpn_valuator_forward.5} parent=31 // pred_fallthru
          _
      $region32: #{gpn_valuator_forward.5} parent=5 // pred_fallthru
        _
      %p734 = scmp.le.s32.totalorder 1, %s13
      %p735 = scmp.lt.s32.totalorder %s13, 5
      %p736 = pnand %p734, %p735
      %p737 = pneg %p736
      // Predicated region
      $region56: #{gpn_valuator_forward.5} parent=5 // pred_check
        _
      $region57: #{gpn_valuator_forward.5} parent=5 // pred_check_branch
        %739 = sbr.rel (%p736) target = $region59
      $region58: #{gpn_valuator_forward.5} parent=5 // pred_region
        %s740 = ssub.s32 %s13, 1
        %s741 = sand.u32 %s40, 1
        %s742 = sand.u32 %s40, 1
        %s743 = smul.addr %s742, 2048
        %s744 = scalar_lea.vmem [#allocation4], %s743
        // Predicated region
        $region60: #{gpn_valuator_forward.5} parent=58 // pred_check
          %p745 = pneg %p53
        $region61: #{gpn_valuator_forward.5} parent=58 // pred_check_branch
          %747 = sbr.rel (%p745) target = $region63
        $region62: #{gpn_valuator_forward.5} parent=58 // pred_region
          _
        $region63: #{gpn_valuator_forward.5} parent=58 // pred_fallthru
          _
        %s748 = sand.u32 %s40, 1
        %s749 = sand.u32 %s40, 1
        %s750 = smul.addr %s749, 2048
        %s751 = scalar_lea.vmem [#allocation4], %s750
        %p752 = pneg %p53
        %p753 = pneg %p50
        %p754 = pneg %p74
        %p755 = pneg %p71
        %p756 = pneg %p95
        %p757 = pneg %p92
        %p758 = pneg %p116
        %p759 = pneg %p113
        %p760 = pneg %p137
        %p761 = pneg %p134
        %p762 = pneg %p163
        %p763 = pneg %p160
        %s764 = smul.u32 64, %s22
        %p765 = scmp.lt.s32.totalorder %s764, 127
        %s766 = scalar_select %p765, %s764, 127
        %s767 = smul.addr %s766, 8
        %s768 = scalar_lea.vmem %s5, %s767
        %s769 = smul.u32 64, %s22
        %s770 = smul.u32 4, %s23
        %s771 = smul.u32 64, %s22
        %p772 = scmp.lt.s32.totalorder %s771, 127
        %s773 = scalar_select %p772, %s771, 127
        %s774 = smul.addr %s773, 8
        %s775 = scalar_lea.vmem %s5, %s774
        %s776 = smul.u32 64, %s22
        %p777 = scmp.eq.s32.totalorder %s23, 0
        // Predicated region
        $region64: #{gpn_valuator_forward.5} parent=58 // pred_check
          %p778 = pneg %p777
        $region65: #{gpn_valuator_forward.5} parent=58 // pred_check_branch
          %780 = sbr.rel (%p778) target = $region67
        $region66: #{gpn_valuator_forward.5} parent=58 // pred_region
          %781 = vst [vmem:[#allocation2] sm:$0xff] 0.0
          %782 = vst [vmem:[#allocation2 + $0x8] sm:$0xff] 0.0
          %783 = vst [vmem:[#allocation2 + $0x10] sm:$0xff] 0.0
          %784 = vst [vmem:[#allocation2 + $0x18] sm:$0xff] 0.0
          %785 = vst [vmem:[#allocation2 + $0x20] sm:$0xff] 0.0
          %786 = vst [vmem:[#allocation2 + $0x28] sm:$0xff] 0.0
          %787 = vst [vmem:[#allocation2 + $0x30] sm:$0xff] 0.0
          %788 = vst [vmem:[#allocation2 + $0x38] sm:$0xff] 0.0
          %789 = vst [vmem:[#allocation2 + $0x40] sm:$0xff] 0.0
          %790 = vst [vmem:[#allocation2 + $0x48] sm:$0xff] 0.0
          %791 = vst [vmem:[#allocation2 + $0x50] sm:$0xff] 0.0
          %792 = vst [vmem:[#allocation2 + $0x58] sm:$0xff] 0.0
          %793 = vst [vmem:[#allocation2 + $0x60] sm:$0xff] 0.0
          %794 = vst [vmem:[#allocation2 + $0x68] sm:$0xff] 0.0
          %795 = vst [vmem:[#allocation2 + $0x70] sm:$0xff] 0.0
          %796 = vst [vmem:[#allocation2 + $0x78] sm:$0xff] 0.0
          %797 = vst [vmem:[#allocation2 + $0x80] sm:$0xff] 0.0
          %798 = vst [vmem:[#allocation2 + $0x88] sm:$0xff] 0.0
          %799 = vst [vmem:[#allocation2 + $0x90] sm:$0xff] 0.0
          %800 = vst [vmem:[#allocation2 + $0x98] sm:$0xff] 0.0
          %801 = vst [vmem:[#allocation2 + $0xa0] sm:$0xff] 0.0
          %802 = vst [vmem:[#allocation2 + $0xa8] sm:$0xff] 0.0
          %803 = vst [vmem:[#allocation2 + $0xb0] sm:$0xff] 0.0
          %804 = vst [vmem:[#allocation2 + $0xb8] sm:$0xff] 0.0
          %805 = vst [vmem:[#allocation2 + $0xc0] sm:$0xff] 0.0
          %806 = vst [vmem:[#allocation2 + $0xc8] sm:$0xff] 0.0
          %807 = vst [vmem:[#allocation2 + $0xd0] sm:$0xff] 0.0
          %808 = vst [vmem:[#allocation2 + $0xd8] sm:$0xff] 0.0
          %809 = vst [vmem:[#allocation2 + $0xe0] sm:$0xff] 0.0
          %810 = vst [vmem:[#allocation2 + $0xe8] sm:$0xff] 0.0
          %811 = vst [vmem:[#allocation2 + $0xf0] sm:$0xff] 0.0
          %812 = vst [vmem:[#allocation2 + $0xf8] sm:$0xff] 0.0
          %813 = vst [vmem:[#allocation2 + $0x100] sm:$0xff] 0.0
          %814 = vst [vmem:[#allocation2 + $0x108] sm:$0xff] 0.0
          %815 = vst [vmem:[#allocation2 + $0x110] sm:$0xff] 0.0
          %816 = vst [vmem:[#allocation2 + $0x118] sm:$0xff] 0.0
          %817 = vst [vmem:[#allocation2 + $0x120] sm:$0xff] 0.0
          %818 = vst [vmem:[#allocation2 + $0x128] sm:$0xff] 0.0
          %819 = vst [vmem:[#allocation2 + $0x130] sm:$0xff] 0.0
          %820 = vst [vmem:[#allocation2 + $0x138] sm:$0xff] 0.0
          %821 = vst [vmem:[#allocation2 + $0x140] sm:$0xff] 0.0
          %822 = vst [vmem:[#allocation2 + $0x148] sm:$0xff] 0.0
          %823 = vst [vmem:[#allocation2 + $0x150] sm:$0xff] 0.0
          %824 = vst [vmem:[#allocation2 + $0x158] sm:$0xff] 0.0
          %825 = vst [vmem:[#allocation2 + $0x160] sm:$0xff] 0.0
          %826 = vst [vmem:[#allocation2 + $0x168] sm:$0xff] 0.0
          %827 = vst [vmem:[#allocation2 + $0x170] sm:$0xff] 0.0
          %828 = vst [vmem:[#allocation2 + $0x178] sm:$0xff] 0.0
          %829 = vst [vmem:[#allocation2 + $0x180] sm:$0xff] 0.0
          %830 = vst [vmem:[#allocation2 + $0x188] sm:$0xff] 0.0
          %831 = vst [vmem:[#allocation2 + $0x190] sm:$0xff] 0.0
          %832 = vst [vmem:[#allocation2 + $0x198] sm:$0xff] 0.0
          %833 = vst [vmem:[#allocation2 + $0x1a0] sm:$0xff] 0.0
          %834 = vst [vmem:[#allocation2 + $0x1a8] sm:$0xff] 0.0
          %835 = vst [vmem:[#allocation2 + $0x1b0] sm:$0xff] 0.0
          %836 = vst [vmem:[#allocation2 + $0x1b8] sm:$0xff] 0.0
          %837 = vst [vmem:[#allocation2 + $0x1c0] sm:$0xff] 0.0
          %838 = vst [vmem:[#allocation2 + $0x1c8] sm:$0xff] 0.0
          %839 = vst [vmem:[#allocation2 + $0x1d0] sm:$0xff] 0.0
          %840 = vst [vmem:[#allocation2 + $0x1d8] sm:$0xff] 0.0
          %841 = vst [vmem:[#allocation2 + $0x1e0] sm:$0xff] 0.0
          %842 = vst [vmem:[#allocation2 + $0x1e8] sm:$0xff] 0.0
          %843 = vst [vmem:[#allocation2 + $0x1f0] sm:$0xff] 0.0
          %844 = vst [vmem:[#allocation2 + $0x1f8] sm:$0xff] 0.0
        $region67: #{gpn_valuator_forward.5} parent=58 // pred_fallthru
          _
        %s845 = smul.u32 %s23, 512
        %s846 = scalar_lea.vmem %s1, %s845
        %v847 = vld [vmem:[%s846] sm:$0xff]
        %v848 = vld [vmem:[%s846 + $0x8] sm:$0xff]
        %v849 = vld [vmem:[%s846 + $0x10] sm:$0xff]
        %v850 = vld [vmem:[%s846 + $0x18] sm:$0xff]
        %v851 = vld [vmem:[%s846 + $0x20] sm:$0xff]
        %v852 = vld [vmem:[%s846 + $0x28] sm:$0xff]
        %v853 = vld [vmem:[%s846 + $0x30] sm:$0xff]
        %v854 = vld [vmem:[%s846 + $0x38] sm:$0xff]
        %v855 = vld [vmem:[%s846 + $0x40] sm:$0xff]
        %v856 = vld [vmem:[%s846 + $0x48] sm:$0xff]
        %v857 = vld [vmem:[%s846 + $0x50] sm:$0xff]
        %v858 = vld [vmem:[%s846 + $0x58] sm:$0xff]
        %v859 = vld [vmem:[%s846 + $0x60] sm:$0xff]
        %v860 = vld [vmem:[%s846 + $0x68] sm:$0xff]
        %v861 = vld [vmem:[%s846 + $0x70] sm:$0xff]
        %v862 = vld [vmem:[%s846 + $0x78] sm:$0xff]
        %v863 = vld [vmem:[%s846 + $0x80] sm:$0xff]
        %v864 = vld [vmem:[%s846 + $0x88] sm:$0xff]
        %v865 = vld [vmem:[%s846 + $0x90] sm:$0xff]
        %v866 = vld [vmem:[%s846 + $0x98] sm:$0xff]
        %v867 = vld [vmem:[%s846 + $0xa0] sm:$0xff]
        %v868 = vld [vmem:[%s846 + $0xa8] sm:$0xff]
        %v869 = vld [vmem:[%s846 + $0xb0] sm:$0xff]
        %v870 = vld [vmem:[%s846 + $0xb8] sm:$0xff]
        %v871 = vld [vmem:[%s846 + $0xc0] sm:$0xff]
        %v872 = vld [vmem:[%s846 + $0xc8] sm:$0xff]
        %v873 = vld [vmem:[%s846 + $0xd0] sm:$0xff]
        %v874 = vld [vmem:[%s846 + $0xd8] sm:$0xff]
        %v875 = vld [vmem:[%s846 + $0xe0] sm:$0xff]
        %v876 = vld [vmem:[%s846 + $0xe8] sm:$0xff]
        %v877 = vld [vmem:[%s846 + $0xf0] sm:$0xff]
        %v878 = vld [vmem:[%s846 + $0xf8] sm:$0xff]
        %v879 = vld [vmem:[%s846 + $0x100] sm:$0xff]
        %v880 = vld [vmem:[%s846 + $0x108] sm:$0xff]
        %v881 = vld [vmem:[%s846 + $0x110] sm:$0xff]
        %v882 = vld [vmem:[%s846 + $0x118] sm:$0xff]
        %v883 = vld [vmem:[%s846 + $0x120] sm:$0xff]
        %v884 = vld [vmem:[%s846 + $0x128] sm:$0xff]
        %v885 = vld [vmem:[%s846 + $0x130] sm:$0xff]
        %v886 = vld [vmem:[%s846 + $0x138] sm:$0xff]
        %v887 = vld [vmem:[%s846 + $0x140] sm:$0xff]
        %v888 = vld [vmem:[%s846 + $0x148] sm:$0xff]
        %v889 = vld [vmem:[%s846 + $0x150] sm:$0xff]
        %v890 = vld [vmem:[%s846 + $0x158] sm:$0xff]
        %v891 = vld [vmem:[%s846 + $0x160] sm:$0xff]
        %v892 = vld [vmem:[%s846 + $0x168] sm:$0xff]
        %v893 = vld [vmem:[%s846 + $0x170] sm:$0xff]
        %v894 = vld [vmem:[%s846 + $0x178] sm:$0xff]
        %v895 = vld [vmem:[%s846 + $0x180] sm:$0xff]
        %v896 = vld [vmem:[%s846 + $0x188] sm:$0xff]
        %v897 = vld [vmem:[%s846 + $0x190] sm:$0xff]
        %v898 = vld [vmem:[%s846 + $0x198] sm:$0xff]
        %v899 = vld [vmem:[%s846 + $0x1a0] sm:$0xff]
        %v900 = vld [vmem:[%s846 + $0x1a8] sm:$0xff]
        %v901 = vld [vmem:[%s846 + $0x1b0] sm:$0xff]
        %v902 = vld [vmem:[%s846 + $0x1b8] sm:$0xff]
        %v903 = vld [vmem:[%s846 + $0x1c0] sm:$0xff]
        %v904 = vld [vmem:[%s846 + $0x1c8] sm:$0xff]
        %v905 = vld [vmem:[%s846 + $0x1d0] sm:$0xff]
        %v906 = vld [vmem:[%s846 + $0x1d8] sm:$0xff]
        %v907 = vld [vmem:[%s846 + $0x1e0] sm:$0xff]
        %v908 = vld [vmem:[%s846 + $0x1e8] sm:$0xff]
        %v909 = vld [vmem:[%s846 + $0x1f0] sm:$0xff]
        %v910 = vld [vmem:[%s846 + $0x1f8] sm:$0xff]
        %v911 = vld [vmem:[#allocation2] sm:$0xff]
        %v912 = vld [vmem:[#allocation2 + $0x8] sm:$0xff]
        %v913 = vld [vmem:[#allocation2 + $0x10] sm:$0xff]
        %v914 = vld [vmem:[#allocation2 + $0x18] sm:$0xff]
        %v915 = vld [vmem:[#allocation2 + $0x20] sm:$0xff]
        %v916 = vld [vmem:[#allocation2 + $0x28] sm:$0xff]
        %v917 = vld [vmem:[#allocation2 + $0x30] sm:$0xff]
        %v918 = vld [vmem:[#allocation2 + $0x38] sm:$0xff]
        %v919 = vld [vmem:[#allocation2 + $0x40] sm:$0xff]
        %v920 = vld [vmem:[#allocation2 + $0x48] sm:$0xff]
        %v921 = vld [vmem:[#allocation2 + $0x50] sm:$0xff]
        %v922 = vld [vmem:[#allocation2 + $0x58] sm:$0xff]
        %v923 = vld [vmem:[#allocation2 + $0x60] sm:$0xff]
        %v924 = vld [vmem:[#allocation2 + $0x68] sm:$0xff]
        %v925 = vld [vmem:[#allocation2 + $0x70] sm:$0xff]
        %v926 = vld [vmem:[#allocation2 + $0x78] sm:$0xff]
        %v927 = vld [vmem:[#allocation2 + $0x80] sm:$0xff]
        %v928 = vld [vmem:[#allocation2 + $0x88] sm:$0xff]
        %v929 = vld [vmem:[#allocation2 + $0x90] sm:$0xff]
        %v930 = vld [vmem:[#allocation2 + $0x98] sm:$0xff]
        %v931 = vld [vmem:[#allocation2 + $0xa0] sm:$0xff]
        %v932 = vld [vmem:[#allocation2 + $0xa8] sm:$0xff]
        %v933 = vld [vmem:[#allocation2 + $0xb0] sm:$0xff]
        %v934 = vld [vmem:[#allocation2 + $0xb8] sm:$0xff]
        %v935 = vld [vmem:[#allocation2 + $0xc0] sm:$0xff]
        %v936 = vld [vmem:[#allocation2 + $0xc8] sm:$0xff]
        %v937 = vld [vmem:[#allocation2 + $0xd0] sm:$0xff]
        %v938 = vld [vmem:[#allocation2 + $0xd8] sm:$0xff]
        %v939 = vld [vmem:[#allocation2 + $0xe0] sm:$0xff]
        %v940 = vld [vmem:[#allocation2 + $0xe8] sm:$0xff]
        %v941 = vld [vmem:[#allocation2 + $0xf0] sm:$0xff]
        %v942 = vld [vmem:[#allocation2 + $0xf8] sm:$0xff]
        %v943 = vld [vmem:[#allocation2 + $0x100] sm:$0xff]
        %v944 = vld [vmem:[#allocation2 + $0x108] sm:$0xff]
        %v945 = vld [vmem:[#allocation2 + $0x110] sm:$0xff]
        %v946 = vld [vmem:[#allocation2 + $0x118] sm:$0xff]
        %v947 = vld [vmem:[#allocation2 + $0x120] sm:$0xff]
        %v948 = vld [vmem:[#allocation2 + $0x128] sm:$0xff]
        %v949 = vld [vmem:[#allocation2 + $0x130] sm:$0xff]
        %v950 = vld [vmem:[#allocation2 + $0x138] sm:$0xff]
        %v951 = vld [vmem:[#allocation2 + $0x140] sm:$0xff]
        %v952 = vld [vmem:[#allocation2 + $0x148] sm:$0xff]
        %v953 = vld [vmem:[#allocation2 + $0x150] sm:$0xff]
        %v954 = vld [vmem:[#allocation2 + $0x158] sm:$0xff]
        %v955 = vld [vmem:[#allocation2 + $0x160] sm:$0xff]
        %v956 = vld [vmem:[#allocation2 + $0x168] sm:$0xff]
        %v957 = vld [vmem:[#allocation2 + $0x170] sm:$0xff]
        %v958 = vld [vmem:[#allocation2 + $0x178] sm:$0xff]
        %v959 = vld [vmem:[#allocation2 + $0x180] sm:$0xff]
        %v960 = vld [vmem:[#allocation2 + $0x188] sm:$0xff]
        %v961 = vld [vmem:[#allocation2 + $0x190] sm:$0xff]
        %v962 = vld [vmem:[#allocation2 + $0x198] sm:$0xff]
        %v963 = vld [vmem:[#allocation2 + $0x1a0] sm:$0xff]
        %v964 = vld [vmem:[#allocation2 + $0x1a8] sm:$0xff]
        %v965 = vld [vmem:[#allocation2 + $0x1b0] sm:$0xff]
        %v966 = vld [vmem:[#allocation2 + $0x1b8] sm:$0xff]
        %v967 = vld [vmem:[#allocation2 + $0x1c0] sm:$0xff]
        %v968 = vld [vmem:[#allocation2 + $0x1c8] sm:$0xff]
        %v969 = vld [vmem:[#allocation2 + $0x1d0] sm:$0xff]
        %v970 = vld [vmem:[#allocation2 + $0x1d8] sm:$0xff]
        %v971 = vld [vmem:[#allocation2 + $0x1e0] sm:$0xff]
        %v972 = vld [vmem:[#allocation2 + $0x1e8] sm:$0xff]
        %v973 = vld [vmem:[#allocation2 + $0x1f0] sm:$0xff]
        %v974 = vld [vmem:[#allocation2 + $0x1f8] sm:$0xff]
        %v975 = vld [vmem:[%s744] sm:$0xff]
        %v976 = vld [vmem:[%s744 + $0x8] sm:$0xff]
        %v977 = vld [vmem:[%s744 + $0x10] sm:$0xff]
        %v978 = vld [vmem:[%s744 + $0x18] sm:$0xff]
        %v979 = vld [vmem:[%s744 + $0x20] sm:$0xff]
        %v980 = vld [vmem:[%s744 + $0x28] sm:$0xff]
        %v981 = vld [vmem:[%s744 + $0x30] sm:$0xff]
        %v982 = vld [vmem:[%s744 + $0x38] sm:$0xff]
        %v983 = vld [vmem:[%s744 + $0x40] sm:$0xff]
        %v984 = vld [vmem:[%s744 + $0x48] sm:$0xff]
        %v985 = vld [vmem:[%s744 + $0x50] sm:$0xff]
        %v986 = vld [vmem:[%s744 + $0x58] sm:$0xff]
        %v987 = vld [vmem:[%s744 + $0x60] sm:$0xff]
        %v988 = vld [vmem:[%s744 + $0x68] sm:$0xff]
        %v989 = vld [vmem:[%s744 + $0x70] sm:$0xff]
        %v990 = vld [vmem:[%s744 + $0x78] sm:$0xff]
        %v991 = vld [vmem:[%s744 + $0x80] sm:$0xff]
        %v992 = vld [vmem:[%s744 + $0x88] sm:$0xff]
        %v993 = vld [vmem:[%s744 + $0x90] sm:$0xff]
        %v994 = vld [vmem:[%s744 + $0x98] sm:$0xff]
        %v995 = vld [vmem:[%s744 + $0xa0] sm:$0xff]
        %v996 = vld [vmem:[%s744 + $0xa8] sm:$0xff]
        %v997 = vld [vmem:[%s744 + $0xb0] sm:$0xff]
        %v998 = vld [vmem:[%s744 + $0xb8] sm:$0xff]
        %v999 = vld [vmem:[%s744 + $0xc0] sm:$0xff]
        %v1000 = vld [vmem:[%s744 + $0xc8] sm:$0xff]
        %v1001 = vld [vmem:[%s744 + $0xd0] sm:$0xff]
        %v1002 = vld [vmem:[%s744 + $0xd8] sm:$0xff]
        %v1003 = vld [vmem:[%s744 + $0xe0] sm:$0xff]
        %v1004 = vld [vmem:[%s744 + $0xe8] sm:$0xff]
        %v1005 = vld [vmem:[%s744 + $0xf0] sm:$0xff]
        %v1006 = vld [vmem:[%s744 + $0xf8] sm:$0xff]
        %v1007 = vld [vmem:[%s744 + $0x100] sm:$0xff]
        %v1008 = vld [vmem:[%s744 + $0x108] sm:$0xff]
        %v1009 = vld [vmem:[%s744 + $0x110] sm:$0xff]
        %v1010 = vld [vmem:[%s744 + $0x118] sm:$0xff]
        %v1011 = vld [vmem:[%s744 + $0x120] sm:$0xff]
        %v1012 = vld [vmem:[%s744 + $0x128] sm:$0xff]
        %v1013 = vld [vmem:[%s744 + $0x130] sm:$0xff]
        %v1014 = vld [vmem:[%s744 + $0x138] sm:$0xff]
        %v1015 = vld [vmem:[%s744 + $0x140] sm:$0xff]
        %v1016 = vld [vmem:[%s744 + $0x148] sm:$0xff]
        %v1017 = vld [vmem:[%s744 + $0x150] sm:$0xff]
        %v1018 = vld [vmem:[%s744 + $0x158] sm:$0xff]
        %v1019 = vld [vmem:[%s744 + $0x160] sm:$0xff]
        %v1020 = vld [vmem:[%s744 + $0x168] sm:$0xff]
        %v1021 = vld [vmem:[%s744 + $0x170] sm:$0xff]
        %v1022 = vld [vmem:[%s744 + $0x178] sm:$0xff]
        %v1023 = vld [vmem:[%s744 + $0x180] sm:$0xff]
        %v1024 = vld [vmem:[%s744 + $0x188] sm:$0xff]
        %v1025 = vld [vmem:[%s744 + $0x190] sm:$0xff]
        %v1026 = vld [vmem:[%s744 + $0x198] sm:$0xff]
        %v1027 = vld [vmem:[%s744 + $0x1a0] sm:$0xff]
        %v1028 = vld [vmem:[%s744 + $0x1a8] sm:$0xff]
        %v1029 = vld [vmem:[%s744 + $0x1b0] sm:$0xff]
        %v1030 = vld [vmem:[%s744 + $0x1b8] sm:$0xff]
        %v1031 = vld [vmem:[%s744 + $0x1c0] sm:$0xff]
        %v1032 = vld [vmem:[%s744 + $0x1c8] sm:$0xff]
        %v1033 = vld [vmem:[%s744 + $0x1d0] sm:$0xff]
        %v1034 = vld [vmem:[%s744 + $0x1d8] sm:$0xff]
        %v1035 = vld [vmem:[%s744 + $0x1e0] sm:$0xff]
        %v1036 = vld [vmem:[%s744 + $0x1e8] sm:$0xff]
        %v1037 = vld [vmem:[%s744 + $0x1f0] sm:$0xff]
        %v1038 = vld [vmem:[%s744 + $0x1f8] sm:$0xff]
        %v1039 = vld [vmem:[%s744 + $0x200] sm:$0xff]
        %v1040 = vld [vmem:[%s744 + $0x208] sm:$0xff]
        %v1041 = vld [vmem:[%s744 + $0x210] sm:$0xff]
        %v1042 = vld [vmem:[%s744 + $0x218] sm:$0xff]
        %v1043 = vld [vmem:[%s744 + $0x220] sm:$0xff]
        %v1044 = vld [vmem:[%s744 + $0x228] sm:$0xff]
        %v1045 = vld [vmem:[%s744 + $0x230] sm:$0xff]
        %v1046 = vld [vmem:[%s744 + $0x238] sm:$0xff]
        %v1047 = vld [vmem:[%s744 + $0x240] sm:$0xff]
        %v1048 = vld [vmem:[%s744 + $0x248] sm:$0xff]
        %v1049 = vld [vmem:[%s744 + $0x250] sm:$0xff]
        %v1050 = vld [vmem:[%s744 + $0x258] sm:$0xff]
        %v1051 = vld [vmem:[%s744 + $0x260] sm:$0xff]
        %v1052 = vld [vmem:[%s744 + $0x268] sm:$0xff]
        %v1053 = vld [vmem:[%s744 + $0x270] sm:$0xff]
        %v1054 = vld [vmem:[%s744 + $0x278] sm:$0xff]
        %v1055 = vld [vmem:[%s744 + $0x280] sm:$0xff]
        %v1056 = vld [vmem:[%s744 + $0x288] sm:$0xff]
        %v1057 = vld [vmem:[%s744 + $0x290] sm:$0xff]
        %v1058 = vld [vmem:[%s744 + $0x298] sm:$0xff]
        %v1059 = vld [vmem:[%s744 + $0x2a0] sm:$0xff]
        %v1060 = vld [vmem:[%s744 + $0x2a8] sm:$0xff]
        %v1061 = vld [vmem:[%s744 + $0x2b0] sm:$0xff]
        %v1062 = vld [vmem:[%s744 + $0x2b8] sm:$0xff]
        %v1063 = vld [vmem:[%s744 + $0x2c0] sm:$0xff]
        %v1064 = vld [vmem:[%s744 + $0x2c8] sm:$0xff]
        %v1065 = vld [vmem:[%s744 + $0x2d0] sm:$0xff]
        %v1066 = vld [vmem:[%s744 + $0x2d8] sm:$0xff]
        %v1067 = vld [vmem:[%s744 + $0x2e0] sm:$0xff]
        %v1068 = vld [vmem:[%s744 + $0x2e8] sm:$0xff]
        %v1069 = vld [vmem:[%s744 + $0x2f0] sm:$0xff]
        %v1070 = vld [vmem:[%s744 + $0x2f8] sm:$0xff]
        %v1071 = vld [vmem:[%s744 + $0x300] sm:$0xff]
        %v1072 = vld [vmem:[%s744 + $0x308] sm:$0xff]
        %v1073 = vld [vmem:[%s744 + $0x310] sm:$0xff]
        %v1074 = vld [vmem:[%s744 + $0x318] sm:$0xff]
        %v1075 = vld [vmem:[%s744 + $0x320] sm:$0xff]
        %v1076 = vld [vmem:[%s744 + $0x328] sm:$0xff]
        %v1077 = vld [vmem:[%s744 + $0x330] sm:$0xff]
        %v1078 = vld [vmem:[%s744 + $0x338] sm:$0xff]
        %v1079 = vld [vmem:[%s744 + $0x340] sm:$0xff]
        %v1080 = vld [vmem:[%s744 + $0x348] sm:$0xff]
        %v1081 = vld [vmem:[%s744 + $0x350] sm:$0xff]
        %v1082 = vld [vmem:[%s744 + $0x358] sm:$0xff]
        %v1083 = vld [vmem:[%s744 + $0x360] sm:$0xff]
        %v1084 = vld [vmem:[%s744 + $0x368] sm:$0xff]
        %v1085 = vld [vmem:[%s744 + $0x370] sm:$0xff]
        %v1086 = vld [vmem:[%s744 + $0x378] sm:$0xff]
        %v1087 = vld [vmem:[%s744 + $0x380] sm:$0xff]
        %v1088 = vld [vmem:[%s744 + $0x388] sm:$0xff]
        %v1089 = vld [vmem:[%s744 + $0x390] sm:$0xff]
        %v1090 = vld [vmem:[%s744 + $0x398] sm:$0xff]
        %v1091 = vld [vmem:[%s744 + $0x3a0] sm:$0xff]
        %v1092 = vld [vmem:[%s744 + $0x3a8] sm:$0xff]
        %v1093 = vld [vmem:[%s744 + $0x3b0] sm:$0xff]
        %v1094 = vld [vmem:[%s744 + $0x3b8] sm:$0xff]
        %v1095 = vld [vmem:[%s744 + $0x3c0] sm:$0xff]
        %v1096 = vld [vmem:[%s744 + $0x3c8] sm:$0xff]
        %v1097 = vld [vmem:[%s744 + $0x3d0] sm:$0xff]
        %v1098 = vld [vmem:[%s744 + $0x3d8] sm:$0xff]
        %v1099 = vld [vmem:[%s744 + $0x3e0] sm:$0xff]
        %v1100 = vld [vmem:[%s744 + $0x3e8] sm:$0xff]
        %v1101 = vld [vmem:[%s744 + $0x3f0] sm:$0xff]
        %v1102 = vld [vmem:[%s744 + $0x3f8] sm:$0xff]
        %v1103 = vld [vmem:[%s744 + $0x400] sm:$0xff]
        %v1104 = vld [vmem:[%s744 + $0x408] sm:$0xff]
        %v1105 = vld [vmem:[%s744 + $0x410] sm:$0xff]
        %v1106 = vld [vmem:[%s744 + $0x418] sm:$0xff]
        %v1107 = vld [vmem:[%s744 + $0x420] sm:$0xff]
        %v1108 = vld [vmem:[%s744 + $0x428] sm:$0xff]
        %v1109 = vld [vmem:[%s744 + $0x430] sm:$0xff]
        %v1110 = vld [vmem:[%s744 + $0x438] sm:$0xff]
        %v1111 = vld [vmem:[%s744 + $0x440] sm:$0xff]
        %v1112 = vld [vmem:[%s744 + $0x448] sm:$0xff]
        %v1113 = vld [vmem:[%s744 + $0x450] sm:$0xff]
        %v1114 = vld [vmem:[%s744 + $0x458] sm:$0xff]
        %v1115 = vld [vmem:[%s744 + $0x460] sm:$0xff]
        %v1116 = vld [vmem:[%s744 + $0x468] sm:$0xff]
        %v1117 = vld [vmem:[%s744 + $0x470] sm:$0xff]
        %v1118 = vld [vmem:[%s744 + $0x478] sm:$0xff]
        %v1119 = vld [vmem:[%s744 + $0x480] sm:$0xff]
        %v1120 = vld [vmem:[%s744 + $0x488] sm:$0xff]
        %v1121 = vld [vmem:[%s744 + $0x490] sm:$0xff]
        %v1122 = vld [vmem:[%s744 + $0x498] sm:$0xff]
        %v1123 = vld [vmem:[%s744 + $0x4a0] sm:$0xff]
        %v1124 = vld [vmem:[%s744 + $0x4a8] sm:$0xff]
        %v1125 = vld [vmem:[%s744 + $0x4b0] sm:$0xff]
        %v1126 = vld [vmem:[%s744 + $0x4b8] sm:$0xff]
        %v1127 = vld [vmem:[%s744 + $0x4c0] sm:$0xff]
        %v1128 = vld [vmem:[%s744 + $0x4c8] sm:$0xff]
        %v1129 = vld [vmem:[%s744 + $0x4d0] sm:$0xff]
        %v1130 = vld [vmem:[%s744 + $0x4d8] sm:$0xff]
        %v1131 = vld [vmem:[%s744 + $0x4e0] sm:$0xff]
        %v1132 = vld [vmem:[%s744 + $0x4e8] sm:$0xff]
        %v1133 = vld [vmem:[%s744 + $0x4f0] sm:$0xff]
        %v1134 = vld [vmem:[%s744 + $0x4f8] sm:$0xff]
        %v1135 = vld [vmem:[%s744 + $0x500] sm:$0xff]
        %v1136 = vld [vmem:[%s744 + $0x508] sm:$0xff]
        %v1137 = vld [vmem:[%s744 + $0x510] sm:$0xff]
        %v1138 = vld [vmem:[%s744 + $0x518] sm:$0xff]
        %v1139 = vld [vmem:[%s744 + $0x520] sm:$0xff]
        %v1140 = vld [vmem:[%s744 + $0x528] sm:$0xff]
        %v1141 = vld [vmem:[%s744 + $0x530] sm:$0xff]
        %v1142 = vld [vmem:[%s744 + $0x538] sm:$0xff]
        %v1143 = vld [vmem:[%s744 + $0x540] sm:$0xff]
        %v1144 = vld [vmem:[%s744 + $0x548] sm:$0xff]
        %v1145 = vld [vmem:[%s744 + $0x550] sm:$0xff]
        %v1146 = vld [vmem:[%s744 + $0x558] sm:$0xff]
        %v1147 = vld [vmem:[%s744 + $0x560] sm:$0xff]
        %v1148 = vld [vmem:[%s744 + $0x568] sm:$0xff]
        %v1149 = vld [vmem:[%s744 + $0x570] sm:$0xff]
        %v1150 = vld [vmem:[%s744 + $0x578] sm:$0xff]
        %v1151 = vld [vmem:[%s744 + $0x580] sm:$0xff]
        %v1152 = vld [vmem:[%s744 + $0x588] sm:$0xff]
        %v1153 = vld [vmem:[%s744 + $0x590] sm:$0xff]
        %v1154 = vld [vmem:[%s744 + $0x598] sm:$0xff]
        %v1155 = vld [vmem:[%s744 + $0x5a0] sm:$0xff]
        %v1156 = vld [vmem:[%s744 + $0x5a8] sm:$0xff]
        %v1157 = vld [vmem:[%s744 + $0x5b0] sm:$0xff]
        %v1158 = vld [vmem:[%s744 + $0x5b8] sm:$0xff]
        %v1159 = vld [vmem:[%s744 + $0x5c0] sm:$0xff]
        %v1160 = vld [vmem:[%s744 + $0x5c8] sm:$0xff]
        %v1161 = vld [vmem:[%s744 + $0x5d0] sm:$0xff]
        %v1162 = vld [vmem:[%s744 + $0x5d8] sm:$0xff]
        %v1163 = vld [vmem:[%s744 + $0x5e0] sm:$0xff]
        %v1164 = vld [vmem:[%s744 + $0x5e8] sm:$0xff]
        %v1165 = vld [vmem:[%s744 + $0x5f0] sm:$0xff]
        %v1166 = vld [vmem:[%s744 + $0x5f8] sm:$0xff]
        %v1167 = vld [vmem:[%s744 + $0x600] sm:$0xff]
        %v1168 = vld [vmem:[%s744 + $0x608] sm:$0xff]
        %v1169 = vld [vmem:[%s744 + $0x610] sm:$0xff]
        %v1170 = vld [vmem:[%s744 + $0x618] sm:$0xff]
        %v1171 = vld [vmem:[%s744 + $0x620] sm:$0xff]
        %v1172 = vld [vmem:[%s744 + $0x628] sm:$0xff]
        %v1173 = vld [vmem:[%s744 + $0x630] sm:$0xff]
        %v1174 = vld [vmem:[%s744 + $0x638] sm:$0xff]
        %v1175 = vld [vmem:[%s744 + $0x640] sm:$0xff]
        %v1176 = vld [vmem:[%s744 + $0x648] sm:$0xff]
        %v1177 = vld [vmem:[%s744 + $0x650] sm:$0xff]
        %v1178 = vld [vmem:[%s744 + $0x658] sm:$0xff]
        %v1179 = vld [vmem:[%s744 + $0x660] sm:$0xff]
        %v1180 = vld [vmem:[%s744 + $0x668] sm:$0xff]
        %v1181 = vld [vmem:[%s744 + $0x670] sm:$0xff]
        %v1182 = vld [vmem:[%s744 + $0x678] sm:$0xff]
        %v1183 = vld [vmem:[%s744 + $0x680] sm:$0xff]
        %v1184 = vld [vmem:[%s744 + $0x688] sm:$0xff]
        %v1185 = vld [vmem:[%s744 + $0x690] sm:$0xff]
        %v1186 = vld [vmem:[%s744 + $0x698] sm:$0xff]
        %v1187 = vld [vmem:[%s744 + $0x6a0] sm:$0xff]
        %v1188 = vld [vmem:[%s744 + $0x6a8] sm:$0xff]
        %v1189 = vld [vmem:[%s744 + $0x6b0] sm:$0xff]
        %v1190 = vld [vmem:[%s744 + $0x6b8] sm:$0xff]
        %v1191 = vld [vmem:[%s744 + $0x6c0] sm:$0xff]
        %v1192 = vld [vmem:[%s744 + $0x6c8] sm:$0xff]
        %v1193 = vld [vmem:[%s744 + $0x6d0] sm:$0xff]
        %v1194 = vld [vmem:[%s744 + $0x6d8] sm:$0xff]
        %v1195 = vld [vmem:[%s744 + $0x6e0] sm:$0xff]
        %v1196 = vld [vmem:[%s744 + $0x6e8] sm:$0xff]
        %v1197 = vld [vmem:[%s744 + $0x6f0] sm:$0xff]
        %v1198 = vld [vmem:[%s744 + $0x6f8] sm:$0xff]
        %v1199 = vld [vmem:[%s744 + $0x700] sm:$0xff]
        %v1200 = vld [vmem:[%s744 + $0x708] sm:$0xff]
        %v1201 = vld [vmem:[%s744 + $0x710] sm:$0xff]
        %v1202 = vld [vmem:[%s744 + $0x718] sm:$0xff]
        %v1203 = vld [vmem:[%s744 + $0x720] sm:$0xff]
        %v1204 = vld [vmem:[%s744 + $0x728] sm:$0xff]
        %v1205 = vld [vmem:[%s744 + $0x730] sm:$0xff]
        %v1206 = vld [vmem:[%s744 + $0x738] sm:$0xff]
        %v1207 = vld [vmem:[%s744 + $0x740] sm:$0xff]
        %v1208 = vld [vmem:[%s744 + $0x748] sm:$0xff]
        %v1209 = vld [vmem:[%s744 + $0x750] sm:$0xff]
        %v1210 = vld [vmem:[%s744 + $0x758] sm:$0xff]
        %v1211 = vld [vmem:[%s744 + $0x760] sm:$0xff]
        %v1212 = vld [vmem:[%s744 + $0x768] sm:$0xff]
        %v1213 = vld [vmem:[%s744 + $0x770] sm:$0xff]
        %v1214 = vld [vmem:[%s744 + $0x778] sm:$0xff]
        %v1215 = vld [vmem:[%s744 + $0x780] sm:$0xff]
        %v1216 = vld [vmem:[%s744 + $0x788] sm:$0xff]
        %v1217 = vld [vmem:[%s744 + $0x790] sm:$0xff]
        %v1218 = vld [vmem:[%s744 + $0x798] sm:$0xff]
        %v1219 = vld [vmem:[%s744 + $0x7a0] sm:$0xff]
        %v1220 = vld [vmem:[%s744 + $0x7a8] sm:$0xff]
        %v1221 = vld [vmem:[%s744 + $0x7b0] sm:$0xff]
        %v1222 = vld [vmem:[%s744 + $0x7b8] sm:$0xff]
        %v1223 = vld [vmem:[%s744 + $0x7c0] sm:$0xff]
        %v1224 = vld [vmem:[%s744 + $0x7c8] sm:$0xff]
        %v1225 = vld [vmem:[%s744 + $0x7d0] sm:$0xff]
        %v1226 = vld [vmem:[%s744 + $0x7d8] sm:$0xff]
        %v1227 = vld [vmem:[%s744 + $0x7e0] sm:$0xff]
        %v1228 = vld [vmem:[%s744 + $0x7e8] sm:$0xff]
        %v1229 = vld [vmem:[%s744 + $0x7f0] sm:$0xff]
        %v1230 = vld [vmem:[%s744 + $0x7f8] sm:$0xff]
        %1231 = vmatpush.msra.mxu0 %v862
        %1232 = vmatpush.msra.mxu0 %v861
        %1233 = vmatpush.msra.mxu0 %v860
        %1234 = vmatpush.msra.mxu0 %v859
        %1235 = vmatpush.msra.mxu0 %v858
        %1236 = vmatpush.msra.mxu0 %v857
        %1237 = vmatpush.msra.mxu0 %v856
        %1238 = vmatpush.msra.mxu0 %v855
        %1239 = vmatpush.msra.mxu0 %v854
        %1240 = vmatpush.msra.mxu0 %v853
        %1241 = vmatpush.msra.mxu0 %v852
        %1242 = vmatpush.msra.mxu0 %v851
        %1243 = vmatpush.msra.mxu0 %v850
        %1244 = vmatpush.msra.mxu0 %v849
        %1245 = vmatpush.msra.mxu0 %v848
        %1246 = vmatpush.msra.mxu0 %v847
        %1247 = vmatmul.f32.gmra.mxu0 %v975
        %v1248 = vpop.f32.mrf.mxu0
        %v1249 = vadd.f32 0.0, %v1248
        %1250 = vmatmul.f32.gmra.mxu0 %v979
        %v1251 = vpop.f32.mrf.mxu0
        %v1252 = vadd.f32 0.0, %v1251
        %1253 = vmatmul.f32.gmra.mxu0 %v983
        %v1254 = vpop.f32.mrf.mxu0
        %v1255 = vadd.f32 0.0, %v1254
        %1256 = vmatmul.f32.gmra.mxu0 %v987
        %v1257 = vpop.f32.mrf.mxu0
        %v1258 = vadd.f32 0.0, %v1257
        %1259 = vmatmul.f32.gmra.mxu0 %v991
        %v1260 = vpop.f32.mrf.mxu0
        %v1261 = vadd.f32 0.0, %v1260
        %1262 = vmatmul.f32.gmra.mxu0 %v995
        %v1263 = vpop.f32.mrf.mxu0
        %v1264 = vadd.f32 0.0, %v1263
        %1265 = vmatmul.f32.gmra.mxu0 %v999
        %v1266 = vpop.f32.mrf.mxu0
        %v1267 = vadd.f32 0.0, %v1266
        %1268 = vmatmul.f32.gmra.mxu0 %v1003
        %v1269 = vpop.f32.mrf.mxu0
        %v1270 = vadd.f32 0.0, %v1269
        %1271 = vmatmul.f32.gmra.mxu0 %v1007
        %v1272 = vpop.f32.mrf.mxu0
        %v1273 = vadd.f32 0.0, %v1272
        %1274 = vmatmul.f32.gmra.mxu0 %v1011
        %v1275 = vpop.f32.mrf.mxu0
        %v1276 = vadd.f32 0.0, %v1275
        %1277 = vmatmul.f32.gmra.mxu0 %v1015
        %v1278 = vpop.f32.mrf.mxu0
        %v1279 = vadd.f32 0.0, %v1278
        %1280 = vmatmul.f32.gmra.mxu0 %v1019
        %v1281 = vpop.f32.mrf.mxu0
        %v1282 = vadd.f32 0.0, %v1281
        %1283 = vmatmul.f32.gmra.mxu0 %v1023
        %v1284 = vpop.f32.mrf.mxu0
        %v1285 = vadd.f32 0.0, %v1284
        %1286 = vmatmul.f32.gmra.mxu0 %v1027
        %v1287 = vpop.f32.mrf.mxu0
        %v1288 = vadd.f32 0.0, %v1287
        %1289 = vmatmul.f32.gmra.mxu0 %v1031
        %v1290 = vpop.f32.mrf.mxu0
        %v1291 = vadd.f32 0.0, %v1290
        %1292 = vmatmul.f32.gmra.mxu0 %v1035
        %v1293 = vpop.f32.mrf.mxu0
        %v1294 = vadd.f32 0.0, %v1293
        %1295 = vmatmul.f32.gmra.mxu0 %v1039
        %v1296 = vpop.f32.mrf.mxu0
        %v1297 = vadd.f32 0.0, %v1296
        %1298 = vmatmul.f32.gmra.mxu0 %v1043
        %v1299 = vpop.f32.mrf.mxu0
        %v1300 = vadd.f32 0.0, %v1299
        %1301 = vmatmul.f32.gmra.mxu0 %v1047
        %v1302 = vpop.f32.mrf.mxu0
        %v1303 = vadd.f32 0.0, %v1302
        %1304 = vmatmul.f32.gmra.mxu0 %v1051
        %v1305 = vpop.f32.mrf.mxu0
        %v1306 = vadd.f32 0.0, %v1305
        %1307 = vmatmul.f32.gmra.mxu0 %v1055
        %v1308 = vpop.f32.mrf.mxu0
        %v1309 = vadd.f32 0.0, %v1308
        %1310 = vmatmul.f32.gmra.mxu0 %v1059
        %v1311 = vpop.f32.mrf.mxu0
        %v1312 = vadd.f32 0.0, %v1311
        %1313 = vmatmul.f32.gmra.mxu0 %v1063
        %v1314 = vpop.f32.mrf.mxu0
        %v1315 = vadd.f32 0.0, %v1314
        %1316 = vmatmul.f32.gmra.mxu0 %v1067
        %v1317 = vpop.f32.mrf.mxu0
        %v1318 = vadd.f32 0.0, %v1317
        %1319 = vmatmul.f32.gmra.mxu0 %v1071
        %v1320 = vpop.f32.mrf.mxu0
        %v1321 = vadd.f32 0.0, %v1320
        %1322 = vmatmul.f32.gmra.mxu0 %v1075
        %v1323 = vpop.f32.mrf.mxu0
        %v1324 = vadd.f32 0.0, %v1323
        %1325 = vmatmul.f32.gmra.mxu0 %v1079
        %v1326 = vpop.f32.mrf.mxu0
        %v1327 = vadd.f32 0.0, %v1326
        %1328 = vmatmul.f32.gmra.mxu0 %v1083
        %v1329 = vpop.f32.mrf.mxu0
        %v1330 = vadd.f32 0.0, %v1329
        %1331 = vmatmul.f32.gmra.mxu0 %v1087
        %v1332 = vpop.f32.mrf.mxu0
        %v1333 = vadd.f32 0.0, %v1332
        %1334 = vmatmul.f32.gmra.mxu0 %v1091
        %v1335 = vpop.f32.mrf.mxu0
        %v1336 = vadd.f32 0.0, %v1335
        %1337 = vmatmul.f32.gmra.mxu0 %v1095
        %v1338 = vpop.f32.mrf.mxu0
        %v1339 = vadd.f32 0.0, %v1338
        %1340 = vmatmul.f32.gmra.mxu0 %v1099
        %v1341 = vpop.f32.mrf.mxu0
        %v1342 = vadd.f32 0.0, %v1341
        %1343 = vmatmul.f32.gmra.mxu0 %v1103
        %v1344 = vpop.f32.mrf.mxu0
        %v1345 = vadd.f32 0.0, %v1344
        %1346 = vmatmul.f32.gmra.mxu0 %v1107
        %v1347 = vpop.f32.mrf.mxu0
        %v1348 = vadd.f32 0.0, %v1347
        %1349 = vmatmul.f32.gmra.mxu0 %v1111
        %v1350 = vpop.f32.mrf.mxu0
        %v1351 = vadd.f32 0.0, %v1350
        %1352 = vmatmul.f32.gmra.mxu0 %v1115
        %v1353 = vpop.f32.mrf.mxu0
        %v1354 = vadd.f32 0.0, %v1353
        %1355 = vmatmul.f32.gmra.mxu0 %v1119
        %v1356 = vpop.f32.mrf.mxu0
        %v1357 = vadd.f32 0.0, %v1356
        %1358 = vmatmul.f32.gmra.mxu0 %v1123
        %v1359 = vpop.f32.mrf.mxu0
        %v1360 = vadd.f32 0.0, %v1359
        %1361 = vmatmul.f32.gmra.mxu0 %v1127
        %v1362 = vpop.f32.mrf.mxu0
        %v1363 = vadd.f32 0.0, %v1362
        %1364 = vmatmul.f32.gmra.mxu0 %v1131
        %v1365 = vpop.f32.mrf.mxu0
        %v1366 = vadd.f32 0.0, %v1365
        %1367 = vmatmul.f32.gmra.mxu0 %v1135
        %v1368 = vpop.f32.mrf.mxu0
        %v1369 = vadd.f32 0.0, %v1368
        %1370 = vmatmul.f32.gmra.mxu0 %v1139
        %v1371 = vpop.f32.mrf.mxu0
        %v1372 = vadd.f32 0.0, %v1371
        %1373 = vmatmul.f32.gmra.mxu0 %v1143
        %v1374 = vpop.f32.mrf.mxu0
        %v1375 = vadd.f32 0.0, %v1374
        %1376 = vmatmul.f32.gmra.mxu0 %v1147
        %v1377 = vpop.f32.mrf.mxu0
        %v1378 = vadd.f32 0.0, %v1377
        %1379 = vmatmul.f32.gmra.mxu0 %v1151
        %v1380 = vpop.f32.mrf.mxu0
        %v1381 = vadd.f32 0.0, %v1380
        %1382 = vmatmul.f32.gmra.mxu0 %v1155
        %v1383 = vpop.f32.mrf.mxu0
        %v1384 = vadd.f32 0.0, %v1383
        %1385 = vmatmul.f32.gmra.mxu0 %v1159
        %v1386 = vpop.f32.mrf.mxu0
        %v1387 = vadd.f32 0.0, %v1386
        %1388 = vmatmul.f32.gmra.mxu0 %v1163
        %v1389 = vpop.f32.mrf.mxu0
        %v1390 = vadd.f32 0.0, %v1389
        %1391 = vmatmul.f32.gmra.mxu0 %v1167
        %v1392 = vpop.f32.mrf.mxu0
        %v1393 = vadd.f32 0.0, %v1392
        %1394 = vmatmul.f32.gmra.mxu0 %v1171
        %v1395 = vpop.f32.mrf.mxu0
        %v1396 = vadd.f32 0.0, %v1395
        %1397 = vmatmul.f32.gmra.mxu0 %v1175
        %v1398 = vpop.f32.mrf.mxu0
        %v1399 = vadd.f32 0.0, %v1398
        %1400 = vmatmul.f32.gmra.mxu0 %v1179
        %v1401 = vpop.f32.mrf.mxu0
        %v1402 = vadd.f32 0.0, %v1401
        %1403 = vmatmul.f32.gmra.mxu0 %v1183
        %v1404 = vpop.f32.mrf.mxu0
        %v1405 = vadd.f32 0.0, %v1404
        %1406 = vmatmul.f32.gmra.mxu0 %v1187
        %v1407 = vpop.f32.mrf.mxu0
        %v1408 = vadd.f32 0.0, %v1407
        %1409 = vmatmul.f32.gmra.mxu0 %v1191
        %v1410 = vpop.f32.mrf.mxu0
        %v1411 = vadd.f32 0.0, %v1410
        %1412 = vmatmul.f32.gmra.mxu0 %v1195
        %v1413 = vpop.f32.mrf.mxu0
        %v1414 = vadd.f32 0.0, %v1413
        %1415 = vmatmul.f32.gmra.mxu0 %v1199
        %v1416 = vpop.f32.mrf.mxu0
        %v1417 = vadd.f32 0.0, %v1416
        %1418 = vmatmul.f32.gmra.mxu0 %v1203
        %v1419 = vpop.f32.mrf.mxu0
        %v1420 = vadd.f32 0.0, %v1419
        %1421 = vmatmul.f32.gmra.mxu0 %v1207
        %v1422 = vpop.f32.mrf.mxu0
        %v1423 = vadd.f32 0.0, %v1422
        %1424 = vmatmul.f32.gmra.mxu0 %v1211
        %v1425 = vpop.f32.mrf.mxu0
        %v1426 = vadd.f32 0.0, %v1425
        %1427 = vmatmul.f32.gmra.mxu0 %v1215
        %v1428 = vpop.f32.mrf.mxu0
        %v1429 = vadd.f32 0.0, %v1428
        %1430 = vmatmul.f32.gmra.mxu0 %v1219
        %v1431 = vpop.f32.mrf.mxu0
        %v1432 = vadd.f32 0.0, %v1431
        %1433 = vmatmul.f32.gmra.mxu0 %v1223
        %v1434 = vpop.f32.mrf.mxu0
        %v1435 = vadd.f32 0.0, %v1434
        %1436 = vmatmul.f32.gmra.mxu0 %v1227
        %v1437 = vpop.f32.mrf.mxu0
        %v1438 = vadd.f32 0.0, %v1437
        %1439 = vdwg.mxu0
        %1440 = vmatpush.msra.mxu0 %v878
        %1441 = vmatpush.msra.mxu0 %v877
        %1442 = vmatpush.msra.mxu0 %v876
        %1443 = vmatpush.msra.mxu0 %v875
        %1444 = vmatpush.msra.mxu0 %v874
        %1445 = vmatpush.msra.mxu0 %v873
        %1446 = vmatpush.msra.mxu0 %v872
        %1447 = vmatpush.msra.mxu0 %v871
        %1448 = vmatpush.msra.mxu0 %v870
        %1449 = vmatpush.msra.mxu0 %v869
        %1450 = vmatpush.msra.mxu0 %v868
        %1451 = vmatpush.msra.mxu0 %v867
        %1452 = vmatpush.msra.mxu0 %v866
        %1453 = vmatpush.msra.mxu0 %v865
        %1454 = vmatpush.msra.mxu0 %v864
        %1455 = vmatpush.msra.mxu0 %v863
        %1456 = vmatmul.f32.gmra.mxu0 %v976
        %v1457 = vpop.f32.mrf.mxu0
        %v1458 = vadd.f32 %v1249, %v1457
        %1459 = vmatmul.f32.gmra.mxu0 %v980
        %v1460 = vpop.f32.mrf.mxu0
        %v1461 = vadd.f32 %v1252, %v1460
        %1462 = vmatmul.f32.gmra.mxu0 %v984
        %v1463 = vpop.f32.mrf.mxu0
        %v1464 = vadd.f32 %v1255, %v1463
        %1465 = vmatmul.f32.gmra.mxu0 %v988
        %v1466 = vpop.f32.mrf.mxu0
        %v1467 = vadd.f32 %v1258, %v1466
        %1468 = vmatmul.f32.gmra.mxu0 %v992
        %v1469 = vpop.f32.mrf.mxu0
        %v1470 = vadd.f32 %v1261, %v1469
        %1471 = vmatmul.f32.gmra.mxu0 %v996
        %v1472 = vpop.f32.mrf.mxu0
        %v1473 = vadd.f32 %v1264, %v1472
        %1474 = vmatmul.f32.gmra.mxu0 %v1000
        %v1475 = vpop.f32.mrf.mxu0
        %v1476 = vadd.f32 %v1267, %v1475
        %1477 = vmatmul.f32.gmra.mxu0 %v1004
        %v1478 = vpop.f32.mrf.mxu0
        %v1479 = vadd.f32 %v1270, %v1478
        %1480 = vmatmul.f32.gmra.mxu0 %v1008
        %v1481 = vpop.f32.mrf.mxu0
        %v1482 = vadd.f32 %v1273, %v1481
        %1483 = vmatmul.f32.gmra.mxu0 %v1012
        %v1484 = vpop.f32.mrf.mxu0
        %v1485 = vadd.f32 %v1276, %v1484
        %1486 = vmatmul.f32.gmra.mxu0 %v1016
        %v1487 = vpop.f32.mrf.mxu0
        %v1488 = vadd.f32 %v1279, %v1487
        %1489 = vmatmul.f32.gmra.mxu0 %v1020
        %v1490 = vpop.f32.mrf.mxu0
        %v1491 = vadd.f32 %v1282, %v1490
        %1492 = vmatmul.f32.gmra.mxu0 %v1024
        %v1493 = vpop.f32.mrf.mxu0
        %v1494 = vadd.f32 %v1285, %v1493
        %1495 = vmatmul.f32.gmra.mxu0 %v1028
        %v1496 = vpop.f32.mrf.mxu0
        %v1497 = vadd.f32 %v1288, %v1496
        %1498 = vmatmul.f32.gmra.mxu0 %v1032
        %v1499 = vpop.f32.mrf.mxu0
        %v1500 = vadd.f32 %v1291, %v1499
        %1501 = vmatmul.f32.gmra.mxu0 %v1036
        %v1502 = vpop.f32.mrf.mxu0
        %v1503 = vadd.f32 %v1294, %v1502
        %1504 = vmatmul.f32.gmra.mxu0 %v1040
        %v1505 = vpop.f32.mrf.mxu0
        %v1506 = vadd.f32 %v1297, %v1505
        %1507 = vmatmul.f32.gmra.mxu0 %v1044
        %v1508 = vpop.f32.mrf.mxu0
        %v1509 = vadd.f32 %v1300, %v1508
        %1510 = vmatmul.f32.gmra.mxu0 %v1048
        %v1511 = vpop.f32.mrf.mxu0
        %v1512 = vadd.f32 %v1303, %v1511
        %1513 = vmatmul.f32.gmra.mxu0 %v1052
        %v1514 = vpop.f32.mrf.mxu0
        %v1515 = vadd.f32 %v1306, %v1514
        %1516 = vmatmul.f32.gmra.mxu0 %v1056
        %v1517 = vpop.f32.mrf.mxu0
        %v1518 = vadd.f32 %v1309, %v1517
        %1519 = vmatmul.f32.gmra.mxu0 %v1060
        %v1520 = vpop.f32.mrf.mxu0
        %v1521 = vadd.f32 %v1312, %v1520
        %1522 = vmatmul.f32.gmra.mxu0 %v1064
        %v1523 = vpop.f32.mrf.mxu0
        %v1524 = vadd.f32 %v1315, %v1523
        %1525 = vmatmul.f32.gmra.mxu0 %v1068
        %v1526 = vpop.f32.mrf.mxu0
        %v1527 = vadd.f32 %v1318, %v1526
        %1528 = vmatmul.f32.gmra.mxu0 %v1072
        %v1529 = vpop.f32.mrf.mxu0
        %v1530 = vadd.f32 %v1321, %v1529
        %1531 = vmatmul.f32.gmra.mxu0 %v1076
        %v1532 = vpop.f32.mrf.mxu0
        %v1533 = vadd.f32 %v1324, %v1532
        %1534 = vmatmul.f32.gmra.mxu0 %v1080
        %v1535 = vpop.f32.mrf.mxu0
        %v1536 = vadd.f32 %v1327, %v1535
        %1537 = vmatmul.f32.gmra.mxu0 %v1084
        %v1538 = vpop.f32.mrf.mxu0
        %v1539 = vadd.f32 %v1330, %v1538
        %1540 = vmatmul.f32.gmra.mxu0 %v1088
        %v1541 = vpop.f32.mrf.mxu0
        %v1542 = vadd.f32 %v1333, %v1541
        %1543 = vmatmul.f32.gmra.mxu0 %v1092
        %v1544 = vpop.f32.mrf.mxu0
        %v1545 = vadd.f32 %v1336, %v1544
        %1546 = vmatmul.f32.gmra.mxu0 %v1096
        %v1547 = vpop.f32.mrf.mxu0
        %v1548 = vadd.f32 %v1339, %v1547
        %1549 = vmatmul.f32.gmra.mxu0 %v1100
        %v1550 = vpop.f32.mrf.mxu0
        %v1551 = vadd.f32 %v1342, %v1550
        %1552 = vmatmul.f32.gmra.mxu0 %v1104
        %v1553 = vpop.f32.mrf.mxu0
        %v1554 = vadd.f32 %v1345, %v1553
        %1555 = vmatmul.f32.gmra.mxu0 %v1108
        %v1556 = vpop.f32.mrf.mxu0
        %v1557 = vadd.f32 %v1348, %v1556
        %1558 = vmatmul.f32.gmra.mxu0 %v1112
        %v1559 = vpop.f32.mrf.mxu0
        %v1560 = vadd.f32 %v1351, %v1559
        %1561 = vmatmul.f32.gmra.mxu0 %v1116
        %v1562 = vpop.f32.mrf.mxu0
        %v1563 = vadd.f32 %v1354, %v1562
        %1564 = vmatmul.f32.gmra.mxu0 %v1120
        %v1565 = vpop.f32.mrf.mxu0
        %v1566 = vadd.f32 %v1357, %v1565
        %1567 = vmatmul.f32.gmra.mxu0 %v1124
        %v1568 = vpop.f32.mrf.mxu0
        %v1569 = vadd.f32 %v1360, %v1568
        %1570 = vmatmul.f32.gmra.mxu0 %v1128
        %v1571 = vpop.f32.mrf.mxu0
        %v1572 = vadd.f32 %v1363, %v1571
        %1573 = vmatmul.f32.gmra.mxu0 %v1132
        %v1574 = vpop.f32.mrf.mxu0
        %v1575 = vadd.f32 %v1366, %v1574
        %1576 = vmatmul.f32.gmra.mxu0 %v1136
        %v1577 = vpop.f32.mrf.mxu0
        %v1578 = vadd.f32 %v1369, %v1577
        %1579 = vmatmul.f32.gmra.mxu0 %v1140
        %v1580 = vpop.f32.mrf.mxu0
        %v1581 = vadd.f32 %v1372, %v1580
        %1582 = vmatmul.f32.gmra.mxu0 %v1144
        %v1583 = vpop.f32.mrf.mxu0
        %v1584 = vadd.f32 %v1375, %v1583
        %1585 = vmatmul.f32.gmra.mxu0 %v1148
        %v1586 = vpop.f32.mrf.mxu0
        %v1587 = vadd.f32 %v1378, %v1586
        %1588 = vmatmul.f32.gmra.mxu0 %v1152
        %v1589 = vpop.f32.mrf.mxu0
        %v1590 = vadd.f32 %v1381, %v1589
        %1591 = vmatmul.f32.gmra.mxu0 %v1156
        %v1592 = vpop.f32.mrf.mxu0
        %v1593 = vadd.f32 %v1384, %v1592
        %1594 = vmatmul.f32.gmra.mxu0 %v1160
        %v1595 = vpop.f32.mrf.mxu0
        %v1596 = vadd.f32 %v1387, %v1595
        %1597 = vmatmul.f32.gmra.mxu0 %v1164
        %v1598 = vpop.f32.mrf.mxu0
        %v1599 = vadd.f32 %v1390, %v1598
        %1600 = vmatmul.f32.gmra.mxu0 %v1168
        %v1601 = vpop.f32.mrf.mxu0
        %v1602 = vadd.f32 %v1393, %v1601
        %1603 = vmatmul.f32.gmra.mxu0 %v1172
        %v1604 = vpop.f32.mrf.mxu0
        %v1605 = vadd.f32 %v1396, %v1604
        %1606 = vmatmul.f32.gmra.mxu0 %v1176
        %v1607 = vpop.f32.mrf.mxu0
        %v1608 = vadd.f32 %v1399, %v1607
        %1609 = vmatmul.f32.gmra.mxu0 %v1180
        %v1610 = vpop.f32.mrf.mxu0
        %v1611 = vadd.f32 %v1402, %v1610
        %1612 = vmatmul.f32.gmra.mxu0 %v1184
        %v1613 = vpop.f32.mrf.mxu0
        %v1614 = vadd.f32 %v1405, %v1613
        %1615 = vmatmul.f32.gmra.mxu0 %v1188
        %v1616 = vpop.f32.mrf.mxu0
        %v1617 = vadd.f32 %v1408, %v1616
        %1618 = vmatmul.f32.gmra.mxu0 %v1192
        %v1619 = vpop.f32.mrf.mxu0
        %v1620 = vadd.f32 %v1411, %v1619
        %1621 = vmatmul.f32.gmra.mxu0 %v1196
        %v1622 = vpop.f32.mrf.mxu0
        %v1623 = vadd.f32 %v1414, %v1622
        %1624 = vmatmul.f32.gmra.mxu0 %v1200
        %v1625 = vpop.f32.mrf.mxu0
        %v1626 = vadd.f32 %v1417, %v1625
        %1627 = vmatmul.f32.gmra.mxu0 %v1204
        %v1628 = vpop.f32.mrf.mxu0
        %v1629 = vadd.f32 %v1420, %v1628
        %1630 = vmatmul.f32.gmra.mxu0 %v1208
        %v1631 = vpop.f32.mrf.mxu0
        %v1632 = vadd.f32 %v1423, %v1631
        %1633 = vmatmul.f32.gmra.mxu0 %v1212
        %v1634 = vpop.f32.mrf.mxu0
        %v1635 = vadd.f32 %v1426, %v1634
        %1636 = vmatmul.f32.gmra.mxu0 %v1216
        %v1637 = vpop.f32.mrf.mxu0
        %v1638 = vadd.f32 %v1429, %v1637
        %1639 = vmatmul.f32.gmra.mxu0 %v1220
        %v1640 = vpop.f32.mrf.mxu0
        %v1641 = vadd.f32 %v1432, %v1640
        %1642 = vmatmul.f32.gmra.mxu0 %v1224
        %v1643 = vpop.f32.mrf.mxu0
        %v1644 = vadd.f32 %v1435, %v1643
        %1645 = vmatmul.f32.gmra.mxu0 %v1228
        %v1646 = vpop.f32.mrf.mxu0
        %v1647 = vadd.f32 %v1438, %v1646
        %1648 = vdwg.mxu0
        %1649 = vmatpush.msra.mxu0 %v894
        %1650 = vmatpush.msra.mxu0 %v893
        %1651 = vmatpush.msra.mxu0 %v892
        %1652 = vmatpush.msra.mxu0 %v891
        %1653 = vmatpush.msra.mxu0 %v890
        %1654 = vmatpush.msra.mxu0 %v889
        %1655 = vmatpush.msra.mxu0 %v888
        %1656 = vmatpush.msra.mxu0 %v887
        %1657 = vmatpush.msra.mxu0 %v886
        %1658 = vmatpush.msra.mxu0 %v885
        %1659 = vmatpush.msra.mxu0 %v884
        %1660 = vmatpush.msra.mxu0 %v883
        %1661 = vmatpush.msra.mxu0 %v882
        %1662 = vmatpush.msra.mxu0 %v881
        %1663 = vmatpush.msra.mxu0 %v880
        %1664 = vmatpush.msra.mxu0 %v879
        %1665 = vmatmul.f32.gmra.mxu0 %v977
        %v1666 = vpop.f32.mrf.mxu0
        %v1667 = vadd.f32 %v1458, %v1666
        %1668 = vmatmul.f32.gmra.mxu0 %v981
        %v1669 = vpop.f32.mrf.mxu0
        %v1670 = vadd.f32 %v1461, %v1669
        %1671 = vmatmul.f32.gmra.mxu0 %v985
        %v1672 = vpop.f32.mrf.mxu0
        %v1673 = vadd.f32 %v1464, %v1672
        %1674 = vmatmul.f32.gmra.mxu0 %v989
        %v1675 = vpop.f32.mrf.mxu0
        %v1676 = vadd.f32 %v1467, %v1675
        %1677 = vmatmul.f32.gmra.mxu0 %v993
        %v1678 = vpop.f32.mrf.mxu0
        %v1679 = vadd.f32 %v1470, %v1678
        %1680 = vmatmul.f32.gmra.mxu0 %v997
        %v1681 = vpop.f32.mrf.mxu0
        %v1682 = vadd.f32 %v1473, %v1681
        %1683 = vmatmul.f32.gmra.mxu0 %v1001
        %v1684 = vpop.f32.mrf.mxu0
        %v1685 = vadd.f32 %v1476, %v1684
        %1686 = vmatmul.f32.gmra.mxu0 %v1005
        %v1687 = vpop.f32.mrf.mxu0
        %v1688 = vadd.f32 %v1479, %v1687
        %1689 = vmatmul.f32.gmra.mxu0 %v1009
        %v1690 = vpop.f32.mrf.mxu0
        %v1691 = vadd.f32 %v1482, %v1690
        %1692 = vmatmul.f32.gmra.mxu0 %v1013
        %v1693 = vpop.f32.mrf.mxu0
        %v1694 = vadd.f32 %v1485, %v1693
        %1695 = vmatmul.f32.gmra.mxu0 %v1017
        %v1696 = vpop.f32.mrf.mxu0
        %v1697 = vadd.f32 %v1488, %v1696
        %1698 = vmatmul.f32.gmra.mxu0 %v1021
        %v1699 = vpop.f32.mrf.mxu0
        %v1700 = vadd.f32 %v1491, %v1699
        %1701 = vmatmul.f32.gmra.mxu0 %v1025
        %v1702 = vpop.f32.mrf.mxu0
        %v1703 = vadd.f32 %v1494, %v1702
        %1704 = vmatmul.f32.gmra.mxu0 %v1029
        %v1705 = vpop.f32.mrf.mxu0
        %v1706 = vadd.f32 %v1497, %v1705
        %1707 = vmatmul.f32.gmra.mxu0 %v1033
        %v1708 = vpop.f32.mrf.mxu0
        %v1709 = vadd.f32 %v1500, %v1708
        %1710 = vmatmul.f32.gmra.mxu0 %v1037
        %v1711 = vpop.f32.mrf.mxu0
        %v1712 = vadd.f32 %v1503, %v1711
        %1713 = vmatmul.f32.gmra.mxu0 %v1041
        %v1714 = vpop.f32.mrf.mxu0
        %v1715 = vadd.f32 %v1506, %v1714
        %1716 = vmatmul.f32.gmra.mxu0 %v1045
        %v1717 = vpop.f32.mrf.mxu0
        %v1718 = vadd.f32 %v1509, %v1717
        %1719 = vmatmul.f32.gmra.mxu0 %v1049
        %v1720 = vpop.f32.mrf.mxu0
        %v1721 = vadd.f32 %v1512, %v1720
        %1722 = vmatmul.f32.gmra.mxu0 %v1053
        %v1723 = vpop.f32.mrf.mxu0
        %v1724 = vadd.f32 %v1515, %v1723
        %1725 = vmatmul.f32.gmra.mxu0 %v1057
        %v1726 = vpop.f32.mrf.mxu0
        %v1727 = vadd.f32 %v1518, %v1726
        %1728 = vmatmul.f32.gmra.mxu0 %v1061
        %v1729 = vpop.f32.mrf.mxu0
        %v1730 = vadd.f32 %v1521, %v1729
        %1731 = vmatmul.f32.gmra.mxu0 %v1065
        %v1732 = vpop.f32.mrf.mxu0
        %v1733 = vadd.f32 %v1524, %v1732
        %1734 = vmatmul.f32.gmra.mxu0 %v1069
        %v1735 = vpop.f32.mrf.mxu0
        %v1736 = vadd.f32 %v1527, %v1735
        %1737 = vmatmul.f32.gmra.mxu0 %v1073
        %v1738 = vpop.f32.mrf.mxu0
        %v1739 = vadd.f32 %v1530, %v1738
        %1740 = vmatmul.f32.gmra.mxu0 %v1077
        %v1741 = vpop.f32.mrf.mxu0
        %v1742 = vadd.f32 %v1533, %v1741
        %1743 = vmatmul.f32.gmra.mxu0 %v1081
        %v1744 = vpop.f32.mrf.mxu0
        %v1745 = vadd.f32 %v1536, %v1744
        %1746 = vmatmul.f32.gmra.mxu0 %v1085
        %v1747 = vpop.f32.mrf.mxu0
        %v1748 = vadd.f32 %v1539, %v1747
        %1749 = vmatmul.f32.gmra.mxu0 %v1089
        %v1750 = vpop.f32.mrf.mxu0
        %v1751 = vadd.f32 %v1542, %v1750
        %1752 = vmatmul.f32.gmra.mxu0 %v1093
        %v1753 = vpop.f32.mrf.mxu0
        %v1754 = vadd.f32 %v1545, %v1753
        %1755 = vmatmul.f32.gmra.mxu0 %v1097
        %v1756 = vpop.f32.mrf.mxu0
        %v1757 = vadd.f32 %v1548, %v1756
        %1758 = vmatmul.f32.gmra.mxu0 %v1101
        %v1759 = vpop.f32.mrf.mxu0
        %v1760 = vadd.f32 %v1551, %v1759
        %1761 = vmatmul.f32.gmra.mxu0 %v1105
        %v1762 = vpop.f32.mrf.mxu0
        %v1763 = vadd.f32 %v1554, %v1762
        %1764 = vmatmul.f32.gmra.mxu0 %v1109
        %v1765 = vpop.f32.mrf.mxu0
        %v1766 = vadd.f32 %v1557, %v1765
        %1767 = vmatmul.f32.gmra.mxu0 %v1113
        %v1768 = vpop.f32.mrf.mxu0
        %v1769 = vadd.f32 %v1560, %v1768
        %1770 = vmatmul.f32.gmra.mxu0 %v1117
        %v1771 = vpop.f32.mrf.mxu0
        %v1772 = vadd.f32 %v1563, %v1771
        %1773 = vmatmul.f32.gmra.mxu0 %v1121
        %v1774 = vpop.f32.mrf.mxu0
        %v1775 = vadd.f32 %v1566, %v1774
        %1776 = vmatmul.f32.gmra.mxu0 %v1125
        %v1777 = vpop.f32.mrf.mxu0
        %v1778 = vadd.f32 %v1569, %v1777
        %1779 = vmatmul.f32.gmra.mxu0 %v1129
        %v1780 = vpop.f32.mrf.mxu0
        %v1781 = vadd.f32 %v1572, %v1780
        %1782 = vmatmul.f32.gmra.mxu0 %v1133
        %v1783 = vpop.f32.mrf.mxu0
        %v1784 = vadd.f32 %v1575, %v1783
        %1785 = vmatmul.f32.gmra.mxu0 %v1137
        %v1786 = vpop.f32.mrf.mxu0
        %v1787 = vadd.f32 %v1578, %v1786
        %1788 = vmatmul.f32.gmra.mxu0 %v1141
        %v1789 = vpop.f32.mrf.mxu0
        %v1790 = vadd.f32 %v1581, %v1789
        %1791 = vmatmul.f32.gmra.mxu0 %v1145
        %v1792 = vpop.f32.mrf.mxu0
        %v1793 = vadd.f32 %v1584, %v1792
        %1794 = vmatmul.f32.gmra.mxu0 %v1149
        %v1795 = vpop.f32.mrf.mxu0
        %v1796 = vadd.f32 %v1587, %v1795
        %1797 = vmatmul.f32.gmra.mxu0 %v1153
        %v1798 = vpop.f32.mrf.mxu0
        %v1799 = vadd.f32 %v1590, %v1798
        %1800 = vmatmul.f32.gmra.mxu0 %v1157
        %v1801 = vpop.f32.mrf.mxu0
        %v1802 = vadd.f32 %v1593, %v1801
        %1803 = vmatmul.f32.gmra.mxu0 %v1161
        %v1804 = vpop.f32.mrf.mxu0
        %v1805 = vadd.f32 %v1596, %v1804
        %1806 = vmatmul.f32.gmra.mxu0 %v1165
        %v1807 = vpop.f32.mrf.mxu0
        %v1808 = vadd.f32 %v1599, %v1807
        %1809 = vmatmul.f32.gmra.mxu0 %v1169
        %v1810 = vpop.f32.mrf.mxu0
        %v1811 = vadd.f32 %v1602, %v1810
        %1812 = vmatmul.f32.gmra.mxu0 %v1173
        %v1813 = vpop.f32.mrf.mxu0
        %v1814 = vadd.f32 %v1605, %v1813
        %1815 = vmatmul.f32.gmra.mxu0 %v1177
        %v1816 = vpop.f32.mrf.mxu0
        %v1817 = vadd.f32 %v1608, %v1816
        %1818 = vmatmul.f32.gmra.mxu0 %v1181
        %v1819 = vpop.f32.mrf.mxu0
        %v1820 = vadd.f32 %v1611, %v1819
        %1821 = vmatmul.f32.gmra.mxu0 %v1185
        %v1822 = vpop.f32.mrf.mxu0
        %v1823 = vadd.f32 %v1614, %v1822
        %1824 = vmatmul.f32.gmra.mxu0 %v1189
        %v1825 = vpop.f32.mrf.mxu0
        %v1826 = vadd.f32 %v1617, %v1825
        %1827 = vmatmul.f32.gmra.mxu0 %v1193
        %v1828 = vpop.f32.mrf.mxu0
        %v1829 = vadd.f32 %v1620, %v1828
        %1830 = vmatmul.f32.gmra.mxu0 %v1197
        %v1831 = vpop.f32.mrf.mxu0
        %v1832 = vadd.f32 %v1623, %v1831
        %1833 = vmatmul.f32.gmra.mxu0 %v1201
        %v1834 = vpop.f32.mrf.mxu0
        %v1835 = vadd.f32 %v1626, %v1834
        %1836 = vmatmul.f32.gmra.mxu0 %v1205
        %v1837 = vpop.f32.mrf.mxu0
        %v1838 = vadd.f32 %v1629, %v1837
        %1839 = vmatmul.f32.gmra.mxu0 %v1209
        %v1840 = vpop.f32.mrf.mxu0
        %v1841 = vadd.f32 %v1632, %v1840
        %1842 = vmatmul.f32.gmra.mxu0 %v1213
        %v1843 = vpop.f32.mrf.mxu0
        %v1844 = vadd.f32 %v1635, %v1843
        %1845 = vmatmul.f32.gmra.mxu0 %v1217
        %v1846 = vpop.f32.mrf.mxu0
        %v1847 = vadd.f32 %v1638, %v1846
        %1848 = vmatmul.f32.gmra.mxu0 %v1221
        %v1849 = vpop.f32.mrf.mxu0
        %v1850 = vadd.f32 %v1641, %v1849
        %1851 = vmatmul.f32.gmra.mxu0 %v1225
        %v1852 = vpop.f32.mrf.mxu0
        %v1853 = vadd.f32 %v1644, %v1852
        %1854 = vmatmul.f32.gmra.mxu0 %v1229
        %v1855 = vpop.f32.mrf.mxu0
        %v1856 = vadd.f32 %v1647, %v1855
        %1857 = vdwg.mxu0
        %1858 = vmatpush.msra.mxu0 %v910
        %1859 = vmatpush.msra.mxu0 %v909
        %1860 = vmatpush.msra.mxu0 %v908
        %1861 = vmatpush.msra.mxu0 %v907
        %1862 = vmatpush.msra.mxu0 %v906
        %1863 = vmatpush.msra.mxu0 %v905
        %1864 = vmatpush.msra.mxu0 %v904
        %1865 = vmatpush.msra.mxu0 %v903
        %1866 = vmatpush.msra.mxu0 %v902
        %1867 = vmatpush.msra.mxu0 %v901
        %1868 = vmatpush.msra.mxu0 %v900
        %1869 = vmatpush.msra.mxu0 %v899
        %1870 = vmatpush.msra.mxu0 %v898
        %1871 = vmatpush.msra.mxu0 %v897
        %1872 = vmatpush.msra.mxu0 %v896
        %1873 = vmatpush.msra.mxu0 %v895
        %1874 = vmatmul.f32.gmra.mxu0 %v978
        %v1875 = vpop.f32.mrf.mxu0
        %v1876 = vadd.f32 %v1667, %v1875
        %1877 = vmatmul.f32.gmra.mxu0 %v982
        %v1878 = vpop.f32.mrf.mxu0
        %v1879 = vadd.f32 %v1670, %v1878
        %1880 = vmatmul.f32.gmra.mxu0 %v986
        %v1881 = vpop.f32.mrf.mxu0
        %v1882 = vadd.f32 %v1673, %v1881
        %1883 = vmatmul.f32.gmra.mxu0 %v990
        %v1884 = vpop.f32.mrf.mxu0
        %v1885 = vadd.f32 %v1676, %v1884
        %1886 = vmatmul.f32.gmra.mxu0 %v994
        %v1887 = vpop.f32.mrf.mxu0
        %v1888 = vadd.f32 %v1679, %v1887
        %1889 = vmatmul.f32.gmra.mxu0 %v998
        %v1890 = vpop.f32.mrf.mxu0
        %v1891 = vadd.f32 %v1682, %v1890
        %1892 = vmatmul.f32.gmra.mxu0 %v1002
        %v1893 = vpop.f32.mrf.mxu0
        %v1894 = vadd.f32 %v1685, %v1893
        %1895 = vmatmul.f32.gmra.mxu0 %v1006
        %v1896 = vpop.f32.mrf.mxu0
        %v1897 = vadd.f32 %v1688, %v1896
        %1898 = vmatmul.f32.gmra.mxu0 %v1010
        %v1899 = vpop.f32.mrf.mxu0
        %v1900 = vadd.f32 %v1691, %v1899
        %1901 = vmatmul.f32.gmra.mxu0 %v1014
        %v1902 = vpop.f32.mrf.mxu0
        %v1903 = vadd.f32 %v1694, %v1902
        %1904 = vmatmul.f32.gmra.mxu0 %v1018
        %v1905 = vpop.f32.mrf.mxu0
        %v1906 = vadd.f32 %v1697, %v1905
        %1907 = vmatmul.f32.gmra.mxu0 %v1022
        %v1908 = vpop.f32.mrf.mxu0
        %v1909 = vadd.f32 %v1700, %v1908
        %1910 = vmatmul.f32.gmra.mxu0 %v1026
        %v1911 = vpop.f32.mrf.mxu0
        %v1912 = vadd.f32 %v1703, %v1911
        %1913 = vmatmul.f32.gmra.mxu0 %v1030
        %v1914 = vpop.f32.mrf.mxu0
        %v1915 = vadd.f32 %v1706, %v1914
        %1916 = vmatmul.f32.gmra.mxu0 %v1034
        %v1917 = vpop.f32.mrf.mxu0
        %v1918 = vadd.f32 %v1709, %v1917
        %1919 = vmatmul.f32.gmra.mxu0 %v1038
        %v1920 = vpop.f32.mrf.mxu0
        %v1921 = vadd.f32 %v1712, %v1920
        %1922 = vmatmul.f32.gmra.mxu0 %v1042
        %v1923 = vpop.f32.mrf.mxu0
        %v1924 = vadd.f32 %v1715, %v1923
        %1925 = vmatmul.f32.gmra.mxu0 %v1046
        %v1926 = vpop.f32.mrf.mxu0
        %v1927 = vadd.f32 %v1718, %v1926
        %1928 = vmatmul.f32.gmra.mxu0 %v1050
        %v1929 = vpop.f32.mrf.mxu0
        %v1930 = vadd.f32 %v1721, %v1929
        %1931 = vmatmul.f32.gmra.mxu0 %v1054
        %v1932 = vpop.f32.mrf.mxu0
        %v1933 = vadd.f32 %v1724, %v1932
        %1934 = vmatmul.f32.gmra.mxu0 %v1058
        %v1935 = vpop.f32.mrf.mxu0
        %v1936 = vadd.f32 %v1727, %v1935
        %1937 = vmatmul.f32.gmra.mxu0 %v1062
        %v1938 = vpop.f32.mrf.mxu0
        %v1939 = vadd.f32 %v1730, %v1938
        %1940 = vmatmul.f32.gmra.mxu0 %v1066
        %v1941 = vpop.f32.mrf.mxu0
        %v1942 = vadd.f32 %v1733, %v1941
        %1943 = vmatmul.f32.gmra.mxu0 %v1070
        %v1944 = vpop.f32.mrf.mxu0
        %v1945 = vadd.f32 %v1736, %v1944
        %1946 = vmatmul.f32.gmra.mxu0 %v1074
        %v1947 = vpop.f32.mrf.mxu0
        %v1948 = vadd.f32 %v1739, %v1947
        %1949 = vmatmul.f32.gmra.mxu0 %v1078
        %v1950 = vpop.f32.mrf.mxu0
        %v1951 = vadd.f32 %v1742, %v1950
        %1952 = vmatmul.f32.gmra.mxu0 %v1082
        %v1953 = vpop.f32.mrf.mxu0
        %v1954 = vadd.f32 %v1745, %v1953
        %1955 = vmatmul.f32.gmra.mxu0 %v1086
        %v1956 = vpop.f32.mrf.mxu0
        %v1957 = vadd.f32 %v1748, %v1956
        %1958 = vmatmul.f32.gmra.mxu0 %v1090
        %v1959 = vpop.f32.mrf.mxu0
        %v1960 = vadd.f32 %v1751, %v1959
        %1961 = vmatmul.f32.gmra.mxu0 %v1094
        %v1962 = vpop.f32.mrf.mxu0
        %v1963 = vadd.f32 %v1754, %v1962
        %1964 = vmatmul.f32.gmra.mxu0 %v1098
        %v1965 = vpop.f32.mrf.mxu0
        %v1966 = vadd.f32 %v1757, %v1965
        %1967 = vmatmul.f32.gmra.mxu0 %v1102
        %v1968 = vpop.f32.mrf.mxu0
        %v1969 = vadd.f32 %v1760, %v1968
        %1970 = vmatmul.f32.gmra.mxu0 %v1106
        %v1971 = vpop.f32.mrf.mxu0
        %v1972 = vadd.f32 %v1763, %v1971
        %1973 = vmatmul.f32.gmra.mxu0 %v1110
        %v1974 = vpop.f32.mrf.mxu0
        %v1975 = vadd.f32 %v1766, %v1974
        %1976 = vmatmul.f32.gmra.mxu0 %v1114
        %v1977 = vpop.f32.mrf.mxu0
        %v1978 = vadd.f32 %v1769, %v1977
        %1979 = vmatmul.f32.gmra.mxu0 %v1118
        %v1980 = vpop.f32.mrf.mxu0
        %v1981 = vadd.f32 %v1772, %v1980
        %1982 = vmatmul.f32.gmra.mxu0 %v1122
        %v1983 = vpop.f32.mrf.mxu0
        %v1984 = vadd.f32 %v1775, %v1983
        %1985 = vmatmul.f32.gmra.mxu0 %v1126
        %v1986 = vpop.f32.mrf.mxu0
        %v1987 = vadd.f32 %v1778, %v1986
        %1988 = vmatmul.f32.gmra.mxu0 %v1130
        %v1989 = vpop.f32.mrf.mxu0
        %v1990 = vadd.f32 %v1781, %v1989
        %1991 = vmatmul.f32.gmra.mxu0 %v1134
        %v1992 = vpop.f32.mrf.mxu0
        %v1993 = vadd.f32 %v1784, %v1992
        %1994 = vmatmul.f32.gmra.mxu0 %v1138
        %v1995 = vpop.f32.mrf.mxu0
        %v1996 = vadd.f32 %v1787, %v1995
        %1997 = vmatmul.f32.gmra.mxu0 %v1142
        %v1998 = vpop.f32.mrf.mxu0
        %v1999 = vadd.f32 %v1790, %v1998
        %2000 = vmatmul.f32.gmra.mxu0 %v1146
        %v2001 = vpop.f32.mrf.mxu0
        %v2002 = vadd.f32 %v1793, %v2001
        %2003 = vmatmul.f32.gmra.mxu0 %v1150
        %v2004 = vpop.f32.mrf.mxu0
        %v2005 = vadd.f32 %v1796, %v2004
        %2006 = vmatmul.f32.gmra.mxu0 %v1154
        %v2007 = vpop.f32.mrf.mxu0
        %v2008 = vadd.f32 %v1799, %v2007
        %2009 = vmatmul.f32.gmra.mxu0 %v1158
        %v2010 = vpop.f32.mrf.mxu0
        %v2011 = vadd.f32 %v1802, %v2010
        %2012 = vmatmul.f32.gmra.mxu0 %v1162
        %v2013 = vpop.f32.mrf.mxu0
        %v2014 = vadd.f32 %v1805, %v2013
        %2015 = vmatmul.f32.gmra.mxu0 %v1166
        %v2016 = vpop.f32.mrf.mxu0
        %v2017 = vadd.f32 %v1808, %v2016
        %2018 = vmatmul.f32.gmra.mxu0 %v1170
        %v2019 = vpop.f32.mrf.mxu0
        %v2020 = vadd.f32 %v1811, %v2019
        %2021 = vmatmul.f32.gmra.mxu0 %v1174
        %v2022 = vpop.f32.mrf.mxu0
        %v2023 = vadd.f32 %v1814, %v2022
        %2024 = vmatmul.f32.gmra.mxu0 %v1178
        %v2025 = vpop.f32.mrf.mxu0
        %v2026 = vadd.f32 %v1817, %v2025
        %2027 = vmatmul.f32.gmra.mxu0 %v1182
        %v2028 = vpop.f32.mrf.mxu0
        %v2029 = vadd.f32 %v1820, %v2028
        %2030 = vmatmul.f32.gmra.mxu0 %v1186
        %v2031 = vpop.f32.mrf.mxu0
        %v2032 = vadd.f32 %v1823, %v2031
        %2033 = vmatmul.f32.gmra.mxu0 %v1190
        %v2034 = vpop.f32.mrf.mxu0
        %v2035 = vadd.f32 %v1826, %v2034
        %2036 = vmatmul.f32.gmra.mxu0 %v1194
        %v2037 = vpop.f32.mrf.mxu0
        %v2038 = vadd.f32 %v1829, %v2037
        %2039 = vmatmul.f32.gmra.mxu0 %v1198
        %v2040 = vpop.f32.mrf.mxu0
        %v2041 = vadd.f32 %v1832, %v2040
        %2042 = vmatmul.f32.gmra.mxu0 %v1202
        %v2043 = vpop.f32.mrf.mxu0
        %v2044 = vadd.f32 %v1835, %v2043
        %2045 = vmatmul.f32.gmra.mxu0 %v1206
        %v2046 = vpop.f32.mrf.mxu0
        %v2047 = vadd.f32 %v1838, %v2046
        %2048 = vmatmul.f32.gmra.mxu0 %v1210
        %v2049 = vpop.f32.mrf.mxu0
        %v2050 = vadd.f32 %v1841, %v2049
        %2051 = vmatmul.f32.gmra.mxu0 %v1214
        %v2052 = vpop.f32.mrf.mxu0
        %v2053 = vadd.f32 %v1844, %v2052
        %2054 = vmatmul.f32.gmra.mxu0 %v1218
        %v2055 = vpop.f32.mrf.mxu0
        %v2056 = vadd.f32 %v1847, %v2055
        %2057 = vmatmul.f32.gmra.mxu0 %v1222
        %v2058 = vpop.f32.mrf.mxu0
        %v2059 = vadd.f32 %v1850, %v2058
        %2060 = vmatmul.f32.gmra.mxu0 %v1226
        %v2061 = vpop.f32.mrf.mxu0
        %v2062 = vadd.f32 %v1853, %v2061
        %2063 = vmatmul.f32.gmra.mxu0 %v1230
        %v2064 = vpop.f32.mrf.mxu0
        %v2065 = vadd.f32 %v1856, %v2064
        %2066 = vdwg.mxu0
        %v2067 = vadd.f32 %v911, %v1876
        %v2068 = vadd.f32 %v912, %v1879
        %v2069 = vadd.f32 %v913, %v1882
        %v2070 = vadd.f32 %v914, %v1885
        %v2071 = vadd.f32 %v915, %v1888
        %v2072 = vadd.f32 %v916, %v1891
        %v2073 = vadd.f32 %v917, %v1894
        %v2074 = vadd.f32 %v918, %v1897
        %v2075 = vadd.f32 %v919, %v1900
        %v2076 = vadd.f32 %v920, %v1903
        %v2077 = vadd.f32 %v921, %v1906
        %v2078 = vadd.f32 %v922, %v1909
        %v2079 = vadd.f32 %v923, %v1912
        %v2080 = vadd.f32 %v924, %v1915
        %v2081 = vadd.f32 %v925, %v1918
        %v2082 = vadd.f32 %v926, %v1921
        %v2083 = vadd.f32 %v927, %v1924
        %v2084 = vadd.f32 %v928, %v1927
        %v2085 = vadd.f32 %v929, %v1930
        %v2086 = vadd.f32 %v930, %v1933
        %v2087 = vadd.f32 %v931, %v1936
        %v2088 = vadd.f32 %v932, %v1939
        %v2089 = vadd.f32 %v933, %v1942
        %v2090 = vadd.f32 %v934, %v1945
        %v2091 = vadd.f32 %v935, %v1948
        %v2092 = vadd.f32 %v936, %v1951
        %v2093 = vadd.f32 %v937, %v1954
        %v2094 = vadd.f32 %v938, %v1957
        %v2095 = vadd.f32 %v939, %v1960
        %v2096 = vadd.f32 %v940, %v1963
        %v2097 = vadd.f32 %v941, %v1966
        %v2098 = vadd.f32 %v942, %v1969
        %v2099 = vadd.f32 %v943, %v1972
        %v2100 = vadd.f32 %v944, %v1975
        %v2101 = vadd.f32 %v945, %v1978
        %v2102 = vadd.f32 %v946, %v1981
        %v2103 = vadd.f32 %v947, %v1984
        %v2104 = vadd.f32 %v948, %v1987
        %v2105 = vadd.f32 %v949, %v1990
        %v2106 = vadd.f32 %v950, %v1993
        %v2107 = vadd.f32 %v951, %v1996
        %v2108 = vadd.f32 %v952, %v1999
        %v2109 = vadd.f32 %v953, %v2002
        %v2110 = vadd.f32 %v954, %v2005
        %v2111 = vadd.f32 %v955, %v2008
        %v2112 = vadd.f32 %v956, %v2011
        %v2113 = vadd.f32 %v957, %v2014
        %v2114 = vadd.f32 %v958, %v2017
        %v2115 = vadd.f32 %v959, %v2020
        %v2116 = vadd.f32 %v960, %v2023
        %v2117 = vadd.f32 %v961, %v2026
        %v2118 = vadd.f32 %v962, %v2029
        %v2119 = vadd.f32 %v963, %v2032
        %v2120 = vadd.f32 %v964, %v2035
        %v2121 = vadd.f32 %v965, %v2038
        %v2122 = vadd.f32 %v966, %v2041
        %v2123 = vadd.f32 %v967, %v2044
        %v2124 = vadd.f32 %v968, %v2047
        %v2125 = vadd.f32 %v969, %v2050
        %v2126 = vadd.f32 %v970, %v2053
        %v2127 = vadd.f32 %v971, %v2056
        %v2128 = vadd.f32 %v972, %v2059
        %v2129 = vadd.f32 %v973, %v2062
        %v2130 = vadd.f32 %v974, %v2065
        %2131 = vst [vmem:[#allocation2] sm:$0xff] %v2067
        %2132 = vst [vmem:[#allocation2 + $0x8] sm:$0xff] %v2068
        %2133 = vst [vmem:[#allocation2 + $0x10] sm:$0xff] %v2069
        %2134 = vst [vmem:[#allocation2 + $0x18] sm:$0xff] %v2070
        %2135 = vst [vmem:[#allocation2 + $0x20] sm:$0xff] %v2071
        %2136 = vst [vmem:[#allocation2 + $0x28] sm:$0xff] %v2072
        %2137 = vst [vmem:[#allocation2 + $0x30] sm:$0xff] %v2073
        %2138 = vst [vmem:[#allocation2 + $0x38] sm:$0xff] %v2074
        %2139 = vst [vmem:[#allocation2 + $0x40] sm:$0xff] %v2075
        %2140 = vst [vmem:[#allocation2 + $0x48] sm:$0xff] %v2076
        %2141 = vst [vmem:[#allocation2 + $0x50] sm:$0xff] %v2077
        %2142 = vst [vmem:[#allocation2 + $0x58] sm:$0xff] %v2078
        %2143 = vst [vmem:[#allocation2 + $0x60] sm:$0xff] %v2079
        %2144 = vst [vmem:[#allocation2 + $0x68] sm:$0xff] %v2080
        %2145 = vst [vmem:[#allocation2 + $0x70] sm:$0xff] %v2081
        %2146 = vst [vmem:[#allocation2 + $0x78] sm:$0xff] %v2082
        %2147 = vst [vmem:[#allocation2 + $0x80] sm:$0xff] %v2083
        %2148 = vst [vmem:[#allocation2 + $0x88] sm:$0xff] %v2084
        %2149 = vst [vmem:[#allocation2 + $0x90] sm:$0xff] %v2085
        %2150 = vst [vmem:[#allocation2 + $0x98] sm:$0xff] %v2086
        %2151 = vst [vmem:[#allocation2 + $0xa0] sm:$0xff] %v2087
        %2152 = vst [vmem:[#allocation2 + $0xa8] sm:$0xff] %v2088
        %2153 = vst [vmem:[#allocation2 + $0xb0] sm:$0xff] %v2089
        %2154 = vst [vmem:[#allocation2 + $0xb8] sm:$0xff] %v2090
        %2155 = vst [vmem:[#allocation2 + $0xc0] sm:$0xff] %v2091
        %2156 = vst [vmem:[#allocation2 + $0xc8] sm:$0xff] %v2092
        %2157 = vst [vmem:[#allocation2 + $0xd0] sm:$0xff] %v2093
        %2158 = vst [vmem:[#allocation2 + $0xd8] sm:$0xff] %v2094
        %2159 = vst [vmem:[#allocation2 + $0xe0] sm:$0xff] %v2095
        %2160 = vst [vmem:[#allocation2 + $0xe8] sm:$0xff] %v2096
        %2161 = vst [vmem:[#allocation2 + $0xf0] sm:$0xff] %v2097
        %2162 = vst [vmem:[#allocation2 + $0xf8] sm:$0xff] %v2098
        %2163 = vst [vmem:[#allocation2 + $0x100] sm:$0xff] %v2099
        %2164 = vst [vmem:[#allocation2 + $0x108] sm:$0xff] %v2100
        %2165 = vst [vmem:[#allocation2 + $0x110] sm:$0xff] %v2101
        %2166 = vst [vmem:[#allocation2 + $0x118] sm:$0xff] %v2102
        %2167 = vst [vmem:[#allocation2 + $0x120] sm:$0xff] %v2103
        %2168 = vst [vmem:[#allocation2 + $0x128] sm:$0xff] %v2104
        %2169 = vst [vmem:[#allocation2 + $0x130] sm:$0xff] %v2105
        %2170 = vst [vmem:[#allocation2 + $0x138] sm:$0xff] %v2106
        %2171 = vst [vmem:[#allocation2 + $0x140] sm:$0xff] %v2107
        %2172 = vst [vmem:[#allocation2 + $0x148] sm:$0xff] %v2108
        %2173 = vst [vmem:[#allocation2 + $0x150] sm:$0xff] %v2109
        %2174 = vst [vmem:[#allocation2 + $0x158] sm:$0xff] %v2110
        %2175 = vst [vmem:[#allocation2 + $0x160] sm:$0xff] %v2111
        %2176 = vst [vmem:[#allocation2 + $0x168] sm:$0xff] %v2112
        %2177 = vst [vmem:[#allocation2 + $0x170] sm:$0xff] %v2113
        %2178 = vst [vmem:[#allocation2 + $0x178] sm:$0xff] %v2114
        %2179 = vst [vmem:[#allocation2 + $0x180] sm:$0xff] %v2115
        %2180 = vst [vmem:[#allocation2 + $0x188] sm:$0xff] %v2116
        %2181 = vst [vmem:[#allocation2 + $0x190] sm:$0xff] %v2117
        %2182 = vst [vmem:[#allocation2 + $0x198] sm:$0xff] %v2118
        %2183 = vst [vmem:[#allocation2 + $0x1a0] sm:$0xff] %v2119
        %2184 = vst [vmem:[#allocation2 + $0x1a8] sm:$0xff] %v2120
        %2185 = vst [vmem:[#allocation2 + $0x1b0] sm:$0xff] %v2121
        %2186 = vst [vmem:[#allocation2 + $0x1b8] sm:$0xff] %v2122
        %2187 = vst [vmem:[#allocation2 + $0x1c0] sm:$0xff] %v2123
        %2188 = vst [vmem:[#allocation2 + $0x1c8] sm:$0xff] %v2124
        %2189 = vst [vmem:[#allocation2 + $0x1d0] sm:$0xff] %v2125
        %2190 = vst [vmem:[#allocation2 + $0x1d8] sm:$0xff] %v2126
        %2191 = vst [vmem:[#allocation2 + $0x1e0] sm:$0xff] %v2127
        %2192 = vst [vmem:[#allocation2 + $0x1e8] sm:$0xff] %v2128
        %2193 = vst [vmem:[#allocation2 + $0x1f0] sm:$0xff] %v2129
        %2194 = vst [vmem:[#allocation2 + $0x1f8] sm:$0xff] %v2130
        %p2195 = scmp.eq.s32.totalorder %s23, 1
        // Predicated region
        $region68: #{gpn_valuator_forward.5} parent=58 // pred_check
          %p2196 = pneg %p2195
        $region69: #{gpn_valuator_forward.5} parent=58 // pred_check_branch
          %2198 = sbr.rel (%p2196) target = $region71
        $region70: #{gpn_valuator_forward.5} parent=58 // pred_region
          %v2199 = vld [vmem:[#allocation2] sm:$0xff]
          %v2200 = vld [vmem:[#allocation2 + $0x8] sm:$0xff]
          %v2201 = vld [vmem:[#allocation2 + $0x10] sm:$0xff]
          %v2202 = vld [vmem:[#allocation2 + $0x18] sm:$0xff]
          %v2203 = vld [vmem:[#allocation2 + $0x20] sm:$0xff]
          %v2204 = vld [vmem:[#allocation2 + $0x28] sm:$0xff]
          %v2205 = vld [vmem:[#allocation2 + $0x30] sm:$0xff]
          %v2206 = vld [vmem:[#allocation2 + $0x38] sm:$0xff]
          %v2207 = vld [vmem:[#allocation2 + $0x40] sm:$0xff]
          %v2208 = vld [vmem:[#allocation2 + $0x48] sm:$0xff]
          %v2209 = vld [vmem:[#allocation2 + $0x50] sm:$0xff]
          %v2210 = vld [vmem:[#allocation2 + $0x58] sm:$0xff]
          %v2211 = vld [vmem:[#allocation2 + $0x60] sm:$0xff]
          %v2212 = vld [vmem:[#allocation2 + $0x68] sm:$0xff]
          %v2213 = vld [vmem:[#allocation2 + $0x70] sm:$0xff]
          %v2214 = vld [vmem:[#allocation2 + $0x78] sm:$0xff]
          %v2215 = vld [vmem:[#allocation2 + $0x80] sm:$0xff]
          %v2216 = vld [vmem:[#allocation2 + $0x88] sm:$0xff]
          %v2217 = vld [vmem:[#allocation2 + $0x90] sm:$0xff]
          %v2218 = vld [vmem:[#allocation2 + $0x98] sm:$0xff]
          %v2219 = vld [vmem:[#allocation2 + $0xa0] sm:$0xff]
          %v2220 = vld [vmem:[#allocation2 + $0xa8] sm:$0xff]
          %v2221 = vld [vmem:[#allocation2 + $0xb0] sm:$0xff]
          %v2222 = vld [vmem:[#allocation2 + $0xb8] sm:$0xff]
          %v2223 = vld [vmem:[#allocation2 + $0xc0] sm:$0xff]
          %v2224 = vld [vmem:[#allocation2 + $0xc8] sm:$0xff]
          %v2225 = vld [vmem:[#allocation2 + $0xd0] sm:$0xff]
          %v2226 = vld [vmem:[#allocation2 + $0xd8] sm:$0xff]
          %v2227 = vld [vmem:[#allocation2 + $0xe0] sm:$0xff]
          %v2228 = vld [vmem:[#allocation2 + $0xe8] sm:$0xff]
          %v2229 = vld [vmem:[#allocation2 + $0xf0] sm:$0xff]
          %v2230 = vld [vmem:[#allocation2 + $0xf8] sm:$0xff]
          %v2231 = vld [vmem:[#allocation2 + $0x100] sm:$0xff]
          %v2232 = vld [vmem:[#allocation2 + $0x108] sm:$0xff]
          %v2233 = vld [vmem:[#allocation2 + $0x110] sm:$0xff]
          %v2234 = vld [vmem:[#allocation2 + $0x118] sm:$0xff]
          %v2235 = vld [vmem:[#allocation2 + $0x120] sm:$0xff]
          %v2236 = vld [vmem:[#allocation2 + $0x128] sm:$0xff]
          %v2237 = vld [vmem:[#allocation2 + $0x130] sm:$0xff]
          %v2238 = vld [vmem:[#allocation2 + $0x138] sm:$0xff]
          %v2239 = vld [vmem:[#allocation2 + $0x140] sm:$0xff]
          %v2240 = vld [vmem:[#allocation2 + $0x148] sm:$0xff]
          %v2241 = vld [vmem:[#allocation2 + $0x150] sm:$0xff]
          %v2242 = vld [vmem:[#allocation2 + $0x158] sm:$0xff]
          %v2243 = vld [vmem:[#allocation2 + $0x160] sm:$0xff]
          %v2244 = vld [vmem:[#allocation2 + $0x168] sm:$0xff]
          %v2245 = vld [vmem:[#allocation2 + $0x170] sm:$0xff]
          %v2246 = vld [vmem:[#allocation2 + $0x178] sm:$0xff]
          %v2247 = vld [vmem:[#allocation2 + $0x180] sm:$0xff]
          %v2248 = vld [vmem:[#allocation2 + $0x188] sm:$0xff]
          %v2249 = vld [vmem:[#allocation2 + $0x190] sm:$0xff]
          %v2250 = vld [vmem:[#allocation2 + $0x198] sm:$0xff]
          %v2251 = vld [vmem:[#allocation2 + $0x1a0] sm:$0xff]
          %v2252 = vld [vmem:[#allocation2 + $0x1a8] sm:$0xff]
          %v2253 = vld [vmem:[#allocation2 + $0x1b0] sm:$0xff]
          %v2254 = vld [vmem:[#allocation2 + $0x1b8] sm:$0xff]
          %v2255 = vld [vmem:[#allocation2 + $0x1c0] sm:$0xff]
          %v2256 = vld [vmem:[#allocation2 + $0x1c8] sm:$0xff]
          %v2257 = vld [vmem:[#allocation2 + $0x1d0] sm:$0xff]
          %v2258 = vld [vmem:[#allocation2 + $0x1d8] sm:$0xff]
          %v2259 = vld [vmem:[#allocation2 + $0x1e0] sm:$0xff]
          %v2260 = vld [vmem:[#allocation2 + $0x1e8] sm:$0xff]
          %v2261 = vld [vmem:[#allocation2 + $0x1f0] sm:$0xff]
          %v2262 = vld [vmem:[#allocation2 + $0x1f8] sm:$0xff]
          %v2263 = vld [vmem:[%s2] sm:$0x1]
          %v2265 = vperm.slane %v2263, 0
          %v2267 = vadd.f32 %v2199, %v2265
          %v2268 = vadd.f32 %v2200, %v2265
          %v2269 = vadd.f32 %v2201, %v2265
          %v2270 = vadd.f32 %v2202, %v2265
          %v2271 = vadd.f32 %v2203, %v2265
          %v2272 = vadd.f32 %v2204, %v2265
          %v2273 = vadd.f32 %v2205, %v2265
          %v2274 = vadd.f32 %v2206, %v2265
          %v2275 = vadd.f32 %v2207, %v2265
          %v2276 = vadd.f32 %v2208, %v2265
          %v2277 = vadd.f32 %v2209, %v2265
          %v2278 = vadd.f32 %v2210, %v2265
          %v2279 = vadd.f32 %v2211, %v2265
          %v2280 = vadd.f32 %v2212, %v2265
          %v2281 = vadd.f32 %v2213, %v2265
          %v2282 = vadd.f32 %v2214, %v2265
          %v2283 = vadd.f32 %v2215, %v2265
          %v2284 = vadd.f32 %v2216, %v2265
          %v2285 = vadd.f32 %v2217, %v2265
          %v2286 = vadd.f32 %v2218, %v2265
          %v2287 = vadd.f32 %v2219, %v2265
          %v2288 = vadd.f32 %v2220, %v2265
          %v2289 = vadd.f32 %v2221, %v2265
          %v2290 = vadd.f32 %v2222, %v2265
          %v2291 = vadd.f32 %v2223, %v2265
          %v2292 = vadd.f32 %v2224, %v2265
          %v2293 = vadd.f32 %v2225, %v2265
          %v2294 = vadd.f32 %v2226, %v2265
          %v2295 = vadd.f32 %v2227, %v2265
          %v2296 = vadd.f32 %v2228, %v2265
          %v2297 = vadd.f32 %v2229, %v2265
          %v2298 = vadd.f32 %v2230, %v2265
          %v2299 = vadd.f32 %v2231, %v2265
          %v2300 = vadd.f32 %v2232, %v2265
          %v2301 = vadd.f32 %v2233, %v2265
          %v2302 = vadd.f32 %v2234, %v2265
          %v2303 = vadd.f32 %v2235, %v2265
          %v2304 = vadd.f32 %v2236, %v2265
          %v2305 = vadd.f32 %v2237, %v2265
          %v2306 = vadd.f32 %v2238, %v2265
          %v2307 = vadd.f32 %v2239, %v2265
          %v2308 = vadd.f32 %v2240, %v2265
          %v2309 = vadd.f32 %v2241, %v2265
          %v2310 = vadd.f32 %v2242, %v2265
          %v2311 = vadd.f32 %v2243, %v2265
          %v2312 = vadd.f32 %v2244, %v2265
          %v2313 = vadd.f32 %v2245, %v2265
          %v2314 = vadd.f32 %v2246, %v2265
          %v2315 = vadd.f32 %v2247, %v2265
          %v2316 = vadd.f32 %v2248, %v2265
          %v2317 = vadd.f32 %v2249, %v2265
          %v2318 = vadd.f32 %v2250, %v2265
          %v2319 = vadd.f32 %v2251, %v2265
          %v2320 = vadd.f32 %v2252, %v2265
          %v2321 = vadd.f32 %v2253, %v2265
          %v2322 = vadd.f32 %v2254, %v2265
          %v2323 = vadd.f32 %v2255, %v2265
          %v2324 = vadd.f32 %v2256, %v2265
          %v2325 = vadd.f32 %v2257, %v2265
          %v2326 = vadd.f32 %v2258, %v2265
          %v2327 = vadd.f32 %v2259, %v2265
          %v2328 = vadd.f32 %v2260, %v2265
          %v2329 = vadd.f32 %v2261, %v2265
          %v2330 = vadd.f32 %v2262, %v2265
          %v2331 = vmax.f32 %v2267, 0.0
          %v2332 = vmax.f32 %v2268, 0.0
          %v2333 = vmax.f32 %v2269, 0.0
          %v2334 = vmax.f32 %v2270, 0.0
          %v2335 = vmax.f32 %v2271, 0.0
          %v2336 = vmax.f32 %v2272, 0.0
          %v2337 = vmax.f32 %v2273, 0.0
          %v2338 = vmax.f32 %v2274, 0.0
          %v2339 = vmax.f32 %v2275, 0.0
          %v2340 = vmax.f32 %v2276, 0.0
          %v2341 = vmax.f32 %v2277, 0.0
          %v2342 = vmax.f32 %v2278, 0.0
          %v2343 = vmax.f32 %v2279, 0.0
          %v2344 = vmax.f32 %v2280, 0.0
          %v2345 = vmax.f32 %v2281, 0.0
          %v2346 = vmax.f32 %v2282, 0.0
          %v2347 = vmax.f32 %v2283, 0.0
          %v2348 = vmax.f32 %v2284, 0.0
          %v2349 = vmax.f32 %v2285, 0.0
          %v2350 = vmax.f32 %v2286, 0.0
          %v2351 = vmax.f32 %v2287, 0.0
          %v2352 = vmax.f32 %v2288, 0.0
          %v2353 = vmax.f32 %v2289, 0.0
          %v2354 = vmax.f32 %v2290, 0.0
          %v2355 = vmax.f32 %v2291, 0.0
          %v2356 = vmax.f32 %v2292, 0.0
          %v2357 = vmax.f32 %v2293, 0.0
          %v2358 = vmax.f32 %v2294, 0.0
          %v2359 = vmax.f32 %v2295, 0.0
          %v2360 = vmax.f32 %v2296, 0.0
          %v2361 = vmax.f32 %v2297, 0.0
          %v2362 = vmax.f32 %v2298, 0.0
          %v2363 = vmax.f32 %v2299, 0.0
          %v2364 = vmax.f32 %v2300, 0.0
          %v2365 = vmax.f32 %v2301, 0.0
          %v2366 = vmax.f32 %v2302, 0.0
          %v2367 = vmax.f32 %v2303, 0.0
          %v2368 = vmax.f32 %v2304, 0.0
          %v2369 = vmax.f32 %v2305, 0.0
          %v2370 = vmax.f32 %v2306, 0.0
          %v2371 = vmax.f32 %v2307, 0.0
          %v2372 = vmax.f32 %v2308, 0.0
          %v2373 = vmax.f32 %v2309, 0.0
          %v2374 = vmax.f32 %v2310, 0.0
          %v2375 = vmax.f32 %v2311, 0.0
          %v2376 = vmax.f32 %v2312, 0.0
          %v2377 = vmax.f32 %v2313, 0.0
          %v2378 = vmax.f32 %v2314, 0.0
          %v2379 = vmax.f32 %v2315, 0.0
          %v2380 = vmax.f32 %v2316, 0.0
          %v2381 = vmax.f32 %v2317, 0.0
          %v2382 = vmax.f32 %v2318, 0.0
          %v2383 = vmax.f32 %v2319, 0.0
          %v2384 = vmax.f32 %v2320, 0.0
          %v2385 = vmax.f32 %v2321, 0.0
          %v2386 = vmax.f32 %v2322, 0.0
          %v2387 = vmax.f32 %v2323, 0.0
          %v2388 = vmax.f32 %v2324, 0.0
          %v2389 = vmax.f32 %v2325, 0.0
          %v2390 = vmax.f32 %v2326, 0.0
          %v2391 = vmax.f32 %v2327, 0.0
          %v2392 = vmax.f32 %v2328, 0.0
          %v2393 = vmax.f32 %v2329, 0.0
          %v2394 = vmax.f32 %v2330, 0.0
          %v2395 = vld [vmem:[%s3] sm:$0x1]
          %v2397 = vperm.slane %v2395, 0
          %v2399 = vmul.f32 %v2331, %v2397
          %v2400 = vmul.f32 %v2332, %v2397
          %v2401 = vmul.f32 %v2333, %v2397
          %v2402 = vmul.f32 %v2334, %v2397
          %v2403 = vmul.f32 %v2335, %v2397
          %v2404 = vmul.f32 %v2336, %v2397
          %v2405 = vmul.f32 %v2337, %v2397
          %v2406 = vmul.f32 %v2338, %v2397
          %v2407 = vmul.f32 %v2339, %v2397
          %v2408 = vmul.f32 %v2340, %v2397
          %v2409 = vmul.f32 %v2341, %v2397
          %v2410 = vmul.f32 %v2342, %v2397
          %v2411 = vmul.f32 %v2343, %v2397
          %v2412 = vmul.f32 %v2344, %v2397
          %v2413 = vmul.f32 %v2345, %v2397
          %v2414 = vmul.f32 %v2346, %v2397
          %v2415 = vmul.f32 %v2347, %v2397
          %v2416 = vmul.f32 %v2348, %v2397
          %v2417 = vmul.f32 %v2349, %v2397
          %v2418 = vmul.f32 %v2350, %v2397
          %v2419 = vmul.f32 %v2351, %v2397
          %v2420 = vmul.f32 %v2352, %v2397
          %v2421 = vmul.f32 %v2353, %v2397
          %v2422 = vmul.f32 %v2354, %v2397
          %v2423 = vmul.f32 %v2355, %v2397
          %v2424 = vmul.f32 %v2356, %v2397
          %v2425 = vmul.f32 %v2357, %v2397
          %v2426 = vmul.f32 %v2358, %v2397
          %v2427 = vmul.f32 %v2359, %v2397
          %v2428 = vmul.f32 %v2360, %v2397
          %v2429 = vmul.f32 %v2361, %v2397
          %v2430 = vmul.f32 %v2362, %v2397
          %v2431 = vmul.f32 %v2363, %v2397
          %v2432 = vmul.f32 %v2364, %v2397
          %v2433 = vmul.f32 %v2365, %v2397
          %v2434 = vmul.f32 %v2366, %v2397
          %v2435 = vmul.f32 %v2367, %v2397
          %v2436 = vmul.f32 %v2368, %v2397
          %v2437 = vmul.f32 %v2369, %v2397
          %v2438 = vmul.f32 %v2370, %v2397
          %v2439 = vmul.f32 %v2371, %v2397
          %v2440 = vmul.f32 %v2372, %v2397
          %v2441 = vmul.f32 %v2373, %v2397
          %v2442 = vmul.f32 %v2374, %v2397
          %v2443 = vmul.f32 %v2375, %v2397
          %v2444 = vmul.f32 %v2376, %v2397
          %v2445 = vmul.f32 %v2377, %v2397
          %v2446 = vmul.f32 %v2378, %v2397
          %v2447 = vmul.f32 %v2379, %v2397
          %v2448 = vmul.f32 %v2380, %v2397
          %v2449 = vmul.f32 %v2381, %v2397
          %v2450 = vmul.f32 %v2382, %v2397
          %v2451 = vmul.f32 %v2383, %v2397
          %v2452 = vmul.f32 %v2384, %v2397
          %v2453 = vmul.f32 %v2385, %v2397
          %v2454 = vmul.f32 %v2386, %v2397
          %v2455 = vmul.f32 %v2387, %v2397
          %v2456 = vmul.f32 %v2388, %v2397
          %v2457 = vmul.f32 %v2389, %v2397
          %v2458 = vmul.f32 %v2390, %v2397
          %v2459 = vmul.f32 %v2391, %v2397
          %v2460 = vmul.f32 %v2392, %v2397
          %v2461 = vmul.f32 %v2393, %v2397
          %v2462 = vmul.f32 %v2394, %v2397
          %2463 = vadd.xlane.f32.xlu0 %v2399
          %v2464 = vpop.xlane.xlu0 %2463
          %2465 = vadd.xlane.f32.xlu0 %v2400
          %v2466 = vpop.xlane.xlu0 %2465
          %2467 = vadd.xlane.f32.xlu0 %v2401
          %v2468 = vpop.xlane.xlu0 %2467
          %2469 = vadd.xlane.f32.xlu0 %v2402
          %v2470 = vpop.xlane.xlu0 %2469
          %2471 = vadd.xlane.f32.xlu0 %v2403
          %v2472 = vpop.xlane.xlu0 %2471
          %2473 = vadd.xlane.f32.xlu0 %v2404
          %v2474 = vpop.xlane.xlu0 %2473
          %2475 = vadd.xlane.f32.xlu0 %v2405
          %v2476 = vpop.xlane.xlu0 %2475
          %2477 = vadd.xlane.f32.xlu0 %v2406
          %v2478 = vpop.xlane.xlu0 %2477
          %2479 = vadd.xlane.f32.xlu0 %v2407
          %v2480 = vpop.xlane.xlu0 %2479
          %2481 = vadd.xlane.f32.xlu0 %v2408
          %v2482 = vpop.xlane.xlu0 %2481
          %2483 = vadd.xlane.f32.xlu0 %v2409
          %v2484 = vpop.xlane.xlu0 %2483
          %2485 = vadd.xlane.f32.xlu0 %v2410
          %v2486 = vpop.xlane.xlu0 %2485
          %2487 = vadd.xlane.f32.xlu0 %v2411
          %v2488 = vpop.xlane.xlu0 %2487
          %2489 = vadd.xlane.f32.xlu0 %v2412
          %v2490 = vpop.xlane.xlu0 %2489
          %2491 = vadd.xlane.f32.xlu0 %v2413
          %v2492 = vpop.xlane.xlu0 %2491
          %2493 = vadd.xlane.f32.xlu0 %v2414
          %v2494 = vpop.xlane.xlu0 %2493
          %2495 = vadd.xlane.f32.xlu0 %v2415
          %v2496 = vpop.xlane.xlu0 %2495
          %2497 = vadd.xlane.f32.xlu0 %v2416
          %v2498 = vpop.xlane.xlu0 %2497
          %2499 = vadd.xlane.f32.xlu0 %v2417
          %v2500 = vpop.xlane.xlu0 %2499
          %2501 = vadd.xlane.f32.xlu0 %v2418
          %v2502 = vpop.xlane.xlu0 %2501
          %2503 = vadd.xlane.f32.xlu0 %v2419
          %v2504 = vpop.xlane.xlu0 %2503
          %2505 = vadd.xlane.f32.xlu0 %v2420
          %v2506 = vpop.xlane.xlu0 %2505
          %2507 = vadd.xlane.f32.xlu0 %v2421
          %v2508 = vpop.xlane.xlu0 %2507
          %2509 = vadd.xlane.f32.xlu0 %v2422
          %v2510 = vpop.xlane.xlu0 %2509
          %2511 = vadd.xlane.f32.xlu0 %v2423
          %v2512 = vpop.xlane.xlu0 %2511
          %2513 = vadd.xlane.f32.xlu0 %v2424
          %v2514 = vpop.xlane.xlu0 %2513
          %2515 = vadd.xlane.f32.xlu0 %v2425
          %v2516 = vpop.xlane.xlu0 %2515
          %2517 = vadd.xlane.f32.xlu0 %v2426
          %v2518 = vpop.xlane.xlu0 %2517
          %2519 = vadd.xlane.f32.xlu0 %v2427
          %v2520 = vpop.xlane.xlu0 %2519
          %2521 = vadd.xlane.f32.xlu0 %v2428
          %v2522 = vpop.xlane.xlu0 %2521
          %2523 = vadd.xlane.f32.xlu0 %v2429
          %v2524 = vpop.xlane.xlu0 %2523
          %2525 = vadd.xlane.f32.xlu0 %v2430
          %v2526 = vpop.xlane.xlu0 %2525
          %2527 = vadd.xlane.f32.xlu0 %v2431
          %v2528 = vpop.xlane.xlu0 %2527
          %2529 = vadd.xlane.f32.xlu0 %v2432
          %v2530 = vpop.xlane.xlu0 %2529
          %2531 = vadd.xlane.f32.xlu0 %v2433
          %v2532 = vpop.xlane.xlu0 %2531
          %2533 = vadd.xlane.f32.xlu0 %v2434
          %v2534 = vpop.xlane.xlu0 %2533
          %2535 = vadd.xlane.f32.xlu0 %v2435
          %v2536 = vpop.xlane.xlu0 %2535
          %2537 = vadd.xlane.f32.xlu0 %v2436
          %v2538 = vpop.xlane.xlu0 %2537
          %2539 = vadd.xlane.f32.xlu0 %v2437
          %v2540 = vpop.xlane.xlu0 %2539
          %2541 = vadd.xlane.f32.xlu0 %v2438
          %v2542 = vpop.xlane.xlu0 %2541
          %2543 = vadd.xlane.f32.xlu0 %v2439
          %v2544 = vpop.xlane.xlu0 %2543
          %2545 = vadd.xlane.f32.xlu0 %v2440
          %v2546 = vpop.xlane.xlu0 %2545
          %2547 = vadd.xlane.f32.xlu0 %v2441
          %v2548 = vpop.xlane.xlu0 %2547
          %2549 = vadd.xlane.f32.xlu0 %v2442
          %v2550 = vpop.xlane.xlu0 %2549
          %2551 = vadd.xlane.f32.xlu0 %v2443
          %v2552 = vpop.xlane.xlu0 %2551
          %2553 = vadd.xlane.f32.xlu0 %v2444
          %v2554 = vpop.xlane.xlu0 %2553
          %2555 = vadd.xlane.f32.xlu0 %v2445
          %v2556 = vpop.xlane.xlu0 %2555
          %2557 = vadd.xlane.f32.xlu0 %v2446
          %v2558 = vpop.xlane.xlu0 %2557
          %2559 = vadd.xlane.f32.xlu0 %v2447
          %v2560 = vpop.xlane.xlu0 %2559
          %2561 = vadd.xlane.f32.xlu0 %v2448
          %v2562 = vpop.xlane.xlu0 %2561
          %2563 = vadd.xlane.f32.xlu0 %v2449
          %v2564 = vpop.xlane.xlu0 %2563
          %2565 = vadd.xlane.f32.xlu0 %v2450
          %v2566 = vpop.xlane.xlu0 %2565
          %2567 = vadd.xlane.f32.xlu0 %v2451
          %v2568 = vpop.xlane.xlu0 %2567
          %2569 = vadd.xlane.f32.xlu0 %v2452
          %v2570 = vpop.xlane.xlu0 %2569
          %2571 = vadd.xlane.f32.xlu0 %v2453
          %v2572 = vpop.xlane.xlu0 %2571
          %2573 = vadd.xlane.f32.xlu0 %v2454
          %v2574 = vpop.xlane.xlu0 %2573
          %2575 = vadd.xlane.f32.xlu0 %v2455
          %v2576 = vpop.xlane.xlu0 %2575
          %2577 = vadd.xlane.f32.xlu0 %v2456
          %v2578 = vpop.xlane.xlu0 %2577
          %2579 = vadd.xlane.f32.xlu0 %v2457
          %v2580 = vpop.xlane.xlu0 %2579
          %2581 = vadd.xlane.f32.xlu0 %v2458
          %v2582 = vpop.xlane.xlu0 %2581
          %2583 = vadd.xlane.f32.xlu0 %v2459
          %v2584 = vpop.xlane.xlu0 %2583
          %2585 = vadd.xlane.f32.xlu0 %v2460
          %v2586 = vpop.xlane.xlu0 %2585
          %2587 = vadd.xlane.f32.xlu0 %v2461
          %v2588 = vpop.xlane.xlu0 %2587
          %2589 = vadd.xlane.f32.xlu0 %v2462
          %v2590 = vpop.xlane.xlu0 %2589
          %v2591 = vld [vmem:[#allocation3] sm:$0x1]
          %v2593 = vperm.slane %v2591, 0
          %v2595 = vadd.f32 %v2464, %v2593
          %v2596 = vadd.f32 %v2466, %v2593
          %v2597 = vadd.f32 %v2468, %v2593
          %v2598 = vadd.f32 %v2470, %v2593
          %v2599 = vadd.f32 %v2472, %v2593
          %v2600 = vadd.f32 %v2474, %v2593
          %v2601 = vadd.f32 %v2476, %v2593
          %v2602 = vadd.f32 %v2478, %v2593
          %v2603 = vadd.f32 %v2480, %v2593
          %v2604 = vadd.f32 %v2482, %v2593
          %v2605 = vadd.f32 %v2484, %v2593
          %v2606 = vadd.f32 %v2486, %v2593
          %v2607 = vadd.f32 %v2488, %v2593
          %v2608 = vadd.f32 %v2490, %v2593
          %v2609 = vadd.f32 %v2492, %v2593
          %v2610 = vadd.f32 %v2494, %v2593
          %v2611 = vadd.f32 %v2496, %v2593
          %v2612 = vadd.f32 %v2498, %v2593
          %v2613 = vadd.f32 %v2500, %v2593
          %v2614 = vadd.f32 %v2502, %v2593
          %v2615 = vadd.f32 %v2504, %v2593
          %v2616 = vadd.f32 %v2506, %v2593
          %v2617 = vadd.f32 %v2508, %v2593
          %v2618 = vadd.f32 %v2510, %v2593
          %v2619 = vadd.f32 %v2512, %v2593
          %v2620 = vadd.f32 %v2514, %v2593
          %v2621 = vadd.f32 %v2516, %v2593
          %v2622 = vadd.f32 %v2518, %v2593
          %v2623 = vadd.f32 %v2520, %v2593
          %v2624 = vadd.f32 %v2522, %v2593
          %v2625 = vadd.f32 %v2524, %v2593
          %v2626 = vadd.f32 %v2526, %v2593
          %v2627 = vadd.f32 %v2528, %v2593
          %v2628 = vadd.f32 %v2530, %v2593
          %v2629 = vadd.f32 %v2532, %v2593
          %v2630 = vadd.f32 %v2534, %v2593
          %v2631 = vadd.f32 %v2536, %v2593
          %v2632 = vadd.f32 %v2538, %v2593
          %v2633 = vadd.f32 %v2540, %v2593
          %v2634 = vadd.f32 %v2542, %v2593
          %v2635 = vadd.f32 %v2544, %v2593
          %v2636 = vadd.f32 %v2546, %v2593
          %v2637 = vadd.f32 %v2548, %v2593
          %v2638 = vadd.f32 %v2550, %v2593
          %v2639 = vadd.f32 %v2552, %v2593
          %v2640 = vadd.f32 %v2554, %v2593
          %v2641 = vadd.f32 %v2556, %v2593
          %v2642 = vadd.f32 %v2558, %v2593
          %v2643 = vadd.f32 %v2560, %v2593
          %v2644 = vadd.f32 %v2562, %v2593
          %v2645 = vadd.f32 %v2564, %v2593
          %v2646 = vadd.f32 %v2566, %v2593
          %v2647 = vadd.f32 %v2568, %v2593
          %v2648 = vadd.f32 %v2570, %v2593
          %v2649 = vadd.f32 %v2572, %v2593
          %v2650 = vadd.f32 %v2574, %v2593
          %v2651 = vadd.f32 %v2576, %v2593
          %v2652 = vadd.f32 %v2578, %v2593
          %v2653 = vadd.f32 %v2580, %v2593
          %v2654 = vadd.f32 %v2582, %v2593
          %v2655 = vadd.f32 %v2584, %v2593
          %v2656 = vadd.f32 %v2586, %v2593
          %v2657 = vadd.f32 %v2588, %v2593
          %v2658 = vadd.f32 %v2590, %v2593
          %2660 = vset.pattern.permute.xlu0 0
          %2661 = vperm.xlu0 %2660, %v2595
          %v2662 = vpop.permute.xlu0 %2661
          %2665 = vset.pattern.permute.xlu0 0
          %2666 = vperm.xlu0 %2665, %v2596
          %v2667 = vpop.permute.xlu0 %2666
          %2670 = vset.pattern.permute.xlu0 0
          %2671 = vperm.xlu0 %2670, %v2597
          %v2672 = vpop.permute.xlu0 %2671
          %2675 = vset.pattern.permute.xlu0 0
          %2676 = vperm.xlu0 %2675, %v2598
          %v2677 = vpop.permute.xlu0 %2676
          %2680 = vset.pattern.permute.xlu0 0
          %2681 = vperm.xlu0 %2680, %v2599
          %v2682 = vpop.permute.xlu0 %2681
          %2685 = vset.pattern.permute.xlu0 0
          %2686 = vperm.xlu0 %2685, %v2600
          %v2687 = vpop.permute.xlu0 %2686
          %2690 = vset.pattern.permute.xlu0 0
          %2691 = vperm.xlu0 %2690, %v2601
          %v2692 = vpop.permute.xlu0 %2691
          %2695 = vset.pattern.permute.xlu0 0
          %2696 = vperm.xlu0 %2695, %v2602
          %v2697 = vpop.permute.xlu0 %2696
          %2700 = vset.pattern.permute.xlu0 0
          %2701 = vperm.xlu0 %2700, %v2603
          %v2702 = vpop.permute.xlu0 %2701
          %2705 = vset.pattern.permute.xlu0 0
          %2706 = vperm.xlu0 %2705, %v2604
          %v2707 = vpop.permute.xlu0 %2706
          %2710 = vset.pattern.permute.xlu0 0
          %2711 = vperm.xlu0 %2710, %v2605
          %v2712 = vpop.permute.xlu0 %2711
          %2715 = vset.pattern.permute.xlu0 0
          %2716 = vperm.xlu0 %2715, %v2606
          %v2717 = vpop.permute.xlu0 %2716
          %2720 = vset.pattern.permute.xlu0 0
          %2721 = vperm.xlu0 %2720, %v2607
          %v2722 = vpop.permute.xlu0 %2721
          %2725 = vset.pattern.permute.xlu0 0
          %2726 = vperm.xlu0 %2725, %v2608
          %v2727 = vpop.permute.xlu0 %2726
          %2730 = vset.pattern.permute.xlu0 0
          %2731 = vperm.xlu0 %2730, %v2609
          %v2732 = vpop.permute.xlu0 %2731
          %2735 = vset.pattern.permute.xlu0 0
          %2736 = vperm.xlu0 %2735, %v2610
          %v2737 = vpop.permute.xlu0 %2736
          %2740 = vset.pattern.permute.xlu0 0
          %2741 = vperm.xlu0 %2740, %v2611
          %v2742 = vpop.permute.xlu0 %2741
          %2745 = vset.pattern.permute.xlu0 0
          %2746 = vperm.xlu0 %2745, %v2612
          %v2747 = vpop.permute.xlu0 %2746
          %2750 = vset.pattern.permute.xlu0 0
          %2751 = vperm.xlu0 %2750, %v2613
          %v2752 = vpop.permute.xlu0 %2751
          %2755 = vset.pattern.permute.xlu0 0
          %2756 = vperm.xlu0 %2755, %v2614
          %v2757 = vpop.permute.xlu0 %2756
          %2760 = vset.pattern.permute.xlu0 0
          %2761 = vperm.xlu0 %2760, %v2615
          %v2762 = vpop.permute.xlu0 %2761
          %2765 = vset.pattern.permute.xlu0 0
          %2766 = vperm.xlu0 %2765, %v2616
          %v2767 = vpop.permute.xlu0 %2766
          %2770 = vset.pattern.permute.xlu0 0
          %2771 = vperm.xlu0 %2770, %v2617
          %v2772 = vpop.permute.xlu0 %2771
          %2775 = vset.pattern.permute.xlu0 0
          %2776 = vperm.xlu0 %2775, %v2618
          %v2777 = vpop.permute.xlu0 %2776
          %2780 = vset.pattern.permute.xlu0 0
          %2781 = vperm.xlu0 %2780, %v2619
          %v2782 = vpop.permute.xlu0 %2781
          %2785 = vset.pattern.permute.xlu0 0
          %2786 = vperm.xlu0 %2785, %v2620
          %v2787 = vpop.permute.xlu0 %2786
          %2790 = vset.pattern.permute.xlu0 0
          %2791 = vperm.xlu0 %2790, %v2621
          %v2792 = vpop.permute.xlu0 %2791
          %2795 = vset.pattern.permute.xlu0 0
          %2796 = vperm.xlu0 %2795, %v2622
          %v2797 = vpop.permute.xlu0 %2796
          %2800 = vset.pattern.permute.xlu0 0
          %2801 = vperm.xlu0 %2800, %v2623
          %v2802 = vpop.permute.xlu0 %2801
          %2805 = vset.pattern.permute.xlu0 0
          %2806 = vperm.xlu0 %2805, %v2624
          %v2807 = vpop.permute.xlu0 %2806
          %2810 = vset.pattern.permute.xlu0 0
          %2811 = vperm.xlu0 %2810, %v2625
          %v2812 = vpop.permute.xlu0 %2811
          %2815 = vset.pattern.permute.xlu0 0
          %2816 = vperm.xlu0 %2815, %v2626
          %v2817 = vpop.permute.xlu0 %2816
          %2820 = vset.pattern.permute.xlu0 0
          %2821 = vperm.xlu0 %2820, %v2627
          %v2822 = vpop.permute.xlu0 %2821
          %2825 = vset.pattern.permute.xlu0 0
          %2826 = vperm.xlu0 %2825, %v2628
          %v2827 = vpop.permute.xlu0 %2826
          %2830 = vset.pattern.permute.xlu0 0
          %2831 = vperm.xlu0 %2830, %v2629
          %v2832 = vpop.permute.xlu0 %2831
          %2835 = vset.pattern.permute.xlu0 0
          %2836 = vperm.xlu0 %2835, %v2630
          %v2837 = vpop.permute.xlu0 %2836
          %2840 = vset.pattern.permute.xlu0 0
          %2841 = vperm.xlu0 %2840, %v2631
          %v2842 = vpop.permute.xlu0 %2841
          %2845 = vset.pattern.permute.xlu0 0
          %2846 = vperm.xlu0 %2845, %v2632
          %v2847 = vpop.permute.xlu0 %2846
          %2850 = vset.pattern.permute.xlu0 0
          %2851 = vperm.xlu0 %2850, %v2633
          %v2852 = vpop.permute.xlu0 %2851
          %2855 = vset.pattern.permute.xlu0 0
          %2856 = vperm.xlu0 %2855, %v2634
          %v2857 = vpop.permute.xlu0 %2856
          %2860 = vset.pattern.permute.xlu0 0
          %2861 = vperm.xlu0 %2860, %v2635
          %v2862 = vpop.permute.xlu0 %2861
          %2865 = vset.pattern.permute.xlu0 0
          %2866 = vperm.xlu0 %2865, %v2636
          %v2867 = vpop.permute.xlu0 %2866
          %2870 = vset.pattern.permute.xlu0 0
          %2871 = vperm.xlu0 %2870, %v2637
          %v2872 = vpop.permute.xlu0 %2871
          %2875 = vset.pattern.permute.xlu0 0
          %2876 = vperm.xlu0 %2875, %v2638
          %v2877 = vpop.permute.xlu0 %2876
          %2880 = vset.pattern.permute.xlu0 0
          %2881 = vperm.xlu0 %2880, %v2639
          %v2882 = vpop.permute.xlu0 %2881
          %2885 = vset.pattern.permute.xlu0 0
          %2886 = vperm.xlu0 %2885, %v2640
          %v2887 = vpop.permute.xlu0 %2886
          %2890 = vset.pattern.permute.xlu0 0
          %2891 = vperm.xlu0 %2890, %v2641
          %v2892 = vpop.permute.xlu0 %2891
          %2895 = vset.pattern.permute.xlu0 0
          %2896 = vperm.xlu0 %2895, %v2642
          %v2897 = vpop.permute.xlu0 %2896
          %2900 = vset.pattern.permute.xlu0 0
          %2901 = vperm.xlu0 %2900, %v2643
          %v2902 = vpop.permute.xlu0 %2901
          %2905 = vset.pattern.permute.xlu0 0
          %2906 = vperm.xlu0 %2905, %v2644
          %v2907 = vpop.permute.xlu0 %2906
          %2910 = vset.pattern.permute.xlu0 0
          %2911 = vperm.xlu0 %2910, %v2645
          %v2912 = vpop.permute.xlu0 %2911
          %2915 = vset.pattern.permute.xlu0 0
          %2916 = vperm.xlu0 %2915, %v2646
          %v2917 = vpop.permute.xlu0 %2916
          %2920 = vset.pattern.permute.xlu0 0
          %2921 = vperm.xlu0 %2920, %v2647
          %v2922 = vpop.permute.xlu0 %2921
          %2925 = vset.pattern.permute.xlu0 0
          %2926 = vperm.xlu0 %2925, %v2648
          %v2927 = vpop.permute.xlu0 %2926
          %2930 = vset.pattern.permute.xlu0 0
          %2931 = vperm.xlu0 %2930, %v2649
          %v2932 = vpop.permute.xlu0 %2931
          %2935 = vset.pattern.permute.xlu0 0
          %2936 = vperm.xlu0 %2935, %v2650
          %v2937 = vpop.permute.xlu0 %2936
          %2940 = vset.pattern.permute.xlu0 0
          %2941 = vperm.xlu0 %2940, %v2651
          %v2942 = vpop.permute.xlu0 %2941
          %2945 = vset.pattern.permute.xlu0 0
          %2946 = vperm.xlu0 %2945, %v2652
          %v2947 = vpop.permute.xlu0 %2946
          %2950 = vset.pattern.permute.xlu0 0
          %2951 = vperm.xlu0 %2950, %v2653
          %v2952 = vpop.permute.xlu0 %2951
          %2955 = vset.pattern.permute.xlu0 0
          %2956 = vperm.xlu0 %2955, %v2654
          %v2957 = vpop.permute.xlu0 %2956
          %2960 = vset.pattern.permute.xlu0 0
          %2961 = vperm.xlu0 %2960, %v2655
          %v2962 = vpop.permute.xlu0 %2961
          %2965 = vset.pattern.permute.xlu0 0
          %2966 = vperm.xlu0 %2965, %v2656
          %v2967 = vpop.permute.xlu0 %2966
          %2970 = vset.pattern.permute.xlu0 0
          %2971 = vperm.xlu0 %2970, %v2657
          %v2972 = vpop.permute.xlu0 %2971
          %2975 = vset.pattern.permute.xlu0 0
          %2976 = vperm.xlu0 %2975, %v2658
          %v2977 = vpop.permute.xlu0 %2976
          %2979 = vst [vmem:[%s775] sm:$0xff] %v2662
          %2980 = vst [vmem:[%s775 + $0x8] sm:$0xff] %v2667
          %2981 = vst [vmem:[%s775 + $0x10] sm:$0xff] %v2672
          %2982 = vst [vmem:[%s775 + $0x18] sm:$0xff] %v2677
          %2983 = vst [vmem:[%s775 + $0x20] sm:$0xff] %v2682
          %2984 = vst [vmem:[%s775 + $0x28] sm:$0xff] %v2687
          %2985 = vst [vmem:[%s775 + $0x30] sm:$0xff] %v2692
          %2986 = vst [vmem:[%s775 + $0x38] sm:$0xff] %v2697
          %2987 = vst [vmem:[%s775 + $0x40] sm:$0xff] %v2702
          %2988 = vst [vmem:[%s775 + $0x48] sm:$0xff] %v2707
          %2989 = vst [vmem:[%s775 + $0x50] sm:$0xff] %v2712
          %2990 = vst [vmem:[%s775 + $0x58] sm:$0xff] %v2717
          %2991 = vst [vmem:[%s775 + $0x60] sm:$0xff] %v2722
          %2992 = vst [vmem:[%s775 + $0x68] sm:$0xff] %v2727
          %2993 = vst [vmem:[%s775 + $0x70] sm:$0xff] %v2732
          %2994 = vst [vmem:[%s775 + $0x78] sm:$0xff] %v2737
          %2995 = vst [vmem:[%s775 + $0x80] sm:$0xff] %v2742
          %2996 = vst [vmem:[%s775 + $0x88] sm:$0xff] %v2747
          %2997 = vst [vmem:[%s775 + $0x90] sm:$0xff] %v2752
          %2998 = vst [vmem:[%s775 + $0x98] sm:$0xff] %v2757
          %2999 = vst [vmem:[%s775 + $0xa0] sm:$0xff] %v2762
          %3000 = vst [vmem:[%s775 + $0xa8] sm:$0xff] %v2767
          %3001 = vst [vmem:[%s775 + $0xb0] sm:$0xff] %v2772
          %3002 = vst [vmem:[%s775 + $0xb8] sm:$0xff] %v2777
          %3003 = vst [vmem:[%s775 + $0xc0] sm:$0xff] %v2782
          %3004 = vst [vmem:[%s775 + $0xc8] sm:$0xff] %v2787
          %3005 = vst [vmem:[%s775 + $0xd0] sm:$0xff] %v2792
          %3006 = vst [vmem:[%s775 + $0xd8] sm:$0xff] %v2797
          %3007 = vst [vmem:[%s775 + $0xe0] sm:$0xff] %v2802
          %3008 = vst [vmem:[%s775 + $0xe8] sm:$0xff] %v2807
          %3009 = vst [vmem:[%s775 + $0xf0] sm:$0xff] %v2812
          %3010 = vst [vmem:[%s775 + $0xf8] sm:$0xff] %v2817
          %3011 = vst [vmem:[%s775 + $0x100] sm:$0xff] %v2822
          %3012 = vst [vmem:[%s775 + $0x108] sm:$0xff] %v2827
          %3013 = vst [vmem:[%s775 + $0x110] sm:$0xff] %v2832
          %3014 = vst [vmem:[%s775 + $0x118] sm:$0xff] %v2837
          %3015 = vst [vmem:[%s775 + $0x120] sm:$0xff] %v2842
          %3016 = vst [vmem:[%s775 + $0x128] sm:$0xff] %v2847
          %3017 = vst [vmem:[%s775 + $0x130] sm:$0xff] %v2852
          %3018 = vst [vmem:[%s775 + $0x138] sm:$0xff] %v2857
          %3019 = vst [vmem:[%s775 + $0x140] sm:$0xff] %v2862
          %3020 = vst [vmem:[%s775 + $0x148] sm:$0xff] %v2867
          %3021 = vst [vmem:[%s775 + $0x150] sm:$0xff] %v2872
          %3022 = vst [vmem:[%s775 + $0x158] sm:$0xff] %v2877
          %3023 = vst [vmem:[%s775 + $0x160] sm:$0xff] %v2882
          %3024 = vst [vmem:[%s775 + $0x168] sm:$0xff] %v2887
          %3025 = vst [vmem:[%s775 + $0x170] sm:$0xff] %v2892
          %3026 = vst [vmem:[%s775 + $0x178] sm:$0xff] %v2897
          %3027 = vst [vmem:[%s775 + $0x180] sm:$0xff] %v2902
          %3028 = vst [vmem:[%s775 + $0x188] sm:$0xff] %v2907
          %3029 = vst [vmem:[%s775 + $0x190] sm:$0xff] %v2912
          %3030 = vst [vmem:[%s775 + $0x198] sm:$0xff] %v2917
          %3031 = vst [vmem:[%s775 + $0x1a0] sm:$0xff] %v2922
          %3032 = vst [vmem:[%s775 + $0x1a8] sm:$0xff] %v2927
          %3033 = vst [vmem:[%s775 + $0x1b0] sm:$0xff] %v2932
          %3034 = vst [vmem:[%s775 + $0x1b8] sm:$0xff] %v2937
          %3035 = vst [vmem:[%s775 + $0x1c0] sm:$0xff] %v2942
          %3036 = vst [vmem:[%s775 + $0x1c8] sm:$0xff] %v2947
          %3037 = vst [vmem:[%s775 + $0x1d0] sm:$0xff] %v2952
          %3038 = vst [vmem:[%s775 + $0x1d8] sm:$0xff] %v2957
          %3039 = vst [vmem:[%s775 + $0x1e0] sm:$0xff] %v2962
          %3040 = vst [vmem:[%s775 + $0x1e8] sm:$0xff] %v2967
          %3041 = vst [vmem:[%s775 + $0x1f0] sm:$0xff] %v2972
          %3042 = vst [vmem:[%s775 + $0x1f8] sm:$0xff] %v2977
        $region71: #{gpn_valuator_forward.5} parent=58 // pred_fallthru
          _
        %s3043 = smul.u32 64, %s22
        %p3044 = scmp.lt.s32.totalorder %s3043, 127
        %s3045 = scalar_select %p3044, %s3043, 127
        %s3046 = smul.addr %s3045, 8
        %s3047 = scalar_lea.vmem %s5, %s3046
        // Predicated region
        $region72: #{gpn_valuator_forward.5} parent=58 // pred_check
          %p3048 = pneg %p160
        $region73: #{gpn_valuator_forward.5} parent=58 // pred_check_branch
          %3050 = sbr.rel (%p3048) target = $region75
        $region74: #{gpn_valuator_forward.5} parent=58 // pred_region
          %s3051 = smul.u32 64, %s22
        $region75: #{gpn_valuator_forward.5} parent=58 // pred_fallthru
          _
      $region59: #{gpn_valuator_forward.5} parent=5 // pred_fallthru
        _
      %p3052 = scmp.le.s32.totalorder 2, %s13
      // Predicated region
      $region76: #{gpn_valuator_forward.5} parent=5 // pred_check
        %p3053 = pneg %p3052
      $region77: #{gpn_valuator_forward.5} parent=5 // pred_check_branch
        %3055 = sbr.rel (%p3053) target = $region79
      $region78: #{gpn_valuator_forward.5} parent=5 // pred_region
        %s3056 = ssub.s32 %s13, 2
        // Predicated region
        $region80: #{gpn_valuator_forward.5} parent=78 // pred_check
          %p3057 = pneg %p166
        $region81: #{gpn_valuator_forward.5} parent=78 // pred_check_branch
          %3059 = sbr.rel (%p3057) target = $region83
        $region82: #{gpn_valuator_forward.5} parent=78 // pred_region
          %s3060 = smul.u32 64, %s24
          %p3061 = scmp.lt.s32.totalorder %s3060, 127
          %s3062 = scalar_select %p3061, %s3060, 127
          %s3063 = smul.addr %s3062, 8
          %s3064 = scalar_lea.vmem %s5, %s3063
        $region83: #{gpn_valuator_forward.5} parent=78 // pred_fallthru
          _
      $region79: #{gpn_valuator_forward.5} parent=5 // pred_fallthru
        _
    $region6: #{gpn_valuator_forward.5} parent=1 // loop_footer
      %s17 = sadd.s32 1, %s13
    $region7: #{gpn_valuator_forward.5} parent=1 // loop_footer_branch
      %12 = sbr.rel target = $region3
    $region8: #{gpn_valuator_forward.5} parent=1 // loop_exit
      _

</llo_original>
